<compile_context>
chip_gen: v7x
topology: tpu7x:2x2x1
jax: 0.10.0
libtpu: 0.0.40
codegen_flags: <defaults>
</compile_context>

<pallas_src>
import functools

import jax
import jax.numpy as jnp
from jax.experimental import pallas as pl
from jax.experimental.pallas import tpu as pltpu


def _round_up(x, m):
    return ((x + m - 1) // m) * m


def _vmem_specs(n):
    return [pl.BlockSpec(memory_space=pltpu.MemorySpace.VMEM) for _ in range(n)]


# ----------------------------- Pallas kernels ------------------------------

def _upsample_matmul_kernel(x_ref, w_ref, b_ref, o_ref):
    # ConvTranspose2d(k=2, s=2) hot path: one matmul (4 disjoint 1x1 convs), bf16 MXU
    # operands, f32 accumulate + bias, bf16 result.
    acc = jnp.dot(x_ref[...], w_ref[...], preferred_element_type=jnp.float32)
    o_ref[...] = (acc + b_ref[...]).astype(o_ref.dtype)


def _fused_double_conv_kernel(
    x2g_ref, x1g_ref, vh_ref, vo_ref,
    w1_ref, b1_ref, g1_ref, be1_ref,
    w2_ref, b2_ref, g2_ref, be2_ref,
    out_ref, h_ref,
    *, Wg, P1, P2, cnt1, cnt2, eps,
):
    """cat([x2, x1u], C) -> conv1(k2,p1) -> BN1 -> ReLU -> conv2(k2,p1) -> BN2 -> ReLU.

    Inputs live on a per-image zero-padded grid (flat pixel-major, width Wg); the merged
    data sits at grid offset (2, 2) so both convs' receptive fields only ever see data or
    zeros.  Each conv is ONE matmul over every grid pixel; invalid ("garbage") pixels are
    excluded from the BN stats and zeroed where they would feed the next conv.
    """
    shifts = (0, 1, Wg, Wg + 1)            # (di, dj) = (0,0), (0,1), (1,0), (1,1)

    # ---------------- conv1 + bias: one MXU matmul over all grid pixels ----------------
    taps = []
    for s in shifts:
        taps.append(x2g_ref[pl.ds(s, P1), :])   # skip-connection channels
        taps.append(x1g_ref[pl.ds(s, P1), :])   # upsampled channels (channel concat fused)
    patch1 = jnp.concatenate(taps, axis=1)                              # (P1, 4*Cin) bf16
    y1 = jnp.dot(patch1, w1_ref[...],
                 preferred_element_type=jnp.float32) + b1_ref[...]      # (P1, mid) f32

    # ---------------- BN1 (two-pass masked batch stats) + ReLU ----------------
    m1 = vh_ref[pl.ds(0, P1), :]            # (P1, 1): 1.0 on valid conv1 output pixels
    mean1 = jnp.sum(y1 * m1, axis=0, keepdims=True) * (1.0 / cnt1)
    d1 = (y1 - mean1) * m1
    var1 = jnp.sum(d1 * d1, axis=0, keepdims=True) * (1.0 / cnt1)
    inv1 = jax.lax.rsqrt(var1 + eps)
    scale1 = g1_ref[...] * inv1
    shift1 = be1_ref[...] - mean1 * scale1
    # mask AFTER BN+ReLU so the out-of-image region of h stays exactly zero
    # (it is conv2's zero padding).
    h = jnp.maximum(y1 * scale1 + shift1, 0.0) * m1
    h_ref[...] = h.astype(jnp.bfloat16)     # single bulk store into the bf16 scratch

    # ---------------- conv2 + bias ----------------
    patch2 = jnp.concatenate(
        [h_ref[pl.ds(s, P2), :] for s in shifts], axis=1)               # (P2, 4*mid) bf16
    y2 = jnp.dot(patch2, w2_ref[...],
                 preferred_element_type=jnp.float32) + b2_ref[...]      # (P2, cout) f32

    # ---------------- BN2 (two-pass masked batch stats) + ReLU ----------------
    m2 = vo_ref[pl.ds(0, P2), :]
    mean2 = jnp.sum(y2 * m2, axis=0, keepdims=True) * (1.0 / cnt2)
    d2 = (y2 - mean2) * m2
    var2 = jnp.sum(d2 * d2, axis=0, keepdims=True) * (1.0 / cnt2)
    inv2 = jax.lax.rsqrt(var2 + eps)
    scale2 = g2_ref[...] * inv2
    shift2 = be2_ref[...] - mean2 * scale2

    out_ref[pl.ds(0, P2), :] = jnp.maximum(y2 * scale2 + shift2, 0.0)
    tail = out_ref.shape[0] - P2
    out_ref[pl.ds(P2, tail), :] = jnp.zeros((tail, out_ref.shape[1]), jnp.float32)


# ------------------------------ pallas_call wrappers ------------------------------

def upsample_matmul(x_flat_bf16, w_bf16, b_f32):
    M = x_flat_bf16.shape[0]
    Nc = w_bf16.shape[1]
    return pl.pallas_call(
        _upsample_matmul_kernel,
        out_shape=jax.ShapeDtypeStruct((M, Nc), jnp.bfloat16),
        in_specs=_vmem_specs(3),
        out_specs=pl.BlockSpec(memory_space=pltpu.MemorySpace.VMEM),
    )(x_flat_bf16, w_bf16, b_f32)


def _conv1_weight_matrix(w1, c2):
    # Row order matches the in-kernel patch lane layout:
    #   for (di, dj) in ((0,0),(0,1),(1,0),(1,1)): [x2 block (c2 rows) | x1u block (cu rows)]
    blocks = []
    for di in (0, 1):
        for dj in (0, 1):
            blocks.append(jnp.transpose(w1[:, :c2, di, dj]))   # (c2, mid)
            blocks.append(jnp.transpose(w1[:, c2:, di, dj]))   # (cu, mid)
    return jnp.concatenate(blocks, axis=0).astype(jnp.bfloat16)


def _conv2_weight_matrix(w2):
    blocks = []
    for di in (0, 1):
        for dj in (0, 1):
            blocks.append(jnp.transpose(w2[:, :, di, dj]))     # (mid, cout)
    return jnp.concatenate(blocks, axis=0).astype(jnp.bfloat16)


def fused_double_conv(x2_nhwc, x1u_nhwc, w1, b1, g1, be1, w2, b2, g2, be2):
    n_img, H, W, c2 = x2_nhwc.shape
    mid, cout = w1.shape[0], w2.shape[0]
    Ho1, Wo1 = H + 1, W + 1
    Ho2, Wo2 = H + 2, W + 2

    # Per-image zero-padded grid: merged data at offset (2, 2).  Big enough that every
    # tap read of a valid output pixel stays inside the image's grid.
    Hg = H + 4
    Wg = _round_up(W + 4, 8)
    Mg = n_img * Hg * Wg
    P1 = Mg - Wg - 1          # grid pixels for which conv1 is evaluated
    P2 = P1 - Wg - 1          # grid pixels for which conv2 is evaluated

    def to_grid(x):
        # TODO(synk): this small zero-pad is the one piece of layout prep done by XLA;
        # at real sizes it fuses with the producer (cast / interleave) and is amortized.
        x = jnp.pad(x.astype(jnp.bfloat16),
                    ((0, 0), (2, Hg - H - 2), (2, Wg - W - 2), (0, 0)))
        return x.reshape(Mg, x.shape[-1])

    x2g = to_grid(x2_nhwc)
    x1g = to_grid(x1u_nhwc)

    # 0/1 masks of valid conv1 / conv2 output pixels on the grid (BN stats + h zeroing).
    vh = jnp.pad(jnp.ones((n_img, Ho1, Wo1, 1), jnp.float32),
                 ((0, 0), (1, Hg - 1 - Ho1), (1, Wg - 1 - Wo1), (0, 0))).reshape(Mg, 1)
    vo = jnp.pad(jnp.ones((n_img, Ho2, Wo2, 1), jnp.float32),
                 ((0, 0), (0, Hg - Ho2), (0, Wg - Wo2), (0, 0))).reshape(Mg, 1)

    kernel = functools.partial(
        _fused_double_conv_kernel, Wg=Wg, P1=P1, P2=P2,
        cnt1=float(n_img * Ho1 * Wo1), cnt2=float(n_img * Ho2 * Wo2), eps=1e-5)

    out_flat = pl.pallas_call(
        kernel,
        out_shape=jax.ShapeDtypeStruct((Mg, cout), jnp.float32),
        in_specs=_vmem_specs(12),
        out_specs=pl.BlockSpec(memory_space=pltpu.MemorySpace.VMEM),
        scratch_shapes=[pltpu.VMEM((P1, mid), jnp.bfloat16)],
        compiler_params=pltpu.CompilerParams(vmem_limit_bytes=32 * 1024 * 1024),
    )(
        x2g, x1g, vh, vo,
        _conv1_weight_matrix(w1, c2),
        b1.reshape(1, -1).astype(jnp.float32),
        g1.reshape(1, -1).astype(jnp.float32),
        be1.reshape(1, -1).astype(jnp.float32),
        _conv2_weight_matrix(w2),
        b2.reshape(1, -1).astype(jnp.float32),
        g2.reshape(1, -1).astype(jnp.float32),
        be2.reshape(1, -1).astype(jnp.float32),
    )
    # back to NHWC: reshape is free metadata, slice drops the grid padding
    return out_flat.reshape(n_img, Hg, Wg, cout)[:, :Ho2, :Wo2, :]


# ------------------------------- forward pass ----------------------------------

def decoder_forward(params, x1_nhwc, x2_nhwc):
    n_img, H1, W1, cin = x1_nhwc.shape
    _, H2, W2, _ = x2_nhwc.shape
    cu = params["up_w"].shape[1]

    # 1) ConvTranspose2d(cin, cin//2, 2, stride=2) as one batched Pallas matmul (bf16 MXU)
    wt = jnp.transpose(params["up_w"], (0, 2, 3, 1)).reshape(cin, 4 * cu).astype(jnp.bfloat16)
    bt = jnp.tile(params["up_b"], 4).reshape(1, 4 * cu).astype(jnp.float32)
    x1_flat = x1_nhwc.astype(jnp.bfloat16).reshape(n_img * H1 * W1, cin)
    y_up = upsample_matmul(x1_flat, wt, bt)                       # (N*H1*W1, 4*cu) bf16

    # TODO(synk): stride-2 pixel interleave still done by XLA (needs strided sublane
    # stores to fold into the fused kernel).
    x1u = y_up.reshape(n_img, H1, W1, 2, 2, cu)
    x1u = jnp.transpose(x1u, (0, 1, 3, 2, 4, 5)).reshape(n_img, 2 * H1, 2 * W1, cu)

    # 2) replicate the reference F.pad call verbatim (diffX pads W, diffY pads H)
    diffX = H2 - x1u.shape[1]     # NCHW dim-2 (H) difference, used on W (as in reference)
    diffY = W2 - x1u.shape[2]     # NCHW dim-3 (W) difference, used on H (as in reference)
    x1u = jnp.pad(
        x1u,
        ((0, 0),
         (diffY // 2, diffY - diffY // 2),
         (diffX // 2, diffX - diffX // 2),
         (0, 0)))
    assert x1u.shape[1] == H2 and x1u.shape[2] == W2

    # 3) + 4) concat + DoubleConvHelper: ONE fused Pallas kernel
    return fused_double_conv(
        x2_nhwc, x1u,
        params["c1_w"], params["c1_b"], params["bn1_g"], params["bn1_b"],
        params["c2_w"], params["c2_b"], params["bn2_g"], params["bn2_b"])


def init_decoder_params(key, in_channels, out_channels):
    c_half = in_channels // 2
    mid = out_channels  # DoubleConvHelper default: mid_channels = out_channels
    keys = jax.random.split(key, 10)

    def rnd(k, shape, scale=0.1):
        return scale * jax.random.normal(k, shape, dtype=jnp.float32)

    return {
        # ConvTranspose2d(in, in//2, 2, stride=2): weight (Cin, Cout, 2, 2)
        "up_w": rnd(keys[0], (in_channels, c_half, 2, 2)),
        "up_b": rnd(keys[1], (c_half,)),
        # Conv2d(in_channels, mid, 2, padding=1): weight (Cout, Cin, 2, 2)
        "c1_w": rnd(keys[2], (mid, in_channels, 2, 2)),
        "c1_b": rnd(keys[3], (mid,)),
        "bn1_g": 1.0 + rnd(keys[4], (mid,)),
        "bn1_b": rnd(keys[5], (mid,)),
        # Conv2d(mid, out_channels, 2, padding=1)
        "c2_w": rnd(keys[6], (out_channels, mid, 2, 2)),
        "c2_b": rnd(keys[7], (out_channels,)),
        "bn2_g": 1.0 + rnd(keys[8], (out_channels,)),
        "bn2_b": rnd(keys[9], (out_channels,)),
    }


# --------------------------- pure-JAX reference ---------------------------------

def reference_forward(params, x1, x2):
    """XLA reference with the same bf16-operand / f32-accumulate convention."""
    bf, f32 = jnp.bfloat16, jnp.float32
    cu = params["up_w"].shape[1]

    up = jnp.einsum("nhwc,coab->nhawbo",
                    x1.astype(bf), params["up_w"].astype(bf),
                    preferred_element_type=f32)
    up = up.reshape(x1.shape[0], 2 * x1.shape[1], 2 * x1.shape[2], cu) + params["up_b"]
    up = up.astype(bf).astype(f32)

    H2, W2 = x2.shape[1], x2.shape[2]
    diffX = H2 - up.shape[1]
    diffY = W2 - up.shape[2]
    up = jnp.pad(
        up,
        ((0, 0),
         (diffY // 2, diffY - diffY // 2),
         (diffX // 2, diffX - diffX // 2),
         (0, 0)))
    merge = jnp.concatenate([x2, up], axis=-1)

    def conv_bn_relu(x, w, b, g, be):
        y = jax.lax.conv_general_dilated(
            x.astype(bf), jnp.transpose(w, (2, 3, 1, 0)).astype(bf),
            window_strides=(1, 1), padding=((1, 1), (1, 1)),
            dimension_numbers=("NHWC", "HWIO", "NHWC"),
            preferred_element_type=f32) + b
        mean = jnp.mean(y, axis=(0, 1, 2))
        var = jnp.mean(jnp.square(y - mean), axis=(0, 1, 2))
        yn = (y - mean) * jax.lax.rsqrt(var + 1e-5) * g + be
        return jnp.maximum(yn, 0.0)

    h = conv_bn_relu(merge, params["c1_w"], params["c1_b"],
                     params["bn1_g"], params["bn1_b"])
    return conv_bn_relu(h, params["c2_w"], params["c2_b"],
                        params["bn2_g"], params["bn2_b"])


# ----------------------------------- main ---------------------------------------

if __name__ == "__main__":
    key = jax.random.PRNGKey(0)
    kp, k1, k2 = jax.random.split(key, 3)

    in_channels, out_channels = 8, 4
    n_img, H1, W1 = 2, 8, 8          # x1 (deep features)      NHWC (2, 8, 8, 8)
    H2, W2 = 16, 16                  # x2 (skip features)      NHWC (2, 16, 16, 4)

    params = init_decoder_params(kp, in_channels, out_channels)
    x1 = jax.random.normal(k1, (n_img, H1, W1, in_channels), dtype=jnp.float32)
    x2 = jax.random.normal(k2, (n_img, H2, W2, in_channels // 2), dtype=jnp.float32)

    fwd = jax.jit(functools.partial(decoder_forward, params))
    out = jax.block_until_ready(fwd(x1, x2))

    # merge (2,16,16,8) -> conv1 (k=2,p=1) -> (2,17,17,4) -> conv2 -> (2,18,18,4)
    assert out.shape == (n_img, H2 + 2, W2 + 2, out_channels), out.shape
    assert bool(jnp.all(jnp.isfinite(out)))
    assert bool(jnp.all(out >= 0.0))  # final ReLU

    # numerical cross-check against the XLA reference (same bf16/f32 convention)
    ref = jax.block_until_ready(jax.jit(functools.partial(reference_forward, params))(x1, x2))
    max_err = float(jnp.max(jnp.abs(out - ref)))
    assert max_err < 5e-2, f"max abs error {max_err}"

    print("KERNEL_OK")
</pallas_src>

<mosaic_0001>
module attributes {stable_mosaic.version = 11 : i64} {
  func.func @_upsample_matmul_kernel(%arg0: memref<128x8xbf16, #tpu.memory_space<vmem>>, %arg1: memref<8x16xbf16, #tpu.memory_space<vmem>>, %arg2: memref<1x16xf32, #tpu.memory_space<vmem>>, %arg3: memref<128x16xbf16, #tpu.memory_space<vmem>>) attributes {dimension_semantics = [], scalar_prefetch = 0 : i64, scratch_operands = 0 : i64, tpu.core_type = #tpu.core_type<tc>} {
    %c0 = arith.constant 0 : index
    %c0_0 = arith.constant 0 : index
    %0 = vector.load %arg0[%c0, %c0_0] : memref<128x8xbf16, #tpu.memory_space<vmem>>, vector<128x8xbf16>
    %c0_1 = arith.constant 0 : index
    %c0_2 = arith.constant 0 : index
    %1 = vector.load %arg1[%c0_1, %c0_2] : memref<8x16xbf16, #tpu.memory_space<vmem>>, vector<8x16xbf16>
    %cst = arith.constant dense<0.000000e+00> : vector<128x16xf32>
    %2 = tpu.matmul %0, %1, %cst {dimension_numbers = #tpu.dot_dimension_numbers<[1], [0], [0], [1], [0, 0, 1, 1], [], []>} : vector<128x8xbf16>, vector<8x16xbf16>, vector<128x16xf32> -> vector<128x16xf32>
    %c0_3 = arith.constant 0 : index
    %c0_4 = arith.constant 0 : index
    %3 = vector.load %arg2[%c0_3, %c0_4] : memref<1x16xf32, #tpu.memory_space<vmem>>, vector<1x16xf32>
    %4 = vector.broadcast %3 : vector<1x16xf32> to vector<128x16xf32>
    %5 = arith.addf %2, %4 : vector<128x16xf32>
    %6 = arith.truncf %5 : vector<128x16xf32> to vector<128x16xbf16>
    %c0_5 = arith.constant 0 : index
    %c0_6 = arith.constant 0 : index
    %7 = vector.load %arg3[%c0_5, %c0_6] : memref<128x16xbf16, #tpu.memory_space<vmem>>, vector<128x16xbf16>
    tpu.vector_store %arg3[%c0_5, %c0_6], %6 {strides = array<i32>} : memref<128x16xbf16, #tpu.memory_space<vmem>>, vector<128x16xbf16>,
    return
  }
}

module attributes {stable_mosaic.version = 11 : i64} {
  func.func @_fused_double_conv_kernel(%arg0: memref<960x4xbf16, #tpu.memory_space<vmem>>, %arg1: memref<960x4xbf16, #tpu.memory_space<vmem>>, %arg2: memref<960x1xf32, #tpu.memory_space<vmem>>, %arg3: memref<960x1xf32, #tpu.memory_space<vmem>>, %arg4: memref<32x4xbf16, #tpu.memory_space<vmem>>, %arg5: memref<1x4xf32, #tpu.memory_space<vmem>>, %arg6: memref<1x4xf32, #tpu.memory_space<vmem>>, %arg7: memref<1x4xf32, #tpu.memory_space<vmem>>, %arg8: memref<16x4xbf16, #tpu.memory_space<vmem>>, %arg9: memref<1x4xf32, #tpu.memory_space<vmem>>, %arg10: memref<1x4xf32, #tpu.memory_space<vmem>>, %arg11: memref<1x4xf32, #tpu.memory_space<vmem>>, %arg12: memref<960x4xf32, #tpu.memory_space<vmem>>, %arg13: memref<935x4xbf16, #tpu.memory_space<vmem>>) attributes {dimension_semantics = [], scalar_prefetch = 0 : i64, scratch_operands = 1 : i64, tpu.core_type = #tpu.core_type<tc>} {
    %c0 = arith.constant 0 : index
    %c0_0 = arith.constant 0 : index
    %0 = vector.load %arg0[%c0, %c0_0] : memref<960x4xbf16, #tpu.memory_space<vmem>>, vector<935x4xbf16>
    %c0_1 = arith.constant 0 : index
    %c0_2 = arith.constant 0 : index
    %1 = vector.load %arg1[%c0_1, %c0_2] : memref<960x4xbf16, #tpu.memory_space<vmem>>, vector<935x4xbf16>
    %c1 = arith.constant 1 : index
    %c0_3 = arith.constant 0 : index
    %2 = vector.load %arg0[%c1, %c0_3] : memref<960x4xbf16, #tpu.memory_space<vmem>>, vector<935x4xbf16>
    %c1_4 = arith.constant 1 : index
    %c0_5 = arith.constant 0 : index
    %3 = vector.load %arg1[%c1_4, %c0_5] : memref<960x4xbf16, #tpu.memory_space<vmem>>, vector<935x4xbf16>
    %c24 = arith.constant 24 : index
    %c0_6 = arith.constant 0 : index
    %4 = vector.load %arg0[%c24, %c0_6] : memref<960x4xbf16, #tpu.memory_space<vmem>>, vector<935x4xbf16>
    %c24_7 = arith.constant 24 : index
    %c0_8 = arith.constant 0 : index
    %5 = vector.load %arg1[%c24_7, %c0_8] : memref<960x4xbf16, #tpu.memory_space<vmem>>, vector<935x4xbf16>
    %c25 = arith.constant 25 : index
    %c0_9 = arith.constant 0 : index
    %6 = vector.load %arg0[%c25, %c0_9] : memref<960x4xbf16, #tpu.memory_space<vmem>>, vector<935x4xbf16>
    %c25_10 = arith.constant 25 : index
    %c0_11 = arith.constant 0 : index
    %7 = vector.load %arg1[%c25_10, %c0_11] : memref<960x4xbf16, #tpu.memory_space<vmem>>, vector<935x4xbf16>
    %8 = tpu.concatenate %0, %1, %2, %3, %4, %5, %6, %7 in 1 : vector<935x4xbf16>, vector<935x4xbf16>, vector<935x4xbf16>, vector<935x4xbf16>, vector<935x4xbf16>, vector<935x4xbf16>, vector<935x4xbf16>, vector<935x4xbf16> -> vector<935x32xbf16>
    %c0_12 = arith.constant 0 : index
    %c0_13 = arith.constant 0 : index
    %9 = vector.load %arg4[%c0_12, %c0_13] : memref<32x4xbf16, #tpu.memory_space<vmem>>, vector<32x4xbf16>
    %cst = arith.constant dense<0.000000e+00> : vector<935x4xf32>
    %10 = tpu.matmul %8, %9, %cst {dimension_numbers = #tpu.dot_dimension_numbers<[1], [0], [0], [1], [0, 0, 1, 1], [], []>} : vector<935x32xbf16>, vector<32x4xbf16>, vector<935x4xf32> -> vector<935x4xf32>
    %c0_14 = arith.constant 0 : index
    %c0_15 = arith.constant 0 : index
    %11 = vector.load %arg5[%c0_14, %c0_15] : memref<1x4xf32, #tpu.memory_space<vmem>>, vector<1x4xf32>
    %12 = vector.broadcast %11 : vector<1x4xf32> to vector<935x4xf32>
    %13 = arith.addf %10, %12 : vector<935x4xf32>
    %c0_16 = arith.constant 0 : index
    %c0_17 = arith.constant 0 : index
    %14 = vector.load %arg2[%c0_16, %c0_17] : memref<960x1xf32, #tpu.memory_space<vmem>>, vector<935x1xf32>
    %15 = vector.broadcast %14 : vector<935x1xf32> to vector<935x4xf32>
    %16 = arith.mulf %13, %15 : vector<935x4xf32>
    %cst_18 = arith.constant dense<0.000000e+00> : vector<4xf32>
    %17 = vector.multi_reduction <add>, %16, %cst_18 [0] : vector<935x4xf32> to vector<4xf32>
    %18 = vector.shape_cast %17 : vector<4xf32> to vector<1x4xf32>
    %cst_19 = arith.constant 0.00173010386 : f32
    %19 = vector.broadcast %cst_19 : f32 to vector<1x4xf32>
    %20 = arith.mulf %18, %19 : vector<1x4xf32>
    %21 = vector.broadcast %20 : vector<1x4xf32> to vector<935x4xf32>
    %22 = arith.subf %13, %21 : vector<935x4xf32>
    %23 = vector.broadcast %14 : vector<935x1xf32> to vector<935x4xf32>
    %24 = arith.mulf %22, %23 : vector<935x4xf32>
    %25 = arith.mulf %24, %24 : vector<935x4xf32>
    %cst_20 = arith.constant dense<0.000000e+00> : vector<4xf32>
    %26 = vector.multi_reduction <add>, %25, %cst_20 [0] : vector<935x4xf32> to vector<4xf32>
    %27 = vector.shape_cast %26 : vector<4xf32> to vector<1x4xf32>
    %cst_21 = arith.constant 0.00173010386 : f32
    %28 = vector.broadcast %cst_21 : f32 to vector<1x4xf32>
    %29 = arith.mulf %27, %28 : vector<1x4xf32>
    %cst_22 = arith.constant 9.99999974E-6 : f32
    %30 = vector.broadcast %cst_22 : f32 to vector<1x4xf32>
    %31 = arith.addf %29, %30 : vector<1x4xf32>
    %32 = math.rsqrt %31 : vector<1x4xf32>
    %c0_23 = arith.constant 0 : index
    %c0_24 = arith.constant 0 : index
    %33 = vector.load %arg6[%c0_23, %c0_24] : memref<1x4xf32, #tpu.memory_space<vmem>>, vector<1x4xf32>
    %34 = arith.mulf %33, %32 : vector<1x4xf32>
    %c0_25 = arith.constant 0 : index
    %c0_26 = arith.constant 0 : index
    %35 = vector.load %arg7[%c0_25, %c0_26] : memref<1x4xf32, #tpu.memory_space<vmem>>, vector<1x4xf32>
    %36 = arith.mulf %20, %34 : vector<1x4xf32>
    %37 = arith.subf %35, %36 : vector<1x4xf32>
    %38 = vector.broadcast %34 : vector<1x4xf32> to vector<935x4xf32>
    %39 = arith.mulf %13, %38 : vector<935x4xf32>
    %40 = vector.broadcast %37 : vector<1x4xf32> to vector<935x4xf32>
    %41 = arith.addf %39, %40 : vector<935x4xf32>
    %cst_27 = arith.constant 0.000000e+00 : f32
    %42 = vector.broadcast %cst_27 : f32 to vector<935x4xf32>
    %43 = arith.maximumf %41, %42 : vector<935x4xf32>
    %44 = vector.broadcast %14 : vector<935x1xf32> to vector<935x4xf32>
    %45 = arith.mulf %43, %44 : vector<935x4xf32>
    %46 = arith.truncf %45 : vector<935x4xf32> to vector<935x4xbf16>
    %c0_28 = arith.constant 0 : index
    %c0_29 = arith.constant 0 : index
    %47 = vector.load %arg13[%c0_28, %c0_29] : memref<935x4xbf16, #tpu.memory_space<vmem>>, vector<935x4xbf16>
    tpu.vector_store %arg13[%c0_28, %c0_29], %46 {strides = array<i32>} : memref<935x4xbf16, #tpu.memory_space<vmem>>, vector<935x4xbf16>,
    %c0_30 = arith.constant 0 : index
    %c0_31 = arith.constant 0 : index
    %48 = vector.load %arg13[%c0_30, %c0_31] : memref<935x4xbf16, #tpu.memory_space<vmem>>, vector<910x4xbf16>
    %c1_32 = arith.constant 1 : index
    %c0_33 = arith.constant 0 : index
    %49 = vector.load %arg13[%c1_32, %c0_33] : memref<935x4xbf16, #tpu.memory_space<vmem>>, vector<910x4xbf16>
    %c24_34 = arith.constant 24 : index
    %c0_35 = arith.constant 0 : index
    %50 = vector.load %arg13[%c24_34, %c0_35] : memref<935x4xbf16, #tpu.memory_space<vmem>>, vector<910x4xbf16>
    %c25_36 = arith.constant 25 : index
    %c0_37 = arith.constant 0 : index
    %51 = vector.load %arg13[%c25_36, %c0_37] : memref<935x4xbf16, #tpu.memory_space<vmem>>, vector<910x4xbf16>
    %52 = tpu.concatenate %48, %49, %50, %51 in 1 : vector<910x4xbf16>, vector<910x4xbf16>, vector<910x4xbf16>, vector<910x4xbf16> -> vector<910x16xbf16>
    %c0_38 = arith.constant 0 : index
    %c0_39 = arith.constant 0 : index
    %53 = vector.load %arg8[%c0_38, %c0_39] : memref<16x4xbf16, #tpu.memory_space<vmem>>, vector<16x4xbf16>
    %cst_40 = arith.constant dense<0.000000e+00> : vector<910x4xf32>
    %54 = tpu.matmul %52, %53, %cst_40 {dimension_numbers = #tpu.dot_dimension_numbers<[1], [0], [0], [1], [0, 0, 1, 1], [], []>} : vector<910x16xbf16>, vector<16x4xbf16>, vector<910x4xf32> -> vector<910x4xf32>
    %c0_41 = arith.constant 0 : index
    %c0_42 = arith.constant 0 : index
    %55 = vector.load %arg9[%c0_41, %c0_42] : memref<1x4xf32, #tpu.memory_space<vmem>>, vector<1x4xf32>
    %56 = vector.broadcast %55 : vector<1x4xf32> to vector<910x4xf32>
    %57 = arith.addf %54, %56 : vector<910x4xf32>
    %c0_43 = arith.constant 0 : index
    %c0_44 = arith.constant 0 : index
    %58 = vector.load %arg3[%c0_43, %c0_44] : memref<960x1xf32, #tpu.memory_space<vmem>>, vector<910x1xf32>
    %59 = vector.broadcast %58 : vector<910x1xf32> to vector<910x4xf32>
    %60 = arith.mulf %57, %59 : vector<910x4xf32>
    %cst_45 = arith.constant dense<0.000000e+00> : vector<4xf32>
    %61 = vector.multi_reduction <add>, %60, %cst_45 [0] : vector<910x4xf32> to vector<4xf32>
    %62 = vector.shape_cast %61 : vector<4xf32> to vector<1x4xf32>
    %cst_46 = arith.constant 0.00154320989 : f32
    %63 = vector.broadcast %cst_46 : f32 to vector<1x4xf32>
    %64 = arith.mulf %62, %63 : vector<1x4xf32>
    %65 = vector.broadcast %64 : vector<1x4xf32> to vector<910x4xf32>
    %66 = arith.subf %57, %65 : vector<910x4xf32>
    %67 = vector.broadcast %58 : vector<910x1xf32> to vector<910x4xf32>
    %68 = arith.mulf %66, %67 : vector<910x4xf32>
    %69 = arith.mulf %68, %68 : vector<910x4xf32>
    %cst_47 = arith.constant dense<0.000000e+00> : vector<4xf32>
    %70 = vector.multi_reduction <add>, %69, %cst_47 [0] : vector<910x4xf32> to vector<4xf32>
    %71 = vector.shape_cast %70 : vector<4xf32> to vector<1x4xf32>
    %cst_48 = arith.constant 0.00154320989 : f32
    %72 = vector.broadcast %cst_48 : f32 to vector<1x4xf32>
    %73 = arith.mulf %71, %72 : vector<1x4xf32>
    %cst_49 = arith.constant 9.99999974E-6 : f32
    %74 = vector.broadcast %cst_49 : f32 to vector<1x4xf32>
    %75 = arith.addf %73, %74 : vector<1x4xf32>
    %76 = math.rsqrt %75 : vector<1x4xf32>
    %c0_50 = arith.constant 0 : index
    %c0_51 = arith.constant 0 : index
    %77 = vector.load %arg10[%c0_50, %c0_51] : memref<1x4xf32, #tpu.memory_space<vmem>>, vector<1x4xf32>
    %78 = arith.mulf %77, %76 : vector<1x4xf32>
    %c0_52 = arith.constant 0 : index
    %c0_53 = arith.constant 0 : index
    %79 = vector.load %arg11[%c0_52, %c0_53] : memref<1x4xf32, #tpu.memory_space<vmem>>, vector<1x4xf32>
    %80 = arith.mulf %64, %78 : vector<1x4xf32>
    %81 = arith.subf %79, %80 : vector<1x4xf32>
    %82 = vector.broadcast %78 : vector<1x4xf32> to vector<910x4xf32>
    %83 = arith.mulf %57, %82 : vector<910x4xf32>
    %84 = vector.broadcast %81 : vector<1x4xf32> to vector<910x4xf32>
    %85 = arith.addf %83, %84 : vector<910x4xf32>
    %cst_54 = arith.constant 0.000000e+00 : f32
    %86 = vector.broadcast %cst_54 : f32 to vector<910x4xf32>
    %87 = arith.maximumf %85, %86 : vector<910x4xf32>
    %c0_55 = arith.constant 0 : index
    %c0_56 = arith.constant 0 : index
    %88 = vector.load %arg12[%c0_55, %c0_56] : memref<960x4xf32, #tpu.memory_space<vmem>>, vector<910x4xf32>
    tpu.vector_store %arg12[%c0_55, %c0_56], %87 {strides = array<i32>} : memref<960x4xf32, #tpu.memory_space<vmem>>, vector<910x4xf32>,
    %cst_57 = arith.constant 0.000000e+00 : f32
    %89 = vector.broadcast %cst_57 : f32 to vector<50x4xf32>
    %c910 = arith.constant 910 : index
    %c0_58 = arith.constant 0 : index
    %90 = vector.load %arg12[%c910, %c0_58] : memref<960x4xf32, #tpu.memory_space<vmem>>, vector<50x4xf32>
    tpu.vector_store %arg12[%c910, %c0_58], %89 {strides = array<i32>} : memref<960x4xf32, #tpu.memory_space<vmem>>, vector<50x4xf32>,
    return
  }
}

</mosaic_0001>

<llo_original>
// kernel: tile.6
$region0: #{tile.6}
  #allocation0 [shape = 's32[1]{0}', space=sflag, size = 0x4, scoped, tag = 'scoped memory for tile.6']
  %s0 = inlined_call_operand.vmem [shape: f32[4], index: 0, kind: input, shape index: {}]
  %s1 = inlined_call_operand.vmem [shape: f32[4,4], index: 1, kind: output, shape index: {}]
  // Predicated region
  $region2: #{tile.6} parent=0 // pred_check
    _
  $region3: #{tile.6} parent=0 // pred_check_branch
    %3 = sbr.rel (0) target = $region5
  $region4: #{tile.6} parent=0 // pred_region
    _
  $region5: #{tile.6} parent=0 // pred_fallthru
    _
  %v4 = vld [vmem:[%s0] ss:$0 sm:$0xff]
  %5 = vst [vmem:[%s1] sm:$0xf] %v4

// kernel: tile.7
$region0: #{tile.7}
  %s0 = inlined_call_operand.vmem [shape: f32[4,4], index: 0, kind: input, shape index: {}]
  %s1 = inlined_call_operand.vmem [shape: f32[1,16], index: 1, kind: output, shape index: {}]
  $region1: #{tile.7} parent=0
    #allocation0 [shape = 'u8[4096]{0}', space=vmem, size = 0x1000, scoped, tag = 'scoped mem for output reshape']
    #allocation1 [shape = 'u8[4096]{0}', space=vmem, size = 0x1000, scoped, tag = 'scoped mem for input reshape']
    %s3 = sshllo.u32 0, 4
    %v4 = vld [vmem:[%s0] sm:%s3]
    %5 = vst [vmem:[#allocation1] sm:%s3] %v4
    %v6 = vld [vmem:[#allocation1] sm:$0x1]
    %vm7 = vcmask 31744
    %8 = vst.msk [vmem:[#allocation0] sm:$0x1] %vm7, %v6
    %s9 = scalar_lea.vmem [#allocation1], 3
    %v10 = vld [vmem:[%s9] sm:$0x1]
    %11 = vrot.lane.b32.xlu0 %v10, 12
    %v12 = vpop.permute.xlu0 %11
    %vm13 = vcmask 130144
    %14 = vst.msk [vmem:[#allocation0] sm:$0x1] %vm13, %v12
    %s15 = scalar_lea.vmem [#allocation1], 2
    %v16 = vld [vmem:[%s15] sm:$0x1]
    %17 = vrot.lane.b32.xlu0 %v16, 8
    %v18 = vpop.permute.xlu0 %17
    %vm19 = vcmask 97344
    %20 = vst.msk [vmem:[#allocation0] sm:$0x1] %vm19, %v18
    %s21 = scalar_lea.vmem [#allocation1], 1
    %v22 = vld [vmem:[%s21] sm:$0x1]
    %23 = vrot.lane.b32.xlu0 %v22, 4
    %v24 = vpop.permute.xlu0 %23
    %vm25 = vcmask 64544
    %26 = vst.msk [vmem:[#allocation0] sm:$0x1] %vm25, %v24
    %s28 = sshllo.u32 0, 1
    %v30 = vld [vmem:[#allocation0] sm:%s28]
    %s31 = sshllo.u32 0, 1
    %32 = vst [vmem:[%s1] sm:%s31] %v30

// kernel: decoder_forward.2
$region0: #{decoder_forward.2}
  #allocation0 [shape = 'u32[]', space=smem, size = 0x4, offset = 0x4, fixed_abs, tag = 'smem constant byte address 0x4 - core index']
  #allocation1 [shape = 'u32[144,128]{1,0:T(1,128)}', space=vmem, size = 0x12000, scoped, tag = 'internal scratch']
  %s0 = inlined_call_operand.vmem [shape: bf16[128,8], index: 0, kind: input, shape index: {}]
  %s1 = inlined_call_operand.vmem [shape: bf16[8,16], index: 1, kind: input, shape index: {}]
  %s2 = inlined_call_operand.vmem [shape: f32[1,16], index: 2, kind: input, shape index: {}]
  %s3 = inlined_call_operand.vmem [shape: bf16[128,16], index: 3, kind: output, shape index: {}]
  %s4 = sld [smem:[#allocation0]]
  $region22: #{decoder_forward.2} parent=0
    _
  %s6 = ssub.s32 1, %s4
  %s7 = scalar_select 0, %s6, %s4
  // Predicated region
  $region2: #{decoder_forward.2} parent=0 // pred_check
    _
  $region3: #{decoder_forward.2} parent=0 // pred_check_branch
    %9 = sbr.rel (0) target = $region5
  $region4: #{decoder_forward.2} parent=0 // pred_region
    _
  $region5: #{decoder_forward.2} parent=0 // pred_fallthru
    _
  // Predicated region
  $region6: #{decoder_forward.2} parent=0 // pred_check
    _
  $region7: #{decoder_forward.2} parent=0 // pred_check_branch
    %11 = sbr.rel (0) target = $region9
  $region8: #{decoder_forward.2} parent=0 // pred_region
    _
  $region9: #{decoder_forward.2} parent=0 // pred_fallthru
    _
  // Predicated region
  $region10: #{decoder_forward.2} parent=0 // pred_check
    _
  $region11: #{decoder_forward.2} parent=0 // pred_check_branch
    %13 = sbr.rel (0) target = $region13
  $region12: #{decoder_forward.2} parent=0 // pred_region
    _
  $region13: #{decoder_forward.2} parent=0 // pred_fallthru
    _
  %v15 = vld [vmem:[%s0] sm:$0xf]
  %v16 = vld [vmem:[%s0 + $0x4] sm:$0xf]
  %v17 = vld [vmem:[%s0 + $0x8] sm:$0xf]
  %v18 = vld [vmem:[%s0 + $0xc] sm:$0xf]
  %v19 = vld [vmem:[%s0 + $0x10] sm:$0xf]
  %v20 = vld [vmem:[%s0 + $0x14] sm:$0xf]
  %v21 = vld [vmem:[%s0 + $0x18] sm:$0xf]
  %v22 = vld [vmem:[%s0 + $0x1c] sm:$0xf]
  %v23 = vld [vmem:[%s0 + $0x20] sm:$0xf]
  %v24 = vld [vmem:[%s0 + $0x24] sm:$0xf]
  %v25 = vld [vmem:[%s0 + $0x28] sm:$0xf]
  %v26 = vld [vmem:[%s0 + $0x2c] sm:$0xf]
  %v27 = vld [vmem:[%s0 + $0x30] sm:$0xf]
  %v28 = vld [vmem:[%s0 + $0x34] sm:$0xf]
  %v29 = vld [vmem:[%s0 + $0x38] sm:$0xf]
  %v30 = vld [vmem:[%s0 + $0x3c] sm:$0xf]
  %v31 = vld [vmem:[%s1] sm:$0xf]
  %v32 = vld [vmem:[%s2] sm:$0x1]
  %v34 = vlaneseq
  %v35 = vshrl.u32 %v34, 7
  %v36 = vsub.s32 0, %v35
  %v37 = vrot.slane %v32, %v36
  %v55 = vunpack.c.l.b16 %v15
  %v56 = vunpack.c.l.b16 %v16
  %v57 = vunpack.c.l.b16 %v17
  %v58 = vunpack.c.l.b16 %v18
  %v59 = vunpack.c.l.b16 %v19
  %v60 = vunpack.c.l.b16 %v20
  %v61 = vunpack.c.l.b16 %v21
  %v62 = vunpack.c.l.b16 %v22
  %v63 = vunpack.c.l.b16 %v23
  %v64 = vunpack.c.l.b16 %v24
  %v65 = vunpack.c.l.b16 %v25
  %v66 = vunpack.c.l.b16 %v26
  %v67 = vunpack.c.l.b16 %v27
  %v68 = vunpack.c.l.b16 %v28
  %v69 = vunpack.c.l.b16 %v29
  %v70 = vunpack.c.l.b16 %v30
  %v71 = vpack.c.b16 %v56, %v55
  %v72 = vpack.c.b16 %v58, %v57
  %v73 = vpack.c.b16 %v60, %v59
  %v74 = vpack.c.b16 %v62, %v61
  %v75 = vpack.c.b16 %v64, %v63
  %v76 = vpack.c.b16 %v66, %v65
  %v77 = vpack.c.b16 %v68, %v67
  %v78 = vpack.c.b16 %v70, %v69
  %vm79 = vcmask 64512
  %v81 = vsel %vm79, %v71, 0
  %v84 = vsel %vm79, %v72, 0
  %v87 = vsel %vm79, %v73, 0
  %v90 = vsel %vm79, %v74, 0
  %v93 = vsel %vm79, %v75, 0
  %v96 = vsel %vm79, %v76, 0
  %v99 = vsel %vm79, %v77, 0
  %v102 = vsel %vm79, %v78, 0
  %vm104 = vcmask 1043456
  %v106 = vsel %vm104, %v31, 0
  %108 = vmatprep.subr.bf16.mxu0 0
  %109 = vmatpush1.bf16.msra.mxu0 %v106
  %110 = vmatprep.subr.bf16.mxu0 0
  %111 = vmatpush1.bf16.msra.mxu0 0
  %112 = vmatprep.subr.bf16.mxu0 0
  %113 = vmatpush1.bf16.msra.mxu0 0
  %114 = vmatprep.subr.bf16.mxu0 0
  %115 = vmatpush1.bf16.msra.mxu0 0
  %116 = vmatprep.subr.bf16.mxu0 0
  %117 = vmatpush1.bf16.msra.mxu0 0
  %118 = vmatprep.subr.bf16.mxu0 0
  %119 = vmatpush1.bf16.msra.mxu0 0
  %120 = vmatprep.subr.bf16.mxu0 0
  %121 = vmatpush1.bf16.msra.mxu0 0
  %122 = vmatprep.subr.bf16.mxu0 0
  %123 = vmatpush1.bf16.msra.mxu0 0
  %124 = vmatprep.subr.bf16.mxu0 0
  %125 = vmatpush1.bf16.msra.mxu0 0
  %126 = vmatprep.subr.bf16.mxu0 0
  %127 = vmatpush1.bf16.msra.mxu0 0
  %128 = vmatprep.subr.bf16.mxu0 0
  %129 = vmatpush1.bf16.msra.mxu0 0
  %130 = vmatprep.subr.bf16.mxu0 0
  %131 = vmatpush1.bf16.msra.mxu0 0
  %132 = vmatprep.subr.bf16.mxu0 0
  %133 = vmatpush1.bf16.msra.mxu0 0
  %134 = vmatprep.subr.bf16.mxu0 0
  %135 = vmatpush1.bf16.msra.mxu0 0
  %136 = vmatprep.subr.bf16.mxu0 0
  %137 = vmatpush1.bf16.msra.mxu0 0
  %138 = vmatprep.subr.bf16.mxu0 0
  %139 = vmatpush1.bf16.msra.mxu0 0
  %140 = vmatprep.mubr.bf16.mxu0 0
  %141 = vmatmul.mubr.bf16.gmra.mrb[0].mxu0 %v81
  %v142 = vpop.f32.mrb[0].mxu0
  %v143 = vadd.f32 %v37, %v142
  %v144 = vpop.f32.mrb[0].mxu0
  %v145 = vpop.f32.mrb[0].mxu0
  %v146 = vadd.f32 %v37, %v145
  %v147 = vpop.f32.mrb[0].mxu0
  %148 = vmatprep.mubr.bf16.mxu0 0
  %149 = vmatmul.mubr.bf16.gmra.mrb[0].mxu0 %v84
  %v150 = vpop.f32.mrb[0].mxu0
  %v151 = vadd.f32 %v37, %v150
  %v152 = vpop.f32.mrb[0].mxu0
  %v153 = vpop.f32.mrb[0].mxu0
  %v154 = vadd.f32 %v37, %v153
  %v155 = vpop.f32.mrb[0].mxu0
  %156 = vmatprep.mubr.bf16.mxu0 0
  %157 = vmatmul.mubr.bf16.gmra.mrb[0].mxu0 %v87
  %v158 = vpop.f32.mrb[0].mxu0
  %v159 = vadd.f32 %v37, %v158
  %v160 = vpop.f32.mrb[0].mxu0
  %v161 = vpop.f32.mrb[0].mxu0
  %v162 = vadd.f32 %v37, %v161
  %v163 = vpop.f32.mrb[0].mxu0
  %164 = vmatprep.mubr.bf16.mxu0 0
  %165 = vmatmul.mubr.bf16.gmra.mrb[0].mxu0 %v90
  %v166 = vpop.f32.mrb[0].mxu0
  %v167 = vadd.f32 %v37, %v166
  %v168 = vpop.f32.mrb[0].mxu0
  %v169 = vpop.f32.mrb[0].mxu0
  %v170 = vadd.f32 %v37, %v169
  %v171 = vpop.f32.mrb[0].mxu0
  %172 = vmatprep.mubr.bf16.mxu0 0
  %173 = vmatmul.mubr.bf16.gmra.mrb[0].mxu0 %v93
  %v174 = vpop.f32.mrb[0].mxu0
  %v175 = vadd.f32 %v37, %v174
  %v176 = vpop.f32.mrb[0].mxu0
  %v177 = vpop.f32.mrb[0].mxu0
  %v178 = vadd.f32 %v37, %v177
  %v179 = vpop.f32.mrb[0].mxu0
  %180 = vmatprep.mubr.bf16.mxu0 0
  %181 = vmatmul.mubr.bf16.gmra.mrb[0].mxu0 %v96
  %v182 = vpop.f32.mrb[0].mxu0
  %v183 = vadd.f32 %v37, %v182
  %v184 = vpop.f32.mrb[0].mxu0
  %v185 = vpop.f32.mrb[0].mxu0
  %v186 = vadd.f32 %v37, %v185
  %v187 = vpop.f32.mrb[0].mxu0
  %188 = vmatprep.mubr.bf16.mxu0 0
  %189 = vmatmul.mubr.bf16.gmra.mrb[0].mxu0 %v99
  %v190 = vpop.f32.mrb[0].mxu0
  %v191 = vadd.f32 %v37, %v190
  %v192 = vpop.f32.mrb[0].mxu0
  %v193 = vpop.f32.mrb[0].mxu0
  %v194 = vadd.f32 %v37, %v193
  %v195 = vpop.f32.mrb[0].mxu0
  %196 = vmatprep.mubr.bf16.mxu0 0
  %197 = vmatmul.mubr.bf16.gmra.mrb[0].mxu0 %v102
  %v198 = vpop.f32.mrb[0].mxu0
  %v199 = vadd.f32 %v37, %v198
  %v200 = vpop.f32.mrb[0].mxu0
  %v201 = vpop.f32.mrb[0].mxu0
  %v202 = vadd.f32 %v37, %v201
  %v203 = vpop.f32.mrb[0].mxu0
  %204 = vdwg.mxu0
  %v205 = vpack.c.bf16 %v146, %v143
  %v206 = vpack.c.bf16 %v154, %v151
  %v207 = vpack.c.bf16 %v162, %v159
  %v208 = vpack.c.bf16 %v170, %v167
  %v209 = vpack.c.bf16 %v178, %v175
  %v210 = vpack.c.bf16 %v186, %v183
  %v211 = vpack.c.bf16 %v194, %v191
  %v212 = vpack.c.bf16 %v202, %v199
  %v221 = vunpack.c.l.b16 %v205
  %v222 = vunpack.c.h.b16 %v205
  %v223 = vunpack.c.l.b16 %v206
  %v224 = vunpack.c.h.b16 %v206
  %v225 = vunpack.c.l.b16 %v207
  %v226 = vunpack.c.h.b16 %v207
  %v227 = vunpack.c.l.b16 %v208
  %v228 = vunpack.c.h.b16 %v208
  %v229 = vunpack.c.l.b16 %v209
  %v230 = vunpack.c.h.b16 %v209
  %v231 = vunpack.c.l.b16 %v210
  %v232 = vunpack.c.h.b16 %v210
  %v233 = vunpack.c.l.b16 %v211
  %v234 = vunpack.c.h.b16 %v211
  %v235 = vunpack.c.l.b16 %v212
  %v236 = vunpack.c.h.b16 %v212
  %v237 = vpack.c.b16 %v221, %v221
  %v238 = vpack.c.b16 %v222, %v222
  %v239 = vpack.c.b16 %v223, %v223
  %v240 = vpack.c.b16 %v224, %v224
  %v241 = vpack.c.b16 %v225, %v225
  %v242 = vpack.c.b16 %v226, %v226
  %v243 = vpack.c.b16 %v227, %v227
  %v244 = vpack.c.b16 %v228, %v228
  %v245 = vpack.c.b16 %v229, %v229
  %v246 = vpack.c.b16 %v230, %v230
  %v247 = vpack.c.b16 %v231, %v231
  %v248 = vpack.c.b16 %v232, %v232
  %v249 = vpack.c.b16 %v233, %v233
  %v250 = vpack.c.b16 %v234, %v234
  %v251 = vpack.c.b16 %v235, %v235
  %v252 = vpack.c.b16 %v236, %v236
  %vm269 = vcmask 125952
  %270 = vst.msk [vmem:[%s3] sm:$0xf] %vm269, %v237
  %271 = vst.msk [vmem:[%s3 + $0x4] sm:$0xf] %vm269, %v238
  %272 = vst.msk [vmem:[%s3 + $0x8] sm:$0xf] %vm269, %v239
  %273 = vst.msk [vmem:[%s3 + $0xc] sm:$0xf] %vm269, %v240
  %274 = vst.msk [vmem:[%s3 + $0x10] sm:$0xf] %vm269, %v241
  %275 = vst.msk [vmem:[%s3 + $0x14] sm:$0xf] %vm269, %v242
  %276 = vst.msk [vmem:[%s3 + $0x18] sm:$0xf] %vm269, %v243
  %277 = vst.msk [vmem:[%s3 + $0x1c] sm:$0xf] %vm269, %v244
  %278 = vst.msk [vmem:[%s3 + $0x20] sm:$0xf] %vm269, %v245
  %279 = vst.msk [vmem:[%s3 + $0x24] sm:$0xf] %vm269, %v246
  %280 = vst.msk [vmem:[%s3 + $0x28] sm:$0xf] %vm269, %v247
  %281 = vst.msk [vmem:[%s3 + $0x2c] sm:$0xf] %vm269, %v248
  %282 = vst.msk [vmem:[%s3 + $0x30] sm:$0xf] %vm269, %v249
  %283 = vst.msk [vmem:[%s3 + $0x34] sm:$0xf] %vm269, %v250
  %284 = vst.msk [vmem:[%s3 + $0x38] sm:$0xf] %vm269, %v251
  %285 = vst.msk [vmem:[%s3 + $0x3c] sm:$0xf] %vm269, %v252
  // Predicated region
  $region14: #{decoder_forward.2} parent=0 // pred_check
    _
  $region15: #{decoder_forward.2} parent=0 // pred_check_branch
    %287 = sbr.rel (0) target = $region17
  $region16: #{decoder_forward.2} parent=0 // pred_region
    _
  $region17: #{decoder_forward.2} parent=0 // pred_fallthru
    _
  // Predicated region
  $region18: #{decoder_forward.2} parent=0 // pred_check
    _
  $region19: #{decoder_forward.2} parent=0 // pred_check_branch
    %289 = sbr.rel (0) target = $region21
  $region20: #{decoder_forward.2} parent=0 // pred_region
    _
  $region21: #{decoder_forward.2} parent=0 // pred_fallthru
    _

// kernel: decoder_forward.3
$region0: #{decoder_forward.3}
  #allocation0 [shape = 'u32[]', space=smem, size = 0x4, offset = 0x4, fixed_abs, tag = 'smem constant byte address 0x4 - core index']
  #allocation1 [shape = 'u32[144,128]{1,0:T(1,128)}', space=vmem, size = 0x12000, scoped, tag = 'internal scratch']
  #allocation2 [shape = 'bf16[935,4]{1,0:T(8,128)(2,1)}', space=vmem, size = 0x3a800, scoped, tag = 'scratch operand']
  %s0 = inlined_call_operand.vmem [shape: bf16[960,4], index: 0, kind: input, shape index: {}]
  %s1 = inlined_call_operand.vmem [shape: bf16[960,4], index: 1, kind: input, shape index: {}]
  %s2 = inlined_call_operand.vmem [shape: f32[960,1], index: 2, kind: input, shape index: {}]
  %s3 = inlined_call_operand.vmem [shape: f32[960,1], index: 3, kind: input, shape index: {}]
  %s4 = inlined_call_operand.vmem [shape: bf16[32,4], index: 4, kind: input, shape index: {}]
  %s5 = inlined_call_operand.vmem [shape: f32[1,4], index: 5, kind: input, shape index: {}]
  %s6 = inlined_call_operand.vmem [shape: f32[1,4], index: 6, kind: input, shape index: {}]
  %s7 = inlined_call_operand.vmem [shape: f32[1,4], index: 7, kind: input, shape index: {}]
  %s8 = inlined_call_operand.vmem [shape: bf16[16,4], index: 8, kind: input, shape index: {}]
  %s9 = inlined_call_operand.vmem [shape: f32[1,4], index: 9, kind: input, shape index: {}]
  %s10 = inlined_call_operand.vmem [shape: f32[1,4], index: 10, kind: input, shape index: {}]
  %s11 = inlined_call_operand.vmem [shape: f32[1,4], index: 11, kind: input, shape index: {}]
  %s12 = inlined_call_operand.vmem [shape: f32[960,4], index: 12, kind: output, shape index: {}]
  %s13 = sld [smem:[#allocation0]]
  $region58: #{decoder_forward.3} parent=0
    _
  %s15 = ssub.s32 1, %s13
  %s16 = scalar_select 0, %s15, %s13
  // Predicated region
  $region2: #{decoder_forward.3} parent=0 // pred_check
    _
  $region3: #{decoder_forward.3} parent=0 // pred_check_branch
    %18 = sbr.rel (0) target = $region5
  $region4: #{decoder_forward.3} parent=0 // pred_region
    _
  $region5: #{decoder_forward.3} parent=0 // pred_fallthru
    _
  // Predicated region
  $region6: #{decoder_forward.3} parent=0 // pred_check
    _
  $region7: #{decoder_forward.3} parent=0 // pred_check_branch
    %20 = sbr.rel (0) target = $region9
  $region8: #{decoder_forward.3} parent=0 // pred_region
    _
  $region9: #{decoder_forward.3} parent=0 // pred_fallthru
    _
  // Predicated region
  $region10: #{decoder_forward.3} parent=0 // pred_check
    _
  $region11: #{decoder_forward.3} parent=0 // pred_check_branch
    %22 = sbr.rel (0) target = $region13
  $region12: #{decoder_forward.3} parent=0 // pred_region
    _
  $region13: #{decoder_forward.3} parent=0 // pred_fallthru
    _
  // Predicated region
  $region14: #{decoder_forward.3} parent=0 // pred_check
    _
  $region15: #{decoder_forward.3} parent=0 // pred_check_branch
    %24 = sbr.rel (0) target = $region17
  $region16: #{decoder_forward.3} parent=0 // pred_region
    _
  $region17: #{decoder_forward.3} parent=0 // pred_fallthru
    _
  // Predicated region
  $region18: #{decoder_forward.3} parent=0 // pred_check
    _
  $region19: #{decoder_forward.3} parent=0 // pred_check_branch
    %26 = sbr.rel (0) target = $region21
  $region20: #{decoder_forward.3} parent=0 // pred_region
    _
  $region21: #{decoder_forward.3} parent=0 // pred_fallthru
    _
  // Predicated region
  $region22: #{decoder_forward.3} parent=0 // pred_check
    _
  $region23: #{decoder_forward.3} parent=0 // pred_check_branch
    %28 = sbr.rel (0) target = $region25
  $region24: #{decoder_forward.3} parent=0 // pred_region
    _
  $region25: #{decoder_forward.3} parent=0 // pred_fallthru
    _
  // Predicated region
  $region26: #{decoder_forward.3} parent=0 // pred_check
    _
  $region27: #{decoder_forward.3} parent=0 // pred_check_branch
    %30 = sbr.rel (0) target = $region29
  $region28: #{decoder_forward.3} parent=0 // pred_region
    _
  $region29: #{decoder_forward.3} parent=0 // pred_fallthru
    _
  // Predicated region
  $region30: #{decoder_forward.3} parent=0 // pred_check
    _
  $region31: #{decoder_forward.3} parent=0 // pred_check_branch
    %32 = sbr.rel (0) target = $region33
  $region32: #{decoder_forward.3} parent=0 // pred_region
    _
  $region33: #{decoder_forward.3} parent=0 // pred_fallthru
    _
  // Predicated region
  $region34: #{decoder_forward.3} parent=0 // pred_check
    _
  $region35: #{decoder_forward.3} parent=0 // pred_check_branch
    %34 = sbr.rel (0) target = $region37
  $region36: #{decoder_forward.3} parent=0 // pred_region
    _
  $region37: #{decoder_forward.3} parent=0 // pred_fallthru
    _
  // Predicated region
  $region38: #{decoder_forward.3} parent=0 // pred_check
    _
  $region39: #{decoder_forward.3} parent=0 // pred_check_branch
    %36 = sbr.rel (0) target = $region41
  $region40: #{decoder_forward.3} parent=0 // pred_region
    _
  $region41: #{decoder_forward.3} parent=0 // pred_fallthru
    _
  // Predicated region
  $region42: #{decoder_forward.3} parent=0 // pred_check
    _
  $region43: #{decoder_forward.3} parent=0 // pred_check_branch
    %38 = sbr.rel (0) target = $region45
  $region44: #{decoder_forward.3} parent=0 // pred_region
    _
  $region45: #{decoder_forward.3} parent=0 // pred_fallthru
    _
  // Predicated region
  $region46: #{decoder_forward.3} parent=0 // pred_check
    _
  $region47: #{decoder_forward.3} parent=0 // pred_check_branch
    %40 = sbr.rel (0) target = $region49
  $region48: #{decoder_forward.3} parent=0 // pred_region
    _
  $region49: #{decoder_forward.3} parent=0 // pred_fallthru
    _
  %v42 = vld [vmem:[%s0] sm:$0xf]
  %v43 = vld [vmem:[%s0 + $0x4] sm:$0xf]
  %v44 = vld [vmem:[%s0 + $0x8] sm:$0xf]
  %v45 = vld [vmem:[%s0 + $0xc] sm:$0xf]
  %v46 = vld [vmem:[%s0 + $0x10] sm:$0xf]
  %v47 = vld [vmem:[%s0 + $0x14] sm:$0xf]
  %v48 = vld [vmem:[%s0 + $0x18] sm:$0xf]
  %v49 = vld [vmem:[%s0 + $0x1c] sm:$0xf]
  %v50 = vld [vmem:[%s0 + $0x20] sm:$0xf]
  %v51 = vld [vmem:[%s0 + $0x24] sm:$0xf]
  %v52 = vld [vmem:[%s0 + $0x28] sm:$0xf]
  %v53 = vld [vmem:[%s0 + $0x2c] sm:$0xf]
  %v54 = vld [vmem:[%s0 + $0x30] sm:$0xf]
  %v55 = vld [vmem:[%s0 + $0x34] sm:$0xf]
  %v56 = vld [vmem:[%s0 + $0x38] sm:$0xf]
  %v57 = vld [vmem:[%s0 + $0x3c] sm:$0xf]
  %v58 = vld [vmem:[%s0 + $0x40] sm:$0xf]
  %v59 = vld [vmem:[%s0 + $0x44] sm:$0xf]
  %v60 = vld [vmem:[%s0 + $0x48] sm:$0xf]
  %v61 = vld [vmem:[%s0 + $0x4c] sm:$0xf]
  %v62 = vld [vmem:[%s0 + $0x50] sm:$0xf]
  %v63 = vld [vmem:[%s0 + $0x54] sm:$0xf]
  %v64 = vld [vmem:[%s0 + $0x58] sm:$0xf]
  %v65 = vld [vmem:[%s0 + $0x5c] sm:$0xf]
  %v66 = vld [vmem:[%s0 + $0x60] sm:$0xf]
  %v67 = vld [vmem:[%s0 + $0x64] sm:$0xf]
  %v68 = vld [vmem:[%s0 + $0x68] sm:$0xf]
  %v69 = vld [vmem:[%s0 + $0x6c] sm:$0xf]
  %v70 = vld [vmem:[%s0 + $0x70] sm:$0xf]
  %v71 = vld [vmem:[%s0 + $0x74] sm:$0xf]
  %v72 = vld [vmem:[%s0 + $0x78] sm:$0xf]
  %v73 = vld [vmem:[%s0 + $0x7c] sm:$0xf]
  %v74 = vld [vmem:[%s0 + $0x80] sm:$0xf]
  %v75 = vld [vmem:[%s0 + $0x84] sm:$0xf]
  %v76 = vld [vmem:[%s0 + $0x88] sm:$0xf]
  %v77 = vld [vmem:[%s0 + $0x8c] sm:$0xf]
  %v78 = vld [vmem:[%s0 + $0x90] sm:$0xf]
  %v79 = vld [vmem:[%s0 + $0x94] sm:$0xf]
  %v80 = vld [vmem:[%s0 + $0x98] sm:$0xf]
  %v81 = vld [vmem:[%s0 + $0x9c] sm:$0xf]
  %v82 = vld [vmem:[%s0 + $0xa0] sm:$0xf]
  %v83 = vld [vmem:[%s0 + $0xa4] sm:$0xf]
  %v84 = vld [vmem:[%s0 + $0xa8] sm:$0xf]
  %v85 = vld [vmem:[%s0 + $0xac] sm:$0xf]
  %v86 = vld [vmem:[%s0 + $0xb0] sm:$0xf]
  %v87 = vld [vmem:[%s0 + $0xb4] sm:$0xf]
  %v88 = vld [vmem:[%s0 + $0xb8] sm:$0xf]
  %v89 = vld [vmem:[%s0 + $0xbc] sm:$0xf]
  %v90 = vld [vmem:[%s0 + $0xc0] sm:$0xf]
  %v91 = vld [vmem:[%s0 + $0xc4] sm:$0xf]
  %v92 = vld [vmem:[%s0 + $0xc8] sm:$0xf]
  %v93 = vld [vmem:[%s0 + $0xcc] sm:$0xf]
  %v94 = vld [vmem:[%s0 + $0xd0] sm:$0xf]
  %v95 = vld [vmem:[%s0 + $0xd4] sm:$0xf]
  %v96 = vld [vmem:[%s0 + $0xd8] sm:$0xf]
  %v97 = vld [vmem:[%s0 + $0xdc] sm:$0xf]
  %v98 = vld [vmem:[%s0 + $0xe0] sm:$0xf]
  %v99 = vld [vmem:[%s0 + $0xe4] sm:$0xf]
  %v100 = vld [vmem:[%s0 + $0xe8] sm:$0xf]
  %v101 = vld [vmem:[%s0 + $0xec] sm:$0xf]
  %v102 = vld [vmem:[%s0 + $0xf0] sm:$0xf]
  %v103 = vld [vmem:[%s0 + $0xf4] sm:$0xf]
  %v104 = vld [vmem:[%s0 + $0xf8] sm:$0xf]
  %v105 = vld [vmem:[%s0 + $0xfc] sm:$0xf]
  %v106 = vld [vmem:[%s0 + $0x100] sm:$0xf]
  %v107 = vld [vmem:[%s0 + $0x104] sm:$0xf]
  %v108 = vld [vmem:[%s0 + $0x108] sm:$0xf]
  %v109 = vld [vmem:[%s0 + $0x10c] sm:$0xf]
  %v110 = vld [vmem:[%s0 + $0x110] sm:$0xf]
  %v111 = vld [vmem:[%s0 + $0x114] sm:$0xf]
  %v112 = vld [vmem:[%s0 + $0x118] sm:$0xf]
  %v113 = vld [vmem:[%s0 + $0x11c] sm:$0xf]
  %v114 = vld [vmem:[%s0 + $0x120] sm:$0xf]
  %v115 = vld [vmem:[%s0 + $0x124] sm:$0xf]
  %v116 = vld [vmem:[%s0 + $0x128] sm:$0xf]
  %v117 = vld [vmem:[%s0 + $0x12c] sm:$0xf]
  %v118 = vld [vmem:[%s0 + $0x130] sm:$0xf]
  %v119 = vld [vmem:[%s0 + $0x134] sm:$0xf]
  %v120 = vld [vmem:[%s0 + $0x138] sm:$0xf]
  %v121 = vld [vmem:[%s0 + $0x13c] sm:$0xf]
  %v122 = vld [vmem:[%s0 + $0x140] sm:$0xf]
  %v123 = vld [vmem:[%s0 + $0x144] sm:$0xf]
  %v124 = vld [vmem:[%s0 + $0x148] sm:$0xf]
  %v125 = vld [vmem:[%s0 + $0x14c] sm:$0xf]
  %v126 = vld [vmem:[%s0 + $0x150] sm:$0xf]
  %v127 = vld [vmem:[%s0 + $0x154] sm:$0xf]
  %v128 = vld [vmem:[%s0 + $0x158] sm:$0xf]
  %v129 = vld [vmem:[%s0 + $0x15c] sm:$0xf]
  %v130 = vld [vmem:[%s0 + $0x160] sm:$0xf]
  %v131 = vld [vmem:[%s0 + $0x164] sm:$0xf]
  %v132 = vld [vmem:[%s0 + $0x168] sm:$0xf]
  %v133 = vld [vmem:[%s0 + $0x16c] sm:$0xf]
  %v134 = vld [vmem:[%s0 + $0x170] sm:$0xf]
  %v135 = vld [vmem:[%s0 + $0x174] sm:$0xf]
  %v136 = vld [vmem:[%s0 + $0x178] sm:$0xf]
  %v137 = vld [vmem:[%s0 + $0x17c] sm:$0xf]
  %v138 = vld [vmem:[%s0 + $0x180] sm:$0xf]
  %v139 = vld [vmem:[%s0 + $0x184] sm:$0xf]
  %v140 = vld [vmem:[%s0 + $0x188] sm:$0xf]
  %v141 = vld [vmem:[%s0 + $0x18c] sm:$0xf]
  %v142 = vld [vmem:[%s0 + $0x190] sm:$0xf]
  %v143 = vld [vmem:[%s0 + $0x194] sm:$0xf]
  %v144 = vld [vmem:[%s0 + $0x198] sm:$0xf]
  %v145 = vld [vmem:[%s0 + $0x19c] sm:$0xf]
  %v146 = vld [vmem:[%s0 + $0x1a0] sm:$0xf]
  %v147 = vld [vmem:[%s0 + $0x1a4] sm:$0xf]
  %v148 = vld [vmem:[%s0 + $0x1a8] sm:$0xf]
  %v149 = vld [vmem:[%s0 + $0x1ac] sm:$0xf]
  %v150 = vld [vmem:[%s0 + $0x1b0] sm:$0xf]
  %v151 = vld [vmem:[%s0 + $0x1b4] sm:$0xf]
  %v152 = vld [vmem:[%s0 + $0x1b8] sm:$0xf]
  %v153 = vld [vmem:[%s0 + $0x1bc] sm:$0xf]
  %v154 = vld [vmem:[%s0 + $0x1c0] sm:$0xf]
  %v155 = vld [vmem:[%s0 + $0x1c4] sm:$0xf]
  %v156 = vld [vmem:[%s0 + $0x1c8] sm:$0xf]
  %v157 = vld [vmem:[%s0 + $0x1cc] sm:$0xf]
  %v158 = vld [vmem:[%s0 + $0x1d0] sm:$0xf]
  %v159 = vld [vmem:[%s1] sm:$0xf]
  %v160 = vld [vmem:[%s1 + $0x4] sm:$0xf]
  %v161 = vld [vmem:[%s1 + $0x8] sm:$0xf]
  %v162 = vld [vmem:[%s1 + $0xc] sm:$0xf]
  %v163 = vld [vmem:[%s1 + $0x10] sm:$0xf]
  %v164 = vld [vmem:[%s1 + $0x14] sm:$0xf]
  %v165 = vld [vmem:[%s1 + $0x18] sm:$0xf]
  %v166 = vld [vmem:[%s1 + $0x1c] sm:$0xf]
  %v167 = vld [vmem:[%s1 + $0x20] sm:$0xf]
  %v168 = vld [vmem:[%s1 + $0x24] sm:$0xf]
  %v169 = vld [vmem:[%s1 + $0x28] sm:$0xf]
  %v170 = vld [vmem:[%s1 + $0x2c] sm:$0xf]
  %v171 = vld [vmem:[%s1 + $0x30] sm:$0xf]
  %v172 = vld [vmem:[%s1 + $0x34] sm:$0xf]
  %v173 = vld [vmem:[%s1 + $0x38] sm:$0xf]
  %v174 = vld [vmem:[%s1 + $0x3c] sm:$0xf]
  %v175 = vld [vmem:[%s1 + $0x40] sm:$0xf]
  %v176 = vld [vmem:[%s1 + $0x44] sm:$0xf]
  %v177 = vld [vmem:[%s1 + $0x48] sm:$0xf]
  %v178 = vld [vmem:[%s1 + $0x4c] sm:$0xf]
  %v179 = vld [vmem:[%s1 + $0x50] sm:$0xf]
  %v180 = vld [vmem:[%s1 + $0x54] sm:$0xf]
  %v181 = vld [vmem:[%s1 + $0x58] sm:$0xf]
  %v182 = vld [vmem:[%s1 + $0x5c] sm:$0xf]
  %v183 = vld [vmem:[%s1 + $0x60] sm:$0xf]
  %v184 = vld [vmem:[%s1 + $0x64] sm:$0xf]
  %v185 = vld [vmem:[%s1 + $0x68] sm:$0xf]
  %v186 = vld [vmem:[%s1 + $0x6c] sm:$0xf]
  %v187 = vld [vmem:[%s1 + $0x70] sm:$0xf]
  %v188 = vld [vmem:[%s1 + $0x74] sm:$0xf]
  %v189 = vld [vmem:[%s1 + $0x78] sm:$0xf]
  %v190 = vld [vmem:[%s1 + $0x7c] sm:$0xf]
  %v191 = vld [vmem:[%s1 + $0x80] sm:$0xf]
  %v192 = vld [vmem:[%s1 + $0x84] sm:$0xf]
  %v193 = vld [vmem:[%s1 + $0x88] sm:$0xf]
  %v194 = vld [vmem:[%s1 + $0x8c] sm:$0xf]
  %v195 = vld [vmem:[%s1 + $0x90] sm:$0xf]
  %v196 = vld [vmem:[%s1 + $0x94] sm:$0xf]
  %v197 = vld [vmem:[%s1 + $0x98] sm:$0xf]
  %v198 = vld [vmem:[%s1 + $0x9c] sm:$0xf]
  %v199 = vld [vmem:[%s1 + $0xa0] sm:$0xf]
  %v200 = vld [vmem:[%s1 + $0xa4] sm:$0xf]
  %v201 = vld [vmem:[%s1 + $0xa8] sm:$0xf]
  %v202 = vld [vmem:[%s1 + $0xac] sm:$0xf]
  %v203 = vld [vmem:[%s1 + $0xb0] sm:$0xf]
  %v204 = vld [vmem:[%s1 + $0xb4] sm:$0xf]
  %v205 = vld [vmem:[%s1 + $0xb8] sm:$0xf]
  %v206 = vld [vmem:[%s1 + $0xbc] sm:$0xf]
  %v207 = vld [vmem:[%s1 + $0xc0] sm:$0xf]
  %v208 = vld [vmem:[%s1 + $0xc4] sm:$0xf]
  %v209 = vld [vmem:[%s1 + $0xc8] sm:$0xf]
  %v210 = vld [vmem:[%s1 + $0xcc] sm:$0xf]
  %v211 = vld [vmem:[%s1 + $0xd0] sm:$0xf]
  %v212 = vld [vmem:[%s1 + $0xd4] sm:$0xf]
  %v213 = vld [vmem:[%s1 + $0xd8] sm:$0xf]
  %v214 = vld [vmem:[%s1 + $0xdc] sm:$0xf]
  %v215 = vld [vmem:[%s1 + $0xe0] sm:$0xf]
  %v216 = vld [vmem:[%s1 + $0xe4] sm:$0xf]
  %v217 = vld [vmem:[%s1 + $0xe8] sm:$0xf]
  %v218 = vld [vmem:[%s1 + $0xec] sm:$0xf]
  %v219 = vld [vmem:[%s1 + $0xf0] sm:$0xf]
  %v220 = vld [vmem:[%s1 + $0xf4] sm:$0xf]
  %v221 = vld [vmem:[%s1 + $0xf8] sm:$0xf]
  %v222 = vld [vmem:[%s1 + $0xfc] sm:$0xf]
  %v223 = vld [vmem:[%s1 + $0x100] sm:$0xf]
  %v224 = vld [vmem:[%s1 + $0x104] sm:$0xf]
  %v225 = vld [vmem:[%s1 + $0x108] sm:$0xf]
  %v226 = vld [vmem:[%s1 + $0x10c] sm:$0xf]
  %v227 = vld [vmem:[%s1 + $0x110] sm:$0xf]
  %v228 = vld [vmem:[%s1 + $0x114] sm:$0xf]
  %v229 = vld [vmem:[%s1 + $0x118] sm:$0xf]
  %v230 = vld [vmem:[%s1 + $0x11c] sm:$0xf]
  %v231 = vld [vmem:[%s1 + $0x120] sm:$0xf]
  %v232 = vld [vmem:[%s1 + $0x124] sm:$0xf]
  %v233 = vld [vmem:[%s1 + $0x128] sm:$0xf]
  %v234 = vld [vmem:[%s1 + $0x12c] sm:$0xf]
  %v235 = vld [vmem:[%s1 + $0x130] sm:$0xf]
  %v236 = vld [vmem:[%s1 + $0x134] sm:$0xf]
  %v237 = vld [vmem:[%s1 + $0x138] sm:$0xf]
  %v238 = vld [vmem:[%s1 + $0x13c] sm:$0xf]
  %v239 = vld [vmem:[%s1 + $0x140] sm:$0xf]
  %v240 = vld [vmem:[%s1 + $0x144] sm:$0xf]
  %v241 = vld [vmem:[%s1 + $0x148] sm:$0xf]
  %v242 = vld [vmem:[%s1 + $0x14c] sm:$0xf]
  %v243 = vld [vmem:[%s1 + $0x150] sm:$0xf]
  %v244 = vld [vmem:[%s1 + $0x154] sm:$0xf]
  %v245 = vld [vmem:[%s1 + $0x158] sm:$0xf]
  %v246 = vld [vmem:[%s1 + $0x15c] sm:$0xf]
  %v247 = vld [vmem:[%s1 + $0x160] sm:$0xf]
  %v248 = vld [vmem:[%s1 + $0x164] sm:$0xf]
  %v249 = vld [vmem:[%s1 + $0x168] sm:$0xf]
  %v250 = vld [vmem:[%s1 + $0x16c] sm:$0xf]
  %v251 = vld [vmem:[%s1 + $0x170] sm:$0xf]
  %v252 = vld [vmem:[%s1 + $0x174] sm:$0xf]
  %v253 = vld [vmem:[%s1 + $0x178] sm:$0xf]
  %v254 = vld [vmem:[%s1 + $0x17c] sm:$0xf]
  %v255 = vld [vmem:[%s1 + $0x180] sm:$0xf]
  %v256 = vld [vmem:[%s1 + $0x184] sm:$0xf]
  %v257 = vld [vmem:[%s1 + $0x188] sm:$0xf]
  %v258 = vld [vmem:[%s1 + $0x18c] sm:$0xf]
  %v259 = vld [vmem:[%s1 + $0x190] sm:$0xf]
  %v260 = vld [vmem:[%s1 + $0x194] sm:$0xf]
  %v261 = vld [vmem:[%s1 + $0x198] sm:$0xf]
  %v262 = vld [vmem:[%s1 + $0x19c] sm:$0xf]
  %v263 = vld [vmem:[%s1 + $0x1a0] sm:$0xf]
  %v264 = vld [vmem:[%s1 + $0x1a4] sm:$0xf]
  %v265 = vld [vmem:[%s1 + $0x1a8] sm:$0xf]
  %v266 = vld [vmem:[%s1 + $0x1ac] sm:$0xf]
  %v267 = vld [vmem:[%s1 + $0x1b0] sm:$0xf]
  %v268 = vld [vmem:[%s1 + $0x1b4] sm:$0xf]
  %v269 = vld [vmem:[%s1 + $0x1b8] sm:$0xf]
  %v270 = vld [vmem:[%s1 + $0x1bc] sm:$0xf]
  %v271 = vld [vmem:[%s1 + $0x1c0] sm:$0xf]
  %v272 = vld [vmem:[%s1 + $0x1c4] sm:$0xf]
  %v273 = vld [vmem:[%s1 + $0x1c8] sm:$0xf]
  %v274 = vld [vmem:[%s1 + $0x1cc] sm:$0xf]
  %v275 = vld [vmem:[%s1 + $0x1d0] sm:$0xf]
  %v276 = vld [vmem:[%s0 + $0x1d4] sm:$0xf]
  %v277 = vld [vmem:[%s0 + $0x1d8] sm:$0xf]
  %v278 = vld [vmem:[%s0 + $0x1dc] sm:$0xf]
  %v279 = vld [vmem:[%s1 + $0x1d4] sm:$0xf]
  %v280 = vld [vmem:[%s1 + $0x1d8] sm:$0xf]
  %v281 = vld [vmem:[%s1 + $0x1dc] sm:$0xf]
  %v399 = vunpack.c.l.b16 %v42
  %v400 = vunpack.c.l.b16 %v43
  %v401 = vunpack.c.l.b16 %v44
  %v402 = vunpack.c.l.b16 %v45
  %v403 = vunpack.c.l.b16 %v46
  %v404 = vunpack.c.l.b16 %v47
  %v405 = vunpack.c.l.b16 %v48
  %v406 = vunpack.c.l.b16 %v49
  %v407 = vunpack.c.l.b16 %v50
  %v408 = vunpack.c.l.b16 %v51
  %v409 = vunpack.c.l.b16 %v52
  %v410 = vunpack.c.l.b16 %v53
  %v411 = vunpack.c.l.b16 %v54
  %v412 = vunpack.c.l.b16 %v55
  %v413 = vunpack.c.l.b16 %v56
  %v414 = vunpack.c.l.b16 %v57
  %v415 = vunpack.c.l.b16 %v58
  %v416 = vunpack.c.l.b16 %v59
  %v417 = vunpack.c.l.b16 %v60
  %v418 = vunpack.c.l.b16 %v61
  %v419 = vunpack.c.l.b16 %v62
  %v420 = vunpack.c.l.b16 %v63
  %v421 = vunpack.c.l.b16 %v64
  %v422 = vunpack.c.l.b16 %v65
  %v423 = vunpack.c.l.b16 %v66
  %v424 = vunpack.c.l.b16 %v67
  %v425 = vunpack.c.l.b16 %v68
  %v426 = vunpack.c.l.b16 %v69
  %v427 = vunpack.c.l.b16 %v70
  %v428 = vunpack.c.l.b16 %v71
  %v429 = vunpack.c.l.b16 %v72
  %v430 = vunpack.c.l.b16 %v73
  %v431 = vunpack.c.l.b16 %v74
  %v432 = vunpack.c.l.b16 %v75
  %v433 = vunpack.c.l.b16 %v76
  %v434 = vunpack.c.l.b16 %v77
  %v435 = vunpack.c.l.b16 %v78
  %v436 = vunpack.c.l.b16 %v79
  %v437 = vunpack.c.l.b16 %v80
  %v438 = vunpack.c.l.b16 %v81
  %v439 = vunpack.c.l.b16 %v82
  %v440 = vunpack.c.l.b16 %v83
  %v441 = vunpack.c.l.b16 %v84
  %v442 = vunpack.c.l.b16 %v85
  %v443 = vunpack.c.l.b16 %v86
  %v444 = vunpack.c.l.b16 %v87
  %v445 = vunpack.c.l.b16 %v88
  %v446 = vunpack.c.l.b16 %v89
  %v447 = vunpack.c.l.b16 %v90
  %v448 = vunpack.c.l.b16 %v91
  %v449 = vunpack.c.l.b16 %v92
  %v450 = vunpack.c.l.b16 %v93
  %v451 = vunpack.c.l.b16 %v94
  %v452 = vunpack.c.l.b16 %v95
  %v453 = vunpack.c.l.b16 %v96
  %v454 = vunpack.c.l.b16 %v97
  %v455 = vunpack.c.l.b16 %v98
  %v456 = vunpack.c.l.b16 %v99
  %v457 = vunpack.c.l.b16 %v100
  %v458 = vunpack.c.l.b16 %v101
  %v459 = vunpack.c.l.b16 %v102
  %v460 = vunpack.c.l.b16 %v103
  %v461 = vunpack.c.l.b16 %v104
  %v462 = vunpack.c.l.b16 %v105
  %v463 = vunpack.c.l.b16 %v106
  %v464 = vunpack.c.l.b16 %v107
  %v465 = vunpack.c.l.b16 %v108
  %v466 = vunpack.c.l.b16 %v109
  %v467 = vunpack.c.l.b16 %v110
  %v468 = vunpack.c.l.b16 %v111
  %v469 = vunpack.c.l.b16 %v112
  %v470 = vunpack.c.l.b16 %v113
  %v471 = vunpack.c.l.b16 %v114
  %v472 = vunpack.c.l.b16 %v115
  %v473 = vunpack.c.l.b16 %v116
  %v474 = vunpack.c.l.b16 %v117
  %v475 = vunpack.c.l.b16 %v118
  %v476 = vunpack.c.l.b16 %v119
  %v477 = vunpack.c.l.b16 %v120
  %v478 = vunpack.c.l.b16 %v121
  %v479 = vunpack.c.l.b16 %v122
  %v480 = vunpack.c.l.b16 %v123
  %v481 = vunpack.c.l.b16 %v124
  %v482 = vunpack.c.l.b16 %v125
  %v483 = vunpack.c.l.b16 %v126
  %v484 = vunpack.c.l.b16 %v127
  %v485 = vunpack.c.l.b16 %v128
  %v486 = vunpack.c.l.b16 %v129
  %v487 = vunpack.c.l.b16 %v130
  %v488 = vunpack.c.l.b16 %v131
  %v489 = vunpack.c.l.b16 %v132
  %v490 = vunpack.c.l.b16 %v133
  %v491 = vunpack.c.l.b16 %v134
  %v492 = vunpack.c.l.b16 %v135
  %v493 = vunpack.c.l.b16 %v136
  %v494 = vunpack.c.l.b16 %v137
  %v495 = vunpack.c.l.b16 %v138
  %v496 = vunpack.c.l.b16 %v139
  %v497 = vunpack.c.l.b16 %v140
  %v498 = vunpack.c.l.b16 %v141
  %v499 = vunpack.c.l.b16 %v142
  %v500 = vunpack.c.l.b16 %v143
  %v501 = vunpack.c.l.b16 %v144
  %v502 = vunpack.c.l.b16 %v145
  %v503 = vunpack.c.l.b16 %v146
  %v504 = vunpack.c.l.b16 %v147
  %v505 = vunpack.c.l.b16 %v148
  %v506 = vunpack.c.l.b16 %v149
  %v507 = vunpack.c.l.b16 %v150
  %v508 = vunpack.c.l.b16 %v151
  %v509 = vunpack.c.l.b16 %v152
  %v510 = vunpack.c.l.b16 %v153
  %v511 = vunpack.c.l.b16 %v154
  %v512 = vunpack.c.l.b16 %v155
  %v513 = vunpack.c.l.b16 %v156
  %v514 = vunpack.c.l.b16 %v157
  %v515 = vunpack.c.l.b16 %v158
  %v516 = vpack.c.b16 %v400, %v399
  %v517 = vpack.c.b16 %v402, %v401
  %v518 = vpack.c.b16 %v404, %v403
  %v519 = vpack.c.b16 %v406, %v405
  %v520 = vpack.c.b16 %v408, %v407
  %v521 = vpack.c.b16 %v410, %v409
  %v522 = vpack.c.b16 %v412, %v411
  %v523 = vpack.c.b16 %v414, %v413
  %v524 = vpack.c.b16 %v416, %v415
  %v525 = vpack.c.b16 %v418, %v417
  %v526 = vpack.c.b16 %v420, %v419
  %v527 = vpack.c.b16 %v422, %v421
  %v528 = vpack.c.b16 %v424, %v423
  %v529 = vpack.c.b16 %v426, %v425
  %v530 = vpack.c.b16 %v428, %v427
  %v531 = vpack.c.b16 %v430, %v429
  %v532 = vpack.c.b16 %v432, %v431
  %v533 = vpack.c.b16 %v434, %v433
  %v534 = vpack.c.b16 %v436, %v435
  %v535 = vpack.c.b16 %v438, %v437
  %v536 = vpack.c.b16 %v440, %v439
  %v537 = vpack.c.b16 %v442, %v441
  %v538 = vpack.c.b16 %v444, %v443
  %v539 = vpack.c.b16 %v446, %v445
  %v540 = vpack.c.b16 %v448, %v447
  %v541 = vpack.c.b16 %v450, %v449
  %v542 = vpack.c.b16 %v452, %v451
  %v543 = vpack.c.b16 %v454, %v453
  %v544 = vpack.c.b16 %v456, %v455
  %v545 = vpack.c.b16 %v458, %v457
  %v546 = vpack.c.b16 %v460, %v459
  %v547 = vpack.c.b16 %v462, %v461
  %v548 = vpack.c.b16 %v464, %v463
  %v549 = vpack.c.b16 %v466, %v465
  %v550 = vpack.c.b16 %v468, %v467
  %v551 = vpack.c.b16 %v470, %v469
  %v552 = vpack.c.b16 %v472, %v471
  %v553 = vpack.c.b16 %v474, %v473
  %v554 = vpack.c.b16 %v476, %v475
  %v555 = vpack.c.b16 %v478, %v477
  %v556 = vpack.c.b16 %v480, %v479
  %v557 = vpack.c.b16 %v482, %v481
  %v558 = vpack.c.b16 %v484, %v483
  %v559 = vpack.c.b16 %v486, %v485
  %v560 = vpack.c.b16 %v488, %v487
  %v561 = vpack.c.b16 %v490, %v489
  %v562 = vpack.c.b16 %v492, %v491
  %v563 = vpack.c.b16 %v494, %v493
  %v564 = vpack.c.b16 %v496, %v495
  %v565 = vpack.c.b16 %v498, %v497
  %v566 = vpack.c.b16 %v500, %v499
  %v567 = vpack.c.b16 %v502, %v501
  %v568 = vpack.c.b16 %v504, %v503
  %v569 = vpack.c.b16 %v506, %v505
  %v570 = vpack.c.b16 %v508, %v507
  %v571 = vpack.c.b16 %v510, %v509
  %v572 = vpack.c.b16 %v512, %v511
  %v573 = vpack.c.b16 %v514, %v513
  %v574 = vpack.c.b16 %v515, %v515
  %v692 = vunpack.c.l.b16 %v159
  %v693 = vunpack.c.l.b16 %v160
  %v694 = vunpack.c.l.b16 %v161
  %v695 = vunpack.c.l.b16 %v162
  %v696 = vunpack.c.l.b16 %v163
  %v697 = vunpack.c.l.b16 %v164
  %v698 = vunpack.c.l.b16 %v165
  %v699 = vunpack.c.l.b16 %v166
  %v700 = vunpack.c.l.b16 %v167
  %v701 = vunpack.c.l.b16 %v168
  %v702 = vunpack.c.l.b16 %v169
  %v703 = vunpack.c.l.b16 %v170
  %v704 = vunpack.c.l.b16 %v171
  %v705 = vunpack.c.l.b16 %v172
  %v706 = vunpack.c.l.b16 %v173
  %v707 = vunpack.c.l.b16 %v174
  %v708 = vunpack.c.l.b16 %v175
  %v709 = vunpack.c.l.b16 %v176
  %v710 = vunpack.c.l.b16 %v177
  %v711 = vunpack.c.l.b16 %v178
  %v712 = vunpack.c.l.b16 %v179
  %v713 = vunpack.c.l.b16 %v180
  %v714 = vunpack.c.l.b16 %v181
  %v715 = vunpack.c.l.b16 %v182
  %v716 = vunpack.c.l.b16 %v183
  %v717 = vunpack.c.l.b16 %v184
  %v718 = vunpack.c.l.b16 %v185
  %v719 = vunpack.c.l.b16 %v186
  %v720 = vunpack.c.l.b16 %v187
  %v721 = vunpack.c.l.b16 %v188
  %v722 = vunpack.c.l.b16 %v189
  %v723 = vunpack.c.l.b16 %v190
  %v724 = vunpack.c.l.b16 %v191
  %v725 = vunpack.c.l.b16 %v192
  %v726 = vunpack.c.l.b16 %v193
  %v727 = vunpack.c.l.b16 %v194
  %v728 = vunpack.c.l.b16 %v195
  %v729 = vunpack.c.l.b16 %v196
  %v730 = vunpack.c.l.b16 %v197
  %v731 = vunpack.c.l.b16 %v198
  %v732 = vunpack.c.l.b16 %v199
  %v733 = vunpack.c.l.b16 %v200
  %v734 = vunpack.c.l.b16 %v201
  %v735 = vunpack.c.l.b16 %v202
  %v736 = vunpack.c.l.b16 %v203
  %v737 = vunpack.c.l.b16 %v204
  %v738 = vunpack.c.l.b16 %v205
  %v739 = vunpack.c.l.b16 %v206
  %v740 = vunpack.c.l.b16 %v207
  %v741 = vunpack.c.l.b16 %v208
  %v742 = vunpack.c.l.b16 %v209
  %v743 = vunpack.c.l.b16 %v210
  %v744 = vunpack.c.l.b16 %v211
  %v745 = vunpack.c.l.b16 %v212
  %v746 = vunpack.c.l.b16 %v213
  %v747 = vunpack.c.l.b16 %v214
  %v748 = vunpack.c.l.b16 %v215
  %v749 = vunpack.c.l.b16 %v216
  %v750 = vunpack.c.l.b16 %v217
  %v751 = vunpack.c.l.b16 %v218
  %v752 = vunpack.c.l.b16 %v219
  %v753 = vunpack.c.l.b16 %v220
  %v754 = vunpack.c.l.b16 %v221
  %v755 = vunpack.c.l.b16 %v222
  %v756 = vunpack.c.l.b16 %v223
  %v757 = vunpack.c.l.b16 %v224
  %v758 = vunpack.c.l.b16 %v225
  %v759 = vunpack.c.l.b16 %v226
  %v760 = vunpack.c.l.b16 %v227
  %v761 = vunpack.c.l.b16 %v228
  %v762 = vunpack.c.l.b16 %v229
  %v763 = vunpack.c.l.b16 %v230
  %v764 = vunpack.c.l.b16 %v231
  %v765 = vunpack.c.l.b16 %v232
  %v766 = vunpack.c.l.b16 %v233
  %v767 = vunpack.c.l.b16 %v234
  %v768 = vunpack.c.l.b16 %v235
  %v769 = vunpack.c.l.b16 %v236
  %v770 = vunpack.c.l.b16 %v237
  %v771 = vunpack.c.l.b16 %v238
  %v772 = vunpack.c.l.b16 %v239
  %v773 = vunpack.c.l.b16 %v240
  %v774 = vunpack.c.l.b16 %v241
  %v775 = vunpack.c.l.b16 %v242
  %v776 = vunpack.c.l.b16 %v243
  %v777 = vunpack.c.l.b16 %v244
  %v778 = vunpack.c.l.b16 %v245
  %v779 = vunpack.c.l.b16 %v246
  %v780 = vunpack.c.l.b16 %v247
  %v781 = vunpack.c.l.b16 %v248
  %v782 = vunpack.c.l.b16 %v249
  %v783 = vunpack.c.l.b16 %v250
  %v784 = vunpack.c.l.b16 %v251
  %v785 = vunpack.c.l.b16 %v252
  %v786 = vunpack.c.l.b16 %v253
  %v787 = vunpack.c.l.b16 %v254
  %v788 = vunpack.c.l.b16 %v255
  %v789 = vunpack.c.l.b16 %v256
  %v790 = vunpack.c.l.b16 %v257
  %v791 = vunpack.c.l.b16 %v258
  %v792 = vunpack.c.l.b16 %v259
  %v793 = vunpack.c.l.b16 %v260
  %v794 = vunpack.c.l.b16 %v261
  %v795 = vunpack.c.l.b16 %v262
  %v796 = vunpack.c.l.b16 %v263
  %v797 = vunpack.c.l.b16 %v264
  %v798 = vunpack.c.l.b16 %v265
  %v799 = vunpack.c.l.b16 %v266
  %v800 = vunpack.c.l.b16 %v267
  %v801 = vunpack.c.l.b16 %v268
  %v802 = vunpack.c.l.b16 %v269
  %v803 = vunpack.c.l.b16 %v270
  %v804 = vunpack.c.l.b16 %v271
  %v805 = vunpack.c.l.b16 %v272
  %v806 = vunpack.c.l.b16 %v273
  %v807 = vunpack.c.l.b16 %v274
  %v808 = vunpack.c.l.b16 %v275
  %v809 = vpack.c.b16 %v693, %v692
  %v810 = vpack.c.b16 %v695, %v694
  %v811 = vpack.c.b16 %v697, %v696
  %v812 = vpack.c.b16 %v699, %v698
  %v813 = vpack.c.b16 %v701, %v700
  %v814 = vpack.c.b16 %v703, %v702
  %v815 = vpack.c.b16 %v705, %v704
  %v816 = vpack.c.b16 %v707, %v706
  %v817 = vpack.c.b16 %v709, %v708
  %v818 = vpack.c.b16 %v711, %v710
  %v819 = vpack.c.b16 %v713, %v712
  %v820 = vpack.c.b16 %v715, %v714
  %v821 = vpack.c.b16 %v717, %v716
  %v822 = vpack.c.b16 %v719, %v718
  %v823 = vpack.c.b16 %v721, %v720
  %v824 = vpack.c.b16 %v723, %v722
  %v825 = vpack.c.b16 %v725, %v724
  %v826 = vpack.c.b16 %v727, %v726
  %v827 = vpack.c.b16 %v729, %v728
  %v828 = vpack.c.b16 %v731, %v730
  %v829 = vpack.c.b16 %v733, %v732
  %v830 = vpack.c.b16 %v735, %v734
  %v831 = vpack.c.b16 %v737, %v736
  %v832 = vpack.c.b16 %v739, %v738
  %v833 = vpack.c.b16 %v741, %v740
  %v834 = vpack.c.b16 %v743, %v742
  %v835 = vpack.c.b16 %v745, %v744
  %v836 = vpack.c.b16 %v747, %v746
  %v837 = vpack.c.b16 %v749, %v748
  %v838 = vpack.c.b16 %v751, %v750
  %v839 = vpack.c.b16 %v753, %v752
  %v840 = vpack.c.b16 %v755, %v754
  %v841 = vpack.c.b16 %v757, %v756
  %v842 = vpack.c.b16 %v759, %v758
  %v843 = vpack.c.b16 %v761, %v760
  %v844 = vpack.c.b16 %v763, %v762
  %v845 = vpack.c.b16 %v765, %v764
  %v846 = vpack.c.b16 %v767, %v766
  %v847 = vpack.c.b16 %v769, %v768
  %v848 = vpack.c.b16 %v771, %v770
  %v849 = vpack.c.b16 %v773, %v772
  %v850 = vpack.c.b16 %v775, %v774
  %v851 = vpack.c.b16 %v777, %v776
  %v852 = vpack.c.b16 %v779, %v778
  %v853 = vpack.c.b16 %v781, %v780
  %v854 = vpack.c.b16 %v783, %v782
  %v855 = vpack.c.b16 %v785, %v784
  %v856 = vpack.c.b16 %v787, %v786
  %v857 = vpack.c.b16 %v789, %v788
  %v858 = vpack.c.b16 %v791, %v790
  %v859 = vpack.c.b16 %v793, %v792
  %v860 = vpack.c.b16 %v795, %v794
  %v861 = vpack.c.b16 %v797, %v796
  %v862 = vpack.c.b16 %v799, %v798
  %v863 = vpack.c.b16 %v801, %v800
  %v864 = vpack.c.b16 %v803, %v802
  %v865 = vpack.c.b16 %v805, %v804
  %v866 = vpack.c.b16 %v807, %v806
  %v867 = vpack.c.b16 %v808, %v808
  %868 = vrot.lane.b32.xlu0 %v809, 4
  %v869 = vpop.permute.xlu0 %868
  %870 = vrot.lane.b32.xlu0 %v810, 4
  %v871 = vpop.permute.xlu0 %870
  %872 = vrot.lane.b32.xlu0 %v811, 4
  %v873 = vpop.permute.xlu0 %872
  %874 = vrot.lane.b32.xlu0 %v812, 4
  %v875 = vpop.permute.xlu0 %874
  %876 = vrot.lane.b32.xlu0 %v813, 4
  %v877 = vpop.permute.xlu0 %876
  %878 = vrot.lane.b32.xlu0 %v814, 4
  %v879 = vpop.permute.xlu0 %878
  %880 = vrot.lane.b32.xlu0 %v815, 4
  %v881 = vpop.permute.xlu0 %880
  %882 = vrot.lane.b32.xlu0 %v816, 4
  %v883 = vpop.permute.xlu0 %882
  %884 = vrot.lane.b32.xlu0 %v817, 4
  %v885 = vpop.permute.xlu0 %884
  %886 = vrot.lane.b32.xlu0 %v818, 4
  %v887 = vpop.permute.xlu0 %886
  %888 = vrot.lane.b32.xlu0 %v819, 4
  %v889 = vpop.permute.xlu0 %888
  %890 = vrot.lane.b32.xlu0 %v820, 4
  %v891 = vpop.permute.xlu0 %890
  %892 = vrot.lane.b32.xlu0 %v821, 4
  %v893 = vpop.permute.xlu0 %892
  %894 = vrot.lane.b32.xlu0 %v822, 4
  %v895 = vpop.permute.xlu0 %894
  %896 = vrot.lane.b32.xlu0 %v823, 4
  %v897 = vpop.permute.xlu0 %896
  %898 = vrot.lane.b32.xlu0 %v824, 4
  %v899 = vpop.permute.xlu0 %898
  %900 = vrot.lane.b32.xlu0 %v825, 4
  %v901 = vpop.permute.xlu0 %900
  %902 = vrot.lane.b32.xlu0 %v826, 4
  %v903 = vpop.permute.xlu0 %902
  %904 = vrot.lane.b32.xlu0 %v827, 4
  %v905 = vpop.permute.xlu0 %904
  %906 = vrot.lane.b32.xlu0 %v828, 4
  %v907 = vpop.permute.xlu0 %906
  %908 = vrot.lane.b32.xlu0 %v829, 4
  %v909 = vpop.permute.xlu0 %908
  %910 = vrot.lane.b32.xlu0 %v830, 4
  %v911 = vpop.permute.xlu0 %910
  %912 = vrot.lane.b32.xlu0 %v831, 4
  %v913 = vpop.permute.xlu0 %912
  %914 = vrot.lane.b32.xlu0 %v832, 4
  %v915 = vpop.permute.xlu0 %914
  %916 = vrot.lane.b32.xlu0 %v833, 4
  %v917 = vpop.permute.xlu0 %916
  %918 = vrot.lane.b32.xlu0 %v834, 4
  %v919 = vpop.permute.xlu0 %918
  %920 = vrot.lane.b32.xlu0 %v835, 4
  %v921 = vpop.permute.xlu0 %920
  %922 = vrot.lane.b32.xlu0 %v836, 4
  %v923 = vpop.permute.xlu0 %922
  %924 = vrot.lane.b32.xlu0 %v837, 4
  %v925 = vpop.permute.xlu0 %924
  %926 = vrot.lane.b32.xlu0 %v838, 4
  %v927 = vpop.permute.xlu0 %926
  %928 = vrot.lane.b32.xlu0 %v839, 4
  %v929 = vpop.permute.xlu0 %928
  %930 = vrot.lane.b32.xlu0 %v840, 4
  %v931 = vpop.permute.xlu0 %930
  %932 = vrot.lane.b32.xlu0 %v841, 4
  %v933 = vpop.permute.xlu0 %932
  %934 = vrot.lane.b32.xlu0 %v842, 4
  %v935 = vpop.permute.xlu0 %934
  %936 = vrot.lane.b32.xlu0 %v843, 4
  %v937 = vpop.permute.xlu0 %936
  %938 = vrot.lane.b32.xlu0 %v844, 4
  %v939 = vpop.permute.xlu0 %938
  %940 = vrot.lane.b32.xlu0 %v845, 4
  %v941 = vpop.permute.xlu0 %940
  %942 = vrot.lane.b32.xlu0 %v846, 4
  %v943 = vpop.permute.xlu0 %942
  %944 = vrot.lane.b32.xlu0 %v847, 4
  %v945 = vpop.permute.xlu0 %944
  %946 = vrot.lane.b32.xlu0 %v848, 4
  %v947 = vpop.permute.xlu0 %946
  %948 = vrot.lane.b32.xlu0 %v849, 4
  %v949 = vpop.permute.xlu0 %948
  %950 = vrot.lane.b32.xlu0 %v850, 4
  %v951 = vpop.permute.xlu0 %950
  %952 = vrot.lane.b32.xlu0 %v851, 4
  %v953 = vpop.permute.xlu0 %952
  %954 = vrot.lane.b32.xlu0 %v852, 4
  %v955 = vpop.permute.xlu0 %954
  %956 = vrot.lane.b32.xlu0 %v853, 4
  %v957 = vpop.permute.xlu0 %956
  %958 = vrot.lane.b32.xlu0 %v854, 4
  %v959 = vpop.permute.xlu0 %958
  %960 = vrot.lane.b32.xlu0 %v855, 4
  %v961 = vpop.permute.xlu0 %960
  %962 = vrot.lane.b32.xlu0 %v856, 4
  %v963 = vpop.permute.xlu0 %962
  %964 = vrot.lane.b32.xlu0 %v857, 4
  %v965 = vpop.permute.xlu0 %964
  %966 = vrot.lane.b32.xlu0 %v858, 4
  %v967 = vpop.permute.xlu0 %966
  %968 = vrot.lane.b32.xlu0 %v859, 4
  %v969 = vpop.permute.xlu0 %968
  %970 = vrot.lane.b32.xlu0 %v860, 4
  %v971 = vpop.permute.xlu0 %970
  %972 = vrot.lane.b32.xlu0 %v861, 4
  %v973 = vpop.permute.xlu0 %972
  %974 = vrot.lane.b32.xlu0 %v862, 4
  %v975 = vpop.permute.xlu0 %974
  %976 = vrot.lane.b32.xlu0 %v863, 4
  %v977 = vpop.permute.xlu0 %976
  %978 = vrot.lane.b32.xlu0 %v864, 4
  %v979 = vpop.permute.xlu0 %978
  %980 = vrot.lane.b32.xlu0 %v865, 4
  %v981 = vpop.permute.xlu0 %980
  %982 = vrot.lane.b32.xlu0 %v866, 4
  %v983 = vpop.permute.xlu0 %982
  %984 = vrot.lane.b32.xlu0 %v867, 4
  %v985 = vpop.permute.xlu0 %984
  %vm986 = vsmask.f32 7424
  %v988 = vshrl.u32 %v516, 16
  %v990 = vshll.u32 %v516, 16
  %v992 = vrot.slane %v990, 1
  %v993 = vor.u32 %v988, %v992
  %v995 = vshll.u32 %v517, 16
  %v997 = vrot.slane %v995, 1
  %v998 = vsel %vm986, %v993, %v997
  %v999 = vshrl.u32 %v517, 16
  %v1001 = vor.u32 %v999, %v997
  %v1003 = vshll.u32 %v518, 16
  %v1005 = vrot.slane %v1003, 1
  %v1006 = vsel %vm986, %v1001, %v1005
  %v1007 = vshrl.u32 %v518, 16
  %v1009 = vor.u32 %v1007, %v1005
  %v1011 = vshll.u32 %v519, 16
  %v1013 = vrot.slane %v1011, 1
  %v1014 = vsel %vm986, %v1009, %v1013
  %v1015 = vshrl.u32 %v519, 16
  %v1017 = vor.u32 %v1015, %v1013
  %v1019 = vshll.u32 %v520, 16
  %v1021 = vrot.slane %v1019, 1
  %v1022 = vsel %vm986, %v1017, %v1021
  %v1023 = vshrl.u32 %v520, 16
  %v1025 = vor.u32 %v1023, %v1021
  %v1027 = vshll.u32 %v521, 16
  %v1029 = vrot.slane %v1027, 1
  %v1030 = vsel %vm986, %v1025, %v1029
  %v1031 = vshrl.u32 %v521, 16
  %v1033 = vor.u32 %v1031, %v1029
  %v1035 = vshll.u32 %v522, 16
  %v1037 = vrot.slane %v1035, 1
  %v1038 = vsel %vm986, %v1033, %v1037
  %v1039 = vshrl.u32 %v522, 16
  %v1041 = vor.u32 %v1039, %v1037
  %v1043 = vshll.u32 %v523, 16
  %v1045 = vrot.slane %v1043, 1
  %v1046 = vsel %vm986, %v1041, %v1045
  %v1047 = vshrl.u32 %v523, 16
  %v1049 = vor.u32 %v1047, %v1045
  %v1051 = vshll.u32 %v524, 16
  %v1053 = vrot.slane %v1051, 1
  %v1054 = vsel %vm986, %v1049, %v1053
  %v1055 = vshrl.u32 %v524, 16
  %v1057 = vor.u32 %v1055, %v1053
  %v1059 = vshll.u32 %v525, 16
  %v1061 = vrot.slane %v1059, 1
  %v1062 = vsel %vm986, %v1057, %v1061
  %v1063 = vshrl.u32 %v525, 16
  %v1065 = vor.u32 %v1063, %v1061
  %v1067 = vshll.u32 %v526, 16
  %v1069 = vrot.slane %v1067, 1
  %v1070 = vsel %vm986, %v1065, %v1069
  %v1071 = vshrl.u32 %v526, 16
  %v1073 = vor.u32 %v1071, %v1069
  %v1075 = vshll.u32 %v527, 16
  %v1077 = vrot.slane %v1075, 1
  %v1078 = vsel %vm986, %v1073, %v1077
  %v1079 = vshrl.u32 %v527, 16
  %v1081 = vor.u32 %v1079, %v1077
  %v1083 = vshll.u32 %v528, 16
  %v1085 = vrot.slane %v1083, 1
  %v1086 = vsel %vm986, %v1081, %v1085
  %v1087 = vshrl.u32 %v528, 16
  %v1089 = vor.u32 %v1087, %v1085
  %v1091 = vshll.u32 %v529, 16
  %v1093 = vrot.slane %v1091, 1
  %v1094 = vsel %vm986, %v1089, %v1093
  %v1095 = vshrl.u32 %v529, 16
  %v1097 = vor.u32 %v1095, %v1093
  %v1099 = vshll.u32 %v530, 16
  %v1101 = vrot.slane %v1099, 1
  %v1102 = vsel %vm986, %v1097, %v1101
  %v1103 = vshrl.u32 %v530, 16
  %v1105 = vor.u32 %v1103, %v1101
  %v1107 = vshll.u32 %v531, 16
  %v1109 = vrot.slane %v1107, 1
  %v1110 = vsel %vm986, %v1105, %v1109
  %v1111 = vshrl.u32 %v531, 16
  %v1113 = vor.u32 %v1111, %v1109
  %v1115 = vshll.u32 %v532, 16
  %v1117 = vrot.slane %v1115, 1
  %v1118 = vsel %vm986, %v1113, %v1117
  %v1119 = vshrl.u32 %v532, 16
  %v1121 = vor.u32 %v1119, %v1117
  %v1123 = vshll.u32 %v533, 16
  %v1125 = vrot.slane %v1123, 1
  %v1126 = vsel %vm986, %v1121, %v1125
  %v1127 = vshrl.u32 %v533, 16
  %v1129 = vor.u32 %v1127, %v1125
  %v1131 = vshll.u32 %v534, 16
  %v1133 = vrot.slane %v1131, 1
  %v1134 = vsel %vm986, %v1129, %v1133
  %v1135 = vshrl.u32 %v534, 16
  %v1137 = vor.u32 %v1135, %v1133
  %v1139 = vshll.u32 %v535, 16
  %v1141 = vrot.slane %v1139, 1
  %v1142 = vsel %vm986, %v1137, %v1141
  %v1143 = vshrl.u32 %v535, 16
  %v1145 = vor.u32 %v1143, %v1141
  %v1147 = vshll.u32 %v536, 16
  %v1149 = vrot.slane %v1147, 1
  %v1150 = vsel %vm986, %v1145, %v1149
  %v1151 = vshrl.u32 %v536, 16
  %v1153 = vor.u32 %v1151, %v1149
  %v1155 = vshll.u32 %v537, 16
  %v1157 = vrot.slane %v1155, 1
  %v1158 = vsel %vm986, %v1153, %v1157
  %v1159 = vshrl.u32 %v537, 16
  %v1161 = vor.u32 %v1159, %v1157
  %v1163 = vshll.u32 %v538, 16
  %v1165 = vrot.slane %v1163, 1
  %v1166 = vsel %vm986, %v1161, %v1165
  %v1167 = vshrl.u32 %v538, 16
  %v1169 = vor.u32 %v1167, %v1165
  %v1171 = vshll.u32 %v539, 16
  %v1173 = vrot.slane %v1171, 1
  %v1174 = vsel %vm986, %v1169, %v1173
  %v1175 = vshrl.u32 %v539, 16
  %v1177 = vor.u32 %v1175, %v1173
  %v1179 = vshll.u32 %v540, 16
  %v1181 = vrot.slane %v1179, 1
  %v1182 = vsel %vm986, %v1177, %v1181
  %v1183 = vshrl.u32 %v540, 16
  %v1185 = vor.u32 %v1183, %v1181
  %v1187 = vshll.u32 %v541, 16
  %v1189 = vrot.slane %v1187, 1
  %v1190 = vsel %vm986, %v1185, %v1189
  %v1191 = vshrl.u32 %v541, 16
  %v1193 = vor.u32 %v1191, %v1189
  %v1195 = vshll.u32 %v542, 16
  %v1197 = vrot.slane %v1195, 1
  %v1198 = vsel %vm986, %v1193, %v1197
  %v1199 = vshrl.u32 %v542, 16
  %v1201 = vor.u32 %v1199, %v1197
  %v1203 = vshll.u32 %v543, 16
  %v1205 = vrot.slane %v1203, 1
  %v1206 = vsel %vm986, %v1201, %v1205
  %v1207 = vshrl.u32 %v543, 16
  %v1209 = vor.u32 %v1207, %v1205
  %v1211 = vshll.u32 %v544, 16
  %v1213 = vrot.slane %v1211, 1
  %v1214 = vsel %vm986, %v1209, %v1213
  %v1215 = vshrl.u32 %v544, 16
  %v1217 = vor.u32 %v1215, %v1213
  %v1219 = vshll.u32 %v545, 16
  %v1221 = vrot.slane %v1219, 1
  %v1222 = vsel %vm986, %v1217, %v1221
  %v1223 = vshrl.u32 %v545, 16
  %v1225 = vor.u32 %v1223, %v1221
  %v1227 = vshll.u32 %v546, 16
  %v1229 = vrot.slane %v1227, 1
  %v1230 = vsel %vm986, %v1225, %v1229
  %v1231 = vshrl.u32 %v546, 16
  %v1233 = vor.u32 %v1231, %v1229
  %v1235 = vshll.u32 %v547, 16
  %v1237 = vrot.slane %v1235, 1
  %v1238 = vsel %vm986, %v1233, %v1237
  %v1239 = vshrl.u32 %v547, 16
  %v1241 = vor.u32 %v1239, %v1237
  %v1243 = vshll.u32 %v548, 16
  %v1245 = vrot.slane %v1243, 1
  %v1246 = vsel %vm986, %v1241, %v1245
  %v1247 = vshrl.u32 %v548, 16
  %v1249 = vor.u32 %v1247, %v1245
  %v1251 = vshll.u32 %v549, 16
  %v1253 = vrot.slane %v1251, 1
  %v1254 = vsel %vm986, %v1249, %v1253
  %v1255 = vshrl.u32 %v549, 16
  %v1257 = vor.u32 %v1255, %v1253
  %v1259 = vshll.u32 %v550, 16
  %v1261 = vrot.slane %v1259, 1
  %v1262 = vsel %vm986, %v1257, %v1261
  %v1263 = vshrl.u32 %v550, 16
  %v1265 = vor.u32 %v1263, %v1261
  %v1267 = vshll.u32 %v551, 16
  %v1269 = vrot.slane %v1267, 1
  %v1270 = vsel %vm986, %v1265, %v1269
  %v1271 = vshrl.u32 %v551, 16
  %v1273 = vor.u32 %v1271, %v1269
  %v1275 = vshll.u32 %v552, 16
  %v1277 = vrot.slane %v1275, 1
  %v1278 = vsel %vm986, %v1273, %v1277
  %v1279 = vshrl.u32 %v552, 16
  %v1281 = vor.u32 %v1279, %v1277
  %v1283 = vshll.u32 %v553, 16
  %v1285 = vrot.slane %v1283, 1
  %v1286 = vsel %vm986, %v1281, %v1285
  %v1287 = vshrl.u32 %v553, 16
  %v1289 = vor.u32 %v1287, %v1285
  %v1291 = vshll.u32 %v554, 16
  %v1293 = vrot.slane %v1291, 1
  %v1294 = vsel %vm986, %v1289, %v1293
  %v1295 = vshrl.u32 %v554, 16
  %v1297 = vor.u32 %v1295, %v1293
  %v1299 = vshll.u32 %v555, 16
  %v1301 = vrot.slane %v1299, 1
  %v1302 = vsel %vm986, %v1297, %v1301
  %v1303 = vshrl.u32 %v555, 16
  %v1305 = vor.u32 %v1303, %v1301
  %v1307 = vshll.u32 %v556, 16
  %v1309 = vrot.slane %v1307, 1
  %v1310 = vsel %vm986, %v1305, %v1309
  %v1311 = vshrl.u32 %v556, 16
  %v1313 = vor.u32 %v1311, %v1309
  %v1315 = vshll.u32 %v557, 16
  %v1317 = vrot.slane %v1315, 1
  %v1318 = vsel %vm986, %v1313, %v1317
  %v1319 = vshrl.u32 %v557, 16
  %v1321 = vor.u32 %v1319, %v1317
  %v1323 = vshll.u32 %v558, 16
  %v1325 = vrot.slane %v1323, 1
  %v1326 = vsel %vm986, %v1321, %v1325
  %v1327 = vshrl.u32 %v558, 16
  %v1329 = vor.u32 %v1327, %v1325
  %v1331 = vshll.u32 %v559, 16
  %v1333 = vrot.slane %v1331, 1
  %v1334 = vsel %vm986, %v1329, %v1333
  %v1335 = vshrl.u32 %v559, 16
  %v1337 = vor.u32 %v1335, %v1333
  %v1339 = vshll.u32 %v560, 16
  %v1341 = vrot.slane %v1339, 1
  %v1342 = vsel %vm986, %v1337, %v1341
  %v1343 = vshrl.u32 %v560, 16
  %v1345 = vor.u32 %v1343, %v1341
  %v1347 = vshll.u32 %v561, 16
  %v1349 = vrot.slane %v1347, 1
  %v1350 = vsel %vm986, %v1345, %v1349
  %v1351 = vshrl.u32 %v561, 16
  %v1353 = vor.u32 %v1351, %v1349
  %v1355 = vshll.u32 %v562, 16
  %v1357 = vrot.slane %v1355, 1
  %v1358 = vsel %vm986, %v1353, %v1357
  %v1359 = vshrl.u32 %v562, 16
  %v1361 = vor.u32 %v1359, %v1357
  %v1363 = vshll.u32 %v563, 16
  %v1365 = vrot.slane %v1363, 1
  %v1366 = vsel %vm986, %v1361, %v1365
  %v1367 = vshrl.u32 %v563, 16
  %v1369 = vor.u32 %v1367, %v1365
  %v1371 = vshll.u32 %v564, 16
  %v1373 = vrot.slane %v1371, 1
  %v1374 = vsel %vm986, %v1369, %v1373
  %v1375 = vshrl.u32 %v564, 16
  %v1377 = vor.u32 %v1375, %v1373
  %v1379 = vshll.u32 %v565, 16
  %v1381 = vrot.slane %v1379, 1
  %v1382 = vsel %vm986, %v1377, %v1381
  %v1383 = vshrl.u32 %v565, 16
  %v1385 = vor.u32 %v1383, %v1381
  %v1387 = vshll.u32 %v566, 16
  %v1389 = vrot.slane %v1387, 1
  %v1390 = vsel %vm986, %v1385, %v1389
  %v1391 = vshrl.u32 %v566, 16
  %v1393 = vor.u32 %v1391, %v1389
  %v1395 = vshll.u32 %v567, 16
  %v1397 = vrot.slane %v1395, 1
  %v1398 = vsel %vm986, %v1393, %v1397
  %v1399 = vshrl.u32 %v567, 16
  %v1401 = vor.u32 %v1399, %v1397
  %v1403 = vshll.u32 %v568, 16
  %v1405 = vrot.slane %v1403, 1
  %v1406 = vsel %vm986, %v1401, %v1405
  %v1407 = vshrl.u32 %v568, 16
  %v1409 = vor.u32 %v1407, %v1405
  %v1411 = vshll.u32 %v569, 16
  %v1413 = vrot.slane %v1411, 1
  %v1414 = vsel %vm986, %v1409, %v1413
  %v1415 = vshrl.u32 %v569, 16
  %v1417 = vor.u32 %v1415, %v1413
  %v1419 = vshll.u32 %v570, 16
  %v1421 = vrot.slane %v1419, 1
  %v1422 = vsel %vm986, %v1417, %v1421
  %v1423 = vshrl.u32 %v570, 16
  %v1425 = vor.u32 %v1423, %v1421
  %v1427 = vshll.u32 %v571, 16
  %v1429 = vrot.slane %v1427, 1
  %v1430 = vsel %vm986, %v1425, %v1429
  %v1431 = vshrl.u32 %v571, 16
  %v1433 = vor.u32 %v1431, %v1429
  %v1435 = vshll.u32 %v572, 16
  %v1437 = vrot.slane %v1435, 1
  %v1438 = vsel %vm986, %v1433, %v1437
  %v1439 = vshrl.u32 %v572, 16
  %v1441 = vor.u32 %v1439, %v1437
  %v1443 = vshll.u32 %v573, 16
  %v1445 = vrot.slane %v1443, 1
  %v1446 = vsel %vm986, %v1441, %v1445
  %v1447 = vshrl.u32 %v573, 16
  %v1449 = vor.u32 %v1447, %v1445
  %v1451 = vshll.u32 %v574, 16
  %v1453 = vrot.slane %v1451, 1
  %v1454 = vsel %vm986, %v1449, %v1453
  %v1455 = vshrl.u32 %v574, 16
  %v1457 = vor.u32 %v1455, %v1453
  %1458 = vrot.lane.b32.xlu0 %v998, 8
  %v1459 = vpop.permute.xlu0 %1458
  %1460 = vrot.lane.b32.xlu0 %v1006, 8
  %v1461 = vpop.permute.xlu0 %1460
  %1462 = vrot.lane.b32.xlu0 %v1014, 8
  %v1463 = vpop.permute.xlu0 %1462
  %1464 = vrot.lane.b32.xlu0 %v1022, 8
  %v1465 = vpop.permute.xlu0 %1464
  %1466 = vrot.lane.b32.xlu0 %v1030, 8
  %v1467 = vpop.permute.xlu0 %1466
  %1468 = vrot.lane.b32.xlu0 %v1038, 8
  %v1469 = vpop.permute.xlu0 %1468
  %1470 = vrot.lane.b32.xlu0 %v1046, 8
  %v1471 = vpop.permute.xlu0 %1470
  %1472 = vrot.lane.b32.xlu0 %v1054, 8
  %v1473 = vpop.permute.xlu0 %1472
  %1474 = vrot.lane.b32.xlu0 %v1062, 8
  %v1475 = vpop.permute.xlu0 %1474
  %1476 = vrot.lane.b32.xlu0 %v1070, 8
  %v1477 = vpop.permute.xlu0 %1476
  %1478 = vrot.lane.b32.xlu0 %v1078, 8
  %v1479 = vpop.permute.xlu0 %1478
  %1480 = vrot.lane.b32.xlu0 %v1086, 8
  %v1481 = vpop.permute.xlu0 %1480
  %1482 = vrot.lane.b32.xlu0 %v1094, 8
  %v1483 = vpop.permute.xlu0 %1482
  %1484 = vrot.lane.b32.xlu0 %v1102, 8
  %v1485 = vpop.permute.xlu0 %1484
  %1486 = vrot.lane.b32.xlu0 %v1110, 8
  %v1487 = vpop.permute.xlu0 %1486
  %1488 = vrot.lane.b32.xlu0 %v1118, 8
  %v1489 = vpop.permute.xlu0 %1488
  %1490 = vrot.lane.b32.xlu0 %v1126, 8
  %v1491 = vpop.permute.xlu0 %1490
  %1492 = vrot.lane.b32.xlu0 %v1134, 8
  %v1493 = vpop.permute.xlu0 %1492
  %1494 = vrot.lane.b32.xlu0 %v1142, 8
  %v1495 = vpop.permute.xlu0 %1494
  %1496 = vrot.lane.b32.xlu0 %v1150, 8
  %v1497 = vpop.permute.xlu0 %1496
  %1498 = vrot.lane.b32.xlu0 %v1158, 8
  %v1499 = vpop.permute.xlu0 %1498
  %1500 = vrot.lane.b32.xlu0 %v1166, 8
  %v1501 = vpop.permute.xlu0 %1500
  %1502 = vrot.lane.b32.xlu0 %v1174, 8
  %v1503 = vpop.permute.xlu0 %1502
  %1504 = vrot.lane.b32.xlu0 %v1182, 8
  %v1505 = vpop.permute.xlu0 %1504
  %1506 = vrot.lane.b32.xlu0 %v1190, 8
  %v1507 = vpop.permute.xlu0 %1506
  %1508 = vrot.lane.b32.xlu0 %v1198, 8
  %v1509 = vpop.permute.xlu0 %1508
  %1510 = vrot.lane.b32.xlu0 %v1206, 8
  %v1511 = vpop.permute.xlu0 %1510
  %1512 = vrot.lane.b32.xlu0 %v1214, 8
  %v1513 = vpop.permute.xlu0 %1512
  %1514 = vrot.lane.b32.xlu0 %v1222, 8
  %v1515 = vpop.permute.xlu0 %1514
  %1516 = vrot.lane.b32.xlu0 %v1230, 8
  %v1517 = vpop.permute.xlu0 %1516
  %1518 = vrot.lane.b32.xlu0 %v1238, 8
  %v1519 = vpop.permute.xlu0 %1518
  %1520 = vrot.lane.b32.xlu0 %v1246, 8
  %v1521 = vpop.permute.xlu0 %1520
  %1522 = vrot.lane.b32.xlu0 %v1254, 8
  %v1523 = vpop.permute.xlu0 %1522
  %1524 = vrot.lane.b32.xlu0 %v1262, 8
  %v1525 = vpop.permute.xlu0 %1524
  %1526 = vrot.lane.b32.xlu0 %v1270, 8
  %v1527 = vpop.permute.xlu0 %1526
  %1528 = vrot.lane.b32.xlu0 %v1278, 8
  %v1529 = vpop.permute.xlu0 %1528
  %1530 = vrot.lane.b32.xlu0 %v1286, 8
  %v1531 = vpop.permute.xlu0 %1530
  %1532 = vrot.lane.b32.xlu0 %v1294, 8
  %v1533 = vpop.permute.xlu0 %1532
  %1534 = vrot.lane.b32.xlu0 %v1302, 8
  %v1535 = vpop.permute.xlu0 %1534
  %1536 = vrot.lane.b32.xlu0 %v1310, 8
  %v1537 = vpop.permute.xlu0 %1536
  %1538 = vrot.lane.b32.xlu0 %v1318, 8
  %v1539 = vpop.permute.xlu0 %1538
  %1540 = vrot.lane.b32.xlu0 %v1326, 8
  %v1541 = vpop.permute.xlu0 %1540
  %1542 = vrot.lane.b32.xlu0 %v1334, 8
  %v1543 = vpop.permute.xlu0 %1542
  %1544 = vrot.lane.b32.xlu0 %v1342, 8
  %v1545 = vpop.permute.xlu0 %1544
  %1546 = vrot.lane.b32.xlu0 %v1350, 8
  %v1547 = vpop.permute.xlu0 %1546
  %1548 = vrot.lane.b32.xlu0 %v1358, 8
  %v1549 = vpop.permute.xlu0 %1548
  %1550 = vrot.lane.b32.xlu0 %v1366, 8
  %v1551 = vpop.permute.xlu0 %1550
  %1552 = vrot.lane.b32.xlu0 %v1374, 8
  %v1553 = vpop.permute.xlu0 %1552
  %1554 = vrot.lane.b32.xlu0 %v1382, 8
  %v1555 = vpop.permute.xlu0 %1554
  %1556 = vrot.lane.b32.xlu0 %v1390, 8
  %v1557 = vpop.permute.xlu0 %1556
  %1558 = vrot.lane.b32.xlu0 %v1398, 8
  %v1559 = vpop.permute.xlu0 %1558
  %1560 = vrot.lane.b32.xlu0 %v1406, 8
  %v1561 = vpop.permute.xlu0 %1560
  %1562 = vrot.lane.b32.xlu0 %v1414, 8
  %v1563 = vpop.permute.xlu0 %1562
  %1564 = vrot.lane.b32.xlu0 %v1422, 8
  %v1565 = vpop.permute.xlu0 %1564
  %1566 = vrot.lane.b32.xlu0 %v1430, 8
  %v1567 = vpop.permute.xlu0 %1566
  %1568 = vrot.lane.b32.xlu0 %v1438, 8
  %v1569 = vpop.permute.xlu0 %1568
  %1570 = vrot.lane.b32.xlu0 %v1446, 8
  %v1571 = vpop.permute.xlu0 %1570
  %1572 = vrot.lane.b32.xlu0 %v1454, 8
  %v1573 = vpop.permute.xlu0 %1572
  %1574 = vrot.lane.b32.xlu0 %v1457, 8
  %v1575 = vpop.permute.xlu0 %1574
  %v1577 = vshrl.u32 %v809, 16
  %v1579 = vshll.u32 %v809, 16
  %v1581 = vrot.slane %v1579, 1
  %v1582 = vor.u32 %v1577, %v1581
  %v1584 = vshll.u32 %v810, 16
  %v1586 = vrot.slane %v1584, 1
  %v1587 = vsel %vm986, %v1582, %v1586
  %v1588 = vshrl.u32 %v810, 16
  %v1590 = vor.u32 %v1588, %v1586
  %v1592 = vshll.u32 %v811, 16
  %v1594 = vrot.slane %v1592, 1
  %v1595 = vsel %vm986, %v1590, %v1594
  %v1596 = vshrl.u32 %v811, 16
  %v1598 = vor.u32 %v1596, %v1594
  %v1600 = vshll.u32 %v812, 16
  %v1602 = vrot.slane %v1600, 1
  %v1603 = vsel %vm986, %v1598, %v1602
  %v1604 = vshrl.u32 %v812, 16
  %v1606 = vor.u32 %v1604, %v1602
  %v1608 = vshll.u32 %v813, 16
  %v1610 = vrot.slane %v1608, 1
  %v1611 = vsel %vm986, %v1606, %v1610
  %v1612 = vshrl.u32 %v813, 16
  %v1614 = vor.u32 %v1612, %v1610
  %v1616 = vshll.u32 %v814, 16
  %v1618 = vrot.slane %v1616, 1
  %v1619 = vsel %vm986, %v1614, %v1618
  %v1620 = vshrl.u32 %v814, 16
  %v1622 = vor.u32 %v1620, %v1618
  %v1624 = vshll.u32 %v815, 16
  %v1626 = vrot.slane %v1624, 1
  %v1627 = vsel %vm986, %v1622, %v1626
  %v1628 = vshrl.u32 %v815, 16
  %v1630 = vor.u32 %v1628, %v1626
  %v1632 = vshll.u32 %v816, 16
  %v1634 = vrot.slane %v1632, 1
  %v1635 = vsel %vm986, %v1630, %v1634
  %v1636 = vshrl.u32 %v816, 16
  %v1638 = vor.u32 %v1636, %v1634
  %v1640 = vshll.u32 %v817, 16
  %v1642 = vrot.slane %v1640, 1
  %v1643 = vsel %vm986, %v1638, %v1642
  %v1644 = vshrl.u32 %v817, 16
  %v1646 = vor.u32 %v1644, %v1642
  %v1648 = vshll.u32 %v818, 16
  %v1650 = vrot.slane %v1648, 1
  %v1651 = vsel %vm986, %v1646, %v1650
  %v1652 = vshrl.u32 %v818, 16
  %v1654 = vor.u32 %v1652, %v1650
  %v1656 = vshll.u32 %v819, 16
  %v1658 = vrot.slane %v1656, 1
  %v1659 = vsel %vm986, %v1654, %v1658
  %v1660 = vshrl.u32 %v819, 16
  %v1662 = vor.u32 %v1660, %v1658
  %v1664 = vshll.u32 %v820, 16
  %v1666 = vrot.slane %v1664, 1
  %v1667 = vsel %vm986, %v1662, %v1666
  %v1668 = vshrl.u32 %v820, 16
  %v1670 = vor.u32 %v1668, %v1666
  %v1672 = vshll.u32 %v821, 16
  %v1674 = vrot.slane %v1672, 1
  %v1675 = vsel %vm986, %v1670, %v1674
  %v1676 = vshrl.u32 %v821, 16
  %v1678 = vor.u32 %v1676, %v1674
  %v1680 = vshll.u32 %v822, 16
  %v1682 = vrot.slane %v1680, 1
  %v1683 = vsel %vm986, %v1678, %v1682
  %v1684 = vshrl.u32 %v822, 16
  %v1686 = vor.u32 %v1684, %v1682
  %v1688 = vshll.u32 %v823, 16
  %v1690 = vrot.slane %v1688, 1
  %v1691 = vsel %vm986, %v1686, %v1690
  %v1692 = vshrl.u32 %v823, 16
  %v1694 = vor.u32 %v1692, %v1690
  %v1696 = vshll.u32 %v824, 16
  %v1698 = vrot.slane %v1696, 1
  %v1699 = vsel %vm986, %v1694, %v1698
  %v1700 = vshrl.u32 %v824, 16
  %v1702 = vor.u32 %v1700, %v1698
  %v1704 = vshll.u32 %v825, 16
  %v1706 = vrot.slane %v1704, 1
  %v1707 = vsel %vm986, %v1702, %v1706
  %v1708 = vshrl.u32 %v825, 16
  %v1710 = vor.u32 %v1708, %v1706
  %v1712 = vshll.u32 %v826, 16
  %v1714 = vrot.slane %v1712, 1
  %v1715 = vsel %vm986, %v1710, %v1714
  %v1716 = vshrl.u32 %v826, 16
  %v1718 = vor.u32 %v1716, %v1714
  %v1720 = vshll.u32 %v827, 16
  %v1722 = vrot.slane %v1720, 1
  %v1723 = vsel %vm986, %v1718, %v1722
  %v1724 = vshrl.u32 %v827, 16
  %v1726 = vor.u32 %v1724, %v1722
  %v1728 = vshll.u32 %v828, 16
  %v1730 = vrot.slane %v1728, 1
  %v1731 = vsel %vm986, %v1726, %v1730
  %v1732 = vshrl.u32 %v828, 16
  %v1734 = vor.u32 %v1732, %v1730
  %v1736 = vshll.u32 %v829, 16
  %v1738 = vrot.slane %v1736, 1
  %v1739 = vsel %vm986, %v1734, %v1738
  %v1740 = vshrl.u32 %v829, 16
  %v1742 = vor.u32 %v1740, %v1738
  %v1744 = vshll.u32 %v830, 16
  %v1746 = vrot.slane %v1744, 1
  %v1747 = vsel %vm986, %v1742, %v1746
  %v1748 = vshrl.u32 %v830, 16
  %v1750 = vor.u32 %v1748, %v1746
  %v1752 = vshll.u32 %v831, 16
  %v1754 = vrot.slane %v1752, 1
  %v1755 = vsel %vm986, %v1750, %v1754
  %v1756 = vshrl.u32 %v831, 16
  %v1758 = vor.u32 %v1756, %v1754
  %v1760 = vshll.u32 %v832, 16
  %v1762 = vrot.slane %v1760, 1
  %v1763 = vsel %vm986, %v1758, %v1762
  %v1764 = vshrl.u32 %v832, 16
  %v1766 = vor.u32 %v1764, %v1762
  %v1768 = vshll.u32 %v833, 16
  %v1770 = vrot.slane %v1768, 1
  %v1771 = vsel %vm986, %v1766, %v1770
  %v1772 = vshrl.u32 %v833, 16
  %v1774 = vor.u32 %v1772, %v1770
  %v1776 = vshll.u32 %v834, 16
  %v1778 = vrot.slane %v1776, 1
  %v1779 = vsel %vm986, %v1774, %v1778
  %v1780 = vshrl.u32 %v834, 16
  %v1782 = vor.u32 %v1780, %v1778
  %v1784 = vshll.u32 %v835, 16
  %v1786 = vrot.slane %v1784, 1
  %v1787 = vsel %vm986, %v1782, %v1786
  %v1788 = vshrl.u32 %v835, 16
  %v1790 = vor.u32 %v1788, %v1786
  %v1792 = vshll.u32 %v836, 16
  %v1794 = vrot.slane %v1792, 1
  %v1795 = vsel %vm986, %v1790, %v1794
  %v1796 = vshrl.u32 %v836, 16
  %v1798 = vor.u32 %v1796, %v1794
  %v1800 = vshll.u32 %v837, 16
  %v1802 = vrot.slane %v1800, 1
  %v1803 = vsel %vm986, %v1798, %v1802
  %v1804 = vshrl.u32 %v837, 16
  %v1806 = vor.u32 %v1804, %v1802
  %v1808 = vshll.u32 %v838, 16
  %v1810 = vrot.slane %v1808, 1
  %v1811 = vsel %vm986, %v1806, %v1810
  %v1812 = vshrl.u32 %v838, 16
  %v1814 = vor.u32 %v1812, %v1810
  %v1816 = vshll.u32 %v839, 16
  %v1818 = vrot.slane %v1816, 1
  %v1819 = vsel %vm986, %v1814, %v1818
  %v1820 = vshrl.u32 %v839, 16
  %v1822 = vor.u32 %v1820, %v1818
  %v1824 = vshll.u32 %v840, 16
  %v1826 = vrot.slane %v1824, 1
  %v1827 = vsel %vm986, %v1822, %v1826
  %v1828 = vshrl.u32 %v840, 16
  %v1830 = vor.u32 %v1828, %v1826
  %v1832 = vshll.u32 %v841, 16
  %v1834 = vrot.slane %v1832, 1
  %v1835 = vsel %vm986, %v1830, %v1834
  %v1836 = vshrl.u32 %v841, 16
  %v1838 = vor.u32 %v1836, %v1834
  %v1840 = vshll.u32 %v842, 16
  %v1842 = vrot.slane %v1840, 1
  %v1843 = vsel %vm986, %v1838, %v1842
  %v1844 = vshrl.u32 %v842, 16
  %v1846 = vor.u32 %v1844, %v1842
  %v1848 = vshll.u32 %v843, 16
  %v1850 = vrot.slane %v1848, 1
  %v1851 = vsel %vm986, %v1846, %v1850
  %v1852 = vshrl.u32 %v843, 16
  %v1854 = vor.u32 %v1852, %v1850
  %v1856 = vshll.u32 %v844, 16
  %v1858 = vrot.slane %v1856, 1
  %v1859 = vsel %vm986, %v1854, %v1858
  %v1860 = vshrl.u32 %v844, 16
  %v1862 = vor.u32 %v1860, %v1858
  %v1864 = vshll.u32 %v845, 16
  %v1866 = vrot.slane %v1864, 1
  %v1867 = vsel %vm986, %v1862, %v1866
  %v1868 = vshrl.u32 %v845, 16
  %v1870 = vor.u32 %v1868, %v1866
  %v1872 = vshll.u32 %v846, 16
  %v1874 = vrot.slane %v1872, 1
  %v1875 = vsel %vm986, %v1870, %v1874
  %v1876 = vshrl.u32 %v846, 16
  %v1878 = vor.u32 %v1876, %v1874
  %v1880 = vshll.u32 %v847, 16
  %v1882 = vrot.slane %v1880, 1
  %v1883 = vsel %vm986, %v1878, %v1882
  %v1884 = vshrl.u32 %v847, 16
  %v1886 = vor.u32 %v1884, %v1882
  %v1888 = vshll.u32 %v848, 16
  %v1890 = vrot.slane %v1888, 1
  %v1891 = vsel %vm986, %v1886, %v1890
  %v1892 = vshrl.u32 %v848, 16
  %v1894 = vor.u32 %v1892, %v1890
  %v1896 = vshll.u32 %v849, 16
  %v1898 = vrot.slane %v1896, 1
  %v1899 = vsel %vm986, %v1894, %v1898
  %v1900 = vshrl.u32 %v849, 16
  %v1902 = vor.u32 %v1900, %v1898
  %v1904 = vshll.u32 %v850, 16
  %v1906 = vrot.slane %v1904, 1
  %v1907 = vsel %vm986, %v1902, %v1906
  %v1908 = vshrl.u32 %v850, 16
  %v1910 = vor.u32 %v1908, %v1906
  %v1912 = vshll.u32 %v851, 16
  %v1914 = vrot.slane %v1912, 1
  %v1915 = vsel %vm986, %v1910, %v1914
  %v1916 = vshrl.u32 %v851, 16
  %v1918 = vor.u32 %v1916, %v1914
  %v1920 = vshll.u32 %v852, 16
  %v1922 = vrot.slane %v1920, 1
  %v1923 = vsel %vm986, %v1918, %v1922
  %v1924 = vshrl.u32 %v852, 16
  %v1926 = vor.u32 %v1924, %v1922
  %v1928 = vshll.u32 %v853, 16
  %v1930 = vrot.slane %v1928, 1
  %v1931 = vsel %vm986, %v1926, %v1930
  %v1932 = vshrl.u32 %v853, 16
  %v1934 = vor.u32 %v1932, %v1930
  %v1936 = vshll.u32 %v854, 16
  %v1938 = vrot.slane %v1936, 1
  %v1939 = vsel %vm986, %v1934, %v1938
  %v1940 = vshrl.u32 %v854, 16
  %v1942 = vor.u32 %v1940, %v1938
  %v1944 = vshll.u32 %v855, 16
  %v1946 = vrot.slane %v1944, 1
  %v1947 = vsel %vm986, %v1942, %v1946
  %v1948 = vshrl.u32 %v855, 16
  %v1950 = vor.u32 %v1948, %v1946
  %v1952 = vshll.u32 %v856, 16
  %v1954 = vrot.slane %v1952, 1
  %v1955 = vsel %vm986, %v1950, %v1954
  %v1956 = vshrl.u32 %v856, 16
  %v1958 = vor.u32 %v1956, %v1954
  %v1960 = vshll.u32 %v857, 16
  %v1962 = vrot.slane %v1960, 1
  %v1963 = vsel %vm986, %v1958, %v1962
  %v1964 = vshrl.u32 %v857, 16
  %v1966 = vor.u32 %v1964, %v1962
  %v1968 = vshll.u32 %v858, 16
  %v1970 = vrot.slane %v1968, 1
  %v1971 = vsel %vm986, %v1966, %v1970
  %v1972 = vshrl.u32 %v858, 16
  %v1974 = vor.u32 %v1972, %v1970
  %v1976 = vshll.u32 %v859, 16
  %v1978 = vrot.slane %v1976, 1
  %v1979 = vsel %vm986, %v1974, %v1978
  %v1980 = vshrl.u32 %v859, 16
  %v1982 = vor.u32 %v1980, %v1978
  %v1984 = vshll.u32 %v860, 16
  %v1986 = vrot.slane %v1984, 1
  %v1987 = vsel %vm986, %v1982, %v1986
  %v1988 = vshrl.u32 %v860, 16
  %v1990 = vor.u32 %v1988, %v1986
  %v1992 = vshll.u32 %v861, 16
  %v1994 = vrot.slane %v1992, 1
  %v1995 = vsel %vm986, %v1990, %v1994
  %v1996 = vshrl.u32 %v861, 16
  %v1998 = vor.u32 %v1996, %v1994
  %v2000 = vshll.u32 %v862, 16
  %v2002 = vrot.slane %v2000, 1
  %v2003 = vsel %vm986, %v1998, %v2002
  %v2004 = vshrl.u32 %v862, 16
  %v2006 = vor.u32 %v2004, %v2002
  %v2008 = vshll.u32 %v863, 16
  %v2010 = vrot.slane %v2008, 1
  %v2011 = vsel %vm986, %v2006, %v2010
  %v2012 = vshrl.u32 %v863, 16
  %v2014 = vor.u32 %v2012, %v2010
  %v2016 = vshll.u32 %v864, 16
  %v2018 = vrot.slane %v2016, 1
  %v2019 = vsel %vm986, %v2014, %v2018
  %v2020 = vshrl.u32 %v864, 16
  %v2022 = vor.u32 %v2020, %v2018
  %v2024 = vshll.u32 %v865, 16
  %v2026 = vrot.slane %v2024, 1
  %v2027 = vsel %vm986, %v2022, %v2026
  %v2028 = vshrl.u32 %v865, 16
  %v2030 = vor.u32 %v2028, %v2026
  %v2032 = vshll.u32 %v866, 16
  %v2034 = vrot.slane %v2032, 1
  %v2035 = vsel %vm986, %v2030, %v2034
  %v2036 = vshrl.u32 %v866, 16
  %v2038 = vor.u32 %v2036, %v2034
  %v2040 = vshll.u32 %v867, 16
  %v2042 = vrot.slane %v2040, 1
  %v2043 = vsel %vm986, %v2038, %v2042
  %v2044 = vshrl.u32 %v867, 16
  %v2046 = vor.u32 %v2044, %v2042
  %2047 = vrot.lane.b32.xlu0 %v1587, 12
  %v2048 = vpop.permute.xlu0 %2047
  %2049 = vrot.lane.b32.xlu0 %v1595, 12
  %v2050 = vpop.permute.xlu0 %2049
  %2051 = vrot.lane.b32.xlu0 %v1603, 12
  %v2052 = vpop.permute.xlu0 %2051
  %2053 = vrot.lane.b32.xlu0 %v1611, 12
  %v2054 = vpop.permute.xlu0 %2053
  %2055 = vrot.lane.b32.xlu0 %v1619, 12
  %v2056 = vpop.permute.xlu0 %2055
  %2057 = vrot.lane.b32.xlu0 %v1627, 12
  %v2058 = vpop.permute.xlu0 %2057
  %2059 = vrot.lane.b32.xlu0 %v1635, 12
  %v2060 = vpop.permute.xlu0 %2059
  %2061 = vrot.lane.b32.xlu0 %v1643, 12
  %v2062 = vpop.permute.xlu0 %2061
  %2063 = vrot.lane.b32.xlu0 %v1651, 12
  %v2064 = vpop.permute.xlu0 %2063
  %2065 = vrot.lane.b32.xlu0 %v1659, 12
  %v2066 = vpop.permute.xlu0 %2065
  %2067 = vrot.lane.b32.xlu0 %v1667, 12
  %v2068 = vpop.permute.xlu0 %2067
  %2069 = vrot.lane.b32.xlu0 %v1675, 12
  %v2070 = vpop.permute.xlu0 %2069
  %2071 = vrot.lane.b32.xlu0 %v1683, 12
  %v2072 = vpop.permute.xlu0 %2071
  %2073 = vrot.lane.b32.xlu0 %v1691, 12
  %v2074 = vpop.permute.xlu0 %2073
  %2075 = vrot.lane.b32.xlu0 %v1699, 12
  %v2076 = vpop.permute.xlu0 %2075
  %2077 = vrot.lane.b32.xlu0 %v1707, 12
  %v2078 = vpop.permute.xlu0 %2077
  %2079 = vrot.lane.b32.xlu0 %v1715, 12
  %v2080 = vpop.permute.xlu0 %2079
  %2081 = vrot.lane.b32.xlu0 %v1723, 12
  %v2082 = vpop.permute.xlu0 %2081
  %2083 = vrot.lane.b32.xlu0 %v1731, 12
  %v2084 = vpop.permute.xlu0 %2083
  %2085 = vrot.lane.b32.xlu0 %v1739, 12
  %v2086 = vpop.permute.xlu0 %2085
  %2087 = vrot.lane.b32.xlu0 %v1747, 12
  %v2088 = vpop.permute.xlu0 %2087
  %2089 = vrot.lane.b32.xlu0 %v1755, 12
  %v2090 = vpop.permute.xlu0 %2089
  %2091 = vrot.lane.b32.xlu0 %v1763, 12
  %v2092 = vpop.permute.xlu0 %2091
  %2093 = vrot.lane.b32.xlu0 %v1771, 12
  %v2094 = vpop.permute.xlu0 %2093
  %2095 = vrot.lane.b32.xlu0 %v1779, 12
  %v2096 = vpop.permute.xlu0 %2095
  %2097 = vrot.lane.b32.xlu0 %v1787, 12
  %v2098 = vpop.permute.xlu0 %2097
  %2099 = vrot.lane.b32.xlu0 %v1795, 12
  %v2100 = vpop.permute.xlu0 %2099
  %2101 = vrot.lane.b32.xlu0 %v1803, 12
  %v2102 = vpop.permute.xlu0 %2101
  %2103 = vrot.lane.b32.xlu0 %v1811, 12
  %v2104 = vpop.permute.xlu0 %2103
  %2105 = vrot.lane.b32.xlu0 %v1819, 12
  %v2106 = vpop.permute.xlu0 %2105
  %2107 = vrot.lane.b32.xlu0 %v1827, 12
  %v2108 = vpop.permute.xlu0 %2107
  %2109 = vrot.lane.b32.xlu0 %v1835, 12
  %v2110 = vpop.permute.xlu0 %2109
  %2111 = vrot.lane.b32.xlu0 %v1843, 12
  %v2112 = vpop.permute.xlu0 %2111
  %2113 = vrot.lane.b32.xlu0 %v1851, 12
  %v2114 = vpop.permute.xlu0 %2113
  %2115 = vrot.lane.b32.xlu0 %v1859, 12
  %v2116 = vpop.permute.xlu0 %2115
  %2117 = vrot.lane.b32.xlu0 %v1867, 12
  %v2118 = vpop.permute.xlu0 %2117
  %2119 = vrot.lane.b32.xlu0 %v1875, 12
  %v2120 = vpop.permute.xlu0 %2119
  %2121 = vrot.lane.b32.xlu0 %v1883, 12
  %v2122 = vpop.permute.xlu0 %2121
  %2123 = vrot.lane.b32.xlu0 %v1891, 12
  %v2124 = vpop.permute.xlu0 %2123
  %2125 = vrot.lane.b32.xlu0 %v1899, 12
  %v2126 = vpop.permute.xlu0 %2125
  %2127 = vrot.lane.b32.xlu0 %v1907, 12
  %v2128 = vpop.permute.xlu0 %2127
  %2129 = vrot.lane.b32.xlu0 %v1915, 12
  %v2130 = vpop.permute.xlu0 %2129
  %2131 = vrot.lane.b32.xlu0 %v1923, 12
  %v2132 = vpop.permute.xlu0 %2131
  %2133 = vrot.lane.b32.xlu0 %v1931, 12
  %v2134 = vpop.permute.xlu0 %2133
  %2135 = vrot.lane.b32.xlu0 %v1939, 12
  %v2136 = vpop.permute.xlu0 %2135
  %2137 = vrot.lane.b32.xlu0 %v1947, 12
  %v2138 = vpop.permute.xlu0 %2137
  %2139 = vrot.lane.b32.xlu0 %v1955, 12
  %v2140 = vpop.permute.xlu0 %2139
  %2141 = vrot.lane.b32.xlu0 %v1963, 12
  %v2142 = vpop.permute.xlu0 %2141
  %2143 = vrot.lane.b32.xlu0 %v1971, 12
  %v2144 = vpop.permute.xlu0 %2143
  %2145 = vrot.lane.b32.xlu0 %v1979, 12
  %v2146 = vpop.permute.xlu0 %2145
  %2147 = vrot.lane.b32.xlu0 %v1987, 12
  %v2148 = vpop.permute.xlu0 %2147
  %2149 = vrot.lane.b32.xlu0 %v1995, 12
  %v2150 = vpop.permute.xlu0 %2149
  %2151 = vrot.lane.b32.xlu0 %v2003, 12
  %v2152 = vpop.permute.xlu0 %2151
  %2153 = vrot.lane.b32.xlu0 %v2011, 12
  %v2154 = vpop.permute.xlu0 %2153
  %2155 = vrot.lane.b32.xlu0 %v2019, 12
  %v2156 = vpop.permute.xlu0 %2155
  %2157 = vrot.lane.b32.xlu0 %v2027, 12
  %v2158 = vpop.permute.xlu0 %2157
  %2159 = vrot.lane.b32.xlu0 %v2035, 12
  %v2160 = vpop.permute.xlu0 %2159
  %2161 = vrot.lane.b32.xlu0 %v2043, 12
  %v2162 = vpop.permute.xlu0 %2161
  %2163 = vrot.lane.b32.xlu0 %v2046, 12
  %v2164 = vpop.permute.xlu0 %2163
  %v2168 = vunpack.c.l.b16 %v276
  %v2169 = vunpack.c.l.b16 %v277
  %v2170 = vunpack.c.l.b16 %v278
  %v2171 = vpack.c.b16 %v403, %v402
  %v2172 = vpack.c.b16 %v405, %v404
  %v2173 = vpack.c.b16 %v407, %v406
  %v2174 = vpack.c.b16 %v409, %v408
  %v2175 = vpack.c.b16 %v411, %v410
  %v2176 = vpack.c.b16 %v413, %v412
  %v2177 = vpack.c.b16 %v415, %v414
  %v2178 = vpack.c.b16 %v417, %v416
  %v2179 = vpack.c.b16 %v419, %v418
  %v2180 = vpack.c.b16 %v421, %v420
  %v2181 = vpack.c.b16 %v423, %v422
  %v2182 = vpack.c.b16 %v425, %v424
  %v2183 = vpack.c.b16 %v427, %v426
  %v2184 = vpack.c.b16 %v429, %v428
  %v2185 = vpack.c.b16 %v431, %v430
  %v2186 = vpack.c.b16 %v433, %v432
  %v2187 = vpack.c.b16 %v435, %v434
  %v2188 = vpack.c.b16 %v437, %v436
  %v2189 = vpack.c.b16 %v439, %v438
  %v2190 = vpack.c.b16 %v441, %v440
  %v2191 = vpack.c.b16 %v443, %v442
  %v2192 = vpack.c.b16 %v445, %v444
  %v2193 = vpack.c.b16 %v447, %v446
  %v2194 = vpack.c.b16 %v449, %v448
  %v2195 = vpack.c.b16 %v451, %v450
  %v2196 = vpack.c.b16 %v453, %v452
  %v2197 = vpack.c.b16 %v455, %v454
  %v2198 = vpack.c.b16 %v457, %v456
  %v2199 = vpack.c.b16 %v459, %v458
  %v2200 = vpack.c.b16 %v461, %v460
  %v2201 = vpack.c.b16 %v463, %v462
  %v2202 = vpack.c.b16 %v465, %v464
  %v2203 = vpack.c.b16 %v467, %v466
  %v2204 = vpack.c.b16 %v469, %v468
  %v2205 = vpack.c.b16 %v471, %v470
  %v2206 = vpack.c.b16 %v473, %v472
  %v2207 = vpack.c.b16 %v475, %v474
  %v2208 = vpack.c.b16 %v477, %v476
  %v2209 = vpack.c.b16 %v479, %v478
  %v2210 = vpack.c.b16 %v481, %v480
  %v2211 = vpack.c.b16 %v483, %v482
  %v2212 = vpack.c.b16 %v485, %v484
  %v2213 = vpack.c.b16 %v487, %v486
  %v2214 = vpack.c.b16 %v489, %v488
  %v2215 = vpack.c.b16 %v491, %v490
  %v2216 = vpack.c.b16 %v493, %v492
  %v2217 = vpack.c.b16 %v495, %v494
  %v2218 = vpack.c.b16 %v497, %v496
  %v2219 = vpack.c.b16 %v499, %v498
  %v2220 = vpack.c.b16 %v501, %v500
  %v2221 = vpack.c.b16 %v503, %v502
  %v2222 = vpack.c.b16 %v505, %v504
  %v2223 = vpack.c.b16 %v507, %v506
  %v2224 = vpack.c.b16 %v509, %v508
  %v2225 = vpack.c.b16 %v511, %v510
  %v2226 = vpack.c.b16 %v513, %v512
  %v2227 = vpack.c.b16 %v515, %v514
  %v2228 = vpack.c.b16 %v2169, %v2168
  %v2229 = vpack.c.b16 %v2170, %v2170
  %2230 = vrot.lane.b32.xlu0 %v2171, 16
  %v2231 = vpop.permute.xlu0 %2230
  %2232 = vrot.lane.b32.xlu0 %v2172, 16
  %v2233 = vpop.permute.xlu0 %2232
  %2234 = vrot.lane.b32.xlu0 %v2173, 16
  %v2235 = vpop.permute.xlu0 %2234
  %2236 = vrot.lane.b32.xlu0 %v2174, 16
  %v2237 = vpop.permute.xlu0 %2236
  %2238 = vrot.lane.b32.xlu0 %v2175, 16
  %v2239 = vpop.permute.xlu0 %2238
  %2240 = vrot.lane.b32.xlu0 %v2176, 16
  %v2241 = vpop.permute.xlu0 %2240
  %2242 = vrot.lane.b32.xlu0 %v2177, 16
  %v2243 = vpop.permute.xlu0 %2242
  %2244 = vrot.lane.b32.xlu0 %v2178, 16
  %v2245 = vpop.permute.xlu0 %2244
  %2246 = vrot.lane.b32.xlu0 %v2179, 16
  %v2247 = vpop.permute.xlu0 %2246
  %2248 = vrot.lane.b32.xlu0 %v2180, 16
  %v2249 = vpop.permute.xlu0 %2248
  %2250 = vrot.lane.b32.xlu0 %v2181, 16
  %v2251 = vpop.permute.xlu0 %2250
  %2252 = vrot.lane.b32.xlu0 %v2182, 16
  %v2253 = vpop.permute.xlu0 %2252
  %2254 = vrot.lane.b32.xlu0 %v2183, 16
  %v2255 = vpop.permute.xlu0 %2254
  %2256 = vrot.lane.b32.xlu0 %v2184, 16
  %v2257 = vpop.permute.xlu0 %2256
  %2258 = vrot.lane.b32.xlu0 %v2185, 16
  %v2259 = vpop.permute.xlu0 %2258
  %2260 = vrot.lane.b32.xlu0 %v2186, 16
  %v2261 = vpop.permute.xlu0 %2260
  %2262 = vrot.lane.b32.xlu0 %v2187, 16
  %v2263 = vpop.permute.xlu0 %2262
  %2264 = vrot.lane.b32.xlu0 %v2188, 16
  %v2265 = vpop.permute.xlu0 %2264
  %2266 = vrot.lane.b32.xlu0 %v2189, 16
  %v2267 = vpop.permute.xlu0 %2266
  %2268 = vrot.lane.b32.xlu0 %v2190, 16
  %v2269 = vpop.permute.xlu0 %2268
  %2270 = vrot.lane.b32.xlu0 %v2191, 16
  %v2271 = vpop.permute.xlu0 %2270
  %2272 = vrot.lane.b32.xlu0 %v2192, 16
  %v2273 = vpop.permute.xlu0 %2272
  %2274 = vrot.lane.b32.xlu0 %v2193, 16
  %v2275 = vpop.permute.xlu0 %2274
  %2276 = vrot.lane.b32.xlu0 %v2194, 16
  %v2277 = vpop.permute.xlu0 %2276
  %2278 = vrot.lane.b32.xlu0 %v2195, 16
  %v2279 = vpop.permute.xlu0 %2278
  %2280 = vrot.lane.b32.xlu0 %v2196, 16
  %v2281 = vpop.permute.xlu0 %2280
  %2282 = vrot.lane.b32.xlu0 %v2197, 16
  %v2283 = vpop.permute.xlu0 %2282
  %2284 = vrot.lane.b32.xlu0 %v2198, 16
  %v2285 = vpop.permute.xlu0 %2284
  %2286 = vrot.lane.b32.xlu0 %v2199, 16
  %v2287 = vpop.permute.xlu0 %2286
  %2288 = vrot.lane.b32.xlu0 %v2200, 16
  %v2289 = vpop.permute.xlu0 %2288
  %2290 = vrot.lane.b32.xlu0 %v2201, 16
  %v2291 = vpop.permute.xlu0 %2290
  %2292 = vrot.lane.b32.xlu0 %v2202, 16
  %v2293 = vpop.permute.xlu0 %2292
  %2294 = vrot.lane.b32.xlu0 %v2203, 16
  %v2295 = vpop.permute.xlu0 %2294
  %2296 = vrot.lane.b32.xlu0 %v2204, 16
  %v2297 = vpop.permute.xlu0 %2296
  %2298 = vrot.lane.b32.xlu0 %v2205, 16
  %v2299 = vpop.permute.xlu0 %2298
  %2300 = vrot.lane.b32.xlu0 %v2206, 16
  %v2301 = vpop.permute.xlu0 %2300
  %2302 = vrot.lane.b32.xlu0 %v2207, 16
  %v2303 = vpop.permute.xlu0 %2302
  %2304 = vrot.lane.b32.xlu0 %v2208, 16
  %v2305 = vpop.permute.xlu0 %2304
  %2306 = vrot.lane.b32.xlu0 %v2209, 16
  %v2307 = vpop.permute.xlu0 %2306
  %2308 = vrot.lane.b32.xlu0 %v2210, 16
  %v2309 = vpop.permute.xlu0 %2308
  %2310 = vrot.lane.b32.xlu0 %v2211, 16
  %v2311 = vpop.permute.xlu0 %2310
  %2312 = vrot.lane.b32.xlu0 %v2212, 16
  %v2313 = vpop.permute.xlu0 %2312
  %2314 = vrot.lane.b32.xlu0 %v2213, 16
  %v2315 = vpop.permute.xlu0 %2314
  %2316 = vrot.lane.b32.xlu0 %v2214, 16
  %v2317 = vpop.permute.xlu0 %2316
  %2318 = vrot.lane.b32.xlu0 %v2215, 16
  %v2319 = vpop.permute.xlu0 %2318
  %2320 = vrot.lane.b32.xlu0 %v2216, 16
  %v2321 = vpop.permute.xlu0 %2320
  %2322 = vrot.lane.b32.xlu0 %v2217, 16
  %v2323 = vpop.permute.xlu0 %2322
  %2324 = vrot.lane.b32.xlu0 %v2218, 16
  %v2325 = vpop.permute.xlu0 %2324
  %2326 = vrot.lane.b32.xlu0 %v2219, 16
  %v2327 = vpop.permute.xlu0 %2326
  %2328 = vrot.lane.b32.xlu0 %v2220, 16
  %v2329 = vpop.permute.xlu0 %2328
  %2330 = vrot.lane.b32.xlu0 %v2221, 16
  %v2331 = vpop.permute.xlu0 %2330
  %2332 = vrot.lane.b32.xlu0 %v2222, 16
  %v2333 = vpop.permute.xlu0 %2332
  %2334 = vrot.lane.b32.xlu0 %v2223, 16
  %v2335 = vpop.permute.xlu0 %2334
  %2336 = vrot.lane.b32.xlu0 %v2224, 16
  %v2337 = vpop.permute.xlu0 %2336
  %2338 = vrot.lane.b32.xlu0 %v2225, 16
  %v2339 = vpop.permute.xlu0 %2338
  %2340 = vrot.lane.b32.xlu0 %v2226, 16
  %v2341 = vpop.permute.xlu0 %2340
  %2342 = vrot.lane.b32.xlu0 %v2227, 16
  %v2343 = vpop.permute.xlu0 %2342
  %2344 = vrot.lane.b32.xlu0 %v2228, 16
  %v2345 = vpop.permute.xlu0 %2344
  %2346 = vrot.lane.b32.xlu0 %v2229, 16
  %v2347 = vpop.permute.xlu0 %2346
  %v2351 = vunpack.c.l.b16 %v279
  %v2352 = vunpack.c.l.b16 %v280
  %v2353 = vunpack.c.l.b16 %v281
  %v2354 = vpack.c.b16 %v696, %v695
  %v2355 = vpack.c.b16 %v698, %v697
  %v2356 = vpack.c.b16 %v700, %v699
  %v2357 = vpack.c.b16 %v702, %v701
  %v2358 = vpack.c.b16 %v704, %v703
  %v2359 = vpack.c.b16 %v706, %v705
  %v2360 = vpack.c.b16 %v708, %v707
  %v2361 = vpack.c.b16 %v710, %v709
  %v2362 = vpack.c.b16 %v712, %v711
  %v2363 = vpack.c.b16 %v714, %v713
  %v2364 = vpack.c.b16 %v716, %v715
  %v2365 = vpack.c.b16 %v718, %v717
  %v2366 = vpack.c.b16 %v720, %v719
  %v2367 = vpack.c.b16 %v722, %v721
  %v2368 = vpack.c.b16 %v724, %v723
  %v2369 = vpack.c.b16 %v726, %v725
  %v2370 = vpack.c.b16 %v728, %v727
  %v2371 = vpack.c.b16 %v730, %v729
  %v2372 = vpack.c.b16 %v732, %v731
  %v2373 = vpack.c.b16 %v734, %v733
  %v2374 = vpack.c.b16 %v736, %v735
  %v2375 = vpack.c.b16 %v738, %v737
  %v2376 = vpack.c.b16 %v740, %v739
  %v2377 = vpack.c.b16 %v742, %v741
  %v2378 = vpack.c.b16 %v744, %v743
  %v2379 = vpack.c.b16 %v746, %v745
  %v2380 = vpack.c.b16 %v748, %v747
  %v2381 = vpack.c.b16 %v750, %v749
  %v2382 = vpack.c.b16 %v752, %v751
  %v2383 = vpack.c.b16 %v754, %v753
  %v2384 = vpack.c.b16 %v756, %v755
  %v2385 = vpack.c.b16 %v758, %v757
  %v2386 = vpack.c.b16 %v760, %v759
  %v2387 = vpack.c.b16 %v762, %v761
  %v2388 = vpack.c.b16 %v764, %v763
  %v2389 = vpack.c.b16 %v766, %v765
  %v2390 = vpack.c.b16 %v768, %v767
  %v2391 = vpack.c.b16 %v770, %v769
  %v2392 = vpack.c.b16 %v772, %v771
  %v2393 = vpack.c.b16 %v774, %v773
  %v2394 = vpack.c.b16 %v776, %v775
  %v2395 = vpack.c.b16 %v778, %v777
  %v2396 = vpack.c.b16 %v780, %v779
  %v2397 = vpack.c.b16 %v782, %v781
  %v2398 = vpack.c.b16 %v784, %v783
  %v2399 = vpack.c.b16 %v786, %v785
  %v2400 = vpack.c.b16 %v788, %v787
  %v2401 = vpack.c.b16 %v790, %v789
  %v2402 = vpack.c.b16 %v792, %v791
  %v2403 = vpack.c.b16 %v794, %v793
  %v2404 = vpack.c.b16 %v796, %v795
  %v2405 = vpack.c.b16 %v798, %v797
  %v2406 = vpack.c.b16 %v800, %v799
  %v2407 = vpack.c.b16 %v802, %v801
  %v2408 = vpack.c.b16 %v804, %v803
  %v2409 = vpack.c.b16 %v806, %v805
  %v2410 = vpack.c.b16 %v808, %v807
  %v2411 = vpack.c.b16 %v2352, %v2351
  %v2412 = vpack.c.b16 %v2353, %v2353
  %2413 = vrot.lane.b32.xlu0 %v2354, 20
  %v2414 = vpop.permute.xlu0 %2413
  %2415 = vrot.lane.b32.xlu0 %v2355, 20
  %v2416 = vpop.permute.xlu0 %2415
  %2417 = vrot.lane.b32.xlu0 %v2356, 20
  %v2418 = vpop.permute.xlu0 %2417
  %2419 = vrot.lane.b32.xlu0 %v2357, 20
  %v2420 = vpop.permute.xlu0 %2419
  %2421 = vrot.lane.b32.xlu0 %v2358, 20
  %v2422 = vpop.permute.xlu0 %2421
  %2423 = vrot.lane.b32.xlu0 %v2359, 20
  %v2424 = vpop.permute.xlu0 %2423
  %2425 = vrot.lane.b32.xlu0 %v2360, 20
  %v2426 = vpop.permute.xlu0 %2425
  %2427 = vrot.lane.b32.xlu0 %v2361, 20
  %v2428 = vpop.permute.xlu0 %2427
  %2429 = vrot.lane.b32.xlu0 %v2362, 20
  %v2430 = vpop.permute.xlu0 %2429
  %2431 = vrot.lane.b32.xlu0 %v2363, 20
  %v2432 = vpop.permute.xlu0 %2431
  %2433 = vrot.lane.b32.xlu0 %v2364, 20
  %v2434 = vpop.permute.xlu0 %2433
  %2435 = vrot.lane.b32.xlu0 %v2365, 20
  %v2436 = vpop.permute.xlu0 %2435
  %2437 = vrot.lane.b32.xlu0 %v2366, 20
  %v2438 = vpop.permute.xlu0 %2437
  %2439 = vrot.lane.b32.xlu0 %v2367, 20
  %v2440 = vpop.permute.xlu0 %2439
  %2441 = vrot.lane.b32.xlu0 %v2368, 20
  %v2442 = vpop.permute.xlu0 %2441
  %2443 = vrot.lane.b32.xlu0 %v2369, 20
  %v2444 = vpop.permute.xlu0 %2443
  %2445 = vrot.lane.b32.xlu0 %v2370, 20
  %v2446 = vpop.permute.xlu0 %2445
  %2447 = vrot.lane.b32.xlu0 %v2371, 20
  %v2448 = vpop.permute.xlu0 %2447
  %2449 = vrot.lane.b32.xlu0 %v2372, 20
  %v2450 = vpop.permute.xlu0 %2449
  %2451 = vrot.lane.b32.xlu0 %v2373, 20
  %v2452 = vpop.permute.xlu0 %2451
  %2453 = vrot.lane.b32.xlu0 %v2374, 20
  %v2454 = vpop.permute.xlu0 %2453
  %2455 = vrot.lane.b32.xlu0 %v2375, 20
  %v2456 = vpop.permute.xlu0 %2455
  %2457 = vrot.lane.b32.xlu0 %v2376, 20
  %v2458 = vpop.permute.xlu0 %2457
  %2459 = vrot.lane.b32.xlu0 %v2377, 20
  %v2460 = vpop.permute.xlu0 %2459
  %2461 = vrot.lane.b32.xlu0 %v2378, 20
  %v2462 = vpop.permute.xlu0 %2461
  %2463 = vrot.lane.b32.xlu0 %v2379, 20
  %v2464 = vpop.permute.xlu0 %2463
  %2465 = vrot.lane.b32.xlu0 %v2380, 20
  %v2466 = vpop.permute.xlu0 %2465
  %2467 = vrot.lane.b32.xlu0 %v2381, 20
  %v2468 = vpop.permute.xlu0 %2467
  %2469 = vrot.lane.b32.xlu0 %v2382, 20
  %v2470 = vpop.permute.xlu0 %2469
  %2471 = vrot.lane.b32.xlu0 %v2383, 20
  %v2472 = vpop.permute.xlu0 %2471
  %2473 = vrot.lane.b32.xlu0 %v2384, 20
  %v2474 = vpop.permute.xlu0 %2473
  %2475 = vrot.lane.b32.xlu0 %v2385, 20
  %v2476 = vpop.permute.xlu0 %2475
  %2477 = vrot.lane.b32.xlu0 %v2386, 20
  %v2478 = vpop.permute.xlu0 %2477
  %2479 = vrot.lane.b32.xlu0 %v2387, 20
  %v2480 = vpop.permute.xlu0 %2479
  %2481 = vrot.lane.b32.xlu0 %v2388, 20
  %v2482 = vpop.permute.xlu0 %2481
  %2483 = vrot.lane.b32.xlu0 %v2389, 20
  %v2484 = vpop.permute.xlu0 %2483
  %2485 = vrot.lane.b32.xlu0 %v2390, 20
  %v2486 = vpop.permute.xlu0 %2485
  %2487 = vrot.lane.b32.xlu0 %v2391, 20
  %v2488 = vpop.permute.xlu0 %2487
  %2489 = vrot.lane.b32.xlu0 %v2392, 20
  %v2490 = vpop.permute.xlu0 %2489
  %2491 = vrot.lane.b32.xlu0 %v2393, 20
  %v2492 = vpop.permute.xlu0 %2491
  %2493 = vrot.lane.b32.xlu0 %v2394, 20
  %v2494 = vpop.permute.xlu0 %2493
  %2495 = vrot.lane.b32.xlu0 %v2395, 20
  %v2496 = vpop.permute.xlu0 %2495
  %2497 = vrot.lane.b32.xlu0 %v2396, 20
  %v2498 = vpop.permute.xlu0 %2497
  %2499 = vrot.lane.b32.xlu0 %v2397, 20
  %v2500 = vpop.permute.xlu0 %2499
  %2501 = vrot.lane.b32.xlu0 %v2398, 20
  %v2502 = vpop.permute.xlu0 %2501
  %2503 = vrot.lane.b32.xlu0 %v2399, 20
  %v2504 = vpop.permute.xlu0 %2503
  %2505 = vrot.lane.b32.xlu0 %v2400, 20
  %v2506 = vpop.permute.xlu0 %2505
  %2507 = vrot.lane.b32.xlu0 %v2401, 20
  %v2508 = vpop.permute.xlu0 %2507
  %2509 = vrot.lane.b32.xlu0 %v2402, 20
  %v2510 = vpop.permute.xlu0 %2509
  %2511 = vrot.lane.b32.xlu0 %v2403, 20
  %v2512 = vpop.permute.xlu0 %2511
  %2513 = vrot.lane.b32.xlu0 %v2404, 20
  %v2514 = vpop.permute.xlu0 %2513
  %2515 = vrot.lane.b32.xlu0 %v2405, 20
  %v2516 = vpop.permute.xlu0 %2515
  %2517 = vrot.lane.b32.xlu0 %v2406, 20
  %v2518 = vpop.permute.xlu0 %2517
  %2519 = vrot.lane.b32.xlu0 %v2407, 20
  %v2520 = vpop.permute.xlu0 %2519
  %2521 = vrot.lane.b32.xlu0 %v2408, 20
  %v2522 = vpop.permute.xlu0 %2521
  %2523 = vrot.lane.b32.xlu0 %v2409, 20
  %v2524 = vpop.permute.xlu0 %2523
  %2525 = vrot.lane.b32.xlu0 %v2410, 20
  %v2526 = vpop.permute.xlu0 %2525
  %2527 = vrot.lane.b32.xlu0 %v2411, 20
  %v2528 = vpop.permute.xlu0 %2527
  %2529 = vrot.lane.b32.xlu0 %v2412, 20
  %v2530 = vpop.permute.xlu0 %2529
  %v2532 = vshrl.u32 %v2171, 16
  %v2534 = vshll.u32 %v2171, 16
  %v2536 = vrot.slane %v2534, 1
  %v2537 = vor.u32 %v2532, %v2536
  %v2539 = vshll.u32 %v2172, 16
  %v2541 = vrot.slane %v2539, 1
  %v2542 = vsel %vm986, %v2537, %v2541
  %v2543 = vshrl.u32 %v2172, 16
  %v2545 = vor.u32 %v2543, %v2541
  %v2547 = vshll.u32 %v2173, 16
  %v2549 = vrot.slane %v2547, 1
  %v2550 = vsel %vm986, %v2545, %v2549
  %v2551 = vshrl.u32 %v2173, 16
  %v2553 = vor.u32 %v2551, %v2549
  %v2555 = vshll.u32 %v2174, 16
  %v2557 = vrot.slane %v2555, 1
  %v2558 = vsel %vm986, %v2553, %v2557
  %v2559 = vshrl.u32 %v2174, 16
  %v2561 = vor.u32 %v2559, %v2557
  %v2563 = vshll.u32 %v2175, 16
  %v2565 = vrot.slane %v2563, 1
  %v2566 = vsel %vm986, %v2561, %v2565
  %v2567 = vshrl.u32 %v2175, 16
  %v2569 = vor.u32 %v2567, %v2565
  %v2571 = vshll.u32 %v2176, 16
  %v2573 = vrot.slane %v2571, 1
  %v2574 = vsel %vm986, %v2569, %v2573
  %v2575 = vshrl.u32 %v2176, 16
  %v2577 = vor.u32 %v2575, %v2573
  %v2579 = vshll.u32 %v2177, 16
  %v2581 = vrot.slane %v2579, 1
  %v2582 = vsel %vm986, %v2577, %v2581
  %v2583 = vshrl.u32 %v2177, 16
  %v2585 = vor.u32 %v2583, %v2581
  %v2587 = vshll.u32 %v2178, 16
  %v2589 = vrot.slane %v2587, 1
  %v2590 = vsel %vm986, %v2585, %v2589
  %v2591 = vshrl.u32 %v2178, 16
  %v2593 = vor.u32 %v2591, %v2589
  %v2595 = vshll.u32 %v2179, 16
  %v2597 = vrot.slane %v2595, 1
  %v2598 = vsel %vm986, %v2593, %v2597
  %v2599 = vshrl.u32 %v2179, 16
  %v2601 = vor.u32 %v2599, %v2597
  %v2603 = vshll.u32 %v2180, 16
  %v2605 = vrot.slane %v2603, 1
  %v2606 = vsel %vm986, %v2601, %v2605
  %v2607 = vshrl.u32 %v2180, 16
  %v2609 = vor.u32 %v2607, %v2605
  %v2611 = vshll.u32 %v2181, 16
  %v2613 = vrot.slane %v2611, 1
  %v2614 = vsel %vm986, %v2609, %v2613
  %v2615 = vshrl.u32 %v2181, 16
  %v2617 = vor.u32 %v2615, %v2613
  %v2619 = vshll.u32 %v2182, 16
  %v2621 = vrot.slane %v2619, 1
  %v2622 = vsel %vm986, %v2617, %v2621
  %v2623 = vshrl.u32 %v2182, 16
  %v2625 = vor.u32 %v2623, %v2621
  %v2627 = vshll.u32 %v2183, 16
  %v2629 = vrot.slane %v2627, 1
  %v2630 = vsel %vm986, %v2625, %v2629
  %v2631 = vshrl.u32 %v2183, 16
  %v2633 = vor.u32 %v2631, %v2629
  %v2635 = vshll.u32 %v2184, 16
  %v2637 = vrot.slane %v2635, 1
  %v2638 = vsel %vm986, %v2633, %v2637
  %v2639 = vshrl.u32 %v2184, 16
  %v2641 = vor.u32 %v2639, %v2637
  %v2643 = vshll.u32 %v2185, 16
  %v2645 = vrot.slane %v2643, 1
  %v2646 = vsel %vm986, %v2641, %v2645
  %v2647 = vshrl.u32 %v2185, 16
  %v2649 = vor.u32 %v2647, %v2645
  %v2651 = vshll.u32 %v2186, 16
  %v2653 = vrot.slane %v2651, 1
  %v2654 = vsel %vm986, %v2649, %v2653
  %v2655 = vshrl.u32 %v2186, 16
  %v2657 = vor.u32 %v2655, %v2653
  %v2659 = vshll.u32 %v2187, 16
  %v2661 = vrot.slane %v2659, 1
  %v2662 = vsel %vm986, %v2657, %v2661
  %v2663 = vshrl.u32 %v2187, 16
  %v2665 = vor.u32 %v2663, %v2661
  %v2667 = vshll.u32 %v2188, 16
  %v2669 = vrot.slane %v2667, 1
  %v2670 = vsel %vm986, %v2665, %v2669
  %v2671 = vshrl.u32 %v2188, 16
  %v2673 = vor.u32 %v2671, %v2669
  %v2675 = vshll.u32 %v2189, 16
  %v2677 = vrot.slane %v2675, 1
  %v2678 = vsel %vm986, %v2673, %v2677
  %v2679 = vshrl.u32 %v2189, 16
  %v2681 = vor.u32 %v2679, %v2677
  %v2683 = vshll.u32 %v2190, 16
  %v2685 = vrot.slane %v2683, 1
  %v2686 = vsel %vm986, %v2681, %v2685
  %v2687 = vshrl.u32 %v2190, 16
  %v2689 = vor.u32 %v2687, %v2685
  %v2691 = vshll.u32 %v2191, 16
  %v2693 = vrot.slane %v2691, 1
  %v2694 = vsel %vm986, %v2689, %v2693
  %v2695 = vshrl.u32 %v2191, 16
  %v2697 = vor.u32 %v2695, %v2693
  %v2699 = vshll.u32 %v2192, 16
  %v2701 = vrot.slane %v2699, 1
  %v2702 = vsel %vm986, %v2697, %v2701
  %v2703 = vshrl.u32 %v2192, 16
  %v2705 = vor.u32 %v2703, %v2701
  %v2707 = vshll.u32 %v2193, 16
  %v2709 = vrot.slane %v2707, 1
  %v2710 = vsel %vm986, %v2705, %v2709
  %v2711 = vshrl.u32 %v2193, 16
  %v2713 = vor.u32 %v2711, %v2709
  %v2715 = vshll.u32 %v2194, 16
  %v2717 = vrot.slane %v2715, 1
  %v2718 = vsel %vm986, %v2713, %v2717
  %v2719 = vshrl.u32 %v2194, 16
  %v2721 = vor.u32 %v2719, %v2717
  %v2723 = vshll.u32 %v2195, 16
  %v2725 = vrot.slane %v2723, 1
  %v2726 = vsel %vm986, %v2721, %v2725
  %v2727 = vshrl.u32 %v2195, 16
  %v2729 = vor.u32 %v2727, %v2725
  %v2731 = vshll.u32 %v2196, 16
  %v2733 = vrot.slane %v2731, 1
  %v2734 = vsel %vm986, %v2729, %v2733
  %v2735 = vshrl.u32 %v2196, 16
  %v2737 = vor.u32 %v2735, %v2733
  %v2739 = vshll.u32 %v2197, 16
  %v2741 = vrot.slane %v2739, 1
  %v2742 = vsel %vm986, %v2737, %v2741
  %v2743 = vshrl.u32 %v2197, 16
  %v2745 = vor.u32 %v2743, %v2741
  %v2747 = vshll.u32 %v2198, 16
  %v2749 = vrot.slane %v2747, 1
  %v2750 = vsel %vm986, %v2745, %v2749
  %v2751 = vshrl.u32 %v2198, 16
  %v2753 = vor.u32 %v2751, %v2749
  %v2755 = vshll.u32 %v2199, 16
  %v2757 = vrot.slane %v2755, 1
  %v2758 = vsel %vm986, %v2753, %v2757
  %v2759 = vshrl.u32 %v2199, 16
  %v2761 = vor.u32 %v2759, %v2757
  %v2763 = vshll.u32 %v2200, 16
  %v2765 = vrot.slane %v2763, 1
  %v2766 = vsel %vm986, %v2761, %v2765
  %v2767 = vshrl.u32 %v2200, 16
  %v2769 = vor.u32 %v2767, %v2765
  %v2771 = vshll.u32 %v2201, 16
  %v2773 = vrot.slane %v2771, 1
  %v2774 = vsel %vm986, %v2769, %v2773
  %v2775 = vshrl.u32 %v2201, 16
  %v2777 = vor.u32 %v2775, %v2773
  %v2779 = vshll.u32 %v2202, 16
  %v2781 = vrot.slane %v2779, 1
  %v2782 = vsel %vm986, %v2777, %v2781
  %v2783 = vshrl.u32 %v2202, 16
  %v2785 = vor.u32 %v2783, %v2781
  %v2787 = vshll.u32 %v2203, 16
  %v2789 = vrot.slane %v2787, 1
  %v2790 = vsel %vm986, %v2785, %v2789
  %v2791 = vshrl.u32 %v2203, 16
  %v2793 = vor.u32 %v2791, %v2789
  %v2795 = vshll.u32 %v2204, 16
  %v2797 = vrot.slane %v2795, 1
  %v2798 = vsel %vm986, %v2793, %v2797
  %v2799 = vshrl.u32 %v2204, 16
  %v2801 = vor.u32 %v2799, %v2797
  %v2803 = vshll.u32 %v2205, 16
  %v2805 = vrot.slane %v2803, 1
  %v2806 = vsel %vm986, %v2801, %v2805
  %v2807 = vshrl.u32 %v2205, 16
  %v2809 = vor.u32 %v2807, %v2805
  %v2811 = vshll.u32 %v2206, 16
  %v2813 = vrot.slane %v2811, 1
  %v2814 = vsel %vm986, %v2809, %v2813
  %v2815 = vshrl.u32 %v2206, 16
  %v2817 = vor.u32 %v2815, %v2813
  %v2819 = vshll.u32 %v2207, 16
  %v2821 = vrot.slane %v2819, 1
  %v2822 = vsel %vm986, %v2817, %v2821
  %v2823 = vshrl.u32 %v2207, 16
  %v2825 = vor.u32 %v2823, %v2821
  %v2827 = vshll.u32 %v2208, 16
  %v2829 = vrot.slane %v2827, 1
  %v2830 = vsel %vm986, %v2825, %v2829
  %v2831 = vshrl.u32 %v2208, 16
  %v2833 = vor.u32 %v2831, %v2829
  %v2835 = vshll.u32 %v2209, 16
  %v2837 = vrot.slane %v2835, 1
  %v2838 = vsel %vm986, %v2833, %v2837
  %v2839 = vshrl.u32 %v2209, 16
  %v2841 = vor.u32 %v2839, %v2837
  %v2843 = vshll.u32 %v2210, 16
  %v2845 = vrot.slane %v2843, 1
  %v2846 = vsel %vm986, %v2841, %v2845
  %v2847 = vshrl.u32 %v2210, 16
  %v2849 = vor.u32 %v2847, %v2845
  %v2851 = vshll.u32 %v2211, 16
  %v2853 = vrot.slane %v2851, 1
  %v2854 = vsel %vm986, %v2849, %v2853
  %v2855 = vshrl.u32 %v2211, 16
  %v2857 = vor.u32 %v2855, %v2853
  %v2859 = vshll.u32 %v2212, 16
  %v2861 = vrot.slane %v2859, 1
  %v2862 = vsel %vm986, %v2857, %v2861
  %v2863 = vshrl.u32 %v2212, 16
  %v2865 = vor.u32 %v2863, %v2861
  %v2867 = vshll.u32 %v2213, 16
  %v2869 = vrot.slane %v2867, 1
  %v2870 = vsel %vm986, %v2865, %v2869
  %v2871 = vshrl.u32 %v2213, 16
  %v2873 = vor.u32 %v2871, %v2869
  %v2875 = vshll.u32 %v2214, 16
  %v2877 = vrot.slane %v2875, 1
  %v2878 = vsel %vm986, %v2873, %v2877
  %v2879 = vshrl.u32 %v2214, 16
  %v2881 = vor.u32 %v2879, %v2877
  %v2883 = vshll.u32 %v2215, 16
  %v2885 = vrot.slane %v2883, 1
  %v2886 = vsel %vm986, %v2881, %v2885
  %v2887 = vshrl.u32 %v2215, 16
  %v2889 = vor.u32 %v2887, %v2885
  %v2891 = vshll.u32 %v2216, 16
  %v2893 = vrot.slane %v2891, 1
  %v2894 = vsel %vm986, %v2889, %v2893
  %v2895 = vshrl.u32 %v2216, 16
  %v2897 = vor.u32 %v2895, %v2893
  %v2899 = vshll.u32 %v2217, 16
  %v2901 = vrot.slane %v2899, 1
  %v2902 = vsel %vm986, %v2897, %v2901
  %v2903 = vshrl.u32 %v2217, 16
  %v2905 = vor.u32 %v2903, %v2901
  %v2907 = vshll.u32 %v2218, 16
  %v2909 = vrot.slane %v2907, 1
  %v2910 = vsel %vm986, %v2905, %v2909
  %v2911 = vshrl.u32 %v2218, 16
  %v2913 = vor.u32 %v2911, %v2909
  %v2915 = vshll.u32 %v2219, 16
  %v2917 = vrot.slane %v2915, 1
  %v2918 = vsel %vm986, %v2913, %v2917
  %v2919 = vshrl.u32 %v2219, 16
  %v2921 = vor.u32 %v2919, %v2917
  %v2923 = vshll.u32 %v2220, 16
  %v2925 = vrot.slane %v2923, 1
  %v2926 = vsel %vm986, %v2921, %v2925
  %v2927 = vshrl.u32 %v2220, 16
  %v2929 = vor.u32 %v2927, %v2925
  %v2931 = vshll.u32 %v2221, 16
  %v2933 = vrot.slane %v2931, 1
  %v2934 = vsel %vm986, %v2929, %v2933
  %v2935 = vshrl.u32 %v2221, 16
  %v2937 = vor.u32 %v2935, %v2933
  %v2939 = vshll.u32 %v2222, 16
  %v2941 = vrot.slane %v2939, 1
  %v2942 = vsel %vm986, %v2937, %v2941
  %v2943 = vshrl.u32 %v2222, 16
  %v2945 = vor.u32 %v2943, %v2941
  %v2947 = vshll.u32 %v2223, 16
  %v2949 = vrot.slane %v2947, 1
  %v2950 = vsel %vm986, %v2945, %v2949
  %v2951 = vshrl.u32 %v2223, 16
  %v2953 = vor.u32 %v2951, %v2949
  %v2955 = vshll.u32 %v2224, 16
  %v2957 = vrot.slane %v2955, 1
  %v2958 = vsel %vm986, %v2953, %v2957
  %v2959 = vshrl.u32 %v2224, 16
  %v2961 = vor.u32 %v2959, %v2957
  %v2963 = vshll.u32 %v2225, 16
  %v2965 = vrot.slane %v2963, 1
  %v2966 = vsel %vm986, %v2961, %v2965
  %v2967 = vshrl.u32 %v2225, 16
  %v2969 = vor.u32 %v2967, %v2965
  %v2971 = vshll.u32 %v2226, 16
  %v2973 = vrot.slane %v2971, 1
  %v2974 = vsel %vm986, %v2969, %v2973
  %v2975 = vshrl.u32 %v2226, 16
  %v2977 = vor.u32 %v2975, %v2973
  %v2979 = vshll.u32 %v2227, 16
  %v2981 = vrot.slane %v2979, 1
  %v2982 = vsel %vm986, %v2977, %v2981
  %v2983 = vshrl.u32 %v2227, 16
  %v2985 = vor.u32 %v2983, %v2981
  %v2987 = vshll.u32 %v2228, 16
  %v2989 = vrot.slane %v2987, 1
  %v2990 = vsel %vm986, %v2985, %v2989
  %v2991 = vshrl.u32 %v2228, 16
  %v2993 = vor.u32 %v2991, %v2989
  %v2995 = vshll.u32 %v2229, 16
  %v2997 = vrot.slane %v2995, 1
  %v2998 = vsel %vm986, %v2993, %v2997
  %v2999 = vshrl.u32 %v2229, 16
  %v3001 = vor.u32 %v2999, %v2997
  %3002 = vrot.lane.b32.xlu0 %v2542, 24
  %v3003 = vpop.permute.xlu0 %3002
  %3004 = vrot.lane.b32.xlu0 %v2550, 24
  %v3005 = vpop.permute.xlu0 %3004
  %3006 = vrot.lane.b32.xlu0 %v2558, 24
  %v3007 = vpop.permute.xlu0 %3006
  %3008 = vrot.lane.b32.xlu0 %v2566, 24
  %v3009 = vpop.permute.xlu0 %3008
  %3010 = vrot.lane.b32.xlu0 %v2574, 24
  %v3011 = vpop.permute.xlu0 %3010
  %3012 = vrot.lane.b32.xlu0 %v2582, 24
  %v3013 = vpop.permute.xlu0 %3012
  %3014 = vrot.lane.b32.xlu0 %v2590, 24
  %v3015 = vpop.permute.xlu0 %3014
  %3016 = vrot.lane.b32.xlu0 %v2598, 24
  %v3017 = vpop.permute.xlu0 %3016
  %3018 = vrot.lane.b32.xlu0 %v2606, 24
  %v3019 = vpop.permute.xlu0 %3018
  %3020 = vrot.lane.b32.xlu0 %v2614, 24
  %v3021 = vpop.permute.xlu0 %3020
  %3022 = vrot.lane.b32.xlu0 %v2622, 24
  %v3023 = vpop.permute.xlu0 %3022
  %3024 = vrot.lane.b32.xlu0 %v2630, 24
  %v3025 = vpop.permute.xlu0 %3024
  %3026 = vrot.lane.b32.xlu0 %v2638, 24
  %v3027 = vpop.permute.xlu0 %3026
  %3028 = vrot.lane.b32.xlu0 %v2646, 24
  %v3029 = vpop.permute.xlu0 %3028
  %3030 = vrot.lane.b32.xlu0 %v2654, 24
  %v3031 = vpop.permute.xlu0 %3030
  %3032 = vrot.lane.b32.xlu0 %v2662, 24
  %v3033 = vpop.permute.xlu0 %3032
  %3034 = vrot.lane.b32.xlu0 %v2670, 24
  %v3035 = vpop.permute.xlu0 %3034
  %3036 = vrot.lane.b32.xlu0 %v2678, 24
  %v3037 = vpop.permute.xlu0 %3036
  %3038 = vrot.lane.b32.xlu0 %v2686, 24
  %v3039 = vpop.permute.xlu0 %3038
  %3040 = vrot.lane.b32.xlu0 %v2694, 24
  %v3041 = vpop.permute.xlu0 %3040
  %3042 = vrot.lane.b32.xlu0 %v2702, 24
  %v3043 = vpop.permute.xlu0 %3042
  %3044 = vrot.lane.b32.xlu0 %v2710, 24
  %v3045 = vpop.permute.xlu0 %3044
  %3046 = vrot.lane.b32.xlu0 %v2718, 24
  %v3047 = vpop.permute.xlu0 %3046
  %3048 = vrot.lane.b32.xlu0 %v2726, 24
  %v3049 = vpop.permute.xlu0 %3048
  %3050 = vrot.lane.b32.xlu0 %v2734, 24
  %v3051 = vpop.permute.xlu0 %3050
  %3052 = vrot.lane.b32.xlu0 %v2742, 24
  %v3053 = vpop.permute.xlu0 %3052
  %3054 = vrot.lane.b32.xlu0 %v2750, 24
  %v3055 = vpop.permute.xlu0 %3054
  %3056 = vrot.lane.b32.xlu0 %v2758, 24
  %v3057 = vpop.permute.xlu0 %3056
  %3058 = vrot.lane.b32.xlu0 %v2766, 24
  %v3059 = vpop.permute.xlu0 %3058
  %3060 = vrot.lane.b32.xlu0 %v2774, 24
  %v3061 = vpop.permute.xlu0 %3060
  %3062 = vrot.lane.b32.xlu0 %v2782, 24
  %v3063 = vpop.permute.xlu0 %3062
  %3064 = vrot.lane.b32.xlu0 %v2790, 24
  %v3065 = vpop.permute.xlu0 %3064
  %3066 = vrot.lane.b32.xlu0 %v2798, 24
  %v3067 = vpop.permute.xlu0 %3066
  %3068 = vrot.lane.b32.xlu0 %v2806, 24
  %v3069 = vpop.permute.xlu0 %3068
  %3070 = vrot.lane.b32.xlu0 %v2814, 24
  %v3071 = vpop.permute.xlu0 %3070
  %3072 = vrot.lane.b32.xlu0 %v2822, 24
  %v3073 = vpop.permute.xlu0 %3072
  %3074 = vrot.lane.b32.xlu0 %v2830, 24
  %v3075 = vpop.permute.xlu0 %3074
  %3076 = vrot.lane.b32.xlu0 %v2838, 24
  %v3077 = vpop.permute.xlu0 %3076
  %3078 = vrot.lane.b32.xlu0 %v2846, 24
  %v3079 = vpop.permute.xlu0 %3078
  %3080 = vrot.lane.b32.xlu0 %v2854, 24
  %v3081 = vpop.permute.xlu0 %3080
  %3082 = vrot.lane.b32.xlu0 %v2862, 24
  %v3083 = vpop.permute.xlu0 %3082
  %3084 = vrot.lane.b32.xlu0 %v2870, 24
  %v3085 = vpop.permute.xlu0 %3084
  %3086 = vrot.lane.b32.xlu0 %v2878, 24
  %v3087 = vpop.permute.xlu0 %3086
  %3088 = vrot.lane.b32.xlu0 %v2886, 24
  %v3089 = vpop.permute.xlu0 %3088
  %3090 = vrot.lane.b32.xlu0 %v2894, 24
  %v3091 = vpop.permute.xlu0 %3090
  %3092 = vrot.lane.b32.xlu0 %v2902, 24
  %v3093 = vpop.permute.xlu0 %3092
  %3094 = vrot.lane.b32.xlu0 %v2910, 24
  %v3095 = vpop.permute.xlu0 %3094
  %3096 = vrot.lane.b32.xlu0 %v2918, 24
  %v3097 = vpop.permute.xlu0 %3096
  %3098 = vrot.lane.b32.xlu0 %v2926, 24
  %v3099 = vpop.permute.xlu0 %3098
  %3100 = vrot.lane.b32.xlu0 %v2934, 24
  %v3101 = vpop.permute.xlu0 %3100
  %3102 = vrot.lane.b32.xlu0 %v2942, 24
  %v3103 = vpop.permute.xlu0 %3102
  %3104 = vrot.lane.b32.xlu0 %v2950, 24
  %v3105 = vpop.permute.xlu0 %3104
  %3106 = vrot.lane.b32.xlu0 %v2958, 24
  %v3107 = vpop.permute.xlu0 %3106
  %3108 = vrot.lane.b32.xlu0 %v2966, 24
  %v3109 = vpop.permute.xlu0 %3108
  %3110 = vrot.lane.b32.xlu0 %v2974, 24
  %v3111 = vpop.permute.xlu0 %3110
  %3112 = vrot.lane.b32.xlu0 %v2982, 24
  %v3113 = vpop.permute.xlu0 %3112
  %3114 = vrot.lane.b32.xlu0 %v2990, 24
  %v3115 = vpop.permute.xlu0 %3114
  %3116 = vrot.lane.b32.xlu0 %v2998, 24
  %v3117 = vpop.permute.xlu0 %3116
  %3118 = vrot.lane.b32.xlu0 %v3001, 24
  %v3119 = vpop.permute.xlu0 %3118
  %v3121 = vshrl.u32 %v2354, 16
  %v3123 = vshll.u32 %v2354, 16
  %v3125 = vrot.slane %v3123, 1
  %v3126 = vor.u32 %v3121, %v3125
  %v3128 = vshll.u32 %v2355, 16
  %v3130 = vrot.slane %v3128, 1
  %v3131 = vsel %vm986, %v3126, %v3130
  %v3132 = vshrl.u32 %v2355, 16
  %v3134 = vor.u32 %v3132, %v3130
  %v3136 = vshll.u32 %v2356, 16
  %v3138 = vrot.slane %v3136, 1
  %v3139 = vsel %vm986, %v3134, %v3138
  %v3140 = vshrl.u32 %v2356, 16
  %v3142 = vor.u32 %v3140, %v3138
  %v3144 = vshll.u32 %v2357, 16
  %v3146 = vrot.slane %v3144, 1
  %v3147 = vsel %vm986, %v3142, %v3146
  %v3148 = vshrl.u32 %v2357, 16
  %v3150 = vor.u32 %v3148, %v3146
  %v3152 = vshll.u32 %v2358, 16
  %v3154 = vrot.slane %v3152, 1
  %v3155 = vsel %vm986, %v3150, %v3154
  %v3156 = vshrl.u32 %v2358, 16
  %v3158 = vor.u32 %v3156, %v3154
  %v3160 = vshll.u32 %v2359, 16
  %v3162 = vrot.slane %v3160, 1
  %v3163 = vsel %vm986, %v3158, %v3162
  %v3164 = vshrl.u32 %v2359, 16
  %v3166 = vor.u32 %v3164, %v3162
  %v3168 = vshll.u32 %v2360, 16
  %v3170 = vrot.slane %v3168, 1
  %v3171 = vsel %vm986, %v3166, %v3170
  %v3172 = vshrl.u32 %v2360, 16
  %v3174 = vor.u32 %v3172, %v3170
  %v3176 = vshll.u32 %v2361, 16
  %v3178 = vrot.slane %v3176, 1
  %v3179 = vsel %vm986, %v3174, %v3178
  %v3180 = vshrl.u32 %v2361, 16
  %v3182 = vor.u32 %v3180, %v3178
  %v3184 = vshll.u32 %v2362, 16
  %v3186 = vrot.slane %v3184, 1
  %v3187 = vsel %vm986, %v3182, %v3186
  %v3188 = vshrl.u32 %v2362, 16
  %v3190 = vor.u32 %v3188, %v3186
  %v3192 = vshll.u32 %v2363, 16
  %v3194 = vrot.slane %v3192, 1
  %v3195 = vsel %vm986, %v3190, %v3194
  %v3196 = vshrl.u32 %v2363, 16
  %v3198 = vor.u32 %v3196, %v3194
  %v3200 = vshll.u32 %v2364, 16
  %v3202 = vrot.slane %v3200, 1
  %v3203 = vsel %vm986, %v3198, %v3202
  %v3204 = vshrl.u32 %v2364, 16
  %v3206 = vor.u32 %v3204, %v3202
  %v3208 = vshll.u32 %v2365, 16
  %v3210 = vrot.slane %v3208, 1
  %v3211 = vsel %vm986, %v3206, %v3210
  %v3212 = vshrl.u32 %v2365, 16
  %v3214 = vor.u32 %v3212, %v3210
  %v3216 = vshll.u32 %v2366, 16
  %v3218 = vrot.slane %v3216, 1
  %v3219 = vsel %vm986, %v3214, %v3218
  %v3220 = vshrl.u32 %v2366, 16
  %v3222 = vor.u32 %v3220, %v3218
  %v3224 = vshll.u32 %v2367, 16
  %v3226 = vrot.slane %v3224, 1
  %v3227 = vsel %vm986, %v3222, %v3226
  %v3228 = vshrl.u32 %v2367, 16
  %v3230 = vor.u32 %v3228, %v3226
  %v3232 = vshll.u32 %v2368, 16
  %v3234 = vrot.slane %v3232, 1
  %v3235 = vsel %vm986, %v3230, %v3234
  %v3236 = vshrl.u32 %v2368, 16
  %v3238 = vor.u32 %v3236, %v3234
  %v3240 = vshll.u32 %v2369, 16
  %v3242 = vrot.slane %v3240, 1
  %v3243 = vsel %vm986, %v3238, %v3242
  %v3244 = vshrl.u32 %v2369, 16
  %v3246 = vor.u32 %v3244, %v3242
  %v3248 = vshll.u32 %v2370, 16
  %v3250 = vrot.slane %v3248, 1
  %v3251 = vsel %vm986, %v3246, %v3250
  %v3252 = vshrl.u32 %v2370, 16
  %v3254 = vor.u32 %v3252, %v3250
  %v3256 = vshll.u32 %v2371, 16
  %v3258 = vrot.slane %v3256, 1
  %v3259 = vsel %vm986, %v3254, %v3258
  %v3260 = vshrl.u32 %v2371, 16
  %v3262 = vor.u32 %v3260, %v3258
  %v3264 = vshll.u32 %v2372, 16
  %v3266 = vrot.slane %v3264, 1
  %v3267 = vsel %vm986, %v3262, %v3266
  %v3268 = vshrl.u32 %v2372, 16
  %v3270 = vor.u32 %v3268, %v3266
  %v3272 = vshll.u32 %v2373, 16
  %v3274 = vrot.slane %v3272, 1
  %v3275 = vsel %vm986, %v3270, %v3274
  %v3276 = vshrl.u32 %v2373, 16
  %v3278 = vor.u32 %v3276, %v3274
  %v3280 = vshll.u32 %v2374, 16
  %v3282 = vrot.slane %v3280, 1
  %v3283 = vsel %vm986, %v3278, %v3282
  %v3284 = vshrl.u32 %v2374, 16
  %v3286 = vor.u32 %v3284, %v3282
  %v3288 = vshll.u32 %v2375, 16
  %v3290 = vrot.slane %v3288, 1
  %v3291 = vsel %vm986, %v3286, %v3290
  %v3292 = vshrl.u32 %v2375, 16
  %v3294 = vor.u32 %v3292, %v3290
  %v3296 = vshll.u32 %v2376, 16
  %v3298 = vrot.slane %v3296, 1
  %v3299 = vsel %vm986, %v3294, %v3298
  %v3300 = vshrl.u32 %v2376, 16
  %v3302 = vor.u32 %v3300, %v3298
  %v3304 = vshll.u32 %v2377, 16
  %v3306 = vrot.slane %v3304, 1
  %v3307 = vsel %vm986, %v3302, %v3306
  %v3308 = vshrl.u32 %v2377, 16
  %v3310 = vor.u32 %v3308, %v3306
  %v3312 = vshll.u32 %v2378, 16
  %v3314 = vrot.slane %v3312, 1
  %v3315 = vsel %vm986, %v3310, %v3314
  %v3316 = vshrl.u32 %v2378, 16
  %v3318 = vor.u32 %v3316, %v3314
  %v3320 = vshll.u32 %v2379, 16
  %v3322 = vrot.slane %v3320, 1
  %v3323 = vsel %vm986, %v3318, %v3322
  %v3324 = vshrl.u32 %v2379, 16
  %v3326 = vor.u32 %v3324, %v3322
  %v3328 = vshll.u32 %v2380, 16
  %v3330 = vrot.slane %v3328, 1
  %v3331 = vsel %vm986, %v3326, %v3330
  %v3332 = vshrl.u32 %v2380, 16
  %v3334 = vor.u32 %v3332, %v3330
  %v3336 = vshll.u32 %v2381, 16
  %v3338 = vrot.slane %v3336, 1
  %v3339 = vsel %vm986, %v3334, %v3338
  %v3340 = vshrl.u32 %v2381, 16
  %v3342 = vor.u32 %v3340, %v3338
  %v3344 = vshll.u32 %v2382, 16
  %v3346 = vrot.slane %v3344, 1
  %v3347 = vsel %vm986, %v3342, %v3346
  %v3348 = vshrl.u32 %v2382, 16
  %v3350 = vor.u32 %v3348, %v3346
  %v3352 = vshll.u32 %v2383, 16
  %v3354 = vrot.slane %v3352, 1
  %v3355 = vsel %vm986, %v3350, %v3354
  %v3356 = vshrl.u32 %v2383, 16
  %v3358 = vor.u32 %v3356, %v3354
  %v3360 = vshll.u32 %v2384, 16
  %v3362 = vrot.slane %v3360, 1
  %v3363 = vsel %vm986, %v3358, %v3362
  %v3364 = vshrl.u32 %v2384, 16
  %v3366 = vor.u32 %v3364, %v3362
  %v3368 = vshll.u32 %v2385, 16
  %v3370 = vrot.slane %v3368, 1
  %v3371 = vsel %vm986, %v3366, %v3370
  %v3372 = vshrl.u32 %v2385, 16
  %v3374 = vor.u32 %v3372, %v3370
  %v3376 = vshll.u32 %v2386, 16
  %v3378 = vrot.slane %v3376, 1
  %v3379 = vsel %vm986, %v3374, %v3378
  %v3380 = vshrl.u32 %v2386, 16
  %v3382 = vor.u32 %v3380, %v3378
  %v3384 = vshll.u32 %v2387, 16
  %v3386 = vrot.slane %v3384, 1
  %v3387 = vsel %vm986, %v3382, %v3386
  %v3388 = vshrl.u32 %v2387, 16
  %v3390 = vor.u32 %v3388, %v3386
  %v3392 = vshll.u32 %v2388, 16
  %v3394 = vrot.slane %v3392, 1
  %v3395 = vsel %vm986, %v3390, %v3394
  %v3396 = vshrl.u32 %v2388, 16
  %v3398 = vor.u32 %v3396, %v3394
  %v3400 = vshll.u32 %v2389, 16
  %v3402 = vrot.slane %v3400, 1
  %v3403 = vsel %vm986, %v3398, %v3402
  %v3404 = vshrl.u32 %v2389, 16
  %v3406 = vor.u32 %v3404, %v3402
  %v3408 = vshll.u32 %v2390, 16
  %v3410 = vrot.slane %v3408, 1
  %v3411 = vsel %vm986, %v3406, %v3410
  %v3412 = vshrl.u32 %v2390, 16
  %v3414 = vor.u32 %v3412, %v3410
  %v3416 = vshll.u32 %v2391, 16
  %v3418 = vrot.slane %v3416, 1
  %v3419 = vsel %vm986, %v3414, %v3418
  %v3420 = vshrl.u32 %v2391, 16
  %v3422 = vor.u32 %v3420, %v3418
  %v3424 = vshll.u32 %v2392, 16
  %v3426 = vrot.slane %v3424, 1
  %v3427 = vsel %vm986, %v3422, %v3426
  %v3428 = vshrl.u32 %v2392, 16
  %v3430 = vor.u32 %v3428, %v3426
  %v3432 = vshll.u32 %v2393, 16
  %v3434 = vrot.slane %v3432, 1
  %v3435 = vsel %vm986, %v3430, %v3434
  %v3436 = vshrl.u32 %v2393, 16
  %v3438 = vor.u32 %v3436, %v3434
  %v3440 = vshll.u32 %v2394, 16
  %v3442 = vrot.slane %v3440, 1
  %v3443 = vsel %vm986, %v3438, %v3442
  %v3444 = vshrl.u32 %v2394, 16
  %v3446 = vor.u32 %v3444, %v3442
  %v3448 = vshll.u32 %v2395, 16
  %v3450 = vrot.slane %v3448, 1
  %v3451 = vsel %vm986, %v3446, %v3450
  %v3452 = vshrl.u32 %v2395, 16
  %v3454 = vor.u32 %v3452, %v3450
  %v3456 = vshll.u32 %v2396, 16
  %v3458 = vrot.slane %v3456, 1
  %v3459 = vsel %vm986, %v3454, %v3458
  %v3460 = vshrl.u32 %v2396, 16
  %v3462 = vor.u32 %v3460, %v3458
  %v3464 = vshll.u32 %v2397, 16
  %v3466 = vrot.slane %v3464, 1
  %v3467 = vsel %vm986, %v3462, %v3466
  %v3468 = vshrl.u32 %v2397, 16
  %v3470 = vor.u32 %v3468, %v3466
  %v3472 = vshll.u32 %v2398, 16
  %v3474 = vrot.slane %v3472, 1
  %v3475 = vsel %vm986, %v3470, %v3474
  %v3476 = vshrl.u32 %v2398, 16
  %v3478 = vor.u32 %v3476, %v3474
  %v3480 = vshll.u32 %v2399, 16
  %v3482 = vrot.slane %v3480, 1
  %v3483 = vsel %vm986, %v3478, %v3482
  %v3484 = vshrl.u32 %v2399, 16
  %v3486 = vor.u32 %v3484, %v3482
  %v3488 = vshll.u32 %v2400, 16
  %v3490 = vrot.slane %v3488, 1
  %v3491 = vsel %vm986, %v3486, %v3490
  %v3492 = vshrl.u32 %v2400, 16
  %v3494 = vor.u32 %v3492, %v3490
  %v3496 = vshll.u32 %v2401, 16
  %v3498 = vrot.slane %v3496, 1
  %v3499 = vsel %vm986, %v3494, %v3498
  %v3500 = vshrl.u32 %v2401, 16
  %v3502 = vor.u32 %v3500, %v3498
  %v3504 = vshll.u32 %v2402, 16
  %v3506 = vrot.slane %v3504, 1
  %v3507 = vsel %vm986, %v3502, %v3506
  %v3508 = vshrl.u32 %v2402, 16
  %v3510 = vor.u32 %v3508, %v3506
  %v3512 = vshll.u32 %v2403, 16
  %v3514 = vrot.slane %v3512, 1
  %v3515 = vsel %vm986, %v3510, %v3514
  %v3516 = vshrl.u32 %v2403, 16
  %v3518 = vor.u32 %v3516, %v3514
  %v3520 = vshll.u32 %v2404, 16
  %v3522 = vrot.slane %v3520, 1
  %v3523 = vsel %vm986, %v3518, %v3522
  %v3524 = vshrl.u32 %v2404, 16
  %v3526 = vor.u32 %v3524, %v3522
  %v3528 = vshll.u32 %v2405, 16
  %v3530 = vrot.slane %v3528, 1
  %v3531 = vsel %vm986, %v3526, %v3530
  %v3532 = vshrl.u32 %v2405, 16
  %v3534 = vor.u32 %v3532, %v3530
  %v3536 = vshll.u32 %v2406, 16
  %v3538 = vrot.slane %v3536, 1
  %v3539 = vsel %vm986, %v3534, %v3538
  %v3540 = vshrl.u32 %v2406, 16
  %v3542 = vor.u32 %v3540, %v3538
  %v3544 = vshll.u32 %v2407, 16
  %v3546 = vrot.slane %v3544, 1
  %v3547 = vsel %vm986, %v3542, %v3546
  %v3548 = vshrl.u32 %v2407, 16
  %v3550 = vor.u32 %v3548, %v3546
  %v3552 = vshll.u32 %v2408, 16
  %v3554 = vrot.slane %v3552, 1
  %v3555 = vsel %vm986, %v3550, %v3554
  %v3556 = vshrl.u32 %v2408, 16
  %v3558 = vor.u32 %v3556, %v3554
  %v3560 = vshll.u32 %v2409, 16
  %v3562 = vrot.slane %v3560, 1
  %v3563 = vsel %vm986, %v3558, %v3562
  %v3564 = vshrl.u32 %v2409, 16
  %v3566 = vor.u32 %v3564, %v3562
  %v3568 = vshll.u32 %v2410, 16
  %v3570 = vrot.slane %v3568, 1
  %v3571 = vsel %vm986, %v3566, %v3570
  %v3572 = vshrl.u32 %v2410, 16
  %v3574 = vor.u32 %v3572, %v3570
  %v3576 = vshll.u32 %v2411, 16
  %v3578 = vrot.slane %v3576, 1
  %v3579 = vsel %vm986, %v3574, %v3578
  %v3580 = vshrl.u32 %v2411, 16
  %v3582 = vor.u32 %v3580, %v3578
  %v3584 = vshll.u32 %v2412, 16
  %v3586 = vrot.slane %v3584, 1
  %v3587 = vsel %vm986, %v3582, %v3586
  %v3588 = vshrl.u32 %v2412, 16
  %v3590 = vor.u32 %v3588, %v3586
  %3591 = vrot.lane.b32.xlu0 %v3131, 28
  %v3592 = vpop.permute.xlu0 %3591
  %3593 = vrot.lane.b32.xlu0 %v3139, 28
  %v3594 = vpop.permute.xlu0 %3593
  %3595 = vrot.lane.b32.xlu0 %v3147, 28
  %v3596 = vpop.permute.xlu0 %3595
  %3597 = vrot.lane.b32.xlu0 %v3155, 28
  %v3598 = vpop.permute.xlu0 %3597
  %3599 = vrot.lane.b32.xlu0 %v3163, 28
  %v3600 = vpop.permute.xlu0 %3599
  %3601 = vrot.lane.b32.xlu0 %v3171, 28
  %v3602 = vpop.permute.xlu0 %3601
  %3603 = vrot.lane.b32.xlu0 %v3179, 28
  %v3604 = vpop.permute.xlu0 %3603
  %3605 = vrot.lane.b32.xlu0 %v3187, 28
  %v3606 = vpop.permute.xlu0 %3605
  %3607 = vrot.lane.b32.xlu0 %v3195, 28
  %v3608 = vpop.permute.xlu0 %3607
  %3609 = vrot.lane.b32.xlu0 %v3203, 28
  %v3610 = vpop.permute.xlu0 %3609
  %3611 = vrot.lane.b32.xlu0 %v3211, 28
  %v3612 = vpop.permute.xlu0 %3611
  %3613 = vrot.lane.b32.xlu0 %v3219, 28
  %v3614 = vpop.permute.xlu0 %3613
  %3615 = vrot.lane.b32.xlu0 %v3227, 28
  %v3616 = vpop.permute.xlu0 %3615
  %3617 = vrot.lane.b32.xlu0 %v3235, 28
  %v3618 = vpop.permute.xlu0 %3617
  %3619 = vrot.lane.b32.xlu0 %v3243, 28
  %v3620 = vpop.permute.xlu0 %3619
  %3621 = vrot.lane.b32.xlu0 %v3251, 28
  %v3622 = vpop.permute.xlu0 %3621
  %3623 = vrot.lane.b32.xlu0 %v3259, 28
  %v3624 = vpop.permute.xlu0 %3623
  %3625 = vrot.lane.b32.xlu0 %v3267, 28
  %v3626 = vpop.permute.xlu0 %3625
  %3627 = vrot.lane.b32.xlu0 %v3275, 28
  %v3628 = vpop.permute.xlu0 %3627
  %3629 = vrot.lane.b32.xlu0 %v3283, 28
  %v3630 = vpop.permute.xlu0 %3629
  %3631 = vrot.lane.b32.xlu0 %v3291, 28
  %v3632 = vpop.permute.xlu0 %3631
  %3633 = vrot.lane.b32.xlu0 %v3299, 28
  %v3634 = vpop.permute.xlu0 %3633
  %3635 = vrot.lane.b32.xlu0 %v3307, 28
  %v3636 = vpop.permute.xlu0 %3635
  %3637 = vrot.lane.b32.xlu0 %v3315, 28
  %v3638 = vpop.permute.xlu0 %3637
  %3639 = vrot.lane.b32.xlu0 %v3323, 28
  %v3640 = vpop.permute.xlu0 %3639
  %3641 = vrot.lane.b32.xlu0 %v3331, 28
  %v3642 = vpop.permute.xlu0 %3641
  %3643 = vrot.lane.b32.xlu0 %v3339, 28
  %v3644 = vpop.permute.xlu0 %3643
  %3645 = vrot.lane.b32.xlu0 %v3347, 28
  %v3646 = vpop.permute.xlu0 %3645
  %3647 = vrot.lane.b32.xlu0 %v3355, 28
  %v3648 = vpop.permute.xlu0 %3647
  %3649 = vrot.lane.b32.xlu0 %v3363, 28
  %v3650 = vpop.permute.xlu0 %3649
  %3651 = vrot.lane.b32.xlu0 %v3371, 28
  %v3652 = vpop.permute.xlu0 %3651
  %3653 = vrot.lane.b32.xlu0 %v3379, 28
  %v3654 = vpop.permute.xlu0 %3653
  %3655 = vrot.lane.b32.xlu0 %v3387, 28
  %v3656 = vpop.permute.xlu0 %3655
  %3657 = vrot.lane.b32.xlu0 %v3395, 28
  %v3658 = vpop.permute.xlu0 %3657
  %3659 = vrot.lane.b32.xlu0 %v3403, 28
  %v3660 = vpop.permute.xlu0 %3659
  %3661 = vrot.lane.b32.xlu0 %v3411, 28
  %v3662 = vpop.permute.xlu0 %3661
  %3663 = vrot.lane.b32.xlu0 %v3419, 28
  %v3664 = vpop.permute.xlu0 %3663
  %3665 = vrot.lane.b32.xlu0 %v3427, 28
  %v3666 = vpop.permute.xlu0 %3665
  %3667 = vrot.lane.b32.xlu0 %v3435, 28
  %v3668 = vpop.permute.xlu0 %3667
  %3669 = vrot.lane.b32.xlu0 %v3443, 28
  %v3670 = vpop.permute.xlu0 %3669
  %3671 = vrot.lane.b32.xlu0 %v3451, 28
  %v3672 = vpop.permute.xlu0 %3671
  %3673 = vrot.lane.b32.xlu0 %v3459, 28
  %v3674 = vpop.permute.xlu0 %3673
  %3675 = vrot.lane.b32.xlu0 %v3467, 28
  %v3676 = vpop.permute.xlu0 %3675
  %3677 = vrot.lane.b32.xlu0 %v3475, 28
  %v3678 = vpop.permute.xlu0 %3677
  %3679 = vrot.lane.b32.xlu0 %v3483, 28
  %v3680 = vpop.permute.xlu0 %3679
  %3681 = vrot.lane.b32.xlu0 %v3491, 28
  %v3682 = vpop.permute.xlu0 %3681
  %3683 = vrot.lane.b32.xlu0 %v3499, 28
  %v3684 = vpop.permute.xlu0 %3683
  %3685 = vrot.lane.b32.xlu0 %v3507, 28
  %v3686 = vpop.permute.xlu0 %3685
  %3687 = vrot.lane.b32.xlu0 %v3515, 28
  %v3688 = vpop.permute.xlu0 %3687
  %3689 = vrot.lane.b32.xlu0 %v3523, 28
  %v3690 = vpop.permute.xlu0 %3689
  %3691 = vrot.lane.b32.xlu0 %v3531, 28
  %v3692 = vpop.permute.xlu0 %3691
  %3693 = vrot.lane.b32.xlu0 %v3539, 28
  %v3694 = vpop.permute.xlu0 %3693
  %3695 = vrot.lane.b32.xlu0 %v3547, 28
  %v3696 = vpop.permute.xlu0 %3695
  %3697 = vrot.lane.b32.xlu0 %v3555, 28
  %v3698 = vpop.permute.xlu0 %3697
  %3699 = vrot.lane.b32.xlu0 %v3563, 28
  %v3700 = vpop.permute.xlu0 %3699
  %3701 = vrot.lane.b32.xlu0 %v3571, 28
  %v3702 = vpop.permute.xlu0 %3701
  %3703 = vrot.lane.b32.xlu0 %v3579, 28
  %v3704 = vpop.permute.xlu0 %3703
  %3705 = vrot.lane.b32.xlu0 %v3587, 28
  %v3706 = vpop.permute.xlu0 %3705
  %3707 = vrot.lane.b32.xlu0 %v3590, 28
  %v3708 = vpop.permute.xlu0 %3707
  %vm3709 = vcmask 31744
  %v3711 = vsel %vm3709, %v516, %v869
  %v3713 = vsel %vm3709, %v517, %v871
  %v3715 = vsel %vm3709, %v518, %v873
  %v3717 = vsel %vm3709, %v519, %v875
  %v3719 = vsel %vm3709, %v520, %v877
  %v3721 = vsel %vm3709, %v521, %v879
  %v3723 = vsel %vm3709, %v522, %v881
  %v3725 = vsel %vm3709, %v523, %v883
  %v3727 = vsel %vm3709, %v524, %v885
  %v3729 = vsel %vm3709, %v525, %v887
  %v3731 = vsel %vm3709, %v526, %v889
  %v3733 = vsel %vm3709, %v527, %v891
  %v3735 = vsel %vm3709, %v528, %v893
  %v3737 = vsel %vm3709, %v529, %v895
  %v3739 = vsel %vm3709, %v530, %v897
  %v3741 = vsel %vm3709, %v531, %v899
  %v3743 = vsel %vm3709, %v532, %v901
  %v3745 = vsel %vm3709, %v533, %v903
  %v3747 = vsel %vm3709, %v534, %v905
  %v3749 = vsel %vm3709, %v535, %v907
  %v3751 = vsel %vm3709, %v536, %v909
  %v3753 = vsel %vm3709, %v537, %v911
  %v3755 = vsel %vm3709, %v538, %v913
  %v3757 = vsel %vm3709, %v539, %v915
  %v3759 = vsel %vm3709, %v540, %v917
  %v3761 = vsel %vm3709, %v541, %v919
  %v3763 = vsel %vm3709, %v542, %v921
  %v3765 = vsel %vm3709, %v543, %v923
  %v3767 = vsel %vm3709, %v544, %v925
  %v3769 = vsel %vm3709, %v545, %v927
  %v3771 = vsel %vm3709, %v546, %v929
  %v3773 = vsel %vm3709, %v547, %v931
  %v3775 = vsel %vm3709, %v548, %v933
  %v3777 = vsel %vm3709, %v549, %v935
  %v3779 = vsel %vm3709, %v550, %v937
  %v3781 = vsel %vm3709, %v551, %v939
  %v3783 = vsel %vm3709, %v552, %v941
  %v3785 = vsel %vm3709, %v553, %v943
  %v3787 = vsel %vm3709, %v554, %v945
  %v3789 = vsel %vm3709, %v555, %v947
  %v3791 = vsel %vm3709, %v556, %v949
  %v3793 = vsel %vm3709, %v557, %v951
  %v3795 = vsel %vm3709, %v558, %v953
  %v3797 = vsel %vm3709, %v559, %v955
  %v3799 = vsel %vm3709, %v560, %v957
  %v3801 = vsel %vm3709, %v561, %v959
  %v3803 = vsel %vm3709, %v562, %v961
  %v3805 = vsel %vm3709, %v563, %v963
  %v3807 = vsel %vm3709, %v564, %v965
  %v3809 = vsel %vm3709, %v565, %v967
  %v3811 = vsel %vm3709, %v566, %v969
  %v3813 = vsel %vm3709, %v567, %v971
  %v3815 = vsel %vm3709, %v568, %v973
  %v3817 = vsel %vm3709, %v569, %v975
  %v3819 = vsel %vm3709, %v570, %v977
  %v3821 = vsel %vm3709, %v571, %v979
  %v3823 = vsel %vm3709, %v572, %v981
  %v3825 = vsel %vm3709, %v573, %v983
  %v3827 = vsel %vm3709, %v574, %v985
  %vm3828 = vcmask 64512
  %v3830 = vsel %vm3828, %v3711, %v1459
  %v3832 = vsel %vm3828, %v3713, %v1461
  %v3834 = vsel %vm3828, %v3715, %v1463
  %v3836 = vsel %vm3828, %v3717, %v1465
  %v3838 = vsel %vm3828, %v3719, %v1467
  %v3840 = vsel %vm3828, %v3721, %v1469
  %v3842 = vsel %vm3828, %v3723, %v1471
  %v3844 = vsel %vm3828, %v3725, %v1473
  %v3846 = vsel %vm3828, %v3727, %v1475
  %v3848 = vsel %vm3828, %v3729, %v1477
  %v3850 = vsel %vm3828, %v3731, %v1479
  %v3852 = vsel %vm3828, %v3733, %v1481
  %v3854 = vsel %vm3828, %v3735, %v1483
  %v3856 = vsel %vm3828, %v3737, %v1485
  %v3858 = vsel %vm3828, %v3739, %v1487
  %v3860 = vsel %vm3828, %v3741, %v1489
  %v3862 = vsel %vm3828, %v3743, %v1491
  %v3864 = vsel %vm3828, %v3745, %v1493
  %v3866 = vsel %vm3828, %v3747, %v1495
  %v3868 = vsel %vm3828, %v3749, %v1497
  %v3870 = vsel %vm3828, %v3751, %v1499
  %v3872 = vsel %vm3828, %v3753, %v1501
  %v3874 = vsel %vm3828, %v3755, %v1503
  %v3876 = vsel %vm3828, %v3757, %v1505
  %v3878 = vsel %vm3828, %v3759, %v1507
  %v3880 = vsel %vm3828, %v3761, %v1509
  %v3882 = vsel %vm3828, %v3763, %v1511
  %v3884 = vsel %vm3828, %v3765, %v1513
  %v3886 = vsel %vm3828, %v3767, %v1515
  %v3888 = vsel %vm3828, %v3769, %v1517
  %v3890 = vsel %vm3828, %v3771, %v1519
  %v3892 = vsel %vm3828, %v3773, %v1521
  %v3894 = vsel %vm3828, %v3775, %v1523
  %v3896 = vsel %vm3828, %v3777, %v1525
  %v3898 = vsel %vm3828, %v3779, %v1527
  %v3900 = vsel %vm3828, %v3781, %v1529
  %v3902 = vsel %vm3828, %v3783, %v1531
  %v3904 = vsel %vm3828, %v3785, %v1533
  %v3906 = vsel %vm3828, %v3787, %v1535
  %v3908 = vsel %vm3828, %v3789, %v1537
  %v3910 = vsel %vm3828, %v3791, %v1539
  %v3912 = vsel %vm3828, %v3793, %v1541
  %v3914 = vsel %vm3828, %v3795, %v1543
  %v3916 = vsel %vm3828, %v3797, %v1545
  %v3918 = vsel %vm3828, %v3799, %v1547
  %v3920 = vsel %vm3828, %v3801, %v1549
  %v3922 = vsel %vm3828, %v3803, %v1551
  %v3924 = vsel %vm3828, %v3805, %v1553
  %v3926 = vsel %vm3828, %v3807, %v1555
  %v3928 = vsel %vm3828, %v3809, %v1557
  %v3930 = vsel %vm3828, %v3811, %v1559
  %v3932 = vsel %vm3828, %v3813, %v1561
  %v3934 = vsel %vm3828, %v3815, %v1563
  %v3936 = vsel %vm3828, %v3817, %v1565
  %v3938 = vsel %vm3828, %v3819, %v1567
  %v3940 = vsel %vm3828, %v3821, %v1569
  %v3942 = vsel %vm3828, %v3823, %v1571
  %v3944 = vsel %vm3828, %v3825, %v1573
  %v3946 = vsel %vm3828, %v3827, %v1575
  %vm3947 = vcmask 97280
  %v3949 = vsel %vm3947, %v3830, %v2048
  %v3951 = vsel %vm3947, %v3832, %v2050
  %v3953 = vsel %vm3947, %v3834, %v2052
  %v3955 = vsel %vm3947, %v3836, %v2054
  %v3957 = vsel %vm3947, %v3838, %v2056
  %v3959 = vsel %vm3947, %v3840, %v2058
  %v3961 = vsel %vm3947, %v3842, %v2060
  %v3963 = vsel %vm3947, %v3844, %v2062
  %v3965 = vsel %vm3947, %v3846, %v2064
  %v3967 = vsel %vm3947, %v3848, %v2066
  %v3969 = vsel %vm3947, %v3850, %v2068
  %v3971 = vsel %vm3947, %v3852, %v2070
  %v3973 = vsel %vm3947, %v3854, %v2072
  %v3975 = vsel %vm3947, %v3856, %v2074
  %v3977 = vsel %vm3947, %v3858, %v2076
  %v3979 = vsel %vm3947, %v3860, %v2078
  %v3981 = vsel %vm3947, %v3862, %v2080
  %v3983 = vsel %vm3947, %v3864, %v2082
  %v3985 = vsel %vm3947, %v3866, %v2084
  %v3987 = vsel %vm3947, %v3868, %v2086
  %v3989 = vsel %vm3947, %v3870, %v2088
  %v3991 = vsel %vm3947, %v3872, %v2090
  %v3993 = vsel %vm3947, %v3874, %v2092
  %v3995 = vsel %vm3947, %v3876, %v2094
  %v3997 = vsel %vm3947, %v3878, %v2096
  %v3999 = vsel %vm3947, %v3880, %v2098
  %v4001 = vsel %vm3947, %v3882, %v2100
  %v4003 = vsel %vm3947, %v3884, %v2102
  %v4005 = vsel %vm3947, %v3886, %v2104
  %v4007 = vsel %vm3947, %v3888, %v2106
  %v4009 = vsel %vm3947, %v3890, %v2108
  %v4011 = vsel %vm3947, %v3892, %v2110
  %v4013 = vsel %vm3947, %v3894, %v2112
  %v4015 = vsel %vm3947, %v3896, %v2114
  %v4017 = vsel %vm3947, %v3898, %v2116
  %v4019 = vsel %vm3947, %v3900, %v2118
  %v4021 = vsel %vm3947, %v3902, %v2120
  %v4023 = vsel %vm3947, %v3904, %v2122
  %v4025 = vsel %vm3947, %v3906, %v2124
  %v4027 = vsel %vm3947, %v3908, %v2126
  %v4029 = vsel %vm3947, %v3910, %v2128
  %v4031 = vsel %vm3947, %v3912, %v2130
  %v4033 = vsel %vm3947, %v3914, %v2132
  %v4035 = vsel %vm3947, %v3916, %v2134
  %v4037 = vsel %vm3947, %v3918, %v2136
  %v4039 = vsel %vm3947, %v3920, %v2138
  %v4041 = vsel %vm3947, %v3922, %v2140
  %v4043 = vsel %vm3947, %v3924, %v2142
  %v4045 = vsel %vm3947, %v3926, %v2144
  %v4047 = vsel %vm3947, %v3928, %v2146
  %v4049 = vsel %vm3947, %v3930, %v2148
  %v4051 = vsel %vm3947, %v3932, %v2150
  %v4053 = vsel %vm3947, %v3934, %v2152
  %v4055 = vsel %vm3947, %v3936, %v2154
  %v4057 = vsel %vm3947, %v3938, %v2156
  %v4059 = vsel %vm3947, %v3940, %v2158
  %v4061 = vsel %vm3947, %v3942, %v2160
  %v4063 = vsel %vm3947, %v3944, %v2162
  %v4065 = vsel %vm3947, %v3946, %v2164
  %vm4066 = vcmask 130048
  %v4068 = vsel %vm4066, %v3949, %v2231
  %v4070 = vsel %vm4066, %v3951, %v2233
  %v4072 = vsel %vm4066, %v3953, %v2235
  %v4074 = vsel %vm4066, %v3955, %v2237
  %v4076 = vsel %vm4066, %v3957, %v2239
  %v4078 = vsel %vm4066, %v3959, %v2241
  %v4080 = vsel %vm4066, %v3961, %v2243
  %v4082 = vsel %vm4066, %v3963, %v2245
  %v4084 = vsel %vm4066, %v3965, %v2247
  %v4086 = vsel %vm4066, %v3967, %v2249
  %v4088 = vsel %vm4066, %v3969, %v2251
  %v4090 = vsel %vm4066, %v3971, %v2253
  %v4092 = vsel %vm4066, %v3973, %v2255
  %v4094 = vsel %vm4066, %v3975, %v2257
  %v4096 = vsel %vm4066, %v3977, %v2259
  %v4098 = vsel %vm4066, %v3979, %v2261
  %v4100 = vsel %vm4066, %v3981, %v2263
  %v4102 = vsel %vm4066, %v3983, %v2265
  %v4104 = vsel %vm4066, %v3985, %v2267
  %v4106 = vsel %vm4066, %v3987, %v2269
  %v4108 = vsel %vm4066, %v3989, %v2271
  %v4110 = vsel %vm4066, %v3991, %v2273
  %v4112 = vsel %vm4066, %v3993, %v2275
  %v4114 = vsel %vm4066, %v3995, %v2277
  %v4116 = vsel %vm4066, %v3997, %v2279
  %v4118 = vsel %vm4066, %v3999, %v2281
  %v4120 = vsel %vm4066, %v4001, %v2283
  %v4122 = vsel %vm4066, %v4003, %v2285
  %v4124 = vsel %vm4066, %v4005, %v2287
  %v4126 = vsel %vm4066, %v4007, %v2289
  %v4128 = vsel %vm4066, %v4009, %v2291
  %v4130 = vsel %vm4066, %v4011, %v2293
  %v4132 = vsel %vm4066, %v4013, %v2295
  %v4134 = vsel %vm4066, %v4015, %v2297
  %v4136 = vsel %vm4066, %v4017, %v2299
  %v4138 = vsel %vm4066, %v4019, %v2301
  %v4140 = vsel %vm4066, %v4021, %v2303
  %v4142 = vsel %vm4066, %v4023, %v2305
  %v4144 = vsel %vm4066, %v4025, %v2307
  %v4146 = vsel %vm4066, %v4027, %v2309
  %v4148 = vsel %vm4066, %v4029, %v2311
  %v4150 = vsel %vm4066, %v4031, %v2313
  %v4152 = vsel %vm4066, %v4033, %v2315
  %v4154 = vsel %vm4066, %v4035, %v2317
  %v4156 = vsel %vm4066, %v4037, %v2319
  %v4158 = vsel %vm4066, %v4039, %v2321
  %v4160 = vsel %vm4066, %v4041, %v2323
  %v4162 = vsel %vm4066, %v4043, %v2325
  %v4164 = vsel %vm4066, %v4045, %v2327
  %v4166 = vsel %vm4066, %v4047, %v2329
  %v4168 = vsel %vm4066, %v4049, %v2331
  %v4170 = vsel %vm4066, %v4051, %v2333
  %v4172 = vsel %vm4066, %v4053, %v2335
  %v4174 = vsel %vm4066, %v4055, %v2337
  %v4176 = vsel %vm4066, %v4057, %v2339
  %v4178 = vsel %vm4066, %v4059, %v2341
  %v4180 = vsel %vm4066, %v4061, %v2343
  %v4182 = vsel %vm4066, %v4063, %v2345
  %v4184 = vsel %vm4066, %v4065, %v2347
  %vm4185 = vcmask 162816
  %v4187 = vsel %vm4185, %v4068, %v2414
  %v4189 = vsel %vm4185, %v4070, %v2416
  %v4191 = vsel %vm4185, %v4072, %v2418
  %v4193 = vsel %vm4185, %v4074, %v2420
  %v4195 = vsel %vm4185, %v4076, %v2422
  %v4197 = vsel %vm4185, %v4078, %v2424
  %v4199 = vsel %vm4185, %v4080, %v2426
  %v4201 = vsel %vm4185, %v4082, %v2428
  %v4203 = vsel %vm4185, %v4084, %v2430
  %v4205 = vsel %vm4185, %v4086, %v2432
  %v4207 = vsel %vm4185, %v4088, %v2434
  %v4209 = vsel %vm4185, %v4090, %v2436
  %v4211 = vsel %vm4185, %v4092, %v2438
  %v4213 = vsel %vm4185, %v4094, %v2440
  %v4215 = vsel %vm4185, %v4096, %v2442
  %v4217 = vsel %vm4185, %v4098, %v2444
  %v4219 = vsel %vm4185, %v4100, %v2446
  %v4221 = vsel %vm4185, %v4102, %v2448
  %v4223 = vsel %vm4185, %v4104, %v2450
  %v4225 = vsel %vm4185, %v4106, %v2452
  %v4227 = vsel %vm4185, %v4108, %v2454
  %v4229 = vsel %vm4185, %v4110, %v2456
  %v4231 = vsel %vm4185, %v4112, %v2458
  %v4233 = vsel %vm4185, %v4114, %v2460
  %v4235 = vsel %vm4185, %v4116, %v2462
  %v4237 = vsel %vm4185, %v4118, %v2464
  %v4239 = vsel %vm4185, %v4120, %v2466
  %v4241 = vsel %vm4185, %v4122, %v2468
  %v4243 = vsel %vm4185, %v4124, %v2470
  %v4245 = vsel %vm4185, %v4126, %v2472
  %v4247 = vsel %vm4185, %v4128, %v2474
  %v4249 = vsel %vm4185, %v4130, %v2476
  %v4251 = vsel %vm4185, %v4132, %v2478
  %v4253 = vsel %vm4185, %v4134, %v2480
  %v4255 = vsel %vm4185, %v4136, %v2482
  %v4257 = vsel %vm4185, %v4138, %v2484
  %v4259 = vsel %vm4185, %v4140, %v2486
  %v4261 = vsel %vm4185, %v4142, %v2488
  %v4263 = vsel %vm4185, %v4144, %v2490
  %v4265 = vsel %vm4185, %v4146, %v2492
  %v4267 = vsel %vm4185, %v4148, %v2494
  %v4269 = vsel %vm4185, %v4150, %v2496
  %v4271 = vsel %vm4185, %v4152, %v2498
  %v4273 = vsel %vm4185, %v4154, %v2500
  %v4275 = vsel %vm4185, %v4156, %v2502
  %v4277 = vsel %vm4185, %v4158, %v2504
  %v4279 = vsel %vm4185, %v4160, %v2506
  %v4281 = vsel %vm4185, %v4162, %v2508
  %v4283 = vsel %vm4185, %v4164, %v2510
  %v4285 = vsel %vm4185, %v4166, %v2512
  %v4287 = vsel %vm4185, %v4168, %v2514
  %v4289 = vsel %vm4185, %v4170, %v2516
  %v4291 = vsel %vm4185, %v4172, %v2518
  %v4293 = vsel %vm4185, %v4174, %v2520
  %v4295 = vsel %vm4185, %v4176, %v2522
  %v4297 = vsel %vm4185, %v4178, %v2524
  %v4299 = vsel %vm4185, %v4180, %v2526
  %v4301 = vsel %vm4185, %v4182, %v2528
  %v4303 = vsel %vm4185, %v4184, %v2530
  %vm4304 = vcmask 195584
  %v4306 = vsel %vm4304, %v4187, %v3003
  %v4308 = vsel %vm4304, %v4189, %v3005
  %v4310 = vsel %vm4304, %v4191, %v3007
  %v4312 = vsel %vm4304, %v4193, %v3009
  %v4314 = vsel %vm4304, %v4195, %v3011
  %v4316 = vsel %vm4304, %v4197, %v3013
  %v4318 = vsel %vm4304, %v4199, %v3015
  %v4320 = vsel %vm4304, %v4201, %v3017
  %v4322 = vsel %vm4304, %v4203, %v3019
  %v4324 = vsel %vm4304, %v4205, %v3021
  %v4326 = vsel %vm4304, %v4207, %v3023
  %v4328 = vsel %vm4304, %v4209, %v3025
  %v4330 = vsel %vm4304, %v4211, %v3027
  %v4332 = vsel %vm4304, %v4213, %v3029
  %v4334 = vsel %vm4304, %v4215, %v3031
  %v4336 = vsel %vm4304, %v4217, %v3033
  %v4338 = vsel %vm4304, %v4219, %v3035
  %v4340 = vsel %vm4304, %v4221, %v3037
  %v4342 = vsel %vm4304, %v4223, %v3039
  %v4344 = vsel %vm4304, %v4225, %v3041
  %v4346 = vsel %vm4304, %v4227, %v3043
  %v4348 = vsel %vm4304, %v4229, %v3045
  %v4350 = vsel %vm4304, %v4231, %v3047
  %v4352 = vsel %vm4304, %v4233, %v3049
  %v4354 = vsel %vm4304, %v4235, %v3051
  %v4356 = vsel %vm4304, %v4237, %v3053
  %v4358 = vsel %vm4304, %v4239, %v3055
  %v4360 = vsel %vm4304, %v4241, %v3057
  %v4362 = vsel %vm4304, %v4243, %v3059
  %v4364 = vsel %vm4304, %v4245, %v3061
  %v4366 = vsel %vm4304, %v4247, %v3063
  %v4368 = vsel %vm4304, %v4249, %v3065
  %v4370 = vsel %vm4304, %v4251, %v3067
  %v4372 = vsel %vm4304, %v4253, %v3069
  %v4374 = vsel %vm4304, %v4255, %v3071
  %v4376 = vsel %vm4304, %v4257, %v3073
  %v4378 = vsel %vm4304, %v4259, %v3075
  %v4380 = vsel %vm4304, %v4261, %v3077
  %v4382 = vsel %vm4304, %v4263, %v3079
  %v4384 = vsel %vm4304, %v4265, %v3081
  %v4386 = vsel %vm4304, %v4267, %v3083
  %v4388 = vsel %vm4304, %v4269, %v3085
  %v4390 = vsel %vm4304, %v4271, %v3087
  %v4392 = vsel %vm4304, %v4273, %v3089
  %v4394 = vsel %vm4304, %v4275, %v3091
  %v4396 = vsel %vm4304, %v4277, %v3093
  %v4398 = vsel %vm4304, %v4279, %v3095
  %v4400 = vsel %vm4304, %v4281, %v3097
  %v4402 = vsel %vm4304, %v4283, %v3099
  %v4404 = vsel %vm4304, %v4285, %v3101
  %v4406 = vsel %vm4304, %v4287, %v3103
  %v4408 = vsel %vm4304, %v4289, %v3105
  %v4410 = vsel %vm4304, %v4291, %v3107
  %v4412 = vsel %vm4304, %v4293, %v3109
  %v4414 = vsel %vm4304, %v4295, %v3111
  %v4416 = vsel %vm4304, %v4297, %v3113
  %v4418 = vsel %vm4304, %v4299, %v3115
  %v4420 = vsel %vm4304, %v4301, %v3117
  %v4422 = vsel %vm4304, %v4303, %v3119
  %vm4423 = vcmask 228352
  %v4425 = vsel %vm4423, %v4306, %v3592
  %v4427 = vsel %vm4423, %v4308, %v3594
  %v4429 = vsel %vm4423, %v4310, %v3596
  %v4431 = vsel %vm4423, %v4312, %v3598
  %v4433 = vsel %vm4423, %v4314, %v3600
  %v4435 = vsel %vm4423, %v4316, %v3602
  %v4437 = vsel %vm4423, %v4318, %v3604
  %v4439 = vsel %vm4423, %v4320, %v3606
  %v4441 = vsel %vm4423, %v4322, %v3608
  %v4443 = vsel %vm4423, %v4324, %v3610
  %v4445 = vsel %vm4423, %v4326, %v3612
  %v4447 = vsel %vm4423, %v4328, %v3614
  %v4449 = vsel %vm4423, %v4330, %v3616
  %v4451 = vsel %vm4423, %v4332, %v3618
  %v4453 = vsel %vm4423, %v4334, %v3620
  %v4455 = vsel %vm4423, %v4336, %v3622
  %v4457 = vsel %vm4423, %v4338, %v3624
  %v4459 = vsel %vm4423, %v4340, %v3626
  %v4461 = vsel %vm4423, %v4342, %v3628
  %v4463 = vsel %vm4423, %v4344, %v3630
  %v4465 = vsel %vm4423, %v4346, %v3632
  %v4467 = vsel %vm4423, %v4348, %v3634
  %v4469 = vsel %vm4423, %v4350, %v3636
  %v4471 = vsel %vm4423, %v4352, %v3638
  %v4473 = vsel %vm4423, %v4354, %v3640
  %v4475 = vsel %vm4423, %v4356, %v3642
  %v4477 = vsel %vm4423, %v4358, %v3644
  %v4479 = vsel %vm4423, %v4360, %v3646
  %v4481 = vsel %vm4423, %v4362, %v3648
  %v4483 = vsel %vm4423, %v4364, %v3650
  %v4485 = vsel %vm4423, %v4366, %v3652
  %v4487 = vsel %vm4423, %v4368, %v3654
  %v4489 = vsel %vm4423, %v4370, %v3656
  %v4491 = vsel %vm4423, %v4372, %v3658
  %v4493 = vsel %vm4423, %v4374, %v3660
  %v4495 = vsel %vm4423, %v4376, %v3662
  %v4497 = vsel %vm4423, %v4378, %v3664
  %v4499 = vsel %vm4423, %v4380, %v3666
  %v4501 = vsel %vm4423, %v4382, %v3668
  %v4503 = vsel %vm4423, %v4384, %v3670
  %v4505 = vsel %vm4423, %v4386, %v3672
  %v4507 = vsel %vm4423, %v4388, %v3674
  %v4509 = vsel %vm4423, %v4390, %v3676
  %v4511 = vsel %vm4423, %v4392, %v3678
  %v4513 = vsel %vm4423, %v4394, %v3680
  %v4515 = vsel %vm4423, %v4396, %v3682
  %v4517 = vsel %vm4423, %v4398, %v3684
  %v4519 = vsel %vm4423, %v4400, %v3686
  %v4521 = vsel %vm4423, %v4402, %v3688
  %v4523 = vsel %vm4423, %v4404, %v3690
  %v4525 = vsel %vm4423, %v4406, %v3692
  %v4527 = vsel %vm4423, %v4408, %v3694
  %v4529 = vsel %vm4423, %v4410, %v3696
  %v4531 = vsel %vm4423, %v4412, %v3698
  %v4533 = vsel %vm4423, %v4414, %v3700
  %v4535 = vsel %vm4423, %v4416, %v3702
  %v4537 = vsel %vm4423, %v4418, %v3704
  %v4539 = vsel %vm4423, %v4420, %v3706
  %v4541 = vsel %vm4423, %v4422, %v3708
  %v4542 = vld [vmem:[%s4] sm:$0xf]
  %v4543 = vld [vmem:[%s4 + $0x4] sm:$0xf]
  %v4544 = vld [vmem:[%s4 + $0x8] sm:$0xf]
  %v4545 = vld [vmem:[%s4 + $0xc] sm:$0xf]
  %v4546 = vld [vmem:[%s5] sm:$0x1]
  %v4548 = vlaneseq
  %v4549 = vshrl.u32 %v4548, 7
  %v4550 = vsub.s32 0, %v4549
  %v4551 = vrot.slane %v4546, %v4550
  %v4557 = vunpack.c.l.b16 %v4542
  %v4558 = vunpack.c.l.b16 %v4543
  %v4559 = vunpack.c.l.b16 %v4544
  %v4560 = vunpack.c.l.b16 %v4545
  %v4561 = vpack.c.b16 %v4558, %v4557
  %v4562 = vpack.c.b16 %v4560, %v4559
  %vm4565 = vcmask 261120
  %v4566 = vsel %vm4565, %v4425, 0
  %v4568 = vsel %vm4565, %v4427, 0
  %v4570 = vsel %vm4565, %v4429, 0
  %v4572 = vsel %vm4565, %v4431, 0
  %v4574 = vsel %vm4565, %v4433, 0
  %v4576 = vsel %vm4565, %v4435, 0
  %v4578 = vsel %vm4565, %v4437, 0
  %v4580 = vsel %vm4565, %v4439, 0
  %v4582 = vsel %vm4565, %v4441, 0
  %v4584 = vsel %vm4565, %v4443, 0
  %v4586 = vsel %vm4565, %v4445, 0
  %v4588 = vsel %vm4565, %v4447, 0
  %v4590 = vsel %vm4565, %v4449, 0
  %v4592 = vsel %vm4565, %v4451, 0
  %v4594 = vsel %vm4565, %v4453, 0
  %v4596 = vsel %vm4565, %v4455, 0
  %v4598 = vsel %vm4565, %v4457, 0
  %v4600 = vsel %vm4565, %v4459, 0
  %v4602 = vsel %vm4565, %v4461, 0
  %v4604 = vsel %vm4565, %v4463, 0
  %v4606 = vsel %vm4565, %v4465, 0
  %v4608 = vsel %vm4565, %v4467, 0
  %v4610 = vsel %vm4565, %v4469, 0
  %v4612 = vsel %vm4565, %v4471, 0
  %v4614 = vsel %vm4565, %v4473, 0
  %v4616 = vsel %vm4565, %v4475, 0
  %v4618 = vsel %vm4565, %v4477, 0
  %v4620 = vsel %vm4565, %v4479, 0
  %v4622 = vsel %vm4565, %v4481, 0
  %v4624 = vsel %vm4565, %v4483, 0
  %v4626 = vsel %vm4565, %v4485, 0
  %v4628 = vsel %vm4565, %v4487, 0
  %v4630 = vsel %vm4565, %v4489, 0
  %v4632 = vsel %vm4565, %v4491, 0
  %v4634 = vsel %vm4565, %v4493, 0
  %v4636 = vsel %vm4565, %v4495, 0
  %v4638 = vsel %vm4565, %v4497, 0
  %v4640 = vsel %vm4565, %v4499, 0
  %v4642 = vsel %vm4565, %v4501, 0
  %v4644 = vsel %vm4565, %v4503, 0
  %v4646 = vsel %vm4565, %v4505, 0
  %v4648 = vsel %vm4565, %v4507, 0
  %v4650 = vsel %vm4565, %v4509, 0
  %v4652 = vsel %vm4565, %v4511, 0
  %v4654 = vsel %vm4565, %v4513, 0
  %v4656 = vsel %vm4565, %v4515, 0
  %v4658 = vsel %vm4565, %v4517, 0
  %v4660 = vsel %vm4565, %v4519, 0
  %v4662 = vsel %vm4565, %v4521, 0
  %v4664 = vsel %vm4565, %v4523, 0
  %v4666 = vsel %vm4565, %v4525, 0
  %v4668 = vsel %vm4565, %v4527, 0
  %v4670 = vsel %vm4565, %v4529, 0
  %v4672 = vsel %vm4565, %v4531, 0
  %v4674 = vsel %vm4565, %v4533, 0
  %v4676 = vsel %vm4565, %v4535, 0
  %v4678 = vsel %vm4565, %v4537, 0
  %v4680 = vsel %vm4565, %v4539, 0
  %v4682 = vsel %vm4565, %v4541, 0
  %4684 = vmatprep.subr.bf16.mxu0 0
  %4685 = vmatpush1.bf16.msra.mxu0 %v4561
  %4686 = vmatprep.subr.bf16.mxu0 0
  %4687 = vmatpush1.bf16.msra.mxu0 %v4562
  %4688 = vmatprep.subr.bf16.mxu0 0
  %4689 = vmatpush1.bf16.msra.mxu0 0
  %4690 = vmatprep.subr.bf16.mxu0 0
  %4691 = vmatpush1.bf16.msra.mxu0 0
  %4692 = vmatprep.subr.bf16.mxu0 0
  %4693 = vmatpush1.bf16.msra.mxu0 0
  %4694 = vmatprep.subr.bf16.mxu0 0
  %4695 = vmatpush1.bf16.msra.mxu0 0
  %4696 = vmatprep.subr.bf16.mxu0 0
  %4697 = vmatpush1.bf16.msra.mxu0 0
  %4698 = vmatprep.subr.bf16.mxu0 0
  %4699 = vmatpush1.bf16.msra.mxu0 0
  %4700 = vmatprep.subr.bf16.mxu0 0
  %4701 = vmatpush1.bf16.msra.mxu0 0
  %4702 = vmatprep.subr.bf16.mxu0 0
  %4703 = vmatpush1.bf16.msra.mxu0 0
  %4704 = vmatprep.subr.bf16.mxu0 0
  %4705 = vmatpush1.bf16.msra.mxu0 0
  %4706 = vmatprep.subr.bf16.mxu0 0
  %4707 = vmatpush1.bf16.msra.mxu0 0
  %4708 = vmatprep.subr.bf16.mxu0 0
  %4709 = vmatpush1.bf16.msra.mxu0 0
  %4710 = vmatprep.subr.bf16.mxu0 0
  %4711 = vmatpush1.bf16.msra.mxu0 0
  %4712 = vmatprep.subr.bf16.mxu0 0
  %4713 = vmatpush1.bf16.msra.mxu0 0
  %4714 = vmatprep.subr.bf16.mxu0 0
  %4715 = vmatpush1.bf16.msra.mxu0 0
  %4716 = vmatprep.mubr.bf16.mxu0 0
  %4717 = vmatmul.mubr.bf16.gmra.mrb[0].mxu0 %v4566
  %v4718 = vpop.f32.mrb[0].mxu0
  %v4719 = vadd.f32 %v4551, %v4718
  %v4720 = vpop.f32.mrb[0].mxu0
  %v4721 = vpop.f32.mrb[0].mxu0
  %v4722 = vadd.f32 %v4551, %v4721
  %v4723 = vpop.f32.mrb[0].mxu0
  %4724 = vmatprep.mubr.bf16.mxu0 0
  %4725 = vmatmul.mubr.bf16.gmra.mrb[0].mxu0 %v4568
  %v4726 = vpop.f32.mrb[0].mxu0
  %v4727 = vadd.f32 %v4551, %v4726
  %v4728 = vpop.f32.mrb[0].mxu0
  %v4729 = vpop.f32.mrb[0].mxu0
  %v4730 = vadd.f32 %v4551, %v4729
  %v4731 = vpop.f32.mrb[0].mxu0
  %4732 = vmatprep.mubr.bf16.mxu0 0
  %4733 = vmatmul.mubr.bf16.gmra.mrb[0].mxu0 %v4570
  %v4734 = vpop.f32.mrb[0].mxu0
  %v4735 = vadd.f32 %v4551, %v4734
  %v4736 = vpop.f32.mrb[0].mxu0
  %v4737 = vpop.f32.mrb[0].mxu0
  %v4738 = vadd.f32 %v4551, %v4737
  %v4739 = vpop.f32.mrb[0].mxu0
  %4740 = vmatprep.mubr.bf16.mxu0 0
  %4741 = vmatmul.mubr.bf16.gmra.mrb[0].mxu0 %v4572
  %v4742 = vpop.f32.mrb[0].mxu0
  %v4743 = vadd.f32 %v4551, %v4742
  %v4744 = vpop.f32.mrb[0].mxu0
  %v4745 = vpop.f32.mrb[0].mxu0
  %v4746 = vadd.f32 %v4551, %v4745
  %v4747 = vpop.f32.mrb[0].mxu0
  %4748 = vmatprep.mubr.bf16.mxu0 0
  %4749 = vmatmul.mubr.bf16.gmra.mrb[0].mxu0 %v4574
  %v4750 = vpop.f32.mrb[0].mxu0
  %v4751 = vadd.f32 %v4551, %v4750
  %v4752 = vpop.f32.mrb[0].mxu0
  %v4753 = vpop.f32.mrb[0].mxu0
  %v4754 = vadd.f32 %v4551, %v4753
  %v4755 = vpop.f32.mrb[0].mxu0
  %4756 = vmatprep.mubr.bf16.mxu0 0
  %4757 = vmatmul.mubr.bf16.gmra.mrb[0].mxu0 %v4576
  %v4758 = vpop.f32.mrb[0].mxu0
  %v4759 = vadd.f32 %v4551, %v4758
  %v4760 = vpop.f32.mrb[0].mxu0
  %v4761 = vpop.f32.mrb[0].mxu0
  %v4762 = vadd.f32 %v4551, %v4761
  %v4763 = vpop.f32.mrb[0].mxu0
  %4764 = vmatprep.mubr.bf16.mxu0 0
  %4765 = vmatmul.mubr.bf16.gmra.mrb[0].mxu0 %v4578
  %v4766 = vpop.f32.mrb[0].mxu0
  %v4767 = vadd.f32 %v4551, %v4766
  %v4768 = vpop.f32.mrb[0].mxu0
  %v4769 = vpop.f32.mrb[0].mxu0
  %v4770 = vadd.f32 %v4551, %v4769
  %v4771 = vpop.f32.mrb[0].mxu0
  %4772 = vmatprep.mubr.bf16.mxu0 0
  %4773 = vmatmul.mubr.bf16.gmra.mrb[0].mxu0 %v4580
  %v4774 = vpop.f32.mrb[0].mxu0
  %v4775 = vadd.f32 %v4551, %v4774
  %v4776 = vpop.f32.mrb[0].mxu0
  %v4777 = vpop.f32.mrb[0].mxu0
  %v4778 = vadd.f32 %v4551, %v4777
  %v4779 = vpop.f32.mrb[0].mxu0
  %4780 = vmatprep.mubr.bf16.mxu0 0
  %4781 = vmatmul.mubr.bf16.gmra.mrb[0].mxu0 %v4582
  %v4782 = vpop.f32.mrb[0].mxu0
  %v4783 = vadd.f32 %v4551, %v4782
  %v4784 = vpop.f32.mrb[0].mxu0
  %v4785 = vpop.f32.mrb[0].mxu0
  %v4786 = vadd.f32 %v4551, %v4785
  %v4787 = vpop.f32.mrb[0].mxu0
  %4788 = vmatprep.mubr.bf16.mxu0 0
  %4789 = vmatmul.mubr.bf16.gmra.mrb[0].mxu0 %v4584
  %v4790 = vpop.f32.mrb[0].mxu0
  %v4791 = vadd.f32 %v4551, %v4790
  %v4792 = vpop.f32.mrb[0].mxu0
  %v4793 = vpop.f32.mrb[0].mxu0
  %v4794 = vadd.f32 %v4551, %v4793
  %v4795 = vpop.f32.mrb[0].mxu0
  %4796 = vmatprep.mubr.bf16.mxu0 0
  %4797 = vmatmul.mubr.bf16.gmra.mrb[0].mxu0 %v4586
  %v4798 = vpop.f32.mrb[0].mxu0
  %v4799 = vadd.f32 %v4551, %v4798
  %v4800 = vpop.f32.mrb[0].mxu0
  %v4801 = vpop.f32.mrb[0].mxu0
  %v4802 = vadd.f32 %v4551, %v4801
  %v4803 = vpop.f32.mrb[0].mxu0
  %4804 = vmatprep.mubr.bf16.mxu0 0
  %4805 = vmatmul.mubr.bf16.gmra.mrb[0].mxu0 %v4588
  %v4806 = vpop.f32.mrb[0].mxu0
  %v4807 = vadd.f32 %v4551, %v4806
  %v4808 = vpop.f32.mrb[0].mxu0
  %v4809 = vpop.f32.mrb[0].mxu0
  %v4810 = vadd.f32 %v4551, %v4809
  %v4811 = vpop.f32.mrb[0].mxu0
  %4812 = vmatprep.mubr.bf16.mxu0 0
  %4813 = vmatmul.mubr.bf16.gmra.mrb[0].mxu0 %v4590
  %v4814 = vpop.f32.mrb[0].mxu0
  %v4815 = vadd.f32 %v4551, %v4814
  %v4816 = vpop.f32.mrb[0].mxu0
  %v4817 = vpop.f32.mrb[0].mxu0
  %v4818 = vadd.f32 %v4551, %v4817
  %v4819 = vpop.f32.mrb[0].mxu0
  %4820 = vmatprep.mubr.bf16.mxu0 0
  %4821 = vmatmul.mubr.bf16.gmra.mrb[0].mxu0 %v4592
  %v4822 = vpop.f32.mrb[0].mxu0
  %v4823 = vadd.f32 %v4551, %v4822
  %v4824 = vpop.f32.mrb[0].mxu0
  %v4825 = vpop.f32.mrb[0].mxu0
  %v4826 = vadd.f32 %v4551, %v4825
  %v4827 = vpop.f32.mrb[0].mxu0
  %4828 = vmatprep.mubr.bf16.mxu0 0
  %4829 = vmatmul.mubr.bf16.gmra.mrb[0].mxu0 %v4594
  %v4830 = vpop.f32.mrb[0].mxu0
  %v4831 = vadd.f32 %v4551, %v4830
  %v4832 = vpop.f32.mrb[0].mxu0
  %v4833 = vpop.f32.mrb[0].mxu0
  %v4834 = vadd.f32 %v4551, %v4833
  %v4835 = vpop.f32.mrb[0].mxu0
  %4836 = vmatprep.mubr.bf16.mxu0 0
  %4837 = vmatmul.mubr.bf16.gmra.mrb[0].mxu0 %v4596
  %v4838 = vpop.f32.mrb[0].mxu0
  %v4839 = vadd.f32 %v4551, %v4838
  %v4840 = vpop.f32.mrb[0].mxu0
  %v4841 = vpop.f32.mrb[0].mxu0
  %v4842 = vadd.f32 %v4551, %v4841
  %v4843 = vpop.f32.mrb[0].mxu0
  %4844 = vmatprep.mubr.bf16.mxu0 0
  %4845 = vmatmul.mubr.bf16.gmra.mrb[0].mxu0 %v4598
  %v4846 = vpop.f32.mrb[0].mxu0
  %v4847 = vadd.f32 %v4551, %v4846
  %v4848 = vpop.f32.mrb[0].mxu0
  %v4849 = vpop.f32.mrb[0].mxu0
  %v4850 = vadd.f32 %v4551, %v4849
  %v4851 = vpop.f32.mrb[0].mxu0
  %4852 = vmatprep.mubr.bf16.mxu0 0
  %4853 = vmatmul.mubr.bf16.gmra.mrb[0].mxu0 %v4600
  %v4854 = vpop.f32.mrb[0].mxu0
  %v4855 = vadd.f32 %v4551, %v4854
  %v4856 = vpop.f32.mrb[0].mxu0
  %v4857 = vpop.f32.mrb[0].mxu0
  %v4858 = vadd.f32 %v4551, %v4857
  %v4859 = vpop.f32.mrb[0].mxu0
  %4860 = vmatprep.mubr.bf16.mxu0 0
  %4861 = vmatmul.mubr.bf16.gmra.mrb[0].mxu0 %v4602
  %v4862 = vpop.f32.mrb[0].mxu0
  %v4863 = vadd.f32 %v4551, %v4862
  %v4864 = vpop.f32.mrb[0].mxu0
  %v4865 = vpop.f32.mrb[0].mxu0
  %v4866 = vadd.f32 %v4551, %v4865
  %v4867 = vpop.f32.mrb[0].mxu0
  %4868 = vmatprep.mubr.bf16.mxu0 0
  %4869 = vmatmul.mubr.bf16.gmra.mrb[0].mxu0 %v4604
  %v4870 = vpop.f32.mrb[0].mxu0
  %v4871 = vadd.f32 %v4551, %v4870
  %v4872 = vpop.f32.mrb[0].mxu0
  %v4873 = vpop.f32.mrb[0].mxu0
  %v4874 = vadd.f32 %v4551, %v4873
  %v4875 = vpop.f32.mrb[0].mxu0
  %4876 = vmatprep.mubr.bf16.mxu0 0
  %4877 = vmatmul.mubr.bf16.gmra.mrb[0].mxu0 %v4606
  %v4878 = vpop.f32.mrb[0].mxu0
  %v4879 = vadd.f32 %v4551, %v4878
  %v4880 = vpop.f32.mrb[0].mxu0
  %v4881 = vpop.f32.mrb[0].mxu0
  %v4882 = vadd.f32 %v4551, %v4881
  %v4883 = vpop.f32.mrb[0].mxu0
  %4884 = vmatprep.mubr.bf16.mxu0 0
  %4885 = vmatmul.mubr.bf16.gmra.mrb[0].mxu0 %v4608
  %v4886 = vpop.f32.mrb[0].mxu0
  %v4887 = vadd.f32 %v4551, %v4886
  %v4888 = vpop.f32.mrb[0].mxu0
  %v4889 = vpop.f32.mrb[0].mxu0
  %v4890 = vadd.f32 %v4551, %v4889
  %v4891 = vpop.f32.mrb[0].mxu0
  %4892 = vmatprep.mubr.bf16.mxu0 0
  %4893 = vmatmul.mubr.bf16.gmra.mrb[0].mxu0 %v4610
  %v4894 = vpop.f32.mrb[0].mxu0
  %v4895 = vadd.f32 %v4551, %v4894
  %v4896 = vpop.f32.mrb[0].mxu0
  %v4897 = vpop.f32.mrb[0].mxu0
  %v4898 = vadd.f32 %v4551, %v4897
  %v4899 = vpop.f32.mrb[0].mxu0
  %4900 = vmatprep.mubr.bf16.mxu0 0
  %4901 = vmatmul.mubr.bf16.gmra.mrb[0].mxu0 %v4612
  %v4902 = vpop.f32.mrb[0].mxu0
  %v4903 = vadd.f32 %v4551, %v4902
  %v4904 = vpop.f32.mrb[0].mxu0
  %v4905 = vpop.f32.mrb[0].mxu0
  %v4906 = vadd.f32 %v4551, %v4905
  %v4907 = vpop.f32.mrb[0].mxu0
  %4908 = vmatprep.mubr.bf16.mxu0 0
  %4909 = vmatmul.mubr.bf16.gmra.mrb[0].mxu0 %v4614
  %v4910 = vpop.f32.mrb[0].mxu0
  %v4911 = vadd.f32 %v4551, %v4910
  %v4912 = vpop.f32.mrb[0].mxu0
  %v4913 = vpop.f32.mrb[0].mxu0
  %v4914 = vadd.f32 %v4551, %v4913
  %v4915 = vpop.f32.mrb[0].mxu0
  %4916 = vmatprep.mubr.bf16.mxu0 0
  %4917 = vmatmul.mubr.bf16.gmra.mrb[0].mxu0 %v4616
  %v4918 = vpop.f32.mrb[0].mxu0
  %v4919 = vadd.f32 %v4551, %v4918
  %v4920 = vpop.f32.mrb[0].mxu0
  %v4921 = vpop.f32.mrb[0].mxu0
  %v4922 = vadd.f32 %v4551, %v4921
  %v4923 = vpop.f32.mrb[0].mxu0
  %4924 = vmatprep.mubr.bf16.mxu0 0
  %4925 = vmatmul.mubr.bf16.gmra.mrb[0].mxu0 %v4618
  %v4926 = vpop.f32.mrb[0].mxu0
  %v4927 = vadd.f32 %v4551, %v4926
  %v4928 = vpop.f32.mrb[0].mxu0
  %v4929 = vpop.f32.mrb[0].mxu0
  %v4930 = vadd.f32 %v4551, %v4929
  %v4931 = vpop.f32.mrb[0].mxu0
  %4932 = vmatprep.mubr.bf16.mxu0 0
  %4933 = vmatmul.mubr.bf16.gmra.mrb[0].mxu0 %v4620
  %v4934 = vpop.f32.mrb[0].mxu0
  %v4935 = vadd.f32 %v4551, %v4934
  %v4936 = vpop.f32.mrb[0].mxu0
  %v4937 = vpop.f32.mrb[0].mxu0
  %v4938 = vadd.f32 %v4551, %v4937
  %v4939 = vpop.f32.mrb[0].mxu0
  %4940 = vmatprep.mubr.bf16.mxu0 0
  %4941 = vmatmul.mubr.bf16.gmra.mrb[0].mxu0 %v4622
  %v4942 = vpop.f32.mrb[0].mxu0
  %v4943 = vadd.f32 %v4551, %v4942
  %v4944 = vpop.f32.mrb[0].mxu0
  %v4945 = vpop.f32.mrb[0].mxu0
  %v4946 = vadd.f32 %v4551, %v4945
  %v4947 = vpop.f32.mrb[0].mxu0
  %4948 = vmatprep.mubr.bf16.mxu0 0
  %4949 = vmatmul.mubr.bf16.gmra.mrb[0].mxu0 %v4624
  %v4950 = vpop.f32.mrb[0].mxu0
  %v4951 = vadd.f32 %v4551, %v4950
  %v4952 = vpop.f32.mrb[0].mxu0
  %v4953 = vpop.f32.mrb[0].mxu0
  %v4954 = vadd.f32 %v4551, %v4953
  %v4955 = vpop.f32.mrb[0].mxu0
  %4956 = vmatprep.mubr.bf16.mxu0 0
  %4957 = vmatmul.mubr.bf16.gmra.mrb[0].mxu0 %v4626
  %v4958 = vpop.f32.mrb[0].mxu0
  %v4959 = vadd.f32 %v4551, %v4958
  %v4960 = vpop.f32.mrb[0].mxu0
  %v4961 = vpop.f32.mrb[0].mxu0
  %v4962 = vadd.f32 %v4551, %v4961
  %v4963 = vpop.f32.mrb[0].mxu0
  %4964 = vmatprep.mubr.bf16.mxu0 0
  %4965 = vmatmul.mubr.bf16.gmra.mrb[0].mxu0 %v4628
  %v4966 = vpop.f32.mrb[0].mxu0
  %v4967 = vadd.f32 %v4551, %v4966
  %v4968 = vpop.f32.mrb[0].mxu0
  %v4969 = vpop.f32.mrb[0].mxu0
  %v4970 = vadd.f32 %v4551, %v4969
  %v4971 = vpop.f32.mrb[0].mxu0
  %4972 = vmatprep.mubr.bf16.mxu0 0
  %4973 = vmatmul.mubr.bf16.gmra.mrb[0].mxu0 %v4630
  %v4974 = vpop.f32.mrb[0].mxu0
  %v4975 = vadd.f32 %v4551, %v4974
  %v4976 = vpop.f32.mrb[0].mxu0
  %v4977 = vpop.f32.mrb[0].mxu0
  %v4978 = vadd.f32 %v4551, %v4977
  %v4979 = vpop.f32.mrb[0].mxu0
  %4980 = vmatprep.mubr.bf16.mxu0 0
  %4981 = vmatmul.mubr.bf16.gmra.mrb[0].mxu0 %v4632
  %v4982 = vpop.f32.mrb[0].mxu0
  %v4983 = vadd.f32 %v4551, %v4982
  %v4984 = vpop.f32.mrb[0].mxu0
  %v4985 = vpop.f32.mrb[0].mxu0
  %v4986 = vadd.f32 %v4551, %v4985
  %v4987 = vpop.f32.mrb[0].mxu0
  %4988 = vmatprep.mubr.bf16.mxu0 0
  %4989 = vmatmul.mubr.bf16.gmra.mrb[0].mxu0 %v4634
  %v4990 = vpop.f32.mrb[0].mxu0
  %v4991 = vadd.f32 %v4551, %v4990
  %v4992 = vpop.f32.mrb[0].mxu0
  %v4993 = vpop.f32.mrb[0].mxu0
  %v4994 = vadd.f32 %v4551, %v4993
  %v4995 = vpop.f32.mrb[0].mxu0
  %4996 = vmatprep.mubr.bf16.mxu0 0
  %4997 = vmatmul.mubr.bf16.gmra.mrb[0].mxu0 %v4636
  %v4998 = vpop.f32.mrb[0].mxu0
  %v4999 = vadd.f32 %v4551, %v4998
  %v5000 = vpop.f32.mrb[0].mxu0
  %v5001 = vpop.f32.mrb[0].mxu0
  %v5002 = vadd.f32 %v4551, %v5001
  %v5003 = vpop.f32.mrb[0].mxu0
  %5004 = vmatprep.mubr.bf16.mxu0 0
  %5005 = vmatmul.mubr.bf16.gmra.mrb[0].mxu0 %v4638
  %v5006 = vpop.f32.mrb[0].mxu0
  %v5007 = vadd.f32 %v4551, %v5006
  %v5008 = vpop.f32.mrb[0].mxu0
  %v5009 = vpop.f32.mrb[0].mxu0
  %v5010 = vadd.f32 %v4551, %v5009
  %v5011 = vpop.f32.mrb[0].mxu0
  %5012 = vmatprep.mubr.bf16.mxu0 0
  %5013 = vmatmul.mubr.bf16.gmra.mrb[0].mxu0 %v4640
  %v5014 = vpop.f32.mrb[0].mxu0
  %v5015 = vadd.f32 %v4551, %v5014
  %v5016 = vpop.f32.mrb[0].mxu0
  %v5017 = vpop.f32.mrb[0].mxu0
  %v5018 = vadd.f32 %v4551, %v5017
  %v5019 = vpop.f32.mrb[0].mxu0
  %5020 = vmatprep.mubr.bf16.mxu0 0
  %5021 = vmatmul.mubr.bf16.gmra.mrb[0].mxu0 %v4642
  %v5022 = vpop.f32.mrb[0].mxu0
  %v5023 = vadd.f32 %v4551, %v5022
  %v5024 = vpop.f32.mrb[0].mxu0
  %v5025 = vpop.f32.mrb[0].mxu0
  %v5026 = vadd.f32 %v4551, %v5025
  %v5027 = vpop.f32.mrb[0].mxu0
  %5028 = vmatprep.mubr.bf16.mxu0 0
  %5029 = vmatmul.mubr.bf16.gmra.mrb[0].mxu0 %v4644
  %v5030 = vpop.f32.mrb[0].mxu0
  %v5031 = vadd.f32 %v4551, %v5030
  %v5032 = vpop.f32.mrb[0].mxu0
  %v5033 = vpop.f32.mrb[0].mxu0
  %v5034 = vadd.f32 %v4551, %v5033
  %v5035 = vpop.f32.mrb[0].mxu0
  %5036 = vmatprep.mubr.bf16.mxu0 0
  %5037 = vmatmul.mubr.bf16.gmra.mrb[0].mxu0 %v4646
  %v5038 = vpop.f32.mrb[0].mxu0
  %v5039 = vadd.f32 %v4551, %v5038
  %v5040 = vpop.f32.mrb[0].mxu0
  %v5041 = vpop.f32.mrb[0].mxu0
  %v5042 = vadd.f32 %v4551, %v5041
  %v5043 = vpop.f32.mrb[0].mxu0
  %5044 = vmatprep.mubr.bf16.mxu0 0
  %5045 = vmatmul.mubr.bf16.gmra.mrb[0].mxu0 %v4648
  %v5046 = vpop.f32.mrb[0].mxu0
  %v5047 = vadd.f32 %v4551, %v5046
  %v5048 = vpop.f32.mrb[0].mxu0
  %v5049 = vpop.f32.mrb[0].mxu0
  %v5050 = vadd.f32 %v4551, %v5049
  %v5051 = vpop.f32.mrb[0].mxu0
  %5052 = vmatprep.mubr.bf16.mxu0 0
  %5053 = vmatmul.mubr.bf16.gmra.mrb[0].mxu0 %v4650
  %v5054 = vpop.f32.mrb[0].mxu0
  %v5055 = vadd.f32 %v4551, %v5054
  %v5056 = vpop.f32.mrb[0].mxu0
  %v5057 = vpop.f32.mrb[0].mxu0
  %v5058 = vadd.f32 %v4551, %v5057
  %v5059 = vpop.f32.mrb[0].mxu0
  %5060 = vmatprep.mubr.bf16.mxu0 0
  %5061 = vmatmul.mubr.bf16.gmra.mrb[0].mxu0 %v4652
  %v5062 = vpop.f32.mrb[0].mxu0
  %v5063 = vadd.f32 %v4551, %v5062
  %v5064 = vpop.f32.mrb[0].mxu0
  %v5065 = vpop.f32.mrb[0].mxu0
  %v5066 = vadd.f32 %v4551, %v5065
  %v5067 = vpop.f32.mrb[0].mxu0
  %5068 = vmatprep.mubr.bf16.mxu0 0
  %5069 = vmatmul.mubr.bf16.gmra.mrb[0].mxu0 %v4654
  %v5070 = vpop.f32.mrb[0].mxu0
  %v5071 = vadd.f32 %v4551, %v5070
  %v5072 = vpop.f32.mrb[0].mxu0
  %v5073 = vpop.f32.mrb[0].mxu0
  %v5074 = vadd.f32 %v4551, %v5073
  %v5075 = vpop.f32.mrb[0].mxu0
  %5076 = vmatprep.mubr.bf16.mxu0 0
  %5077 = vmatmul.mubr.bf16.gmra.mrb[0].mxu0 %v4656
  %v5078 = vpop.f32.mrb[0].mxu0
  %v5079 = vadd.f32 %v4551, %v5078
  %v5080 = vpop.f32.mrb[0].mxu0
  %v5081 = vpop.f32.mrb[0].mxu0
  %v5082 = vadd.f32 %v4551, %v5081
  %v5083 = vpop.f32.mrb[0].mxu0
  %5084 = vmatprep.mubr.bf16.mxu0 0
  %5085 = vmatmul.mubr.bf16.gmra.mrb[0].mxu0 %v4658
  %v5086 = vpop.f32.mrb[0].mxu0
  %v5087 = vadd.f32 %v4551, %v5086
  %v5088 = vpop.f32.mrb[0].mxu0
  %v5089 = vpop.f32.mrb[0].mxu0
  %v5090 = vadd.f32 %v4551, %v5089
  %v5091 = vpop.f32.mrb[0].mxu0
  %5092 = vmatprep.mubr.bf16.mxu0 0
  %5093 = vmatmul.mubr.bf16.gmra.mrb[0].mxu0 %v4660
  %v5094 = vpop.f32.mrb[0].mxu0
  %v5095 = vadd.f32 %v4551, %v5094
  %v5096 = vpop.f32.mrb[0].mxu0
  %v5097 = vpop.f32.mrb[0].mxu0
  %v5098 = vadd.f32 %v4551, %v5097
  %v5099 = vpop.f32.mrb[0].mxu0
  %5100 = vmatprep.mubr.bf16.mxu0 0
  %5101 = vmatmul.mubr.bf16.gmra.mrb[0].mxu0 %v4662
  %v5102 = vpop.f32.mrb[0].mxu0
  %v5103 = vadd.f32 %v4551, %v5102
  %v5104 = vpop.f32.mrb[0].mxu0
  %v5105 = vpop.f32.mrb[0].mxu0
  %v5106 = vadd.f32 %v4551, %v5105
  %v5107 = vpop.f32.mrb[0].mxu0
  %5108 = vmatprep.mubr.bf16.mxu0 0
  %5109 = vmatmul.mubr.bf16.gmra.mrb[0].mxu0 %v4664
  %v5110 = vpop.f32.mrb[0].mxu0
  %v5111 = vadd.f32 %v4551, %v5110
  %v5112 = vpop.f32.mrb[0].mxu0
  %v5113 = vpop.f32.mrb[0].mxu0
  %v5114 = vadd.f32 %v4551, %v5113
  %v5115 = vpop.f32.mrb[0].mxu0
  %5116 = vmatprep.mubr.bf16.mxu0 0
  %5117 = vmatmul.mubr.bf16.gmra.mrb[0].mxu0 %v4666
  %v5118 = vpop.f32.mrb[0].mxu0
  %v5119 = vadd.f32 %v4551, %v5118
  %v5120 = vpop.f32.mrb[0].mxu0
  %v5121 = vpop.f32.mrb[0].mxu0
  %v5122 = vadd.f32 %v4551, %v5121
  %v5123 = vpop.f32.mrb[0].mxu0
  %5124 = vmatprep.mubr.bf16.mxu0 0
  %5125 = vmatmul.mubr.bf16.gmra.mrb[0].mxu0 %v4668
  %v5126 = vpop.f32.mrb[0].mxu0
  %v5127 = vadd.f32 %v4551, %v5126
  %v5128 = vpop.f32.mrb[0].mxu0
  %v5129 = vpop.f32.mrb[0].mxu0
  %v5130 = vadd.f32 %v4551, %v5129
  %v5131 = vpop.f32.mrb[0].mxu0
  %5132 = vmatprep.mubr.bf16.mxu0 0
  %5133 = vmatmul.mubr.bf16.gmra.mrb[0].mxu0 %v4670
  %v5134 = vpop.f32.mrb[0].mxu0
  %v5135 = vadd.f32 %v4551, %v5134
  %v5136 = vpop.f32.mrb[0].mxu0
  %v5137 = vpop.f32.mrb[0].mxu0
  %v5138 = vadd.f32 %v4551, %v5137
  %v5139 = vpop.f32.mrb[0].mxu0
  %5140 = vmatprep.mubr.bf16.mxu0 0
  %5141 = vmatmul.mubr.bf16.gmra.mrb[0].mxu0 %v4672
  %v5142 = vpop.f32.mrb[0].mxu0
  %v5143 = vadd.f32 %v4551, %v5142
  %v5144 = vpop.f32.mrb[0].mxu0
  %v5145 = vpop.f32.mrb[0].mxu0
  %v5146 = vadd.f32 %v4551, %v5145
  %v5147 = vpop.f32.mrb[0].mxu0
  %5148 = vmatprep.mubr.bf16.mxu0 0
  %5149 = vmatmul.mubr.bf16.gmra.mrb[0].mxu0 %v4674
  %v5150 = vpop.f32.mrb[0].mxu0
  %v5151 = vadd.f32 %v4551, %v5150
  %v5152 = vpop.f32.mrb[0].mxu0
  %v5153 = vpop.f32.mrb[0].mxu0
  %v5154 = vadd.f32 %v4551, %v5153
  %v5155 = vpop.f32.mrb[0].mxu0
  %5156 = vmatprep.mubr.bf16.mxu0 0
  %5157 = vmatmul.mubr.bf16.gmra.mrb[0].mxu0 %v4676
  %v5158 = vpop.f32.mrb[0].mxu0
  %v5159 = vadd.f32 %v4551, %v5158
  %v5160 = vpop.f32.mrb[0].mxu0
  %v5161 = vpop.f32.mrb[0].mxu0
  %v5162 = vadd.f32 %v4551, %v5161
  %v5163 = vpop.f32.mrb[0].mxu0
  %5164 = vmatprep.mubr.bf16.mxu0 0
  %5165 = vmatmul.mubr.bf16.gmra.mrb[0].mxu0 %v4678
  %v5166 = vpop.f32.mrb[0].mxu0
  %v5167 = vadd.f32 %v4551, %v5166
  %v5168 = vpop.f32.mrb[0].mxu0
  %v5169 = vpop.f32.mrb[0].mxu0
  %v5170 = vadd.f32 %v4551, %v5169
  %v5171 = vpop.f32.mrb[0].mxu0
  %5172 = vmatprep.mubr.bf16.mxu0 0
  %5173 = vmatmul.mubr.bf16.gmra.mrb[0].mxu0 %v4680
  %v5174 = vpop.f32.mrb[0].mxu0
  %v5175 = vadd.f32 %v4551, %v5174
  %v5176 = vpop.f32.mrb[0].mxu0
  %v5177 = vpop.f32.mrb[0].mxu0
  %v5178 = vadd.f32 %v4551, %v5177
  %v5179 = vpop.f32.mrb[0].mxu0
  %5180 = vmatprep.mubr.bf16.mxu0 0
  %5181 = vmatmul.mubr.bf16.gmra.mrb[0].mxu0 %v4682
  %v5182 = vpop.f32.mrb[0].mxu0
  %v5183 = vadd.f32 %v4551, %v5182
  %v5184 = vpop.f32.mrb[0].mxu0
  %v5185 = vpop.f32.mrb[0].mxu0
  %v5186 = vpop.f32.mrb[0].mxu0
  %5187 = vdwg.mxu0
  %v5188 = vld [vmem:[%s2] sm:$0xff]
  %v5189 = vld [vmem:[%s2 + $0x8] sm:$0xff]
  %v5190 = vld [vmem:[%s2 + $0x10] sm:$0xff]
  %v5191 = vld [vmem:[%s2 + $0x18] sm:$0xff]
  %v5192 = vld [vmem:[%s2 + $0x20] sm:$0xff]
  %v5193 = vld [vmem:[%s2 + $0x28] sm:$0xff]
  %v5194 = vld [vmem:[%s2 + $0x30] sm:$0xff]
  %v5195 = vld [vmem:[%s2 + $0x38] sm:$0xff]
  %v5196 = vld [vmem:[%s2 + $0x40] sm:$0xff]
  %v5197 = vld [vmem:[%s2 + $0x48] sm:$0xff]
  %v5198 = vld [vmem:[%s2 + $0x50] sm:$0xff]
  %v5199 = vld [vmem:[%s2 + $0x58] sm:$0xff]
  %v5200 = vld [vmem:[%s2 + $0x60] sm:$0xff]
  %v5201 = vld [vmem:[%s2 + $0x68] sm:$0xff]
  %v5202 = vld [vmem:[%s2 + $0x70] sm:$0xff]
  %v5203 = vld [vmem:[%s2 + $0x78] sm:$0xff]
  %v5204 = vld [vmem:[%s2 + $0x80] sm:$0xff]
  %v5205 = vld [vmem:[%s2 + $0x88] sm:$0xff]
  %v5206 = vld [vmem:[%s2 + $0x90] sm:$0xff]
  %v5207 = vld [vmem:[%s2 + $0x98] sm:$0xff]
  %v5208 = vld [vmem:[%s2 + $0xa0] sm:$0xff]
  %v5209 = vld [vmem:[%s2 + $0xa8] sm:$0xff]
  %v5210 = vld [vmem:[%s2 + $0xb0] sm:$0xff]
  %v5211 = vld [vmem:[%s2 + $0xb8] sm:$0xff]
  %v5212 = vld [vmem:[%s2 + $0xc0] sm:$0xff]
  %v5213 = vld [vmem:[%s2 + $0xc8] sm:$0xff]
  %v5214 = vld [vmem:[%s2 + $0xd0] sm:$0xff]
  %v5215 = vld [vmem:[%s2 + $0xd8] sm:$0xff]
  %v5216 = vld [vmem:[%s2 + $0xe0] sm:$0xff]
  %v5217 = vld [vmem:[%s2 + $0xe8] sm:$0xff]
  %v5218 = vld [vmem:[%s2 + $0xf0] sm:$0xff]
  %v5219 = vld [vmem:[%s2 + $0xf8] sm:$0xff]
  %v5220 = vld [vmem:[%s2 + $0x100] sm:$0xff]
  %v5221 = vld [vmem:[%s2 + $0x108] sm:$0xff]
  %v5222 = vld [vmem:[%s2 + $0x110] sm:$0xff]
  %v5223 = vld [vmem:[%s2 + $0x118] sm:$0xff]
  %v5224 = vld [vmem:[%s2 + $0x120] sm:$0xff]
  %v5225 = vld [vmem:[%s2 + $0x128] sm:$0xff]
  %v5226 = vld [vmem:[%s2 + $0x130] sm:$0xff]
  %v5227 = vld [vmem:[%s2 + $0x138] sm:$0xff]
  %v5228 = vld [vmem:[%s2 + $0x140] sm:$0xff]
  %v5229 = vld [vmem:[%s2 + $0x148] sm:$0xff]
  %v5230 = vld [vmem:[%s2 + $0x150] sm:$0xff]
  %v5231 = vld [vmem:[%s2 + $0x158] sm:$0xff]
  %v5232 = vld [vmem:[%s2 + $0x160] sm:$0xff]
  %v5233 = vld [vmem:[%s2 + $0x168] sm:$0xff]
  %v5234 = vld [vmem:[%s2 + $0x170] sm:$0xff]
  %v5235 = vld [vmem:[%s2 + $0x178] sm:$0xff]
  %v5236 = vld [vmem:[%s2 + $0x180] sm:$0xff]
  %v5237 = vld [vmem:[%s2 + $0x188] sm:$0xff]
  %v5238 = vld [vmem:[%s2 + $0x190] sm:$0xff]
  %v5239 = vld [vmem:[%s2 + $0x198] sm:$0xff]
  %v5240 = vld [vmem:[%s2 + $0x1a0] sm:$0xff]
  %v5241 = vld [vmem:[%s2 + $0x1a8] sm:$0xff]
  %v5242 = vld [vmem:[%s2 + $0x1b0] sm:$0xff]
  %v5243 = vld [vmem:[%s2 + $0x1b8] sm:$0xff]
  %v5244 = vld [vmem:[%s2 + $0x1c0] sm:$0xff]
  %v5245 = vld [vmem:[%s2 + $0x1c8] sm:$0xff]
  %v5246 = vld [vmem:[%s2 + $0x1d0] sm:$0xff]
  %v5247 = vld [vmem:[%s2 + $0x1d8] sm:$0xff]
  %v5248 = vld [vmem:[%s2 + $0x1e0] sm:$0xff]
  %v5249 = vld [vmem:[%s2 + $0x1e8] sm:$0xff]
  %v5250 = vld [vmem:[%s2 + $0x1f0] sm:$0xff]
  %v5251 = vld [vmem:[%s2 + $0x1f8] sm:$0xff]
  %v5252 = vld [vmem:[%s2 + $0x200] sm:$0xff]
  %v5253 = vld [vmem:[%s2 + $0x208] sm:$0xff]
  %v5254 = vld [vmem:[%s2 + $0x210] sm:$0xff]
  %v5255 = vld [vmem:[%s2 + $0x218] sm:$0xff]
  %v5256 = vld [vmem:[%s2 + $0x220] sm:$0xff]
  %v5257 = vld [vmem:[%s2 + $0x228] sm:$0xff]
  %v5258 = vld [vmem:[%s2 + $0x230] sm:$0xff]
  %v5259 = vld [vmem:[%s2 + $0x238] sm:$0xff]
  %v5260 = vld [vmem:[%s2 + $0x240] sm:$0xff]
  %v5261 = vld [vmem:[%s2 + $0x248] sm:$0xff]
  %v5262 = vld [vmem:[%s2 + $0x250] sm:$0xff]
  %v5263 = vld [vmem:[%s2 + $0x258] sm:$0xff]
  %v5264 = vld [vmem:[%s2 + $0x260] sm:$0xff]
  %v5265 = vld [vmem:[%s2 + $0x268] sm:$0xff]
  %v5266 = vld [vmem:[%s2 + $0x270] sm:$0xff]
  %v5267 = vld [vmem:[%s2 + $0x278] sm:$0xff]
  %v5268 = vld [vmem:[%s2 + $0x280] sm:$0xff]
  %v5269 = vld [vmem:[%s2 + $0x288] sm:$0xff]
  %v5270 = vld [vmem:[%s2 + $0x290] sm:$0xff]
  %v5271 = vld [vmem:[%s2 + $0x298] sm:$0xff]
  %v5272 = vld [vmem:[%s2 + $0x2a0] sm:$0xff]
  %v5273 = vld [vmem:[%s2 + $0x2a8] sm:$0xff]
  %v5274 = vld [vmem:[%s2 + $0x2b0] sm:$0xff]
  %v5275 = vld [vmem:[%s2 + $0x2b8] sm:$0xff]
  %v5276 = vld [vmem:[%s2 + $0x2c0] sm:$0xff]
  %v5277 = vld [vmem:[%s2 + $0x2c8] sm:$0xff]
  %v5278 = vld [vmem:[%s2 + $0x2d0] sm:$0xff]
  %v5279 = vld [vmem:[%s2 + $0x2d8] sm:$0xff]
  %v5280 = vld [vmem:[%s2 + $0x2e0] sm:$0xff]
  %v5281 = vld [vmem:[%s2 + $0x2e8] sm:$0xff]
  %v5282 = vld [vmem:[%s2 + $0x2f0] sm:$0xff]
  %v5283 = vld [vmem:[%s2 + $0x2f8] sm:$0xff]
  %v5284 = vld [vmem:[%s2 + $0x300] sm:$0xff]
  %v5285 = vld [vmem:[%s2 + $0x308] sm:$0xff]
  %v5286 = vld [vmem:[%s2 + $0x310] sm:$0xff]
  %v5287 = vld [vmem:[%s2 + $0x318] sm:$0xff]
  %v5288 = vld [vmem:[%s2 + $0x320] sm:$0xff]
  %v5289 = vld [vmem:[%s2 + $0x328] sm:$0xff]
  %v5290 = vld [vmem:[%s2 + $0x330] sm:$0xff]
  %v5291 = vld [vmem:[%s2 + $0x338] sm:$0xff]
  %v5292 = vld [vmem:[%s2 + $0x340] sm:$0xff]
  %v5293 = vld [vmem:[%s2 + $0x348] sm:$0xff]
  %v5294 = vld [vmem:[%s2 + $0x350] sm:$0xff]
  %v5295 = vld [vmem:[%s2 + $0x358] sm:$0xff]
  %v5296 = vld [vmem:[%s2 + $0x360] sm:$0xff]
  %v5297 = vld [vmem:[%s2 + $0x368] sm:$0xff]
  %v5298 = vld [vmem:[%s2 + $0x370] sm:$0xff]
  %v5299 = vld [vmem:[%s2 + $0x378] sm:$0xff]
  %v5300 = vld [vmem:[%s2 + $0x380] sm:$0xff]
  %v5301 = vld [vmem:[%s2 + $0x388] sm:$0xff]
  %v5302 = vld [vmem:[%s2 + $0x390] sm:$0xff]
  %v5303 = vld [vmem:[%s2 + $0x398] sm:$0xff]
  %v5304 = vld [vmem:[%s2 + $0x3a0] sm:$0x7f]
  %5306 = vset.pattern.permute.xlu0 0
  %5307 = vperm.xlu0 %5306, %v5188
  %v5308 = vpop.permute.xlu0 %5307
  %5311 = vset.pattern.permute.xlu0 0
  %5312 = vperm.xlu0 %5311, %v5189
  %v5313 = vpop.permute.xlu0 %5312
  %5316 = vset.pattern.permute.xlu0 0
  %5317 = vperm.xlu0 %5316, %v5190
  %v5318 = vpop.permute.xlu0 %5317
  %5321 = vset.pattern.permute.xlu0 0
  %5322 = vperm.xlu0 %5321, %v5191
  %v5323 = vpop.permute.xlu0 %5322
  %5326 = vset.pattern.permute.xlu0 0
  %5327 = vperm.xlu0 %5326, %v5192
  %v5328 = vpop.permute.xlu0 %5327
  %5331 = vset.pattern.permute.xlu0 0
  %5332 = vperm.xlu0 %5331, %v5193
  %v5333 = vpop.permute.xlu0 %5332
  %5336 = vset.pattern.permute.xlu0 0
  %5337 = vperm.xlu0 %5336, %v5194
  %v5338 = vpop.permute.xlu0 %5337
  %5341 = vset.pattern.permute.xlu0 0
  %5342 = vperm.xlu0 %5341, %v5195
  %v5343 = vpop.permute.xlu0 %5342
  %5346 = vset.pattern.permute.xlu0 0
  %5347 = vperm.xlu0 %5346, %v5196
  %v5348 = vpop.permute.xlu0 %5347
  %5351 = vset.pattern.permute.xlu0 0
  %5352 = vperm.xlu0 %5351, %v5197
  %v5353 = vpop.permute.xlu0 %5352
  %5356 = vset.pattern.permute.xlu0 0
  %5357 = vperm.xlu0 %5356, %v5198
  %v5358 = vpop.permute.xlu0 %5357
  %5361 = vset.pattern.permute.xlu0 0
  %5362 = vperm.xlu0 %5361, %v5199
  %v5363 = vpop.permute.xlu0 %5362
  %5366 = vset.pattern.permute.xlu0 0
  %5367 = vperm.xlu0 %5366, %v5200
  %v5368 = vpop.permute.xlu0 %5367
  %5371 = vset.pattern.permute.xlu0 0
  %5372 = vperm.xlu0 %5371, %v5201
  %v5373 = vpop.permute.xlu0 %5372
  %5376 = vset.pattern.permute.xlu0 0
  %5377 = vperm.xlu0 %5376, %v5202
  %v5378 = vpop.permute.xlu0 %5377
  %5381 = vset.pattern.permute.xlu0 0
  %5382 = vperm.xlu0 %5381, %v5203
  %v5383 = vpop.permute.xlu0 %5382
  %5386 = vset.pattern.permute.xlu0 0
  %5387 = vperm.xlu0 %5386, %v5204
  %v5388 = vpop.permute.xlu0 %5387
  %5391 = vset.pattern.permute.xlu0 0
  %5392 = vperm.xlu0 %5391, %v5205
  %v5393 = vpop.permute.xlu0 %5392
  %5396 = vset.pattern.permute.xlu0 0
  %5397 = vperm.xlu0 %5396, %v5206
  %v5398 = vpop.permute.xlu0 %5397
  %5401 = vset.pattern.permute.xlu0 0
  %5402 = vperm.xlu0 %5401, %v5207
  %v5403 = vpop.permute.xlu0 %5402
  %5406 = vset.pattern.permute.xlu0 0
  %5407 = vperm.xlu0 %5406, %v5208
  %v5408 = vpop.permute.xlu0 %5407
  %5411 = vset.pattern.permute.xlu0 0
  %5412 = vperm.xlu0 %5411, %v5209
  %v5413 = vpop.permute.xlu0 %5412
  %5416 = vset.pattern.permute.xlu0 0
  %5417 = vperm.xlu0 %5416, %v5210
  %v5418 = vpop.permute.xlu0 %5417
  %5421 = vset.pattern.permute.xlu0 0
  %5422 = vperm.xlu0 %5421, %v5211
  %v5423 = vpop.permute.xlu0 %5422
  %5426 = vset.pattern.permute.xlu0 0
  %5427 = vperm.xlu0 %5426, %v5212
  %v5428 = vpop.permute.xlu0 %5427
  %5431 = vset.pattern.permute.xlu0 0
  %5432 = vperm.xlu0 %5431, %v5213
  %v5433 = vpop.permute.xlu0 %5432
  %5436 = vset.pattern.permute.xlu0 0
  %5437 = vperm.xlu0 %5436, %v5214
  %v5438 = vpop.permute.xlu0 %5437
  %5441 = vset.pattern.permute.xlu0 0
  %5442 = vperm.xlu0 %5441, %v5215
  %v5443 = vpop.permute.xlu0 %5442
  %5446 = vset.pattern.permute.xlu0 0
  %5447 = vperm.xlu0 %5446, %v5216
  %v5448 = vpop.permute.xlu0 %5447
  %5451 = vset.pattern.permute.xlu0 0
  %5452 = vperm.xlu0 %5451, %v5217
  %v5453 = vpop.permute.xlu0 %5452
  %5456 = vset.pattern.permute.xlu0 0
  %5457 = vperm.xlu0 %5456, %v5218
  %v5458 = vpop.permute.xlu0 %5457
  %5461 = vset.pattern.permute.xlu0 0
  %5462 = vperm.xlu0 %5461, %v5219
  %v5463 = vpop.permute.xlu0 %5462
  %5466 = vset.pattern.permute.xlu0 0
  %5467 = vperm.xlu0 %5466, %v5220
  %v5468 = vpop.permute.xlu0 %5467
  %5471 = vset.pattern.permute.xlu0 0
  %5472 = vperm.xlu0 %5471, %v5221
  %v5473 = vpop.permute.xlu0 %5472
  %5476 = vset.pattern.permute.xlu0 0
  %5477 = vperm.xlu0 %5476, %v5222
  %v5478 = vpop.permute.xlu0 %5477
  %5481 = vset.pattern.permute.xlu0 0
  %5482 = vperm.xlu0 %5481, %v5223
  %v5483 = vpop.permute.xlu0 %5482
  %5486 = vset.pattern.permute.xlu0 0
  %5487 = vperm.xlu0 %5486, %v5224
  %v5488 = vpop.permute.xlu0 %5487
  %5491 = vset.pattern.permute.xlu0 0
  %5492 = vperm.xlu0 %5491, %v5225
  %v5493 = vpop.permute.xlu0 %5492
  %5496 = vset.pattern.permute.xlu0 0
  %5497 = vperm.xlu0 %5496, %v5226
  %v5498 = vpop.permute.xlu0 %5497
  %5501 = vset.pattern.permute.xlu0 0
  %5502 = vperm.xlu0 %5501, %v5227
  %v5503 = vpop.permute.xlu0 %5502
  %5506 = vset.pattern.permute.xlu0 0
  %5507 = vperm.xlu0 %5506, %v5228
  %v5508 = vpop.permute.xlu0 %5507
  %5511 = vset.pattern.permute.xlu0 0
  %5512 = vperm.xlu0 %5511, %v5229
  %v5513 = vpop.permute.xlu0 %5512
  %5516 = vset.pattern.permute.xlu0 0
  %5517 = vperm.xlu0 %5516, %v5230
  %v5518 = vpop.permute.xlu0 %5517
  %5521 = vset.pattern.permute.xlu0 0
  %5522 = vperm.xlu0 %5521, %v5231
  %v5523 = vpop.permute.xlu0 %5522
  %5526 = vset.pattern.permute.xlu0 0
  %5527 = vperm.xlu0 %5526, %v5232
  %v5528 = vpop.permute.xlu0 %5527
  %5531 = vset.pattern.permute.xlu0 0
  %5532 = vperm.xlu0 %5531, %v5233
  %v5533 = vpop.permute.xlu0 %5532
  %5536 = vset.pattern.permute.xlu0 0
  %5537 = vperm.xlu0 %5536, %v5234
  %v5538 = vpop.permute.xlu0 %5537
  %5541 = vset.pattern.permute.xlu0 0
  %5542 = vperm.xlu0 %5541, %v5235
  %v5543 = vpop.permute.xlu0 %5542
  %5546 = vset.pattern.permute.xlu0 0
  %5547 = vperm.xlu0 %5546, %v5236
  %v5548 = vpop.permute.xlu0 %5547
  %5551 = vset.pattern.permute.xlu0 0
  %5552 = vperm.xlu0 %5551, %v5237
  %v5553 = vpop.permute.xlu0 %5552
  %5556 = vset.pattern.permute.xlu0 0
  %5557 = vperm.xlu0 %5556, %v5238
  %v5558 = vpop.permute.xlu0 %5557
  %5561 = vset.pattern.permute.xlu0 0
  %5562 = vperm.xlu0 %5561, %v5239
  %v5563 = vpop.permute.xlu0 %5562
  %5566 = vset.pattern.permute.xlu0 0
  %5567 = vperm.xlu0 %5566, %v5240
  %v5568 = vpop.permute.xlu0 %5567
  %5571 = vset.pattern.permute.xlu0 0
  %5572 = vperm.xlu0 %5571, %v5241
  %v5573 = vpop.permute.xlu0 %5572
  %5576 = vset.pattern.permute.xlu0 0
  %5577 = vperm.xlu0 %5576, %v5242
  %v5578 = vpop.permute.xlu0 %5577
  %5581 = vset.pattern.permute.xlu0 0
  %5582 = vperm.xlu0 %5581, %v5243
  %v5583 = vpop.permute.xlu0 %5582
  %5586 = vset.pattern.permute.xlu0 0
  %5587 = vperm.xlu0 %5586, %v5244
  %v5588 = vpop.permute.xlu0 %5587
  %5591 = vset.pattern.permute.xlu0 0
  %5592 = vperm.xlu0 %5591, %v5245
  %v5593 = vpop.permute.xlu0 %5592
  %5596 = vset.pattern.permute.xlu0 0
  %5597 = vperm.xlu0 %5596, %v5246
  %v5598 = vpop.permute.xlu0 %5597
  %5601 = vset.pattern.permute.xlu0 0
  %5602 = vperm.xlu0 %5601, %v5247
  %v5603 = vpop.permute.xlu0 %5602
  %5606 = vset.pattern.permute.xlu0 0
  %5607 = vperm.xlu0 %5606, %v5248
  %v5608 = vpop.permute.xlu0 %5607
  %5611 = vset.pattern.permute.xlu0 0
  %5612 = vperm.xlu0 %5611, %v5249
  %v5613 = vpop.permute.xlu0 %5612
  %5616 = vset.pattern.permute.xlu0 0
  %5617 = vperm.xlu0 %5616, %v5250
  %v5618 = vpop.permute.xlu0 %5617
  %5621 = vset.pattern.permute.xlu0 0
  %5622 = vperm.xlu0 %5621, %v5251
  %v5623 = vpop.permute.xlu0 %5622
  %5626 = vset.pattern.permute.xlu0 0
  %5627 = vperm.xlu0 %5626, %v5252
  %v5628 = vpop.permute.xlu0 %5627
  %5631 = vset.pattern.permute.xlu0 0
  %5632 = vperm.xlu0 %5631, %v5253
  %v5633 = vpop.permute.xlu0 %5632
  %5636 = vset.pattern.permute.xlu0 0
  %5637 = vperm.xlu0 %5636, %v5254
  %v5638 = vpop.permute.xlu0 %5637
  %5641 = vset.pattern.permute.xlu0 0
  %5642 = vperm.xlu0 %5641, %v5255
  %v5643 = vpop.permute.xlu0 %5642
  %5646 = vset.pattern.permute.xlu0 0
  %5647 = vperm.xlu0 %5646, %v5256
  %v5648 = vpop.permute.xlu0 %5647
  %5651 = vset.pattern.permute.xlu0 0
  %5652 = vperm.xlu0 %5651, %v5257
  %v5653 = vpop.permute.xlu0 %5652
  %5656 = vset.pattern.permute.xlu0 0
  %5657 = vperm.xlu0 %5656, %v5258
  %v5658 = vpop.permute.xlu0 %5657
  %5661 = vset.pattern.permute.xlu0 0
  %5662 = vperm.xlu0 %5661, %v5259
  %v5663 = vpop.permute.xlu0 %5662
  %5666 = vset.pattern.permute.xlu0 0
  %5667 = vperm.xlu0 %5666, %v5260
  %v5668 = vpop.permute.xlu0 %5667
  %5671 = vset.pattern.permute.xlu0 0
  %5672 = vperm.xlu0 %5671, %v5261
  %v5673 = vpop.permute.xlu0 %5672
  %5676 = vset.pattern.permute.xlu0 0
  %5677 = vperm.xlu0 %5676, %v5262
  %v5678 = vpop.permute.xlu0 %5677
  %5681 = vset.pattern.permute.xlu0 0
  %5682 = vperm.xlu0 %5681, %v5263
  %v5683 = vpop.permute.xlu0 %5682
  %5686 = vset.pattern.permute.xlu0 0
  %5687 = vperm.xlu0 %5686, %v5264
  %v5688 = vpop.permute.xlu0 %5687
  %5691 = vset.pattern.permute.xlu0 0
  %5692 = vperm.xlu0 %5691, %v5265
  %v5693 = vpop.permute.xlu0 %5692
  %5696 = vset.pattern.permute.xlu0 0
  %5697 = vperm.xlu0 %5696, %v5266
  %v5698 = vpop.permute.xlu0 %5697
  %5701 = vset.pattern.permute.xlu0 0
  %5702 = vperm.xlu0 %5701, %v5267
  %v5703 = vpop.permute.xlu0 %5702
  %5706 = vset.pattern.permute.xlu0 0
  %5707 = vperm.xlu0 %5706, %v5268
  %v5708 = vpop.permute.xlu0 %5707
  %5711 = vset.pattern.permute.xlu0 0
  %5712 = vperm.xlu0 %5711, %v5269
  %v5713 = vpop.permute.xlu0 %5712
  %5716 = vset.pattern.permute.xlu0 0
  %5717 = vperm.xlu0 %5716, %v5270
  %v5718 = vpop.permute.xlu0 %5717
  %5721 = vset.pattern.permute.xlu0 0
  %5722 = vperm.xlu0 %5721, %v5271
  %v5723 = vpop.permute.xlu0 %5722
  %5726 = vset.pattern.permute.xlu0 0
  %5727 = vperm.xlu0 %5726, %v5272
  %v5728 = vpop.permute.xlu0 %5727
  %5731 = vset.pattern.permute.xlu0 0
  %5732 = vperm.xlu0 %5731, %v5273
  %v5733 = vpop.permute.xlu0 %5732
  %5736 = vset.pattern.permute.xlu0 0
  %5737 = vperm.xlu0 %5736, %v5274
  %v5738 = vpop.permute.xlu0 %5737
  %5741 = vset.pattern.permute.xlu0 0
  %5742 = vperm.xlu0 %5741, %v5275
  %v5743 = vpop.permute.xlu0 %5742
  %5746 = vset.pattern.permute.xlu0 0
  %5747 = vperm.xlu0 %5746, %v5276
  %v5748 = vpop.permute.xlu0 %5747
  %5751 = vset.pattern.permute.xlu0 0
  %5752 = vperm.xlu0 %5751, %v5277
  %v5753 = vpop.permute.xlu0 %5752
  %5756 = vset.pattern.permute.xlu0 0
  %5757 = vperm.xlu0 %5756, %v5278
  %v5758 = vpop.permute.xlu0 %5757
  %5761 = vset.pattern.permute.xlu0 0
  %5762 = vperm.xlu0 %5761, %v5279
  %v5763 = vpop.permute.xlu0 %5762
  %5766 = vset.pattern.permute.xlu0 0
  %5767 = vperm.xlu0 %5766, %v5280
  %v5768 = vpop.permute.xlu0 %5767
  %5771 = vset.pattern.permute.xlu0 0
  %5772 = vperm.xlu0 %5771, %v5281
  %v5773 = vpop.permute.xlu0 %5772
  %5776 = vset.pattern.permute.xlu0 0
  %5777 = vperm.xlu0 %5776, %v5282
  %v5778 = vpop.permute.xlu0 %5777
  %5781 = vset.pattern.permute.xlu0 0
  %5782 = vperm.xlu0 %5781, %v5283
  %v5783 = vpop.permute.xlu0 %5782
  %5786 = vset.pattern.permute.xlu0 0
  %5787 = vperm.xlu0 %5786, %v5284
  %v5788 = vpop.permute.xlu0 %5787
  %5791 = vset.pattern.permute.xlu0 0
  %5792 = vperm.xlu0 %5791, %v5285
  %v5793 = vpop.permute.xlu0 %5792
  %5796 = vset.pattern.permute.xlu0 0
  %5797 = vperm.xlu0 %5796, %v5286
  %v5798 = vpop.permute.xlu0 %5797
  %5801 = vset.pattern.permute.xlu0 0
  %5802 = vperm.xlu0 %5801, %v5287
  %v5803 = vpop.permute.xlu0 %5802
  %5806 = vset.pattern.permute.xlu0 0
  %5807 = vperm.xlu0 %5806, %v5288
  %v5808 = vpop.permute.xlu0 %5807
  %5811 = vset.pattern.permute.xlu0 0
  %5812 = vperm.xlu0 %5811, %v5289
  %v5813 = vpop.permute.xlu0 %5812
  %5816 = vset.pattern.permute.xlu0 0
  %5817 = vperm.xlu0 %5816, %v5290
  %v5818 = vpop.permute.xlu0 %5817
  %5821 = vset.pattern.permute.xlu0 0
  %5822 = vperm.xlu0 %5821, %v5291
  %v5823 = vpop.permute.xlu0 %5822
  %5826 = vset.pattern.permute.xlu0 0
  %5827 = vperm.xlu0 %5826, %v5292
  %v5828 = vpop.permute.xlu0 %5827
  %5831 = vset.pattern.permute.xlu0 0
  %5832 = vperm.xlu0 %5831, %v5293
  %v5833 = vpop.permute.xlu0 %5832
  %5836 = vset.pattern.permute.xlu0 0
  %5837 = vperm.xlu0 %5836, %v5294
  %v5838 = vpop.permute.xlu0 %5837
  %5841 = vset.pattern.permute.xlu0 0
  %5842 = vperm.xlu0 %5841, %v5295
  %v5843 = vpop.permute.xlu0 %5842
  %5846 = vset.pattern.permute.xlu0 0
  %5847 = vperm.xlu0 %5846, %v5296
  %v5848 = vpop.permute.xlu0 %5847
  %5851 = vset.pattern.permute.xlu0 0
  %5852 = vperm.xlu0 %5851, %v5297
  %v5853 = vpop.permute.xlu0 %5852
  %5856 = vset.pattern.permute.xlu0 0
  %5857 = vperm.xlu0 %5856, %v5298
  %v5858 = vpop.permute.xlu0 %5857
  %5861 = vset.pattern.permute.xlu0 0
  %5862 = vperm.xlu0 %5861, %v5299
  %v5863 = vpop.permute.xlu0 %5862
  %5866 = vset.pattern.permute.xlu0 0
  %5867 = vperm.xlu0 %5866, %v5300
  %v5868 = vpop.permute.xlu0 %5867
  %5871 = vset.pattern.permute.xlu0 0
  %5872 = vperm.xlu0 %5871, %v5301
  %v5873 = vpop.permute.xlu0 %5872
  %5876 = vset.pattern.permute.xlu0 0
  %5877 = vperm.xlu0 %5876, %v5302
  %v5878 = vpop.permute.xlu0 %5877
  %5881 = vset.pattern.permute.xlu0 0
  %5882 = vperm.xlu0 %5881, %v5303
  %v5883 = vpop.permute.xlu0 %5882
  %5886 = vset.pattern.permute.xlu0 0
  %5887 = vperm.xlu0 %5886, %v5304
  %v5888 = vpop.permute.xlu0 %5887
  %v5890 = vmul.f32 %v4719, %v5308
  %v5891 = vmul.f32 %v4722, %v5313
  %v5892 = vmul.f32 %v4727, %v5318
  %v5893 = vmul.f32 %v4730, %v5323
  %v5894 = vmul.f32 %v4735, %v5328
  %v5895 = vmul.f32 %v4738, %v5333
  %v5896 = vmul.f32 %v4743, %v5338
  %v5897 = vmul.f32 %v4746, %v5343
  %v5898 = vmul.f32 %v4751, %v5348
  %v5899 = vmul.f32 %v4754, %v5353
  %v5900 = vmul.f32 %v4759, %v5358
  %v5901 = vmul.f32 %v4762, %v5363
  %v5902 = vmul.f32 %v4767, %v5368
  %v5903 = vmul.f32 %v4770, %v5373
  %v5904 = vmul.f32 %v4775, %v5378
  %v5905 = vmul.f32 %v4778, %v5383
  %v5906 = vmul.f32 %v4783, %v5388
  %v5907 = vmul.f32 %v4786, %v5393
  %v5908 = vmul.f32 %v4791, %v5398
  %v5909 = vmul.f32 %v4794, %v5403
  %v5910 = vmul.f32 %v4799, %v5408
  %v5911 = vmul.f32 %v4802, %v5413
  %v5912 = vmul.f32 %v4807, %v5418
  %v5913 = vmul.f32 %v4810, %v5423
  %v5914 = vmul.f32 %v4815, %v5428
  %v5915 = vmul.f32 %v4818, %v5433
  %v5916 = vmul.f32 %v4823, %v5438
  %v5917 = vmul.f32 %v4826, %v5443
  %v5918 = vmul.f32 %v4831, %v5448
  %v5919 = vmul.f32 %v4834, %v5453
  %v5920 = vmul.f32 %v4839, %v5458
  %v5921 = vmul.f32 %v4842, %v5463
  %v5922 = vmul.f32 %v4847, %v5468
  %v5923 = vmul.f32 %v4850, %v5473
  %v5924 = vmul.f32 %v4855, %v5478
  %v5925 = vmul.f32 %v4858, %v5483
  %v5926 = vmul.f32 %v4863, %v5488
  %v5927 = vmul.f32 %v4866, %v5493
  %v5928 = vmul.f32 %v4871, %v5498
  %v5929 = vmul.f32 %v4874, %v5503
  %v5930 = vmul.f32 %v4879, %v5508
  %v5931 = vmul.f32 %v4882, %v5513
  %v5932 = vmul.f32 %v4887, %v5518
  %v5933 = vmul.f32 %v4890, %v5523
  %v5934 = vmul.f32 %v4895, %v5528
  %v5935 = vmul.f32 %v4898, %v5533
  %v5936 = vmul.f32 %v4903, %v5538
  %v5937 = vmul.f32 %v4906, %v5543
  %v5938 = vmul.f32 %v4911, %v5548
  %v5939 = vmul.f32 %v4914, %v5553
  %v5940 = vmul.f32 %v4919, %v5558
  %v5941 = vmul.f32 %v4922, %v5563
  %v5942 = vmul.f32 %v4927, %v5568
  %v5943 = vmul.f32 %v4930, %v5573
  %v5944 = vmul.f32 %v4935, %v5578
  %v5945 = vmul.f32 %v4938, %v5583
  %v5946 = vmul.f32 %v4943, %v5588
  %v5947 = vmul.f32 %v4946, %v5593
  %v5948 = vmul.f32 %v4951, %v5598
  %v5949 = vmul.f32 %v4954, %v5603
  %v5950 = vmul.f32 %v4959, %v5608
  %v5951 = vmul.f32 %v4962, %v5613
  %v5952 = vmul.f32 %v4967, %v5618
  %v5953 = vmul.f32 %v4970, %v5623
  %v5954 = vmul.f32 %v4975, %v5628
  %v5955 = vmul.f32 %v4978, %v5633
  %v5956 = vmul.f32 %v4983, %v5638
  %v5957 = vmul.f32 %v4986, %v5643
  %v5958 = vmul.f32 %v4991, %v5648
  %v5959 = vmul.f32 %v4994, %v5653
  %v5960 = vmul.f32 %v4999, %v5658
  %v5961 = vmul.f32 %v5002, %v5663
  %v5962 = vmul.f32 %v5007, %v5668
  %v5963 = vmul.f32 %v5010, %v5673
  %v5964 = vmul.f32 %v5015, %v5678
  %v5965 = vmul.f32 %v5018, %v5683
  %v5966 = vmul.f32 %v5023, %v5688
  %v5967 = vmul.f32 %v5026, %v5693
  %v5968 = vmul.f32 %v5031, %v5698
  %v5969 = vmul.f32 %v5034, %v5703
  %v5970 = vmul.f32 %v5039, %v5708
  %v5971 = vmul.f32 %v5042, %v5713
  %v5972 = vmul.f32 %v5047, %v5718
  %v5973 = vmul.f32 %v5050, %v5723
  %v5974 = vmul.f32 %v5055, %v5728
  %v5975 = vmul.f32 %v5058, %v5733
  %v5976 = vmul.f32 %v5063, %v5738
  %v5977 = vmul.f32 %v5066, %v5743
  %v5978 = vmul.f32 %v5071, %v5748
  %v5979 = vmul.f32 %v5074, %v5753
  %v5980 = vmul.f32 %v5079, %v5758
  %v5981 = vmul.f32 %v5082, %v5763
  %v5982 = vmul.f32 %v5087, %v5768
  %v5983 = vmul.f32 %v5090, %v5773
  %v5984 = vmul.f32 %v5095, %v5778
  %v5985 = vmul.f32 %v5098, %v5783
  %v5986 = vmul.f32 %v5103, %v5788
  %v5987 = vmul.f32 %v5106, %v5793
  %v5988 = vmul.f32 %v5111, %v5798
  %v5989 = vmul.f32 %v5114, %v5803
  %v5990 = vmul.f32 %v5119, %v5808
  %v5991 = vmul.f32 %v5122, %v5813
  %v5992 = vmul.f32 %v5127, %v5818
  %v5993 = vmul.f32 %v5130, %v5823
  %v5994 = vmul.f32 %v5135, %v5828
  %v5995 = vmul.f32 %v5138, %v5833
  %v5996 = vmul.f32 %v5143, %v5838
  %v5997 = vmul.f32 %v5146, %v5843
  %v5998 = vmul.f32 %v5151, %v5848
  %v5999 = vmul.f32 %v5154, %v5853
  %v6000 = vmul.f32 %v5159, %v5858
  %v6001 = vmul.f32 %v5162, %v5863
  %v6002 = vmul.f32 %v5167, %v5868
  %v6003 = vmul.f32 %v5170, %v5873
  %v6004 = vmul.f32 %v5175, %v5878
  %v6005 = vmul.f32 %v5178, %v5883
  %v6006 = vmul.f32 %v5183, %v5888
  %v6007 = vsel %vm3709, %v5890, 0.0
  %v6008 = vsel %vm3709, %v5891, 0.0
  %v6009 = vadd.f32 %v6007, %v6008
  %v6010 = vsel %vm3709, %v5892, 0.0
  %v6011 = vadd.f32 %v6009, %v6010
  %v6012 = vsel %vm3709, %v5893, 0.0
  %v6013 = vadd.f32 %v6011, %v6012
  %v6014 = vsel %vm3709, %v5894, 0.0
  %v6015 = vadd.f32 %v6013, %v6014
  %v6016 = vsel %vm3709, %v5895, 0.0
  %v6017 = vadd.f32 %v6015, %v6016
  %v6018 = vsel %vm3709, %v5896, 0.0
  %v6019 = vadd.f32 %v6017, %v6018
  %v6020 = vsel %vm3709, %v5897, 0.0
  %v6021 = vadd.f32 %v6019, %v6020
  %v6022 = vsel %vm3709, %v5898, 0.0
  %v6023 = vadd.f32 %v6021, %v6022
  %v6024 = vsel %vm3709, %v5899, 0.0
  %v6025 = vadd.f32 %v6023, %v6024
  %v6026 = vsel %vm3709, %v5900, 0.0
  %v6027 = vadd.f32 %v6025, %v6026
  %v6028 = vsel %vm3709, %v5901, 0.0
  %v6029 = vadd.f32 %v6027, %v6028
  %v6030 = vsel %vm3709, %v5902, 0.0
  %v6031 = vadd.f32 %v6029, %v6030
  %v6032 = vsel %vm3709, %v5903, 0.0
  %v6033 = vadd.f32 %v6031, %v6032
  %v6034 = vsel %vm3709, %v5904, 0.0
  %v6035 = vadd.f32 %v6033, %v6034
  %v6036 = vsel %vm3709, %v5905, 0.0
  %v6037 = vadd.f32 %v6035, %v6036
  %v6038 = vsel %vm3709, %v5906, 0.0
  %v6039 = vadd.f32 %v6037, %v6038
  %v6040 = vsel %vm3709, %v5907, 0.0
  %v6041 = vadd.f32 %v6039, %v6040
  %v6042 = vsel %vm3709, %v5908, 0.0
  %v6043 = vadd.f32 %v6041, %v6042
  %v6044 = vsel %vm3709, %v5909, 0.0
  %v6045 = vadd.f32 %v6043, %v6044
  %v6046 = vsel %vm3709, %v5910, 0.0
  %v6047 = vadd.f32 %v6045, %v6046
  %v6048 = vsel %vm3709, %v5911, 0.0
  %v6049 = vadd.f32 %v6047, %v6048
  %v6050 = vsel %vm3709, %v5912, 0.0
  %v6051 = vadd.f32 %v6049, %v6050
  %v6052 = vsel %vm3709, %v5913, 0.0
  %v6053 = vadd.f32 %v6051, %v6052
  %v6054 = vsel %vm3709, %v5914, 0.0
  %v6055 = vadd.f32 %v6053, %v6054
  %v6056 = vsel %vm3709, %v5915, 0.0
  %v6057 = vadd.f32 %v6055, %v6056
  %v6058 = vsel %vm3709, %v5916, 0.0
  %v6059 = vadd.f32 %v6057, %v6058
  %v6060 = vsel %vm3709, %v5917, 0.0
  %v6061 = vadd.f32 %v6059, %v6060
  %v6062 = vsel %vm3709, %v5918, 0.0
  %v6063 = vadd.f32 %v6061, %v6062
  %v6064 = vsel %vm3709, %v5919, 0.0
  %v6065 = vadd.f32 %v6063, %v6064
  %v6066 = vsel %vm3709, %v5920, 0.0
  %v6067 = vadd.f32 %v6065, %v6066
  %v6068 = vsel %vm3709, %v5921, 0.0
  %v6069 = vadd.f32 %v6067, %v6068
  %v6070 = vsel %vm3709, %v5922, 0.0
  %v6071 = vadd.f32 %v6069, %v6070
  %v6072 = vsel %vm3709, %v5923, 0.0
  %v6073 = vadd.f32 %v6071, %v6072
  %v6074 = vsel %vm3709, %v5924, 0.0
  %v6075 = vadd.f32 %v6073, %v6074
  %v6076 = vsel %vm3709, %v5925, 0.0
  %v6077 = vadd.f32 %v6075, %v6076
  %v6078 = vsel %vm3709, %v5926, 0.0
  %v6079 = vadd.f32 %v6077, %v6078
  %v6080 = vsel %vm3709, %v5927, 0.0
  %v6081 = vadd.f32 %v6079, %v6080
  %v6082 = vsel %vm3709, %v5928, 0.0
  %v6083 = vadd.f32 %v6081, %v6082
  %v6084 = vsel %vm3709, %v5929, 0.0
  %v6085 = vadd.f32 %v6083, %v6084
  %v6086 = vsel %vm3709, %v5930, 0.0
  %v6087 = vadd.f32 %v6085, %v6086
  %v6088 = vsel %vm3709, %v5931, 0.0
  %v6089 = vadd.f32 %v6087, %v6088
  %v6090 = vsel %vm3709, %v5932, 0.0
  %v6091 = vadd.f32 %v6089, %v6090
  %v6092 = vsel %vm3709, %v5933, 0.0
  %v6093 = vadd.f32 %v6091, %v6092
  %v6094 = vsel %vm3709, %v5934, 0.0
  %v6095 = vadd.f32 %v6093, %v6094
  %v6096 = vsel %vm3709, %v5935, 0.0
  %v6097 = vadd.f32 %v6095, %v6096
  %v6098 = vsel %vm3709, %v5936, 0.0
  %v6099 = vadd.f32 %v6097, %v6098
  %v6100 = vsel %vm3709, %v5937, 0.0
  %v6101 = vadd.f32 %v6099, %v6100
  %v6102 = vsel %vm3709, %v5938, 0.0
  %v6103 = vadd.f32 %v6101, %v6102
  %v6104 = vsel %vm3709, %v5939, 0.0
  %v6105 = vadd.f32 %v6103, %v6104
  %v6106 = vsel %vm3709, %v5940, 0.0
  %v6107 = vadd.f32 %v6105, %v6106
  %v6108 = vsel %vm3709, %v5941, 0.0
  %v6109 = vadd.f32 %v6107, %v6108
  %v6110 = vsel %vm3709, %v5942, 0.0
  %v6111 = vadd.f32 %v6109, %v6110
  %v6112 = vsel %vm3709, %v5943, 0.0
  %v6113 = vadd.f32 %v6111, %v6112
  %v6114 = vsel %vm3709, %v5944, 0.0
  %v6115 = vadd.f32 %v6113, %v6114
  %v6116 = vsel %vm3709, %v5945, 0.0
  %v6117 = vadd.f32 %v6115, %v6116
  %v6118 = vsel %vm3709, %v5946, 0.0
  %v6119 = vadd.f32 %v6117, %v6118
  %v6120 = vsel %vm3709, %v5947, 0.0
  %v6121 = vadd.f32 %v6119, %v6120
  %v6122 = vsel %vm3709, %v5948, 0.0
  %v6123 = vadd.f32 %v6121, %v6122
  %v6124 = vsel %vm3709, %v5949, 0.0
  %v6125 = vadd.f32 %v6123, %v6124
  %v6126 = vsel %vm3709, %v5950, 0.0
  %v6127 = vadd.f32 %v6125, %v6126
  %v6128 = vsel %vm3709, %v5951, 0.0
  %v6129 = vadd.f32 %v6127, %v6128
  %v6130 = vsel %vm3709, %v5952, 0.0
  %v6131 = vadd.f32 %v6129, %v6130
  %v6132 = vsel %vm3709, %v5953, 0.0
  %v6133 = vadd.f32 %v6131, %v6132
  %v6134 = vsel %vm3709, %v5954, 0.0
  %v6135 = vadd.f32 %v6133, %v6134
  %v6136 = vsel %vm3709, %v5955, 0.0
  %v6137 = vadd.f32 %v6135, %v6136
  %v6138 = vsel %vm3709, %v5956, 0.0
  %v6139 = vadd.f32 %v6137, %v6138
  %v6140 = vsel %vm3709, %v5957, 0.0
  %v6141 = vadd.f32 %v6139, %v6140
  %v6142 = vsel %vm3709, %v5958, 0.0
  %v6143 = vadd.f32 %v6141, %v6142
  %v6144 = vsel %vm3709, %v5959, 0.0
  %v6145 = vadd.f32 %v6143, %v6144
  %v6146 = vsel %vm3709, %v5960, 0.0
  %v6147 = vadd.f32 %v6145, %v6146
  %v6148 = vsel %vm3709, %v5961, 0.0
  %v6149 = vadd.f32 %v6147, %v6148
  %v6150 = vsel %vm3709, %v5962, 0.0
  %v6151 = vadd.f32 %v6149, %v6150
  %v6152 = vsel %vm3709, %v5963, 0.0
  %v6153 = vadd.f32 %v6151, %v6152
  %v6154 = vsel %vm3709, %v5964, 0.0
  %v6155 = vadd.f32 %v6153, %v6154
  %v6156 = vsel %vm3709, %v5965, 0.0
  %v6157 = vadd.f32 %v6155, %v6156
  %v6158 = vsel %vm3709, %v5966, 0.0
  %v6159 = vadd.f32 %v6157, %v6158
  %v6160 = vsel %vm3709, %v5967, 0.0
  %v6161 = vadd.f32 %v6159, %v6160
  %v6162 = vsel %vm3709, %v5968, 0.0
  %v6163 = vadd.f32 %v6161, %v6162
  %v6164 = vsel %vm3709, %v5969, 0.0
  %v6165 = vadd.f32 %v6163, %v6164
  %v6166 = vsel %vm3709, %v5970, 0.0
  %v6167 = vadd.f32 %v6165, %v6166
  %v6168 = vsel %vm3709, %v5971, 0.0
  %v6169 = vadd.f32 %v6167, %v6168
  %v6170 = vsel %vm3709, %v5972, 0.0
  %v6171 = vadd.f32 %v6169, %v6170
  %v6172 = vsel %vm3709, %v5973, 0.0
  %v6173 = vadd.f32 %v6171, %v6172
  %v6174 = vsel %vm3709, %v5974, 0.0
  %v6175 = vadd.f32 %v6173, %v6174
  %v6176 = vsel %vm3709, %v5975, 0.0
  %v6177 = vadd.f32 %v6175, %v6176
  %v6178 = vsel %vm3709, %v5976, 0.0
  %v6179 = vadd.f32 %v6177, %v6178
  %v6180 = vsel %vm3709, %v5977, 0.0
  %v6181 = vadd.f32 %v6179, %v6180
  %v6182 = vsel %vm3709, %v5978, 0.0
  %v6183 = vadd.f32 %v6181, %v6182
  %v6184 = vsel %vm3709, %v5979, 0.0
  %v6185 = vadd.f32 %v6183, %v6184
  %v6186 = vsel %vm3709, %v5980, 0.0
  %v6187 = vadd.f32 %v6185, %v6186
  %v6188 = vsel %vm3709, %v5981, 0.0
  %v6189 = vadd.f32 %v6187, %v6188
  %v6190 = vsel %vm3709, %v5982, 0.0
  %v6191 = vadd.f32 %v6189, %v6190
  %v6192 = vsel %vm3709, %v5983, 0.0
  %v6193 = vadd.f32 %v6191, %v6192
  %v6194 = vsel %vm3709, %v5984, 0.0
  %v6195 = vadd.f32 %v6193, %v6194
  %v6196 = vsel %vm3709, %v5985, 0.0
  %v6197 = vadd.f32 %v6195, %v6196
  %v6198 = vsel %vm3709, %v5986, 0.0
  %v6199 = vadd.f32 %v6197, %v6198
  %v6200 = vsel %vm3709, %v5987, 0.0
  %v6201 = vadd.f32 %v6199, %v6200
  %v6202 = vsel %vm3709, %v5988, 0.0
  %v6203 = vadd.f32 %v6201, %v6202
  %v6204 = vsel %vm3709, %v5989, 0.0
  %v6205 = vadd.f32 %v6203, %v6204
  %v6206 = vsel %vm3709, %v5990, 0.0
  %v6207 = vadd.f32 %v6205, %v6206
  %v6208 = vsel %vm3709, %v5991, 0.0
  %v6209 = vadd.f32 %v6207, %v6208
  %v6210 = vsel %vm3709, %v5992, 0.0
  %v6211 = vadd.f32 %v6209, %v6210
  %v6212 = vsel %vm3709, %v5993, 0.0
  %v6213 = vadd.f32 %v6211, %v6212
  %v6214 = vsel %vm3709, %v5994, 0.0
  %v6215 = vadd.f32 %v6213, %v6214
  %v6216 = vsel %vm3709, %v5995, 0.0
  %v6217 = vadd.f32 %v6215, %v6216
  %v6218 = vsel %vm3709, %v5996, 0.0
  %v6219 = vadd.f32 %v6217, %v6218
  %v6220 = vsel %vm3709, %v5997, 0.0
  %v6221 = vadd.f32 %v6219, %v6220
  %v6222 = vsel %vm3709, %v5998, 0.0
  %v6223 = vadd.f32 %v6221, %v6222
  %v6224 = vsel %vm3709, %v5999, 0.0
  %v6225 = vadd.f32 %v6223, %v6224
  %v6226 = vsel %vm3709, %v6000, 0.0
  %v6227 = vadd.f32 %v6225, %v6226
  %v6228 = vsel %vm3709, %v6001, 0.0
  %v6229 = vadd.f32 %v6227, %v6228
  %v6230 = vsel %vm3709, %v6002, 0.0
  %v6231 = vadd.f32 %v6229, %v6230
  %v6232 = vsel %vm3709, %v6003, 0.0
  %v6233 = vadd.f32 %v6231, %v6232
  %v6234 = vsel %vm3709, %v6004, 0.0
  %v6235 = vadd.f32 %v6233, %v6234
  %v6236 = vsel %vm3709, %v6005, 0.0
  %v6237 = vadd.f32 %v6235, %v6236
  %vm6238 = vcmask 30720
  %v6239 = vsel %vm6238, %v6006, 0.0
  %v6240 = vadd.f32 %v6237, %v6239
  %v6241 = vrot.slane %v6240, 4
  %v6242 = vadd.f32 %v6240, %v6241
  %v6243 = vrot.slane %v6242, 2
  %v6244 = vadd.f32 %v6242, %v6243
  %v6245 = vrot.slane %v6244, 1
  %v6246 = vadd.f32 %v6244, %v6245
  %v6247 = vmul.f32 %v6246, 0.0017301039
  %v6248 = vsub.f32 %v4719, %v6247
  %v6249 = vsub.f32 %v4722, %v6247
  %v6250 = vsub.f32 %v4727, %v6247
  %v6251 = vsub.f32 %v4730, %v6247
  %v6252 = vsub.f32 %v4735, %v6247
  %v6253 = vsub.f32 %v4738, %v6247
  %v6254 = vsub.f32 %v4743, %v6247
  %v6255 = vsub.f32 %v4746, %v6247
  %v6256 = vsub.f32 %v4751, %v6247
  %v6257 = vsub.f32 %v4754, %v6247
  %v6258 = vsub.f32 %v4759, %v6247
  %v6259 = vsub.f32 %v4762, %v6247
  %v6260 = vsub.f32 %v4767, %v6247
  %v6261 = vsub.f32 %v4770, %v6247
  %v6262 = vsub.f32 %v4775, %v6247
  %v6263 = vsub.f32 %v4778, %v6247
  %v6264 = vsub.f32 %v4783, %v6247
  %v6265 = vsub.f32 %v4786, %v6247
  %v6266 = vsub.f32 %v4791, %v6247
  %v6267 = vsub.f32 %v4794, %v6247
  %v6268 = vsub.f32 %v4799, %v6247
  %v6269 = vsub.f32 %v4802, %v6247
  %v6270 = vsub.f32 %v4807, %v6247
  %v6271 = vsub.f32 %v4810, %v6247
  %v6272 = vsub.f32 %v4815, %v6247
  %v6273 = vsub.f32 %v4818, %v6247
  %v6274 = vsub.f32 %v4823, %v6247
  %v6275 = vsub.f32 %v4826, %v6247
  %v6276 = vsub.f32 %v4831, %v6247
  %v6277 = vsub.f32 %v4834, %v6247
  %v6278 = vsub.f32 %v4839, %v6247
  %v6279 = vsub.f32 %v4842, %v6247
  %v6280 = vsub.f32 %v4847, %v6247
  %v6281 = vsub.f32 %v4850, %v6247
  %v6282 = vsub.f32 %v4855, %v6247
  %v6283 = vsub.f32 %v4858, %v6247
  %v6284 = vsub.f32 %v4863, %v6247
  %v6285 = vsub.f32 %v4866, %v6247
  %v6286 = vsub.f32 %v4871, %v6247
  %v6287 = vsub.f32 %v4874, %v6247
  %v6288 = vsub.f32 %v4879, %v6247
  %v6289 = vsub.f32 %v4882, %v6247
  %v6290 = vsub.f32 %v4887, %v6247
  %v6291 = vsub.f32 %v4890, %v6247
  %v6292 = vsub.f32 %v4895, %v6247
  %v6293 = vsub.f32 %v4898, %v6247
  %v6294 = vsub.f32 %v4903, %v6247
  %v6295 = vsub.f32 %v4906, %v6247
  %v6296 = vsub.f32 %v4911, %v6247
  %v6297 = vsub.f32 %v4914, %v6247
  %v6298 = vsub.f32 %v4919, %v6247
  %v6299 = vsub.f32 %v4922, %v6247
  %v6300 = vsub.f32 %v4927, %v6247
  %v6301 = vsub.f32 %v4930, %v6247
  %v6302 = vsub.f32 %v4935, %v6247
  %v6303 = vsub.f32 %v4938, %v6247
  %v6304 = vsub.f32 %v4943, %v6247
  %v6305 = vsub.f32 %v4946, %v6247
  %v6306 = vsub.f32 %v4951, %v6247
  %v6307 = vsub.f32 %v4954, %v6247
  %v6308 = vsub.f32 %v4959, %v6247
  %v6309 = vsub.f32 %v4962, %v6247
  %v6310 = vsub.f32 %v4967, %v6247
  %v6311 = vsub.f32 %v4970, %v6247
  %v6312 = vsub.f32 %v4975, %v6247
  %v6313 = vsub.f32 %v4978, %v6247
  %v6314 = vsub.f32 %v4983, %v6247
  %v6315 = vsub.f32 %v4986, %v6247
  %v6316 = vsub.f32 %v4991, %v6247
  %v6317 = vsub.f32 %v4994, %v6247
  %v6318 = vsub.f32 %v4999, %v6247
  %v6319 = vsub.f32 %v5002, %v6247
  %v6320 = vsub.f32 %v5007, %v6247
  %v6321 = vsub.f32 %v5010, %v6247
  %v6322 = vsub.f32 %v5015, %v6247
  %v6323 = vsub.f32 %v5018, %v6247
  %v6324 = vsub.f32 %v5023, %v6247
  %v6325 = vsub.f32 %v5026, %v6247
  %v6326 = vsub.f32 %v5031, %v6247
  %v6327 = vsub.f32 %v5034, %v6247
  %v6328 = vsub.f32 %v5039, %v6247
  %v6329 = vsub.f32 %v5042, %v6247
  %v6330 = vsub.f32 %v5047, %v6247
  %v6331 = vsub.f32 %v5050, %v6247
  %v6332 = vsub.f32 %v5055, %v6247
  %v6333 = vsub.f32 %v5058, %v6247
  %v6334 = vsub.f32 %v5063, %v6247
  %v6335 = vsub.f32 %v5066, %v6247
  %v6336 = vsub.f32 %v5071, %v6247
  %v6337 = vsub.f32 %v5074, %v6247
  %v6338 = vsub.f32 %v5079, %v6247
  %v6339 = vsub.f32 %v5082, %v6247
  %v6340 = vsub.f32 %v5087, %v6247
  %v6341 = vsub.f32 %v5090, %v6247
  %v6342 = vsub.f32 %v5095, %v6247
  %v6343 = vsub.f32 %v5098, %v6247
  %v6344 = vsub.f32 %v5103, %v6247
  %v6345 = vsub.f32 %v5106, %v6247
  %v6346 = vsub.f32 %v5111, %v6247
  %v6347 = vsub.f32 %v5114, %v6247
  %v6348 = vsub.f32 %v5119, %v6247
  %v6349 = vsub.f32 %v5122, %v6247
  %v6350 = vsub.f32 %v5127, %v6247
  %v6351 = vsub.f32 %v5130, %v6247
  %v6352 = vsub.f32 %v5135, %v6247
  %v6353 = vsub.f32 %v5138, %v6247
  %v6354 = vsub.f32 %v5143, %v6247
  %v6355 = vsub.f32 %v5146, %v6247
  %v6356 = vsub.f32 %v5151, %v6247
  %v6357 = vsub.f32 %v5154, %v6247
  %v6358 = vsub.f32 %v5159, %v6247
  %v6359 = vsub.f32 %v5162, %v6247
  %v6360 = vsub.f32 %v5167, %v6247
  %v6361 = vsub.f32 %v5170, %v6247
  %v6362 = vsub.f32 %v5175, %v6247
  %v6363 = vsub.f32 %v5178, %v6247
  %v6364 = vsub.f32 %v5183, %v6247
  %v6365 = vmul.f32 %v6248, %v5308
  %v6366 = vmul.f32 %v6249, %v5313
  %v6367 = vmul.f32 %v6250, %v5318
  %v6368 = vmul.f32 %v6251, %v5323
  %v6369 = vmul.f32 %v6252, %v5328
  %v6370 = vmul.f32 %v6253, %v5333
  %v6371 = vmul.f32 %v6254, %v5338
  %v6372 = vmul.f32 %v6255, %v5343
  %v6373 = vmul.f32 %v6256, %v5348
  %v6374 = vmul.f32 %v6257, %v5353
  %v6375 = vmul.f32 %v6258, %v5358
  %v6376 = vmul.f32 %v6259, %v5363
  %v6377 = vmul.f32 %v6260, %v5368
  %v6378 = vmul.f32 %v6261, %v5373
  %v6379 = vmul.f32 %v6262, %v5378
  %v6380 = vmul.f32 %v6263, %v5383
  %v6381 = vmul.f32 %v6264, %v5388
  %v6382 = vmul.f32 %v6265, %v5393
  %v6383 = vmul.f32 %v6266, %v5398
  %v6384 = vmul.f32 %v6267, %v5403
  %v6385 = vmul.f32 %v6268, %v5408
  %v6386 = vmul.f32 %v6269, %v5413
  %v6387 = vmul.f32 %v6270, %v5418
  %v6388 = vmul.f32 %v6271, %v5423
  %v6389 = vmul.f32 %v6272, %v5428
  %v6390 = vmul.f32 %v6273, %v5433
  %v6391 = vmul.f32 %v6274, %v5438
  %v6392 = vmul.f32 %v6275, %v5443
  %v6393 = vmul.f32 %v6276, %v5448
  %v6394 = vmul.f32 %v6277, %v5453
  %v6395 = vmul.f32 %v6278, %v5458
  %v6396 = vmul.f32 %v6279, %v5463
  %v6397 = vmul.f32 %v6280, %v5468
  %v6398 = vmul.f32 %v6281, %v5473
  %v6399 = vmul.f32 %v6282, %v5478
  %v6400 = vmul.f32 %v6283, %v5483
  %v6401 = vmul.f32 %v6284, %v5488
  %v6402 = vmul.f32 %v6285, %v5493
  %v6403 = vmul.f32 %v6286, %v5498
  %v6404 = vmul.f32 %v6287, %v5503
  %v6405 = vmul.f32 %v6288, %v5508
  %v6406 = vmul.f32 %v6289, %v5513
  %v6407 = vmul.f32 %v6290, %v5518
  %v6408 = vmul.f32 %v6291, %v5523
  %v6409 = vmul.f32 %v6292, %v5528
  %v6410 = vmul.f32 %v6293, %v5533
  %v6411 = vmul.f32 %v6294, %v5538
  %v6412 = vmul.f32 %v6295, %v5543
  %v6413 = vmul.f32 %v6296, %v5548
  %v6414 = vmul.f32 %v6297, %v5553
  %v6415 = vmul.f32 %v6298, %v5558
  %v6416 = vmul.f32 %v6299, %v5563
  %v6417 = vmul.f32 %v6300, %v5568
  %v6418 = vmul.f32 %v6301, %v5573
  %v6419 = vmul.f32 %v6302, %v5578
  %v6420 = vmul.f32 %v6303, %v5583
  %v6421 = vmul.f32 %v6304, %v5588
  %v6422 = vmul.f32 %v6305, %v5593
  %v6423 = vmul.f32 %v6306, %v5598
  %v6424 = vmul.f32 %v6307, %v5603
  %v6425 = vmul.f32 %v6308, %v5608
  %v6426 = vmul.f32 %v6309, %v5613
  %v6427 = vmul.f32 %v6310, %v5618
  %v6428 = vmul.f32 %v6311, %v5623
  %v6429 = vmul.f32 %v6312, %v5628
  %v6430 = vmul.f32 %v6313, %v5633
  %v6431 = vmul.f32 %v6314, %v5638
  %v6432 = vmul.f32 %v6315, %v5643
  %v6433 = vmul.f32 %v6316, %v5648
  %v6434 = vmul.f32 %v6317, %v5653
  %v6435 = vmul.f32 %v6318, %v5658
  %v6436 = vmul.f32 %v6319, %v5663
  %v6437 = vmul.f32 %v6320, %v5668
  %v6438 = vmul.f32 %v6321, %v5673
  %v6439 = vmul.f32 %v6322, %v5678
  %v6440 = vmul.f32 %v6323, %v5683
  %v6441 = vmul.f32 %v6324, %v5688
  %v6442 = vmul.f32 %v6325, %v5693
  %v6443 = vmul.f32 %v6326, %v5698
  %v6444 = vmul.f32 %v6327, %v5703
  %v6445 = vmul.f32 %v6328, %v5708
  %v6446 = vmul.f32 %v6329, %v5713
  %v6447 = vmul.f32 %v6330, %v5718
  %v6448 = vmul.f32 %v6331, %v5723
  %v6449 = vmul.f32 %v6332, %v5728
  %v6450 = vmul.f32 %v6333, %v5733
  %v6451 = vmul.f32 %v6334, %v5738
  %v6452 = vmul.f32 %v6335, %v5743
  %v6453 = vmul.f32 %v6336, %v5748
  %v6454 = vmul.f32 %v6337, %v5753
  %v6455 = vmul.f32 %v6338, %v5758
  %v6456 = vmul.f32 %v6339, %v5763
  %v6457 = vmul.f32 %v6340, %v5768
  %v6458 = vmul.f32 %v6341, %v5773
  %v6459 = vmul.f32 %v6342, %v5778
  %v6460 = vmul.f32 %v6343, %v5783
  %v6461 = vmul.f32 %v6344, %v5788
  %v6462 = vmul.f32 %v6345, %v5793
  %v6463 = vmul.f32 %v6346, %v5798
  %v6464 = vmul.f32 %v6347, %v5803
  %v6465 = vmul.f32 %v6348, %v5808
  %v6466 = vmul.f32 %v6349, %v5813
  %v6467 = vmul.f32 %v6350, %v5818
  %v6468 = vmul.f32 %v6351, %v5823
  %v6469 = vmul.f32 %v6352, %v5828
  %v6470 = vmul.f32 %v6353, %v5833
  %v6471 = vmul.f32 %v6354, %v5838
  %v6472 = vmul.f32 %v6355, %v5843
  %v6473 = vmul.f32 %v6356, %v5848
  %v6474 = vmul.f32 %v6357, %v5853
  %v6475 = vmul.f32 %v6358, %v5858
  %v6476 = vmul.f32 %v6359, %v5863
  %v6477 = vmul.f32 %v6360, %v5868
  %v6478 = vmul.f32 %v6361, %v5873
  %v6479 = vmul.f32 %v6362, %v5878
  %v6480 = vmul.f32 %v6363, %v5883
  %v6481 = vmul.f32 %v6364, %v5888
  %v6482 = vmul.f32 %v6365, %v6365
  %v6483 = vmul.f32 %v6366, %v6366
  %v6484 = vmul.f32 %v6367, %v6367
  %v6485 = vmul.f32 %v6368, %v6368
  %v6486 = vmul.f32 %v6369, %v6369
  %v6487 = vmul.f32 %v6370, %v6370
  %v6488 = vmul.f32 %v6371, %v6371
  %v6489 = vmul.f32 %v6372, %v6372
  %v6490 = vmul.f32 %v6373, %v6373
  %v6491 = vmul.f32 %v6374, %v6374
  %v6492 = vmul.f32 %v6375, %v6375
  %v6493 = vmul.f32 %v6376, %v6376
  %v6494 = vmul.f32 %v6377, %v6377
  %v6495 = vmul.f32 %v6378, %v6378
  %v6496 = vmul.f32 %v6379, %v6379
  %v6497 = vmul.f32 %v6380, %v6380
  %v6498 = vmul.f32 %v6381, %v6381
  %v6499 = vmul.f32 %v6382, %v6382
  %v6500 = vmul.f32 %v6383, %v6383
  %v6501 = vmul.f32 %v6384, %v6384
  %v6502 = vmul.f32 %v6385, %v6385
  %v6503 = vmul.f32 %v6386, %v6386
  %v6504 = vmul.f32 %v6387, %v6387
  %v6505 = vmul.f32 %v6388, %v6388
  %v6506 = vmul.f32 %v6389, %v6389
  %v6507 = vmul.f32 %v6390, %v6390
  %v6508 = vmul.f32 %v6391, %v6391
  %v6509 = vmul.f32 %v6392, %v6392
  %v6510 = vmul.f32 %v6393, %v6393
  %v6511 = vmul.f32 %v6394, %v6394
  %v6512 = vmul.f32 %v6395, %v6395
  %v6513 = vmul.f32 %v6396, %v6396
  %v6514 = vmul.f32 %v6397, %v6397
  %v6515 = vmul.f32 %v6398, %v6398
  %v6516 = vmul.f32 %v6399, %v6399
  %v6517 = vmul.f32 %v6400, %v6400
  %v6518 = vmul.f32 %v6401, %v6401
  %v6519 = vmul.f32 %v6402, %v6402
  %v6520 = vmul.f32 %v6403, %v6403
  %v6521 = vmul.f32 %v6404, %v6404
  %v6522 = vmul.f32 %v6405, %v6405
  %v6523 = vmul.f32 %v6406, %v6406
  %v6524 = vmul.f32 %v6407, %v6407
  %v6525 = vmul.f32 %v6408, %v6408
  %v6526 = vmul.f32 %v6409, %v6409
  %v6527 = vmul.f32 %v6410, %v6410
  %v6528 = vmul.f32 %v6411, %v6411
  %v6529 = vmul.f32 %v6412, %v6412
  %v6530 = vmul.f32 %v6413, %v6413
  %v6531 = vmul.f32 %v6414, %v6414
  %v6532 = vmul.f32 %v6415, %v6415
  %v6533 = vmul.f32 %v6416, %v6416
  %v6534 = vmul.f32 %v6417, %v6417
  %v6535 = vmul.f32 %v6418, %v6418
  %v6536 = vmul.f32 %v6419, %v6419
  %v6537 = vmul.f32 %v6420, %v6420
  %v6538 = vmul.f32 %v6421, %v6421
  %v6539 = vmul.f32 %v6422, %v6422
  %v6540 = vmul.f32 %v6423, %v6423
  %v6541 = vmul.f32 %v6424, %v6424
  %v6542 = vmul.f32 %v6425, %v6425
  %v6543 = vmul.f32 %v6426, %v6426
  %v6544 = vmul.f32 %v6427, %v6427
  %v6545 = vmul.f32 %v6428, %v6428
  %v6546 = vmul.f32 %v6429, %v6429
  %v6547 = vmul.f32 %v6430, %v6430
  %v6548 = vmul.f32 %v6431, %v6431
  %v6549 = vmul.f32 %v6432, %v6432
  %v6550 = vmul.f32 %v6433, %v6433
  %v6551 = vmul.f32 %v6434, %v6434
  %v6552 = vmul.f32 %v6435, %v6435
  %v6553 = vmul.f32 %v6436, %v6436
  %v6554 = vmul.f32 %v6437, %v6437
  %v6555 = vmul.f32 %v6438, %v6438
  %v6556 = vmul.f32 %v6439, %v6439
  %v6557 = vmul.f32 %v6440, %v6440
  %v6558 = vmul.f32 %v6441, %v6441
  %v6559 = vmul.f32 %v6442, %v6442
  %v6560 = vmul.f32 %v6443, %v6443
  %v6561 = vmul.f32 %v6444, %v6444
  %v6562 = vmul.f32 %v6445, %v6445
  %v6563 = vmul.f32 %v6446, %v6446
  %v6564 = vmul.f32 %v6447, %v6447
  %v6565 = vmul.f32 %v6448, %v6448
  %v6566 = vmul.f32 %v6449, %v6449
  %v6567 = vmul.f32 %v6450, %v6450
  %v6568 = vmul.f32 %v6451, %v6451
  %v6569 = vmul.f32 %v6452, %v6452
  %v6570 = vmul.f32 %v6453, %v6453
  %v6571 = vmul.f32 %v6454, %v6454
  %v6572 = vmul.f32 %v6455, %v6455
  %v6573 = vmul.f32 %v6456, %v6456
  %v6574 = vmul.f32 %v6457, %v6457
  %v6575 = vmul.f32 %v6458, %v6458
  %v6576 = vmul.f32 %v6459, %v6459
  %v6577 = vmul.f32 %v6460, %v6460
  %v6578 = vmul.f32 %v6461, %v6461
  %v6579 = vmul.f32 %v6462, %v6462
  %v6580 = vmul.f32 %v6463, %v6463
  %v6581 = vmul.f32 %v6464, %v6464
  %v6582 = vmul.f32 %v6465, %v6465
  %v6583 = vmul.f32 %v6466, %v6466
  %v6584 = vmul.f32 %v6467, %v6467
  %v6585 = vmul.f32 %v6468, %v6468
  %v6586 = vmul.f32 %v6469, %v6469
  %v6587 = vmul.f32 %v6470, %v6470
  %v6588 = vmul.f32 %v6471, %v6471
  %v6589 = vmul.f32 %v6472, %v6472
  %v6590 = vmul.f32 %v6473, %v6473
  %v6591 = vmul.f32 %v6474, %v6474
  %v6592 = vmul.f32 %v6475, %v6475
  %v6593 = vmul.f32 %v6476, %v6476
  %v6594 = vmul.f32 %v6477, %v6477
  %v6595 = vmul.f32 %v6478, %v6478
  %v6596 = vmul.f32 %v6479, %v6479
  %v6597 = vmul.f32 %v6480, %v6480
  %v6598 = vmul.f32 %v6481, %v6481
  %v6599 = vsel %vm3709, %v6482, 0.0
  %v6600 = vsel %vm3709, %v6483, 0.0
  %v6601 = vadd.f32 %v6599, %v6600
  %v6602 = vsel %vm3709, %v6484, 0.0
  %v6603 = vadd.f32 %v6601, %v6602
  %v6604 = vsel %vm3709, %v6485, 0.0
  %v6605 = vadd.f32 %v6603, %v6604
  %v6606 = vsel %vm3709, %v6486, 0.0
  %v6607 = vadd.f32 %v6605, %v6606
  %v6608 = vsel %vm3709, %v6487, 0.0
  %v6609 = vadd.f32 %v6607, %v6608
  %v6610 = vsel %vm3709, %v6488, 0.0
  %v6611 = vadd.f32 %v6609, %v6610
  %v6612 = vsel %vm3709, %v6489, 0.0
  %v6613 = vadd.f32 %v6611, %v6612
  %v6614 = vsel %vm3709, %v6490, 0.0
  %v6615 = vadd.f32 %v6613, %v6614
  %v6616 = vsel %vm3709, %v6491, 0.0
  %v6617 = vadd.f32 %v6615, %v6616
  %v6618 = vsel %vm3709, %v6492, 0.0
  %v6619 = vadd.f32 %v6617, %v6618
  %v6620 = vsel %vm3709, %v6493, 0.0
  %v6621 = vadd.f32 %v6619, %v6620
  %v6622 = vsel %vm3709, %v6494, 0.0
  %v6623 = vadd.f32 %v6621, %v6622
  %v6624 = vsel %vm3709, %v6495, 0.0
  %v6625 = vadd.f32 %v6623, %v6624
  %v6626 = vsel %vm3709, %v6496, 0.0
  %v6627 = vadd.f32 %v6625, %v6626
  %v6628 = vsel %vm3709, %v6497, 0.0
  %v6629 = vadd.f32 %v6627, %v6628
  %v6630 = vsel %vm3709, %v6498, 0.0
  %v6631 = vadd.f32 %v6629, %v6630
  %v6632 = vsel %vm3709, %v6499, 0.0
  %v6633 = vadd.f32 %v6631, %v6632
  %v6634 = vsel %vm3709, %v6500, 0.0
  %v6635 = vadd.f32 %v6633, %v6634
  %v6636 = vsel %vm3709, %v6501, 0.0
  %v6637 = vadd.f32 %v6635, %v6636
  %v6638 = vsel %vm3709, %v6502, 0.0
  %v6639 = vadd.f32 %v6637, %v6638
  %v6640 = vsel %vm3709, %v6503, 0.0
  %v6641 = vadd.f32 %v6639, %v6640
  %v6642 = vsel %vm3709, %v6504, 0.0
  %v6643 = vadd.f32 %v6641, %v6642
  %v6644 = vsel %vm3709, %v6505, 0.0
  %v6645 = vadd.f32 %v6643, %v6644
  %v6646 = vsel %vm3709, %v6506, 0.0
  %v6647 = vadd.f32 %v6645, %v6646
  %v6648 = vsel %vm3709, %v6507, 0.0
  %v6649 = vadd.f32 %v6647, %v6648
  %v6650 = vsel %vm3709, %v6508, 0.0
  %v6651 = vadd.f32 %v6649, %v6650
  %v6652 = vsel %vm3709, %v6509, 0.0
  %v6653 = vadd.f32 %v6651, %v6652
  %v6654 = vsel %vm3709, %v6510, 0.0
  %v6655 = vadd.f32 %v6653, %v6654
  %v6656 = vsel %vm3709, %v6511, 0.0
  %v6657 = vadd.f32 %v6655, %v6656
  %v6658 = vsel %vm3709, %v6512, 0.0
  %v6659 = vadd.f32 %v6657, %v6658
  %v6660 = vsel %vm3709, %v6513, 0.0
  %v6661 = vadd.f32 %v6659, %v6660
  %v6662 = vsel %vm3709, %v6514, 0.0
  %v6663 = vadd.f32 %v6661, %v6662
  %v6664 = vsel %vm3709, %v6515, 0.0
  %v6665 = vadd.f32 %v6663, %v6664
  %v6666 = vsel %vm3709, %v6516, 0.0
  %v6667 = vadd.f32 %v6665, %v6666
  %v6668 = vsel %vm3709, %v6517, 0.0
  %v6669 = vadd.f32 %v6667, %v6668
  %v6670 = vsel %vm3709, %v6518, 0.0
  %v6671 = vadd.f32 %v6669, %v6670
  %v6672 = vsel %vm3709, %v6519, 0.0
  %v6673 = vadd.f32 %v6671, %v6672
  %v6674 = vsel %vm3709, %v6520, 0.0
  %v6675 = vadd.f32 %v6673, %v6674
  %v6676 = vsel %vm3709, %v6521, 0.0
  %v6677 = vadd.f32 %v6675, %v6676
  %v6678 = vsel %vm3709, %v6522, 0.0
  %v6679 = vadd.f32 %v6677, %v6678
  %v6680 = vsel %vm3709, %v6523, 0.0
  %v6681 = vadd.f32 %v6679, %v6680
  %v6682 = vsel %vm3709, %v6524, 0.0
  %v6683 = vadd.f32 %v6681, %v6682
  %v6684 = vsel %vm3709, %v6525, 0.0
  %v6685 = vadd.f32 %v6683, %v6684
  %v6686 = vsel %vm3709, %v6526, 0.0
  %v6687 = vadd.f32 %v6685, %v6686
  %v6688 = vsel %vm3709, %v6527, 0.0
  %v6689 = vadd.f32 %v6687, %v6688
  %v6690 = vsel %vm3709, %v6528, 0.0
  %v6691 = vadd.f32 %v6689, %v6690
  %v6692 = vsel %vm3709, %v6529, 0.0
  %v6693 = vadd.f32 %v6691, %v6692
  %v6694 = vsel %vm3709, %v6530, 0.0
  %v6695 = vadd.f32 %v6693, %v6694
  %v6696 = vsel %vm3709, %v6531, 0.0
  %v6697 = vadd.f32 %v6695, %v6696
  %v6698 = vsel %vm3709, %v6532, 0.0
  %v6699 = vadd.f32 %v6697, %v6698
  %v6700 = vsel %vm3709, %v6533, 0.0
  %v6701 = vadd.f32 %v6699, %v6700
  %v6702 = vsel %vm3709, %v6534, 0.0
  %v6703 = vadd.f32 %v6701, %v6702
  %v6704 = vsel %vm3709, %v6535, 0.0
  %v6705 = vadd.f32 %v6703, %v6704
  %v6706 = vsel %vm3709, %v6536, 0.0
  %v6707 = vadd.f32 %v6705, %v6706
  %v6708 = vsel %vm3709, %v6537, 0.0
  %v6709 = vadd.f32 %v6707, %v6708
  %v6710 = vsel %vm3709, %v6538, 0.0
  %v6711 = vadd.f32 %v6709, %v6710
  %v6712 = vsel %vm3709, %v6539, 0.0
  %v6713 = vadd.f32 %v6711, %v6712
  %v6714 = vsel %vm3709, %v6540, 0.0
  %v6715 = vadd.f32 %v6713, %v6714
  %v6716 = vsel %vm3709, %v6541, 0.0
  %v6717 = vadd.f32 %v6715, %v6716
  %v6718 = vsel %vm3709, %v6542, 0.0
  %v6719 = vadd.f32 %v6717, %v6718
  %v6720 = vsel %vm3709, %v6543, 0.0
  %v6721 = vadd.f32 %v6719, %v6720
  %v6722 = vsel %vm3709, %v6544, 0.0
  %v6723 = vadd.f32 %v6721, %v6722
  %v6724 = vsel %vm3709, %v6545, 0.0
  %v6725 = vadd.f32 %v6723, %v6724
  %v6726 = vsel %vm3709, %v6546, 0.0
  %v6727 = vadd.f32 %v6725, %v6726
  %v6728 = vsel %vm3709, %v6547, 0.0
  %v6729 = vadd.f32 %v6727, %v6728
  %v6730 = vsel %vm3709, %v6548, 0.0
  %v6731 = vadd.f32 %v6729, %v6730
  %v6732 = vsel %vm3709, %v6549, 0.0
  %v6733 = vadd.f32 %v6731, %v6732
  %v6734 = vsel %vm3709, %v6550, 0.0
  %v6735 = vadd.f32 %v6733, %v6734
  %v6736 = vsel %vm3709, %v6551, 0.0
  %v6737 = vadd.f32 %v6735, %v6736
  %v6738 = vsel %vm3709, %v6552, 0.0
  %v6739 = vadd.f32 %v6737, %v6738
  %v6740 = vsel %vm3709, %v6553, 0.0
  %v6741 = vadd.f32 %v6739, %v6740
  %v6742 = vsel %vm3709, %v6554, 0.0
  %v6743 = vadd.f32 %v6741, %v6742
  %v6744 = vsel %vm3709, %v6555, 0.0
  %v6745 = vadd.f32 %v6743, %v6744
  %v6746 = vsel %vm3709, %v6556, 0.0
  %v6747 = vadd.f32 %v6745, %v6746
  %v6748 = vsel %vm3709, %v6557, 0.0
  %v6749 = vadd.f32 %v6747, %v6748
  %v6750 = vsel %vm3709, %v6558, 0.0
  %v6751 = vadd.f32 %v6749, %v6750
  %v6752 = vsel %vm3709, %v6559, 0.0
  %v6753 = vadd.f32 %v6751, %v6752
  %v6754 = vsel %vm3709, %v6560, 0.0
  %v6755 = vadd.f32 %v6753, %v6754
  %v6756 = vsel %vm3709, %v6561, 0.0
  %v6757 = vadd.f32 %v6755, %v6756
  %v6758 = vsel %vm3709, %v6562, 0.0
  %v6759 = vadd.f32 %v6757, %v6758
  %v6760 = vsel %vm3709, %v6563, 0.0
  %v6761 = vadd.f32 %v6759, %v6760
  %v6762 = vsel %vm3709, %v6564, 0.0
  %v6763 = vadd.f32 %v6761, %v6762
  %v6764 = vsel %vm3709, %v6565, 0.0
  %v6765 = vadd.f32 %v6763, %v6764
  %v6766 = vsel %vm3709, %v6566, 0.0
  %v6767 = vadd.f32 %v6765, %v6766
  %v6768 = vsel %vm3709, %v6567, 0.0
  %v6769 = vadd.f32 %v6767, %v6768
  %v6770 = vsel %vm3709, %v6568, 0.0
  %v6771 = vadd.f32 %v6769, %v6770
  %v6772 = vsel %vm3709, %v6569, 0.0
  %v6773 = vadd.f32 %v6771, %v6772
  %v6774 = vsel %vm3709, %v6570, 0.0
  %v6775 = vadd.f32 %v6773, %v6774
  %v6776 = vsel %vm3709, %v6571, 0.0
  %v6777 = vadd.f32 %v6775, %v6776
  %v6778 = vsel %vm3709, %v6572, 0.0
  %v6779 = vadd.f32 %v6777, %v6778
  %v6780 = vsel %vm3709, %v6573, 0.0
  %v6781 = vadd.f32 %v6779, %v6780
  %v6782 = vsel %vm3709, %v6574, 0.0
  %v6783 = vadd.f32 %v6781, %v6782
  %v6784 = vsel %vm3709, %v6575, 0.0
  %v6785 = vadd.f32 %v6783, %v6784
  %v6786 = vsel %vm3709, %v6576, 0.0
  %v6787 = vadd.f32 %v6785, %v6786
  %v6788 = vsel %vm3709, %v6577, 0.0
  %v6789 = vadd.f32 %v6787, %v6788
  %v6790 = vsel %vm3709, %v6578, 0.0
  %v6791 = vadd.f32 %v6789, %v6790
  %v6792 = vsel %vm3709, %v6579, 0.0
  %v6793 = vadd.f32 %v6791, %v6792
  %v6794 = vsel %vm3709, %v6580, 0.0
  %v6795 = vadd.f32 %v6793, %v6794
  %v6796 = vsel %vm3709, %v6581, 0.0
  %v6797 = vadd.f32 %v6795, %v6796
  %v6798 = vsel %vm3709, %v6582, 0.0
  %v6799 = vadd.f32 %v6797, %v6798
  %v6800 = vsel %vm3709, %v6583, 0.0
  %v6801 = vadd.f32 %v6799, %v6800
  %v6802 = vsel %vm3709, %v6584, 0.0
  %v6803 = vadd.f32 %v6801, %v6802
  %v6804 = vsel %vm3709, %v6585, 0.0
  %v6805 = vadd.f32 %v6803, %v6804
  %v6806 = vsel %vm3709, %v6586, 0.0
  %v6807 = vadd.f32 %v6805, %v6806
  %v6808 = vsel %vm3709, %v6587, 0.0
  %v6809 = vadd.f32 %v6807, %v6808
  %v6810 = vsel %vm3709, %v6588, 0.0
  %v6811 = vadd.f32 %v6809, %v6810
  %v6812 = vsel %vm3709, %v6589, 0.0
  %v6813 = vadd.f32 %v6811, %v6812
  %v6814 = vsel %vm3709, %v6590, 0.0
  %v6815 = vadd.f32 %v6813, %v6814
  %v6816 = vsel %vm3709, %v6591, 0.0
  %v6817 = vadd.f32 %v6815, %v6816
  %v6818 = vsel %vm3709, %v6592, 0.0
  %v6819 = vadd.f32 %v6817, %v6818
  %v6820 = vsel %vm3709, %v6593, 0.0
  %v6821 = vadd.f32 %v6819, %v6820
  %v6822 = vsel %vm3709, %v6594, 0.0
  %v6823 = vadd.f32 %v6821, %v6822
  %v6824 = vsel %vm3709, %v6595, 0.0
  %v6825 = vadd.f32 %v6823, %v6824
  %v6826 = vsel %vm3709, %v6596, 0.0
  %v6827 = vadd.f32 %v6825, %v6826
  %v6828 = vsel %vm3709, %v6597, 0.0
  %v6829 = vadd.f32 %v6827, %v6828
  %v6830 = vsel %vm6238, %v6598, 0.0
  %v6831 = vadd.f32 %v6829, %v6830
  %v6832 = vrot.slane %v6831, 4
  %v6833 = vadd.f32 %v6831, %v6832
  %v6834 = vrot.slane %v6833, 2
  %v6835 = vadd.f32 %v6833, %v6834
  %v6836 = vrot.slane %v6835, 1
  %v6837 = vadd.f32 %v6835, %v6836
  %v6838 = vmul.f32 %v6837, 0.0017301039
  %v6839 = vadd.f32 %v6838, 1e-05
  %v6840 = vrsqrt.pop %v6839
  %v6841 = vld [vmem:[%s6] sm:$0x1]
  %v6842 = vmul.f32 %v6841, %v6840
  %v6843 = vld [vmem:[%s7] sm:$0x1]
  %v6844 = vmul.f32 %v6247, %v6842
  %v6845 = vsub.f32 %v6843, %v6844
  %v6847 = vlaneseq
  %v6848 = vshrl.u32 %v6847, 7
  %v6849 = vsub.s32 0, %v6848
  %v6850 = vrot.slane %v6842, %v6849
  %v6852 = vmul.f32 %v4719, %v6850
  %v6853 = vmul.f32 %v4722, %v6850
  %v6854 = vmul.f32 %v4727, %v6850
  %v6855 = vmul.f32 %v4730, %v6850
  %v6856 = vmul.f32 %v4735, %v6850
  %v6857 = vmul.f32 %v4738, %v6850
  %v6858 = vmul.f32 %v4743, %v6850
  %v6859 = vmul.f32 %v4746, %v6850
  %v6860 = vmul.f32 %v4751, %v6850
  %v6861 = vmul.f32 %v4754, %v6850
  %v6862 = vmul.f32 %v4759, %v6850
  %v6863 = vmul.f32 %v4762, %v6850
  %v6864 = vmul.f32 %v4767, %v6850
  %v6865 = vmul.f32 %v4770, %v6850
  %v6866 = vmul.f32 %v4775, %v6850
  %v6867 = vmul.f32 %v4778, %v6850
  %v6868 = vmul.f32 %v4783, %v6850
  %v6869 = vmul.f32 %v4786, %v6850
  %v6870 = vmul.f32 %v4791, %v6850
  %v6871 = vmul.f32 %v4794, %v6850
  %v6872 = vmul.f32 %v4799, %v6850
  %v6873 = vmul.f32 %v4802, %v6850
  %v6874 = vmul.f32 %v4807, %v6850
  %v6875 = vmul.f32 %v4810, %v6850
  %v6876 = vmul.f32 %v4815, %v6850
  %v6877 = vmul.f32 %v4818, %v6850
  %v6878 = vmul.f32 %v4823, %v6850
  %v6879 = vmul.f32 %v4826, %v6850
  %v6880 = vmul.f32 %v4831, %v6850
  %v6881 = vmul.f32 %v4834, %v6850
  %v6882 = vmul.f32 %v4839, %v6850
  %v6883 = vmul.f32 %v4842, %v6850
  %v6884 = vmul.f32 %v4847, %v6850
  %v6885 = vmul.f32 %v4850, %v6850
  %v6886 = vmul.f32 %v4855, %v6850
  %v6887 = vmul.f32 %v4858, %v6850
  %v6888 = vmul.f32 %v4863, %v6850
  %v6889 = vmul.f32 %v4866, %v6850
  %v6890 = vmul.f32 %v4871, %v6850
  %v6891 = vmul.f32 %v4874, %v6850
  %v6892 = vmul.f32 %v4879, %v6850
  %v6893 = vmul.f32 %v4882, %v6850
  %v6894 = vmul.f32 %v4887, %v6850
  %v6895 = vmul.f32 %v4890, %v6850
  %v6896 = vmul.f32 %v4895, %v6850
  %v6897 = vmul.f32 %v4898, %v6850
  %v6898 = vmul.f32 %v4903, %v6850
  %v6899 = vmul.f32 %v4906, %v6850
  %v6900 = vmul.f32 %v4911, %v6850
  %v6901 = vmul.f32 %v4914, %v6850
  %v6902 = vmul.f32 %v4919, %v6850
  %v6903 = vmul.f32 %v4922, %v6850
  %v6904 = vmul.f32 %v4927, %v6850
  %v6905 = vmul.f32 %v4930, %v6850
  %v6906 = vmul.f32 %v4935, %v6850
  %v6907 = vmul.f32 %v4938, %v6850
  %v6908 = vmul.f32 %v4943, %v6850
  %v6909 = vmul.f32 %v4946, %v6850
  %v6910 = vmul.f32 %v4951, %v6850
  %v6911 = vmul.f32 %v4954, %v6850
  %v6912 = vmul.f32 %v4959, %v6850
  %v6913 = vmul.f32 %v4962, %v6850
  %v6914 = vmul.f32 %v4967, %v6850
  %v6915 = vmul.f32 %v4970, %v6850
  %v6916 = vmul.f32 %v4975, %v6850
  %v6917 = vmul.f32 %v4978, %v6850
  %v6918 = vmul.f32 %v4983, %v6850
  %v6919 = vmul.f32 %v4986, %v6850
  %v6920 = vmul.f32 %v4991, %v6850
  %v6921 = vmul.f32 %v4994, %v6850
  %v6922 = vmul.f32 %v4999, %v6850
  %v6923 = vmul.f32 %v5002, %v6850
  %v6924 = vmul.f32 %v5007, %v6850
  %v6925 = vmul.f32 %v5010, %v6850
  %v6926 = vmul.f32 %v5015, %v6850
  %v6927 = vmul.f32 %v5018, %v6850
  %v6928 = vmul.f32 %v5023, %v6850
  %v6929 = vmul.f32 %v5026, %v6850
  %v6930 = vmul.f32 %v5031, %v6850
  %v6931 = vmul.f32 %v5034, %v6850
  %v6932 = vmul.f32 %v5039, %v6850
  %v6933 = vmul.f32 %v5042, %v6850
  %v6934 = vmul.f32 %v5047, %v6850
  %v6935 = vmul.f32 %v5050, %v6850
  %v6936 = vmul.f32 %v5055, %v6850
  %v6937 = vmul.f32 %v5058, %v6850
  %v6938 = vmul.f32 %v5063, %v6850
  %v6939 = vmul.f32 %v5066, %v6850
  %v6940 = vmul.f32 %v5071, %v6850
  %v6941 = vmul.f32 %v5074, %v6850
  %v6942 = vmul.f32 %v5079, %v6850
  %v6943 = vmul.f32 %v5082, %v6850
  %v6944 = vmul.f32 %v5087, %v6850
  %v6945 = vmul.f32 %v5090, %v6850
  %v6946 = vmul.f32 %v5095, %v6850
  %v6947 = vmul.f32 %v5098, %v6850
  %v6948 = vmul.f32 %v5103, %v6850
  %v6949 = vmul.f32 %v5106, %v6850
  %v6950 = vmul.f32 %v5111, %v6850
  %v6951 = vmul.f32 %v5114, %v6850
  %v6952 = vmul.f32 %v5119, %v6850
  %v6953 = vmul.f32 %v5122, %v6850
  %v6954 = vmul.f32 %v5127, %v6850
  %v6955 = vmul.f32 %v5130, %v6850
  %v6956 = vmul.f32 %v5135, %v6850
  %v6957 = vmul.f32 %v5138, %v6850
  %v6958 = vmul.f32 %v5143, %v6850
  %v6959 = vmul.f32 %v5146, %v6850
  %v6960 = vmul.f32 %v5151, %v6850
  %v6961 = vmul.f32 %v5154, %v6850
  %v6962 = vmul.f32 %v5159, %v6850
  %v6963 = vmul.f32 %v5162, %v6850
  %v6964 = vmul.f32 %v5167, %v6850
  %v6965 = vmul.f32 %v5170, %v6850
  %v6966 = vmul.f32 %v5175, %v6850
  %v6967 = vmul.f32 %v5178, %v6850
  %v6968 = vmul.f32 %v5183, %v6850
  %v6970 = vlaneseq
  %v6971 = vshrl.u32 %v6970, 7
  %v6972 = vsub.s32 0, %v6971
  %v6973 = vrot.slane %v6845, %v6972
  %v6975 = vadd.f32 %v6852, %v6973
  %v6976 = vadd.f32 %v6853, %v6973
  %v6977 = vadd.f32 %v6854, %v6973
  %v6978 = vadd.f32 %v6855, %v6973
  %v6979 = vadd.f32 %v6856, %v6973
  %v6980 = vadd.f32 %v6857, %v6973
  %v6981 = vadd.f32 %v6858, %v6973
  %v6982 = vadd.f32 %v6859, %v6973
  %v6983 = vadd.f32 %v6860, %v6973
  %v6984 = vadd.f32 %v6861, %v6973
  %v6985 = vadd.f32 %v6862, %v6973
  %v6986 = vadd.f32 %v6863, %v6973
  %v6987 = vadd.f32 %v6864, %v6973
  %v6988 = vadd.f32 %v6865, %v6973
  %v6989 = vadd.f32 %v6866, %v6973
  %v6990 = vadd.f32 %v6867, %v6973
  %v6991 = vadd.f32 %v6868, %v6973
  %v6992 = vadd.f32 %v6869, %v6973
  %v6993 = vadd.f32 %v6870, %v6973
  %v6994 = vadd.f32 %v6871, %v6973
  %v6995 = vadd.f32 %v6872, %v6973
  %v6996 = vadd.f32 %v6873, %v6973
  %v6997 = vadd.f32 %v6874, %v6973
  %v6998 = vadd.f32 %v6875, %v6973
  %v6999 = vadd.f32 %v6876, %v6973
  %v7000 = vadd.f32 %v6877, %v6973
  %v7001 = vadd.f32 %v6878, %v6973
  %v7002 = vadd.f32 %v6879, %v6973
  %v7003 = vadd.f32 %v6880, %v6973
  %v7004 = vadd.f32 %v6881, %v6973
  %v7005 = vadd.f32 %v6882, %v6973
  %v7006 = vadd.f32 %v6883, %v6973
  %v7007 = vadd.f32 %v6884, %v6973
  %v7008 = vadd.f32 %v6885, %v6973
  %v7009 = vadd.f32 %v6886, %v6973
  %v7010 = vadd.f32 %v6887, %v6973
  %v7011 = vadd.f32 %v6888, %v6973
  %v7012 = vadd.f32 %v6889, %v6973
  %v7013 = vadd.f32 %v6890, %v6973
  %v7014 = vadd.f32 %v6891, %v6973
  %v7015 = vadd.f32 %v6892, %v6973
  %v7016 = vadd.f32 %v6893, %v6973
  %v7017 = vadd.f32 %v6894, %v6973
  %v7018 = vadd.f32 %v6895, %v6973
  %v7019 = vadd.f32 %v6896, %v6973
  %v7020 = vadd.f32 %v6897, %v6973
  %v7021 = vadd.f32 %v6898, %v6973
  %v7022 = vadd.f32 %v6899, %v6973
  %v7023 = vadd.f32 %v6900, %v6973
  %v7024 = vadd.f32 %v6901, %v6973
  %v7025 = vadd.f32 %v6902, %v6973
  %v7026 = vadd.f32 %v6903, %v6973
  %v7027 = vadd.f32 %v6904, %v6973
  %v7028 = vadd.f32 %v6905, %v6973
  %v7029 = vadd.f32 %v6906, %v6973
  %v7030 = vadd.f32 %v6907, %v6973
  %v7031 = vadd.f32 %v6908, %v6973
  %v7032 = vadd.f32 %v6909, %v6973
  %v7033 = vadd.f32 %v6910, %v6973
  %v7034 = vadd.f32 %v6911, %v6973
  %v7035 = vadd.f32 %v6912, %v6973
  %v7036 = vadd.f32 %v6913, %v6973
  %v7037 = vadd.f32 %v6914, %v6973
  %v7038 = vadd.f32 %v6915, %v6973
  %v7039 = vadd.f32 %v6916, %v6973
  %v7040 = vadd.f32 %v6917, %v6973
  %v7041 = vadd.f32 %v6918, %v6973
  %v7042 = vadd.f32 %v6919, %v6973
  %v7043 = vadd.f32 %v6920, %v6973
  %v7044 = vadd.f32 %v6921, %v6973
  %v7045 = vadd.f32 %v6922, %v6973
  %v7046 = vadd.f32 %v6923, %v6973
  %v7047 = vadd.f32 %v6924, %v6973
  %v7048 = vadd.f32 %v6925, %v6973
  %v7049 = vadd.f32 %v6926, %v6973
  %v7050 = vadd.f32 %v6927, %v6973
  %v7051 = vadd.f32 %v6928, %v6973
  %v7052 = vadd.f32 %v6929, %v6973
  %v7053 = vadd.f32 %v6930, %v6973
  %v7054 = vadd.f32 %v6931, %v6973
  %v7055 = vadd.f32 %v6932, %v6973
  %v7056 = vadd.f32 %v6933, %v6973
  %v7057 = vadd.f32 %v6934, %v6973
  %v7058 = vadd.f32 %v6935, %v6973
  %v7059 = vadd.f32 %v6936, %v6973
  %v7060 = vadd.f32 %v6937, %v6973
  %v7061 = vadd.f32 %v6938, %v6973
  %v7062 = vadd.f32 %v6939, %v6973
  %v7063 = vadd.f32 %v6940, %v6973
  %v7064 = vadd.f32 %v6941, %v6973
  %v7065 = vadd.f32 %v6942, %v6973
  %v7066 = vadd.f32 %v6943, %v6973
  %v7067 = vadd.f32 %v6944, %v6973
  %v7068 = vadd.f32 %v6945, %v6973
  %v7069 = vadd.f32 %v6946, %v6973
  %v7070 = vadd.f32 %v6947, %v6973
  %v7071 = vadd.f32 %v6948, %v6973
  %v7072 = vadd.f32 %v6949, %v6973
  %v7073 = vadd.f32 %v6950, %v6973
  %v7074 = vadd.f32 %v6951, %v6973
  %v7075 = vadd.f32 %v6952, %v6973
  %v7076 = vadd.f32 %v6953, %v6973
  %v7077 = vadd.f32 %v6954, %v6973
  %v7078 = vadd.f32 %v6955, %v6973
  %v7079 = vadd.f32 %v6956, %v6973
  %v7080 = vadd.f32 %v6957, %v6973
  %v7081 = vadd.f32 %v6958, %v6973
  %v7082 = vadd.f32 %v6959, %v6973
  %v7083 = vadd.f32 %v6960, %v6973
  %v7084 = vadd.f32 %v6961, %v6973
  %v7085 = vadd.f32 %v6962, %v6973
  %v7086 = vadd.f32 %v6963, %v6973
  %v7087 = vadd.f32 %v6964, %v6973
  %v7088 = vadd.f32 %v6965, %v6973
  %v7089 = vadd.f32 %v6966, %v6973
  %v7090 = vadd.f32 %v6967, %v6973
  %v7091 = vadd.f32 %v6968, %v6973
  %v7092 = vmax.f32 %v6975, 0.0
  %v7093 = vmax.f32 %v6976, 0.0
  %v7094 = vmax.f32 %v6977, 0.0
  %v7095 = vmax.f32 %v6978, 0.0
  %v7096 = vmax.f32 %v6979, 0.0
  %v7097 = vmax.f32 %v6980, 0.0
  %v7098 = vmax.f32 %v6981, 0.0
  %v7099 = vmax.f32 %v6982, 0.0
  %v7100 = vmax.f32 %v6983, 0.0
  %v7101 = vmax.f32 %v6984, 0.0
  %v7102 = vmax.f32 %v6985, 0.0
  %v7103 = vmax.f32 %v6986, 0.0
  %v7104 = vmax.f32 %v6987, 0.0
  %v7105 = vmax.f32 %v6988, 0.0
  %v7106 = vmax.f32 %v6989, 0.0
  %v7107 = vmax.f32 %v6990, 0.0
  %v7108 = vmax.f32 %v6991, 0.0
  %v7109 = vmax.f32 %v6992, 0.0
  %v7110 = vmax.f32 %v6993, 0.0
  %v7111 = vmax.f32 %v6994, 0.0
  %v7112 = vmax.f32 %v6995, 0.0
  %v7113 = vmax.f32 %v6996, 0.0
  %v7114 = vmax.f32 %v6997, 0.0
  %v7115 = vmax.f32 %v6998, 0.0
  %v7116 = vmax.f32 %v6999, 0.0
  %v7117 = vmax.f32 %v7000, 0.0
  %v7118 = vmax.f32 %v7001, 0.0
  %v7119 = vmax.f32 %v7002, 0.0
  %v7120 = vmax.f32 %v7003, 0.0
  %v7121 = vmax.f32 %v7004, 0.0
  %v7122 = vmax.f32 %v7005, 0.0
  %v7123 = vmax.f32 %v7006, 0.0
  %v7124 = vmax.f32 %v7007, 0.0
  %v7125 = vmax.f32 %v7008, 0.0
  %v7126 = vmax.f32 %v7009, 0.0
  %v7127 = vmax.f32 %v7010, 0.0
  %v7128 = vmax.f32 %v7011, 0.0
  %v7129 = vmax.f32 %v7012, 0.0
  %v7130 = vmax.f32 %v7013, 0.0
  %v7131 = vmax.f32 %v7014, 0.0
  %v7132 = vmax.f32 %v7015, 0.0
  %v7133 = vmax.f32 %v7016, 0.0
  %v7134 = vmax.f32 %v7017, 0.0
  %v7135 = vmax.f32 %v7018, 0.0
  %v7136 = vmax.f32 %v7019, 0.0
  %v7137 = vmax.f32 %v7020, 0.0
  %v7138 = vmax.f32 %v7021, 0.0
  %v7139 = vmax.f32 %v7022, 0.0
  %v7140 = vmax.f32 %v7023, 0.0
  %v7141 = vmax.f32 %v7024, 0.0
  %v7142 = vmax.f32 %v7025, 0.0
  %v7143 = vmax.f32 %v7026, 0.0
  %v7144 = vmax.f32 %v7027, 0.0
  %v7145 = vmax.f32 %v7028, 0.0
  %v7146 = vmax.f32 %v7029, 0.0
  %v7147 = vmax.f32 %v7030, 0.0
  %v7148 = vmax.f32 %v7031, 0.0
  %v7149 = vmax.f32 %v7032, 0.0
  %v7150 = vmax.f32 %v7033, 0.0
  %v7151 = vmax.f32 %v7034, 0.0
  %v7152 = vmax.f32 %v7035, 0.0
  %v7153 = vmax.f32 %v7036, 0.0
  %v7154 = vmax.f32 %v7037, 0.0
  %v7155 = vmax.f32 %v7038, 0.0
  %v7156 = vmax.f32 %v7039, 0.0
  %v7157 = vmax.f32 %v7040, 0.0
  %v7158 = vmax.f32 %v7041, 0.0
  %v7159 = vmax.f32 %v7042, 0.0
  %v7160 = vmax.f32 %v7043, 0.0
  %v7161 = vmax.f32 %v7044, 0.0
  %v7162 = vmax.f32 %v7045, 0.0
  %v7163 = vmax.f32 %v7046, 0.0
  %v7164 = vmax.f32 %v7047, 0.0
  %v7165 = vmax.f32 %v7048, 0.0
  %v7166 = vmax.f32 %v7049, 0.0
  %v7167 = vmax.f32 %v7050, 0.0
  %v7168 = vmax.f32 %v7051, 0.0
  %v7169 = vmax.f32 %v7052, 0.0
  %v7170 = vmax.f32 %v7053, 0.0
  %v7171 = vmax.f32 %v7054, 0.0
  %v7172 = vmax.f32 %v7055, 0.0
  %v7173 = vmax.f32 %v7056, 0.0
  %v7174 = vmax.f32 %v7057, 0.0
  %v7175 = vmax.f32 %v7058, 0.0
  %v7176 = vmax.f32 %v7059, 0.0
  %v7177 = vmax.f32 %v7060, 0.0
  %v7178 = vmax.f32 %v7061, 0.0
  %v7179 = vmax.f32 %v7062, 0.0
  %v7180 = vmax.f32 %v7063, 0.0
  %v7181 = vmax.f32 %v7064, 0.0
  %v7182 = vmax.f32 %v7065, 0.0
  %v7183 = vmax.f32 %v7066, 0.0
  %v7184 = vmax.f32 %v7067, 0.0
  %v7185 = vmax.f32 %v7068, 0.0
  %v7186 = vmax.f32 %v7069, 0.0
  %v7187 = vmax.f32 %v7070, 0.0
  %v7188 = vmax.f32 %v7071, 0.0
  %v7189 = vmax.f32 %v7072, 0.0
  %v7190 = vmax.f32 %v7073, 0.0
  %v7191 = vmax.f32 %v7074, 0.0
  %v7192 = vmax.f32 %v7075, 0.0
  %v7193 = vmax.f32 %v7076, 0.0
  %v7194 = vmax.f32 %v7077, 0.0
  %v7195 = vmax.f32 %v7078, 0.0
  %v7196 = vmax.f32 %v7079, 0.0
  %v7197 = vmax.f32 %v7080, 0.0
  %v7198 = vmax.f32 %v7081, 0.0
  %v7199 = vmax.f32 %v7082, 0.0
  %v7200 = vmax.f32 %v7083, 0.0
  %v7201 = vmax.f32 %v7084, 0.0
  %v7202 = vmax.f32 %v7085, 0.0
  %v7203 = vmax.f32 %v7086, 0.0
  %v7204 = vmax.f32 %v7087, 0.0
  %v7205 = vmax.f32 %v7088, 0.0
  %v7206 = vmax.f32 %v7089, 0.0
  %v7207 = vmax.f32 %v7090, 0.0
  %v7208 = vmax.f32 %v7091, 0.0
  %v7209 = vmul.f32 %v7092, %v5308
  %v7210 = vmul.f32 %v7093, %v5313
  %v7211 = vmul.f32 %v7094, %v5318
  %v7212 = vmul.f32 %v7095, %v5323
  %v7213 = vmul.f32 %v7096, %v5328
  %v7214 = vmul.f32 %v7097, %v5333
  %v7215 = vmul.f32 %v7098, %v5338
  %v7216 = vmul.f32 %v7099, %v5343
  %v7217 = vmul.f32 %v7100, %v5348
  %v7218 = vmul.f32 %v7101, %v5353
  %v7219 = vmul.f32 %v7102, %v5358
  %v7220 = vmul.f32 %v7103, %v5363
  %v7221 = vmul.f32 %v7104, %v5368
  %v7222 = vmul.f32 %v7105, %v5373
  %v7223 = vmul.f32 %v7106, %v5378
  %v7224 = vmul.f32 %v7107, %v5383
  %v7225 = vmul.f32 %v7108, %v5388
  %v7226 = vmul.f32 %v7109, %v5393
  %v7227 = vmul.f32 %v7110, %v5398
  %v7228 = vmul.f32 %v7111, %v5403
  %v7229 = vmul.f32 %v7112, %v5408
  %v7230 = vmul.f32 %v7113, %v5413
  %v7231 = vmul.f32 %v7114, %v5418
  %v7232 = vmul.f32 %v7115, %v5423
  %v7233 = vmul.f32 %v7116, %v5428
  %v7234 = vmul.f32 %v7117, %v5433
  %v7235 = vmul.f32 %v7118, %v5438
  %v7236 = vmul.f32 %v7119, %v5443
  %v7237 = vmul.f32 %v7120, %v5448
  %v7238 = vmul.f32 %v7121, %v5453
  %v7239 = vmul.f32 %v7122, %v5458
  %v7240 = vmul.f32 %v7123, %v5463
  %v7241 = vmul.f32 %v7124, %v5468
  %v7242 = vmul.f32 %v7125, %v5473
  %v7243 = vmul.f32 %v7126, %v5478
  %v7244 = vmul.f32 %v7127, %v5483
  %v7245 = vmul.f32 %v7128, %v5488
  %v7246 = vmul.f32 %v7129, %v5493
  %v7247 = vmul.f32 %v7130, %v5498
  %v7248 = vmul.f32 %v7131, %v5503
  %v7249 = vmul.f32 %v7132, %v5508
  %v7250 = vmul.f32 %v7133, %v5513
  %v7251 = vmul.f32 %v7134, %v5518
  %v7252 = vmul.f32 %v7135, %v5523
  %v7253 = vmul.f32 %v7136, %v5528
  %v7254 = vmul.f32 %v7137, %v5533
  %v7255 = vmul.f32 %v7138, %v5538
  %v7256 = vmul.f32 %v7139, %v5543
  %v7257 = vmul.f32 %v7140, %v5548
  %v7258 = vmul.f32 %v7141, %v5553
  %v7259 = vmul.f32 %v7142, %v5558
  %v7260 = vmul.f32 %v7143, %v5563
  %v7261 = vmul.f32 %v7144, %v5568
  %v7262 = vmul.f32 %v7145, %v5573
  %v7263 = vmul.f32 %v7146, %v5578
  %v7264 = vmul.f32 %v7147, %v5583
  %v7265 = vmul.f32 %v7148, %v5588
  %v7266 = vmul.f32 %v7149, %v5593
  %v7267 = vmul.f32 %v7150, %v5598
  %v7268 = vmul.f32 %v7151, %v5603
  %v7269 = vmul.f32 %v7152, %v5608
  %v7270 = vmul.f32 %v7153, %v5613
  %v7271 = vmul.f32 %v7154, %v5618
  %v7272 = vmul.f32 %v7155, %v5623
  %v7273 = vmul.f32 %v7156, %v5628
  %v7274 = vmul.f32 %v7157, %v5633
  %v7275 = vmul.f32 %v7158, %v5638
  %v7276 = vmul.f32 %v7159, %v5643
  %v7277 = vmul.f32 %v7160, %v5648
  %v7278 = vmul.f32 %v7161, %v5653
  %v7279 = vmul.f32 %v7162, %v5658
  %v7280 = vmul.f32 %v7163, %v5663
  %v7281 = vmul.f32 %v7164, %v5668
  %v7282 = vmul.f32 %v7165, %v5673
  %v7283 = vmul.f32 %v7166, %v5678
  %v7284 = vmul.f32 %v7167, %v5683
  %v7285 = vmul.f32 %v7168, %v5688
  %v7286 = vmul.f32 %v7169, %v5693
  %v7287 = vmul.f32 %v7170, %v5698
  %v7288 = vmul.f32 %v7171, %v5703
  %v7289 = vmul.f32 %v7172, %v5708
  %v7290 = vmul.f32 %v7173, %v5713
  %v7291 = vmul.f32 %v7174, %v5718
  %v7292 = vmul.f32 %v7175, %v5723
  %v7293 = vmul.f32 %v7176, %v5728
  %v7294 = vmul.f32 %v7177, %v5733
  %v7295 = vmul.f32 %v7178, %v5738
  %v7296 = vmul.f32 %v7179, %v5743
  %v7297 = vmul.f32 %v7180, %v5748
  %v7298 = vmul.f32 %v7181, %v5753
  %v7299 = vmul.f32 %v7182, %v5758
  %v7300 = vmul.f32 %v7183, %v5763
  %v7301 = vmul.f32 %v7184, %v5768
  %v7302 = vmul.f32 %v7185, %v5773
  %v7303 = vmul.f32 %v7186, %v5778
  %v7304 = vmul.f32 %v7187, %v5783
  %v7305 = vmul.f32 %v7188, %v5788
  %v7306 = vmul.f32 %v7189, %v5793
  %v7307 = vmul.f32 %v7190, %v5798
  %v7308 = vmul.f32 %v7191, %v5803
  %v7309 = vmul.f32 %v7192, %v5808
  %v7310 = vmul.f32 %v7193, %v5813
  %v7311 = vmul.f32 %v7194, %v5818
  %v7312 = vmul.f32 %v7195, %v5823
  %v7313 = vmul.f32 %v7196, %v5828
  %v7314 = vmul.f32 %v7197, %v5833
  %v7315 = vmul.f32 %v7198, %v5838
  %v7316 = vmul.f32 %v7199, %v5843
  %v7317 = vmul.f32 %v7200, %v5848
  %v7318 = vmul.f32 %v7201, %v5853
  %v7319 = vmul.f32 %v7202, %v5858
  %v7320 = vmul.f32 %v7203, %v5863
  %v7321 = vmul.f32 %v7204, %v5868
  %v7322 = vmul.f32 %v7205, %v5873
  %v7323 = vmul.f32 %v7206, %v5878
  %v7324 = vmul.f32 %v7207, %v5883
  %v7325 = vmul.f32 %v7208, %v5888
  %v7326 = vpack.c.bf16 %v7210, %v7209
  %v7327 = vpack.c.bf16 %v7212, %v7211
  %v7328 = vpack.c.bf16 %v7214, %v7213
  %v7329 = vpack.c.bf16 %v7216, %v7215
  %v7330 = vpack.c.bf16 %v7218, %v7217
  %v7331 = vpack.c.bf16 %v7220, %v7219
  %v7332 = vpack.c.bf16 %v7222, %v7221
  %v7333 = vpack.c.bf16 %v7224, %v7223
  %v7334 = vpack.c.bf16 %v7226, %v7225
  %v7335 = vpack.c.bf16 %v7228, %v7227
  %v7336 = vpack.c.bf16 %v7230, %v7229
  %v7337 = vpack.c.bf16 %v7232, %v7231
  %v7338 = vpack.c.bf16 %v7234, %v7233
  %v7339 = vpack.c.bf16 %v7236, %v7235
  %v7340 = vpack.c.bf16 %v7238, %v7237
  %v7341 = vpack.c.bf16 %v7240, %v7239
  %v7342 = vpack.c.bf16 %v7242, %v7241
  %v7343 = vpack.c.bf16 %v7244, %v7243
  %v7344 = vpack.c.bf16 %v7246, %v7245
  %v7345 = vpack.c.bf16 %v7248, %v7247
  %v7346 = vpack.c.bf16 %v7250, %v7249
  %v7347 = vpack.c.bf16 %v7252, %v7251
  %v7348 = vpack.c.bf16 %v7254, %v7253
  %v7349 = vpack.c.bf16 %v7256, %v7255
  %v7350 = vpack.c.bf16 %v7258, %v7257
  %v7351 = vpack.c.bf16 %v7260, %v7259
  %v7352 = vpack.c.bf16 %v7262, %v7261
  %v7353 = vpack.c.bf16 %v7264, %v7263
  %v7354 = vpack.c.bf16 %v7266, %v7265
  %v7355 = vpack.c.bf16 %v7268, %v7267
  %v7356 = vpack.c.bf16 %v7270, %v7269
  %v7357 = vpack.c.bf16 %v7272, %v7271
  %v7358 = vpack.c.bf16 %v7274, %v7273
  %v7359 = vpack.c.bf16 %v7276, %v7275
  %v7360 = vpack.c.bf16 %v7278, %v7277
  %v7361 = vpack.c.bf16 %v7280, %v7279
  %v7362 = vpack.c.bf16 %v7282, %v7281
  %v7363 = vpack.c.bf16 %v7284, %v7283
  %v7364 = vpack.c.bf16 %v7286, %v7285
  %v7365 = vpack.c.bf16 %v7288, %v7287
  %v7366 = vpack.c.bf16 %v7290, %v7289
  %v7367 = vpack.c.bf16 %v7292, %v7291
  %v7368 = vpack.c.bf16 %v7294, %v7293
  %v7369 = vpack.c.bf16 %v7296, %v7295
  %v7370 = vpack.c.bf16 %v7298, %v7297
  %v7371 = vpack.c.bf16 %v7300, %v7299
  %v7372 = vpack.c.bf16 %v7302, %v7301
  %v7373 = vpack.c.bf16 %v7304, %v7303
  %v7374 = vpack.c.bf16 %v7306, %v7305
  %v7375 = vpack.c.bf16 %v7308, %v7307
  %v7376 = vpack.c.bf16 %v7310, %v7309
  %v7377 = vpack.c.bf16 %v7312, %v7311
  %v7378 = vpack.c.bf16 %v7314, %v7313
  %v7379 = vpack.c.bf16 %v7316, %v7315
  %v7380 = vpack.c.bf16 %v7318, %v7317
  %v7381 = vpack.c.bf16 %v7320, %v7319
  %v7382 = vpack.c.bf16 %v7322, %v7321
  %v7383 = vpack.c.bf16 %v7324, %v7323
  %v7384 = vpack.c.bf16 %v7325, %v7325
  %v7444 = vunpack.c.l.b16 %v7326
  %v7445 = vunpack.c.h.b16 %v7326
  %v7446 = vunpack.c.l.b16 %v7327
  %v7447 = vunpack.c.h.b16 %v7327
  %v7448 = vunpack.c.l.b16 %v7328
  %v7449 = vunpack.c.h.b16 %v7328
  %v7450 = vunpack.c.l.b16 %v7329
  %v7451 = vunpack.c.h.b16 %v7329
  %v7452 = vunpack.c.l.b16 %v7330
  %v7453 = vunpack.c.h.b16 %v7330
  %v7454 = vunpack.c.l.b16 %v7331
  %v7455 = vunpack.c.h.b16 %v7331
  %v7456 = vunpack.c.l.b16 %v7332
  %v7457 = vunpack.c.h.b16 %v7332
  %v7458 = vunpack.c.l.b16 %v7333
  %v7459 = vunpack.c.h.b16 %v7333
  %v7460 = vunpack.c.l.b16 %v7334
  %v7461 = vunpack.c.h.b16 %v7334
  %v7462 = vunpack.c.l.b16 %v7335
  %v7463 = vunpack.c.h.b16 %v7335
  %v7464 = vunpack.c.l.b16 %v7336
  %v7465 = vunpack.c.h.b16 %v7336
  %v7466 = vunpack.c.l.b16 %v7337
  %v7467 = vunpack.c.h.b16 %v7337
  %v7468 = vunpack.c.l.b16 %v7338
  %v7469 = vunpack.c.h.b16 %v7338
  %v7470 = vunpack.c.l.b16 %v7339
  %v7471 = vunpack.c.h.b16 %v7339
  %v7472 = vunpack.c.l.b16 %v7340
  %v7473 = vunpack.c.h.b16 %v7340
  %v7474 = vunpack.c.l.b16 %v7341
  %v7475 = vunpack.c.h.b16 %v7341
  %v7476 = vunpack.c.l.b16 %v7342
  %v7477 = vunpack.c.h.b16 %v7342
  %v7478 = vunpack.c.l.b16 %v7343
  %v7479 = vunpack.c.h.b16 %v7343
  %v7480 = vunpack.c.l.b16 %v7344
  %v7481 = vunpack.c.h.b16 %v7344
  %v7482 = vunpack.c.l.b16 %v7345
  %v7483 = vunpack.c.h.b16 %v7345
  %v7484 = vunpack.c.l.b16 %v7346
  %v7485 = vunpack.c.h.b16 %v7346
  %v7486 = vunpack.c.l.b16 %v7347
  %v7487 = vunpack.c.h.b16 %v7347
  %v7488 = vunpack.c.l.b16 %v7348
  %v7489 = vunpack.c.h.b16 %v7348
  %v7490 = vunpack.c.l.b16 %v7349
  %v7491 = vunpack.c.h.b16 %v7349
  %v7492 = vunpack.c.l.b16 %v7350
  %v7493 = vunpack.c.h.b16 %v7350
  %v7494 = vunpack.c.l.b16 %v7351
  %v7495 = vunpack.c.h.b16 %v7351
  %v7496 = vunpack.c.l.b16 %v7352
  %v7497 = vunpack.c.h.b16 %v7352
  %v7498 = vunpack.c.l.b16 %v7353
  %v7499 = vunpack.c.h.b16 %v7353
  %v7500 = vunpack.c.l.b16 %v7354
  %v7501 = vunpack.c.h.b16 %v7354
  %v7502 = vunpack.c.l.b16 %v7355
  %v7503 = vunpack.c.h.b16 %v7355
  %v7504 = vunpack.c.l.b16 %v7356
  %v7505 = vunpack.c.h.b16 %v7356
  %v7506 = vunpack.c.l.b16 %v7357
  %v7507 = vunpack.c.h.b16 %v7357
  %v7508 = vunpack.c.l.b16 %v7358
  %v7509 = vunpack.c.h.b16 %v7358
  %v7510 = vunpack.c.l.b16 %v7359
  %v7511 = vunpack.c.h.b16 %v7359
  %v7512 = vunpack.c.l.b16 %v7360
  %v7513 = vunpack.c.h.b16 %v7360
  %v7514 = vunpack.c.l.b16 %v7361
  %v7515 = vunpack.c.h.b16 %v7361
  %v7516 = vunpack.c.l.b16 %v7362
  %v7517 = vunpack.c.h.b16 %v7362
  %v7518 = vunpack.c.l.b16 %v7363
  %v7519 = vunpack.c.h.b16 %v7363
  %v7520 = vunpack.c.l.b16 %v7364
  %v7521 = vunpack.c.h.b16 %v7364
  %v7522 = vunpack.c.l.b16 %v7365
  %v7523 = vunpack.c.h.b16 %v7365
  %v7524 = vunpack.c.l.b16 %v7366
  %v7525 = vunpack.c.h.b16 %v7366
  %v7526 = vunpack.c.l.b16 %v7367
  %v7527 = vunpack.c.h.b16 %v7367
  %v7528 = vunpack.c.l.b16 %v7368
  %v7529 = vunpack.c.h.b16 %v7368
  %v7530 = vunpack.c.l.b16 %v7369
  %v7531 = vunpack.c.h.b16 %v7369
  %v7532 = vunpack.c.l.b16 %v7370
  %v7533 = vunpack.c.h.b16 %v7370
  %v7534 = vunpack.c.l.b16 %v7371
  %v7535 = vunpack.c.h.b16 %v7371
  %v7536 = vunpack.c.l.b16 %v7372
  %v7537 = vunpack.c.h.b16 %v7372
  %v7538 = vunpack.c.l.b16 %v7373
  %v7539 = vunpack.c.h.b16 %v7373
  %v7540 = vunpack.c.l.b16 %v7374
  %v7541 = vunpack.c.h.b16 %v7374
  %v7542 = vunpack.c.l.b16 %v7375
  %v7543 = vunpack.c.h.b16 %v7375
  %v7544 = vunpack.c.l.b16 %v7376
  %v7545 = vunpack.c.h.b16 %v7376
  %v7546 = vunpack.c.l.b16 %v7377
  %v7547 = vunpack.c.h.b16 %v7377
  %v7548 = vunpack.c.l.b16 %v7378
  %v7549 = vunpack.c.h.b16 %v7378
  %v7550 = vunpack.c.l.b16 %v7379
  %v7551 = vunpack.c.h.b16 %v7379
  %v7552 = vunpack.c.l.b16 %v7380
  %v7553 = vunpack.c.h.b16 %v7380
  %v7554 = vunpack.c.l.b16 %v7381
  %v7555 = vunpack.c.h.b16 %v7381
  %v7556 = vunpack.c.l.b16 %v7382
  %v7557 = vunpack.c.h.b16 %v7382
  %v7558 = vunpack.c.l.b16 %v7383
  %v7559 = vunpack.c.h.b16 %v7383
  %v7560 = vunpack.c.l.b16 %v7384
  %v7561 = vpack.c.b16 %v7444, %v7444
  %v7562 = vpack.c.b16 %v7445, %v7445
  %v7563 = vpack.c.b16 %v7446, %v7446
  %v7564 = vpack.c.b16 %v7447, %v7447
  %v7565 = vpack.c.b16 %v7448, %v7448
  %v7566 = vpack.c.b16 %v7449, %v7449
  %v7567 = vpack.c.b16 %v7450, %v7450
  %v7568 = vpack.c.b16 %v7451, %v7451
  %v7569 = vpack.c.b16 %v7452, %v7452
  %v7570 = vpack.c.b16 %v7453, %v7453
  %v7571 = vpack.c.b16 %v7454, %v7454
  %v7572 = vpack.c.b16 %v7455, %v7455
  %v7573 = vpack.c.b16 %v7456, %v7456
  %v7574 = vpack.c.b16 %v7457, %v7457
  %v7575 = vpack.c.b16 %v7458, %v7458
  %v7576 = vpack.c.b16 %v7459, %v7459
  %v7577 = vpack.c.b16 %v7460, %v7460
  %v7578 = vpack.c.b16 %v7461, %v7461
  %v7579 = vpack.c.b16 %v7462, %v7462
  %v7580 = vpack.c.b16 %v7463, %v7463
  %v7581 = vpack.c.b16 %v7464, %v7464
  %v7582 = vpack.c.b16 %v7465, %v7465
  %v7583 = vpack.c.b16 %v7466, %v7466
  %v7584 = vpack.c.b16 %v7467, %v7467
  %v7585 = vpack.c.b16 %v7468, %v7468
  %v7586 = vpack.c.b16 %v7469, %v7469
  %v7587 = vpack.c.b16 %v7470, %v7470
  %v7588 = vpack.c.b16 %v7471, %v7471
  %v7589 = vpack.c.b16 %v7472, %v7472
  %v7590 = vpack.c.b16 %v7473, %v7473
  %v7591 = vpack.c.b16 %v7474, %v7474
  %v7592 = vpack.c.b16 %v7475, %v7475
  %v7593 = vpack.c.b16 %v7476, %v7476
  %v7594 = vpack.c.b16 %v7477, %v7477
  %v7595 = vpack.c.b16 %v7478, %v7478
  %v7596 = vpack.c.b16 %v7479, %v7479
  %v7597 = vpack.c.b16 %v7480, %v7480
  %v7598 = vpack.c.b16 %v7481, %v7481
  %v7599 = vpack.c.b16 %v7482, %v7482
  %v7600 = vpack.c.b16 %v7483, %v7483
  %v7601 = vpack.c.b16 %v7484, %v7484
  %v7602 = vpack.c.b16 %v7485, %v7485
  %v7603 = vpack.c.b16 %v7486, %v7486
  %v7604 = vpack.c.b16 %v7487, %v7487
  %v7605 = vpack.c.b16 %v7488, %v7488
  %v7606 = vpack.c.b16 %v7489, %v7489
  %v7607 = vpack.c.b16 %v7490, %v7490
  %v7608 = vpack.c.b16 %v7491, %v7491
  %v7609 = vpack.c.b16 %v7492, %v7492
  %v7610 = vpack.c.b16 %v7493, %v7493
  %v7611 = vpack.c.b16 %v7494, %v7494
  %v7612 = vpack.c.b16 %v7495, %v7495
  %v7613 = vpack.c.b16 %v7496, %v7496
  %v7614 = vpack.c.b16 %v7497, %v7497
  %v7615 = vpack.c.b16 %v7498, %v7498
  %v7616 = vpack.c.b16 %v7499, %v7499
  %v7617 = vpack.c.b16 %v7500, %v7500
  %v7618 = vpack.c.b16 %v7501, %v7501
  %v7619 = vpack.c.b16 %v7502, %v7502
  %v7620 = vpack.c.b16 %v7503, %v7503
  %v7621 = vpack.c.b16 %v7504, %v7504
  %v7622 = vpack.c.b16 %v7505, %v7505
  %v7623 = vpack.c.b16 %v7506, %v7506
  %v7624 = vpack.c.b16 %v7507, %v7507
  %v7625 = vpack.c.b16 %v7508, %v7508
  %v7626 = vpack.c.b16 %v7509, %v7509
  %v7627 = vpack.c.b16 %v7510, %v7510
  %v7628 = vpack.c.b16 %v7511, %v7511
  %v7629 = vpack.c.b16 %v7512, %v7512
  %v7630 = vpack.c.b16 %v7513, %v7513
  %v7631 = vpack.c.b16 %v7514, %v7514
  %v7632 = vpack.c.b16 %v7515, %v7515
  %v7633 = vpack.c.b16 %v7516, %v7516
  %v7634 = vpack.c.b16 %v7517, %v7517
  %v7635 = vpack.c.b16 %v7518, %v7518
  %v7636 = vpack.c.b16 %v7519, %v7519
  %v7637 = vpack.c.b16 %v7520, %v7520
  %v7638 = vpack.c.b16 %v7521, %v7521
  %v7639 = vpack.c.b16 %v7522, %v7522
  %v7640 = vpack.c.b16 %v7523, %v7523
  %v7641 = vpack.c.b16 %v7524, %v7524
  %v7642 = vpack.c.b16 %v7525, %v7525
  %v7643 = vpack.c.b16 %v7526, %v7526
  %v7644 = vpack.c.b16 %v7527, %v7527
  %v7645 = vpack.c.b16 %v7528, %v7528
  %v7646 = vpack.c.b16 %v7529, %v7529
  %v7647 = vpack.c.b16 %v7530, %v7530
  %v7648 = vpack.c.b16 %v7531, %v7531
  %v7649 = vpack.c.b16 %v7532, %v7532
  %v7650 = vpack.c.b16 %v7533, %v7533
  %v7651 = vpack.c.b16 %v7534, %v7534
  %v7652 = vpack.c.b16 %v7535, %v7535
  %v7653 = vpack.c.b16 %v7536, %v7536
  %v7654 = vpack.c.b16 %v7537, %v7537
  %v7655 = vpack.c.b16 %v7538, %v7538
  %v7656 = vpack.c.b16 %v7539, %v7539
  %v7657 = vpack.c.b16 %v7540, %v7540
  %v7658 = vpack.c.b16 %v7541, %v7541
  %v7659 = vpack.c.b16 %v7542, %v7542
  %v7660 = vpack.c.b16 %v7543, %v7543
  %v7661 = vpack.c.b16 %v7544, %v7544
  %v7662 = vpack.c.b16 %v7545, %v7545
  %v7663 = vpack.c.b16 %v7546, %v7546
  %v7664 = vpack.c.b16 %v7547, %v7547
  %v7665 = vpack.c.b16 %v7548, %v7548
  %v7666 = vpack.c.b16 %v7549, %v7549
  %v7667 = vpack.c.b16 %v7550, %v7550
  %v7668 = vpack.c.b16 %v7551, %v7551
  %v7669 = vpack.c.b16 %v7552, %v7552
  %v7670 = vpack.c.b16 %v7553, %v7553
  %v7671 = vpack.c.b16 %v7554, %v7554
  %v7672 = vpack.c.b16 %v7555, %v7555
  %v7673 = vpack.c.b16 %v7556, %v7556
  %v7674 = vpack.c.b16 %v7557, %v7557
  %v7675 = vpack.c.b16 %v7558, %v7558
  %v7676 = vpack.c.b16 %v7559, %v7559
  %v7677 = vpack.c.b16 %v7560, %v7560
  %vm7795 = vcmask 27648
  %7796 = vst.msk [vmem:[#allocation2] sm:$0xf] %vm7795, %v7561
  %7797 = vst.msk [vmem:[#allocation2 + $0x4] sm:$0xf] %vm7795, %v7562
  %7798 = vst.msk [vmem:[#allocation2 + $0x8] sm:$0xf] %vm7795, %v7563
  %7799 = vst.msk [vmem:[#allocation2 + $0xc] sm:$0xf] %vm7795, %v7564
  %7800 = vst.msk [vmem:[#allocation2 + $0x10] sm:$0xf] %vm7795, %v7565
  %7801 = vst.msk [vmem:[#allocation2 + $0x14] sm:$0xf] %vm7795, %v7566
  %7802 = vst.msk [vmem:[#allocation2 + $0x18] sm:$0xf] %vm7795, %v7567
  %7803 = vst.msk [vmem:[#allocation2 + $0x1c] sm:$0xf] %vm7795, %v7568
  %7804 = vst.msk [vmem:[#allocation2 + $0x20] sm:$0xf] %vm7795, %v7569
  %7805 = vst.msk [vmem:[#allocation2 + $0x24] sm:$0xf] %vm7795, %v7570
  %7806 = vst.msk [vmem:[#allocation2 + $0x28] sm:$0xf] %vm7795, %v7571
  %7807 = vst.msk [vmem:[#allocation2 + $0x2c] sm:$0xf] %vm7795, %v7572
  %7808 = vst.msk [vmem:[#allocation2 + $0x30] sm:$0xf] %vm7795, %v7573
  %7809 = vst.msk [vmem:[#allocation2 + $0x34] sm:$0xf] %vm7795, %v7574
  %7810 = vst.msk [vmem:[#allocation2 + $0x38] sm:$0xf] %vm7795, %v7575
  %7811 = vst.msk [vmem:[#allocation2 + $0x3c] sm:$0xf] %vm7795, %v7576
  %7812 = vst.msk [vmem:[#allocation2 + $0x40] sm:$0xf] %vm7795, %v7577
  %7813 = vst.msk [vmem:[#allocation2 + $0x44] sm:$0xf] %vm7795, %v7578
  %7814 = vst.msk [vmem:[#allocation2 + $0x48] sm:$0xf] %vm7795, %v7579
  %7815 = vst.msk [vmem:[#allocation2 + $0x4c] sm:$0xf] %vm7795, %v7580
  %7816 = vst.msk [vmem:[#allocation2 + $0x50] sm:$0xf] %vm7795, %v7581
  %7817 = vst.msk [vmem:[#allocation2 + $0x54] sm:$0xf] %vm7795, %v7582
  %7818 = vst.msk [vmem:[#allocation2 + $0x58] sm:$0xf] %vm7795, %v7583
  %7819 = vst.msk [vmem:[#allocation2 + $0x5c] sm:$0xf] %vm7795, %v7584
  %7820 = vst.msk [vmem:[#allocation2 + $0x60] sm:$0xf] %vm7795, %v7585
  %7821 = vst.msk [vmem:[#allocation2 + $0x64] sm:$0xf] %vm7795, %v7586
  %7822 = vst.msk [vmem:[#allocation2 + $0x68] sm:$0xf] %vm7795, %v7587
  %7823 = vst.msk [vmem:[#allocation2 + $0x6c] sm:$0xf] %vm7795, %v7588
  %7824 = vst.msk [vmem:[#allocation2 + $0x70] sm:$0xf] %vm7795, %v7589
  %7825 = vst.msk [vmem:[#allocation2 + $0x74] sm:$0xf] %vm7795, %v7590
  %7826 = vst.msk [vmem:[#allocation2 + $0x78] sm:$0xf] %vm7795, %v7591
  %7827 = vst.msk [vmem:[#allocation2 + $0x7c] sm:$0xf] %vm7795, %v7592
  %7828 = vst.msk [vmem:[#allocation2 + $0x80] sm:$0xf] %vm7795, %v7593
  %7829 = vst.msk [vmem:[#allocation2 + $0x84] sm:$0xf] %vm7795, %v7594
  %7830 = vst.msk [vmem:[#allocation2 + $0x88] sm:$0xf] %vm7795, %v7595
  %7831 = vst.msk [vmem:[#allocation2 + $0x8c] sm:$0xf] %vm7795, %v7596
  %7832 = vst.msk [vmem:[#allocation2 + $0x90] sm:$0xf] %vm7795, %v7597
  %7833 = vst.msk [vmem:[#allocation2 + $0x94] sm:$0xf] %vm7795, %v7598
  %7834 = vst.msk [vmem:[#allocation2 + $0x98] sm:$0xf] %vm7795, %v7599
  %7835 = vst.msk [vmem:[#allocation2 + $0x9c] sm:$0xf] %vm7795, %v7600
  %7836 = vst.msk [vmem:[#allocation2 + $0xa0] sm:$0xf] %vm7795, %v7601
  %7837 = vst.msk [vmem:[#allocation2 + $0xa4] sm:$0xf] %vm7795, %v7602
  %7838 = vst.msk [vmem:[#allocation2 + $0xa8] sm:$0xf] %vm7795, %v7603
  %7839 = vst.msk [vmem:[#allocation2 + $0xac] sm:$0xf] %vm7795, %v7604
  %7840 = vst.msk [vmem:[#allocation2 + $0xb0] sm:$0xf] %vm7795, %v7605
  %7841 = vst.msk [vmem:[#allocation2 + $0xb4] sm:$0xf] %vm7795, %v7606
  %7842 = vst.msk [vmem:[#allocation2 + $0xb8] sm:$0xf] %vm7795, %v7607
  %7843 = vst.msk [vmem:[#allocation2 + $0xbc] sm:$0xf] %vm7795, %v7608
  %7844 = vst.msk [vmem:[#allocation2 + $0xc0] sm:$0xf] %vm7795, %v7609
  %7845 = vst.msk [vmem:[#allocation2 + $0xc4] sm:$0xf] %vm7795, %v7610
  %7846 = vst.msk [vmem:[#allocation2 + $0xc8] sm:$0xf] %vm7795, %v7611
  %7847 = vst.msk [vmem:[#allocation2 + $0xcc] sm:$0xf] %vm7795, %v7612
  %7848 = vst.msk [vmem:[#allocation2 + $0xd0] sm:$0xf] %vm7795, %v7613
  %7849 = vst.msk [vmem:[#allocation2 + $0xd4] sm:$0xf] %vm7795, %v7614
  %7850 = vst.msk [vmem:[#allocation2 + $0xd8] sm:$0xf] %vm7795, %v7615
  %7851 = vst.msk [vmem:[#allocation2 + $0xdc] sm:$0xf] %vm7795, %v7616
  %7852 = vst.msk [vmem:[#allocation2 + $0xe0] sm:$0xf] %vm7795, %v7617
  %7853 = vst.msk [vmem:[#allocation2 + $0xe4] sm:$0xf] %vm7795, %v7618
  %7854 = vst.msk [vmem:[#allocation2 + $0xe8] sm:$0xf] %vm7795, %v7619
  %7855 = vst.msk [vmem:[#allocation2 + $0xec] sm:$0xf] %vm7795, %v7620
  %7856 = vst.msk [vmem:[#allocation2 + $0xf0] sm:$0xf] %vm7795, %v7621
  %7857 = vst.msk [vmem:[#allocation2 + $0xf4] sm:$0xf] %vm7795, %v7622
  %7858 = vst.msk [vmem:[#allocation2 + $0xf8] sm:$0xf] %vm7795, %v7623
  %7859 = vst.msk [vmem:[#allocation2 + $0xfc] sm:$0xf] %vm7795, %v7624
  %7860 = vst.msk [vmem:[#allocation2 + $0x100] sm:$0xf] %vm7795, %v7625
  %7861 = vst.msk [vmem:[#allocation2 + $0x104] sm:$0xf] %vm7795, %v7626
  %7862 = vst.msk [vmem:[#allocation2 + $0x108] sm:$0xf] %vm7795, %v7627
  %7863 = vst.msk [vmem:[#allocation2 + $0x10c] sm:$0xf] %vm7795, %v7628
  %7864 = vst.msk [vmem:[#allocation2 + $0x110] sm:$0xf] %vm7795, %v7629
  %7865 = vst.msk [vmem:[#allocation2 + $0x114] sm:$0xf] %vm7795, %v7630
  %7866 = vst.msk [vmem:[#allocation2 + $0x118] sm:$0xf] %vm7795, %v7631
  %7867 = vst.msk [vmem:[#allocation2 + $0x11c] sm:$0xf] %vm7795, %v7632
  %7868 = vst.msk [vmem:[#allocation2 + $0x120] sm:$0xf] %vm7795, %v7633
  %7869 = vst.msk [vmem:[#allocation2 + $0x124] sm:$0xf] %vm7795, %v7634
  %7870 = vst.msk [vmem:[#allocation2 + $0x128] sm:$0xf] %vm7795, %v7635
  %7871 = vst.msk [vmem:[#allocation2 + $0x12c] sm:$0xf] %vm7795, %v7636
  %7872 = vst.msk [vmem:[#allocation2 + $0x130] sm:$0xf] %vm7795, %v7637
  %7873 = vst.msk [vmem:[#allocation2 + $0x134] sm:$0xf] %vm7795, %v7638
  %7874 = vst.msk [vmem:[#allocation2 + $0x138] sm:$0xf] %vm7795, %v7639
  %7875 = vst.msk [vmem:[#allocation2 + $0x13c] sm:$0xf] %vm7795, %v7640
  %7876 = vst.msk [vmem:[#allocation2 + $0x140] sm:$0xf] %vm7795, %v7641
  %7877 = vst.msk [vmem:[#allocation2 + $0x144] sm:$0xf] %vm7795, %v7642
  %7878 = vst.msk [vmem:[#allocation2 + $0x148] sm:$0xf] %vm7795, %v7643
  %7879 = vst.msk [vmem:[#allocation2 + $0x14c] sm:$0xf] %vm7795, %v7644
  %7880 = vst.msk [vmem:[#allocation2 + $0x150] sm:$0xf] %vm7795, %v7645
  %7881 = vst.msk [vmem:[#allocation2 + $0x154] sm:$0xf] %vm7795, %v7646
  %7882 = vst.msk [vmem:[#allocation2 + $0x158] sm:$0xf] %vm7795, %v7647
  %7883 = vst.msk [vmem:[#allocation2 + $0x15c] sm:$0xf] %vm7795, %v7648
  %7884 = vst.msk [vmem:[#allocation2 + $0x160] sm:$0xf] %vm7795, %v7649
  %7885 = vst.msk [vmem:[#allocation2 + $0x164] sm:$0xf] %vm7795, %v7650
  %7886 = vst.msk [vmem:[#allocation2 + $0x168] sm:$0xf] %vm7795, %v7651
  %7887 = vst.msk [vmem:[#allocation2 + $0x16c] sm:$0xf] %vm7795, %v7652
  %7888 = vst.msk [vmem:[#allocation2 + $0x170] sm:$0xf] %vm7795, %v7653
  %7889 = vst.msk [vmem:[#allocation2 + $0x174] sm:$0xf] %vm7795, %v7654
  %7890 = vst.msk [vmem:[#allocation2 + $0x178] sm:$0xf] %vm7795, %v7655
  %7891 = vst.msk [vmem:[#allocation2 + $0x17c] sm:$0xf] %vm7795, %v7656
  %7892 = vst.msk [vmem:[#allocation2 + $0x180] sm:$0xf] %vm7795, %v7657
  %7893 = vst.msk [vmem:[#allocation2 + $0x184] sm:$0xf] %vm7795, %v7658
  %7894 = vst.msk [vmem:[#allocation2 + $0x188] sm:$0xf] %vm7795, %v7659
  %7895 = vst.msk [vmem:[#allocation2 + $0x18c] sm:$0xf] %vm7795, %v7660
  %7896 = vst.msk [vmem:[#allocation2 + $0x190] sm:$0xf] %vm7795, %v7661
  %7897 = vst.msk [vmem:[#allocation2 + $0x194] sm:$0xf] %vm7795, %v7662
  %7898 = vst.msk [vmem:[#allocation2 + $0x198] sm:$0xf] %vm7795, %v7663
  %7899 = vst.msk [vmem:[#allocation2 + $0x19c] sm:$0xf] %vm7795, %v7664
  %7900 = vst.msk [vmem:[#allocation2 + $0x1a0] sm:$0xf] %vm7795, %v7665
  %7901 = vst.msk [vmem:[#allocation2 + $0x1a4] sm:$0xf] %vm7795, %v7666
  %7902 = vst.msk [vmem:[#allocation2 + $0x1a8] sm:$0xf] %vm7795, %v7667
  %7903 = vst.msk [vmem:[#allocation2 + $0x1ac] sm:$0xf] %vm7795, %v7668
  %7904 = vst.msk [vmem:[#allocation2 + $0x1b0] sm:$0xf] %vm7795, %v7669
  %7905 = vst.msk [vmem:[#allocation2 + $0x1b4] sm:$0xf] %vm7795, %v7670
  %7906 = vst.msk [vmem:[#allocation2 + $0x1b8] sm:$0xf] %vm7795, %v7671
  %7907 = vst.msk [vmem:[#allocation2 + $0x1bc] sm:$0xf] %vm7795, %v7672
  %7908 = vst.msk [vmem:[#allocation2 + $0x1c0] sm:$0xf] %vm7795, %v7673
  %7909 = vst.msk [vmem:[#allocation2 + $0x1c4] sm:$0xf] %vm7795, %v7674
  %7910 = vst.msk [vmem:[#allocation2 + $0x1c8] sm:$0xf] %vm7795, %v7675
  %7911 = vst.msk [vmem:[#allocation2 + $0x1cc] sm:$0xf] %vm7795, %v7676
  %vm7912 = vcmask 27648
  %vm7913 = vsmask.f32 3328
  %vm7914 = vmand %vm7912, %vm7913
  %v7915 = vld [vmem:[#allocation2 + $0x1d0] sm:$0xf]
  %v7916 = vsel %vm7914, %v7677, %v7915
  %7917 = vst [vmem:[#allocation2 + $0x1d0] sm:$0xf] %v7916
  %v7918 = vld [vmem:[#allocation2] sm:$0xf]
  %v7919 = vld [vmem:[#allocation2 + $0x4] sm:$0xf]
  %v7920 = vld [vmem:[#allocation2 + $0x8] sm:$0xf]
  %v7921 = vld [vmem:[#allocation2 + $0xc] sm:$0xf]
  %v7922 = vld [vmem:[#allocation2 + $0x10] sm:$0xf]
  %v7923 = vld [vmem:[#allocation2 + $0x14] sm:$0xf]
  %v7924 = vld [vmem:[#allocation2 + $0x18] sm:$0xf]
  %v7925 = vld [vmem:[#allocation2 + $0x1c] sm:$0xf]
  %v7926 = vld [vmem:[#allocation2 + $0x20] sm:$0xf]
  %v7927 = vld [vmem:[#allocation2 + $0x24] sm:$0xf]
  %v7928 = vld [vmem:[#allocation2 + $0x28] sm:$0xf]
  %v7929 = vld [vmem:[#allocation2 + $0x2c] sm:$0xf]
  %v7930 = vld [vmem:[#allocation2 + $0x30] sm:$0xf]
  %v7931 = vld [vmem:[#allocation2 + $0x34] sm:$0xf]
  %v7932 = vld [vmem:[#allocation2 + $0x38] sm:$0xf]
  %v7933 = vld [vmem:[#allocation2 + $0x3c] sm:$0xf]
  %v7934 = vld [vmem:[#allocation2 + $0x40] sm:$0xf]
  %v7935 = vld [vmem:[#allocation2 + $0x44] sm:$0xf]
  %v7936 = vld [vmem:[#allocation2 + $0x48] sm:$0xf]
  %v7937 = vld [vmem:[#allocation2 + $0x4c] sm:$0xf]
  %v7938 = vld [vmem:[#allocation2 + $0x50] sm:$0xf]
  %v7939 = vld [vmem:[#allocation2 + $0x54] sm:$0xf]
  %v7940 = vld [vmem:[#allocation2 + $0x58] sm:$0xf]
  %v7941 = vld [vmem:[#allocation2 + $0x5c] sm:$0xf]
  %v7942 = vld [vmem:[#allocation2 + $0x60] sm:$0xf]
  %v7943 = vld [vmem:[#allocation2 + $0x64] sm:$0xf]
  %v7944 = vld [vmem:[#allocation2 + $0x68] sm:$0xf]
  %v7945 = vld [vmem:[#allocation2 + $0x6c] sm:$0xf]
  %v7946 = vld [vmem:[#allocation2 + $0x70] sm:$0xf]
  %v7947 = vld [vmem:[#allocation2 + $0x74] sm:$0xf]
  %v7948 = vld [vmem:[#allocation2 + $0x78] sm:$0xf]
  %v7949 = vld [vmem:[#allocation2 + $0x7c] sm:$0xf]
  %v7950 = vld [vmem:[#allocation2 + $0x80] sm:$0xf]
  %v7951 = vld [vmem:[#allocation2 + $0x84] sm:$0xf]
  %v7952 = vld [vmem:[#allocation2 + $0x88] sm:$0xf]
  %v7953 = vld [vmem:[#allocation2 + $0x8c] sm:$0xf]
  %v7954 = vld [vmem:[#allocation2 + $0x90] sm:$0xf]
  %v7955 = vld [vmem:[#allocation2 + $0x94] sm:$0xf]
  %v7956 = vld [vmem:[#allocation2 + $0x98] sm:$0xf]
  %v7957 = vld [vmem:[#allocation2 + $0x9c] sm:$0xf]
  %v7958 = vld [vmem:[#allocation2 + $0xa0] sm:$0xf]
  %v7959 = vld [vmem:[#allocation2 + $0xa4] sm:$0xf]
  %v7960 = vld [vmem:[#allocation2 + $0xa8] sm:$0xf]
  %v7961 = vld [vmem:[#allocation2 + $0xac] sm:$0xf]
  %v7962 = vld [vmem:[#allocation2 + $0xb0] sm:$0xf]
  %v7963 = vld [vmem:[#allocation2 + $0xb4] sm:$0xf]
  %v7964 = vld [vmem:[#allocation2 + $0xb8] sm:$0xf]
  %v7965 = vld [vmem:[#allocation2 + $0xbc] sm:$0xf]
  %v7966 = vld [vmem:[#allocation2 + $0xc0] sm:$0xf]
  %v7967 = vld [vmem:[#allocation2 + $0xc4] sm:$0xf]
  %v7968 = vld [vmem:[#allocation2 + $0xc8] sm:$0xf]
  %v7969 = vld [vmem:[#allocation2 + $0xcc] sm:$0xf]
  %v7970 = vld [vmem:[#allocation2 + $0xd0] sm:$0xf]
  %v7971 = vld [vmem:[#allocation2 + $0xd4] sm:$0xf]
  %v7972 = vld [vmem:[#allocation2 + $0xd8] sm:$0xf]
  %v7973 = vld [vmem:[#allocation2 + $0xdc] sm:$0xf]
  %v7974 = vld [vmem:[#allocation2 + $0xe0] sm:$0xf]
  %v7975 = vld [vmem:[#allocation2 + $0xe4] sm:$0xf]
  %v7976 = vld [vmem:[#allocation2 + $0xe8] sm:$0xf]
  %v7977 = vld [vmem:[#allocation2 + $0xec] sm:$0xf]
  %v7978 = vld [vmem:[#allocation2 + $0xf0] sm:$0xf]
  %v7979 = vld [vmem:[#allocation2 + $0xf4] sm:$0xf]
  %v7980 = vld [vmem:[#allocation2 + $0xf8] sm:$0xf]
  %v7981 = vld [vmem:[#allocation2 + $0xfc] sm:$0xf]
  %v7982 = vld [vmem:[#allocation2 + $0x100] sm:$0xf]
  %v7983 = vld [vmem:[#allocation2 + $0x104] sm:$0xf]
  %v7984 = vld [vmem:[#allocation2 + $0x108] sm:$0xf]
  %v7985 = vld [vmem:[#allocation2 + $0x10c] sm:$0xf]
  %v7986 = vld [vmem:[#allocation2 + $0x110] sm:$0xf]
  %v7987 = vld [vmem:[#allocation2 + $0x114] sm:$0xf]
  %v7988 = vld [vmem:[#allocation2 + $0x118] sm:$0xf]
  %v7989 = vld [vmem:[#allocation2 + $0x11c] sm:$0xf]
  %v7990 = vld [vmem:[#allocation2 + $0x120] sm:$0xf]
  %v7991 = vld [vmem:[#allocation2 + $0x124] sm:$0xf]
  %v7992 = vld [vmem:[#allocation2 + $0x128] sm:$0xf]
  %v7993 = vld [vmem:[#allocation2 + $0x12c] sm:$0xf]
  %v7994 = vld [vmem:[#allocation2 + $0x130] sm:$0xf]
  %v7995 = vld [vmem:[#allocation2 + $0x134] sm:$0xf]
  %v7996 = vld [vmem:[#allocation2 + $0x138] sm:$0xf]
  %v7997 = vld [vmem:[#allocation2 + $0x13c] sm:$0xf]
  %v7998 = vld [vmem:[#allocation2 + $0x140] sm:$0xf]
  %v7999 = vld [vmem:[#allocation2 + $0x144] sm:$0xf]
  %v8000 = vld [vmem:[#allocation2 + $0x148] sm:$0xf]
  %v8001 = vld [vmem:[#allocation2 + $0x14c] sm:$0xf]
  %v8002 = vld [vmem:[#allocation2 + $0x150] sm:$0xf]
  %v8003 = vld [vmem:[#allocation2 + $0x154] sm:$0xf]
  %v8004 = vld [vmem:[#allocation2 + $0x158] sm:$0xf]
  %v8005 = vld [vmem:[#allocation2 + $0x15c] sm:$0xf]
  %v8006 = vld [vmem:[#allocation2 + $0x160] sm:$0xf]
  %v8007 = vld [vmem:[#allocation2 + $0x164] sm:$0xf]
  %v8008 = vld [vmem:[#allocation2 + $0x168] sm:$0xf]
  %v8009 = vld [vmem:[#allocation2 + $0x16c] sm:$0xf]
  %v8010 = vld [vmem:[#allocation2 + $0x170] sm:$0xf]
  %v8011 = vld [vmem:[#allocation2 + $0x174] sm:$0xf]
  %v8012 = vld [vmem:[#allocation2 + $0x178] sm:$0xf]
  %v8013 = vld [vmem:[#allocation2 + $0x17c] sm:$0xf]
  %v8014 = vld [vmem:[#allocation2 + $0x180] sm:$0xf]
  %v8015 = vld [vmem:[#allocation2 + $0x184] sm:$0xf]
  %v8016 = vld [vmem:[#allocation2 + $0x188] sm:$0xf]
  %v8017 = vld [vmem:[#allocation2 + $0x18c] sm:$0xf]
  %v8018 = vld [vmem:[#allocation2 + $0x190] sm:$0xf]
  %v8019 = vld [vmem:[#allocation2 + $0x194] sm:$0xf]
  %v8020 = vld [vmem:[#allocation2 + $0x198] sm:$0xf]
  %v8021 = vld [vmem:[#allocation2 + $0x19c] sm:$0xf]
  %v8022 = vld [vmem:[#allocation2 + $0x1a0] sm:$0xf]
  %v8023 = vld [vmem:[#allocation2 + $0x1a4] sm:$0xf]
  %v8024 = vld [vmem:[#allocation2 + $0x1a8] sm:$0xf]
  %v8025 = vld [vmem:[#allocation2 + $0x1ac] sm:$0xf]
  %v8026 = vld [vmem:[#allocation2 + $0x1b0] sm:$0xf]
  %v8027 = vld [vmem:[#allocation2 + $0x1b4] sm:$0xf]
  %v8028 = vld [vmem:[#allocation2 + $0x1b8] sm:$0xf]
  %v8029 = vld [vmem:[#allocation2 + $0x1bc] sm:$0xf]
  %v8030 = vld [vmem:[#allocation2 + $0x1c0] sm:$0xf]
  %v8031 = vld [vmem:[#allocation2 + $0x1c4] sm:$0x7]
  %v8032 = vld [vmem:[#allocation2 + $0x1c4] sm:$0xf]
  %v8033 = vld [vmem:[#allocation2 + $0x1c8] sm:$0xf]
  %v8034 = vld [vmem:[#allocation2 + $0x1cc] sm:$0xf]
  %v8035 = vld [vmem:[#allocation2 + $0x1d0] sm:$0x7]
  %v8036 = vld [vmem:[#allocation2 + $0x1d0] sm:$0xf]
  %v8151 = vunpack.c.l.b16 %v7918
  %v8152 = vunpack.c.l.b16 %v7919
  %v8153 = vunpack.c.l.b16 %v7920
  %v8154 = vunpack.c.l.b16 %v7921
  %v8155 = vunpack.c.l.b16 %v7922
  %v8156 = vunpack.c.l.b16 %v7923
  %v8157 = vunpack.c.l.b16 %v7924
  %v8158 = vunpack.c.l.b16 %v7925
  %v8159 = vunpack.c.l.b16 %v7926
  %v8160 = vunpack.c.l.b16 %v7927
  %v8161 = vunpack.c.l.b16 %v7928
  %v8162 = vunpack.c.l.b16 %v7929
  %v8163 = vunpack.c.l.b16 %v7930
  %v8164 = vunpack.c.l.b16 %v7931
  %v8165 = vunpack.c.l.b16 %v7932
  %v8166 = vunpack.c.l.b16 %v7933
  %v8167 = vunpack.c.l.b16 %v7934
  %v8168 = vunpack.c.l.b16 %v7935
  %v8169 = vunpack.c.l.b16 %v7936
  %v8170 = vunpack.c.l.b16 %v7937
  %v8171 = vunpack.c.l.b16 %v7938
  %v8172 = vunpack.c.l.b16 %v7939
  %v8173 = vunpack.c.l.b16 %v7940
  %v8174 = vunpack.c.l.b16 %v7941
  %v8175 = vunpack.c.l.b16 %v7942
  %v8176 = vunpack.c.l.b16 %v7943
  %v8177 = vunpack.c.l.b16 %v7944
  %v8178 = vunpack.c.l.b16 %v7945
  %v8179 = vunpack.c.l.b16 %v7946
  %v8180 = vunpack.c.l.b16 %v7947
  %v8181 = vunpack.c.l.b16 %v7948
  %v8182 = vunpack.c.l.b16 %v7949
  %v8183 = vunpack.c.l.b16 %v7950
  %v8184 = vunpack.c.l.b16 %v7951
  %v8185 = vunpack.c.l.b16 %v7952
  %v8186 = vunpack.c.l.b16 %v7953
  %v8187 = vunpack.c.l.b16 %v7954
  %v8188 = vunpack.c.l.b16 %v7955
  %v8189 = vunpack.c.l.b16 %v7956
  %v8190 = vunpack.c.l.b16 %v7957
  %v8191 = vunpack.c.l.b16 %v7958
  %v8192 = vunpack.c.l.b16 %v7959
  %v8193 = vunpack.c.l.b16 %v7960
  %v8194 = vunpack.c.l.b16 %v7961
  %v8195 = vunpack.c.l.b16 %v7962
  %v8196 = vunpack.c.l.b16 %v7963
  %v8197 = vunpack.c.l.b16 %v7964
  %v8198 = vunpack.c.l.b16 %v7965
  %v8199 = vunpack.c.l.b16 %v7966
  %v8200 = vunpack.c.l.b16 %v7967
  %v8201 = vunpack.c.l.b16 %v7968
  %v8202 = vunpack.c.l.b16 %v7969
  %v8203 = vunpack.c.l.b16 %v7970
  %v8204 = vunpack.c.l.b16 %v7971
  %v8205 = vunpack.c.l.b16 %v7972
  %v8206 = vunpack.c.l.b16 %v7973
  %v8207 = vunpack.c.l.b16 %v7974
  %v8208 = vunpack.c.l.b16 %v7975
  %v8209 = vunpack.c.l.b16 %v7976
  %v8210 = vunpack.c.l.b16 %v7977
  %v8211 = vunpack.c.l.b16 %v7978
  %v8212 = vunpack.c.l.b16 %v7979
  %v8213 = vunpack.c.l.b16 %v7980
  %v8214 = vunpack.c.l.b16 %v7981
  %v8215 = vunpack.c.l.b16 %v7982
  %v8216 = vunpack.c.l.b16 %v7983
  %v8217 = vunpack.c.l.b16 %v7984
  %v8218 = vunpack.c.l.b16 %v7985
  %v8219 = vunpack.c.l.b16 %v7986
  %v8220 = vunpack.c.l.b16 %v7987
  %v8221 = vunpack.c.l.b16 %v7988
  %v8222 = vunpack.c.l.b16 %v7989
  %v8223 = vunpack.c.l.b16 %v7990
  %v8224 = vunpack.c.l.b16 %v7991
  %v8225 = vunpack.c.l.b16 %v7992
  %v8226 = vunpack.c.l.b16 %v7993
  %v8227 = vunpack.c.l.b16 %v7994
  %v8228 = vunpack.c.l.b16 %v7995
  %v8229 = vunpack.c.l.b16 %v7996
  %v8230 = vunpack.c.l.b16 %v7997
  %v8231 = vunpack.c.l.b16 %v7998
  %v8232 = vunpack.c.l.b16 %v7999
  %v8233 = vunpack.c.l.b16 %v8000
  %v8234 = vunpack.c.l.b16 %v8001
  %v8235 = vunpack.c.l.b16 %v8002
  %v8236 = vunpack.c.l.b16 %v8003
  %v8237 = vunpack.c.l.b16 %v8004
  %v8238 = vunpack.c.l.b16 %v8005
  %v8239 = vunpack.c.l.b16 %v8006
  %v8240 = vunpack.c.l.b16 %v8007
  %v8241 = vunpack.c.l.b16 %v8008
  %v8242 = vunpack.c.l.b16 %v8009
  %v8243 = vunpack.c.l.b16 %v8010
  %v8244 = vunpack.c.l.b16 %v8011
  %v8245 = vunpack.c.l.b16 %v8012
  %v8246 = vunpack.c.l.b16 %v8013
  %v8247 = vunpack.c.l.b16 %v8014
  %v8248 = vunpack.c.l.b16 %v8015
  %v8249 = vunpack.c.l.b16 %v8016
  %v8250 = vunpack.c.l.b16 %v8017
  %v8251 = vunpack.c.l.b16 %v8018
  %v8252 = vunpack.c.l.b16 %v8019
  %v8253 = vunpack.c.l.b16 %v8020
  %v8254 = vunpack.c.l.b16 %v8021
  %v8255 = vunpack.c.l.b16 %v8022
  %v8256 = vunpack.c.l.b16 %v8023
  %v8257 = vunpack.c.l.b16 %v8024
  %v8258 = vunpack.c.l.b16 %v8025
  %v8259 = vunpack.c.l.b16 %v8026
  %v8260 = vunpack.c.l.b16 %v8027
  %v8261 = vunpack.c.l.b16 %v8028
  %v8262 = vunpack.c.l.b16 %v8029
  %v8263 = vunpack.c.l.b16 %v8030
  %v8264 = vunpack.c.l.b16 %v8031
  %v8265 = vpack.c.b16 %v8152, %v8151
  %v8266 = vpack.c.b16 %v8154, %v8153
  %v8267 = vpack.c.b16 %v8156, %v8155
  %v8268 = vpack.c.b16 %v8158, %v8157
  %v8269 = vpack.c.b16 %v8160, %v8159
  %v8270 = vpack.c.b16 %v8162, %v8161
  %v8271 = vpack.c.b16 %v8164, %v8163
  %v8272 = vpack.c.b16 %v8166, %v8165
  %v8273 = vpack.c.b16 %v8168, %v8167
  %v8274 = vpack.c.b16 %v8170, %v8169
  %v8275 = vpack.c.b16 %v8172, %v8171
  %v8276 = vpack.c.b16 %v8174, %v8173
  %v8277 = vpack.c.b16 %v8176, %v8175
  %v8278 = vpack.c.b16 %v8178, %v8177
  %v8279 = vpack.c.b16 %v8180, %v8179
  %v8280 = vpack.c.b16 %v8182, %v8181
  %v8281 = vpack.c.b16 %v8184, %v8183
  %v8282 = vpack.c.b16 %v8186, %v8185
  %v8283 = vpack.c.b16 %v8188, %v8187
  %v8284 = vpack.c.b16 %v8190, %v8189
  %v8285 = vpack.c.b16 %v8192, %v8191
  %v8286 = vpack.c.b16 %v8194, %v8193
  %v8287 = vpack.c.b16 %v8196, %v8195
  %v8288 = vpack.c.b16 %v8198, %v8197
  %v8289 = vpack.c.b16 %v8200, %v8199
  %v8290 = vpack.c.b16 %v8202, %v8201
  %v8291 = vpack.c.b16 %v8204, %v8203
  %v8292 = vpack.c.b16 %v8206, %v8205
  %v8293 = vpack.c.b16 %v8208, %v8207
  %v8294 = vpack.c.b16 %v8210, %v8209
  %v8295 = vpack.c.b16 %v8212, %v8211
  %v8296 = vpack.c.b16 %v8214, %v8213
  %v8297 = vpack.c.b16 %v8216, %v8215
  %v8298 = vpack.c.b16 %v8218, %v8217
  %v8299 = vpack.c.b16 %v8220, %v8219
  %v8300 = vpack.c.b16 %v8222, %v8221
  %v8301 = vpack.c.b16 %v8224, %v8223
  %v8302 = vpack.c.b16 %v8226, %v8225
  %v8303 = vpack.c.b16 %v8228, %v8227
  %v8304 = vpack.c.b16 %v8230, %v8229
  %v8305 = vpack.c.b16 %v8232, %v8231
  %v8306 = vpack.c.b16 %v8234, %v8233
  %v8307 = vpack.c.b16 %v8236, %v8235
  %v8308 = vpack.c.b16 %v8238, %v8237
  %v8309 = vpack.c.b16 %v8240, %v8239
  %v8310 = vpack.c.b16 %v8242, %v8241
  %v8311 = vpack.c.b16 %v8244, %v8243
  %v8312 = vpack.c.b16 %v8246, %v8245
  %v8313 = vpack.c.b16 %v8248, %v8247
  %v8314 = vpack.c.b16 %v8250, %v8249
  %v8315 = vpack.c.b16 %v8252, %v8251
  %v8316 = vpack.c.b16 %v8254, %v8253
  %v8317 = vpack.c.b16 %v8256, %v8255
  %v8318 = vpack.c.b16 %v8258, %v8257
  %v8319 = vpack.c.b16 %v8260, %v8259
  %v8320 = vpack.c.b16 %v8262, %v8261
  %v8321 = vpack.c.b16 %v8264, %v8263
  %v8323 = vunpack.c.l.b16 %v8032
  %v8324 = vpack.c.b16 %v8323, %v8263
  %v8326 = vshrl.u32 %v8265, 16
  %v8328 = vshll.u32 %v8265, 16
  %v8330 = vrot.slane %v8328, 1
  %v8331 = vor.u32 %v8326, %v8330
  %v8333 = vshll.u32 %v8266, 16
  %v8335 = vrot.slane %v8333, 1
  %v8336 = vsel %vm986, %v8331, %v8335
  %v8337 = vshrl.u32 %v8266, 16
  %v8339 = vor.u32 %v8337, %v8335
  %v8341 = vshll.u32 %v8267, 16
  %v8343 = vrot.slane %v8341, 1
  %v8344 = vsel %vm986, %v8339, %v8343
  %v8345 = vshrl.u32 %v8267, 16
  %v8347 = vor.u32 %v8345, %v8343
  %v8349 = vshll.u32 %v8268, 16
  %v8351 = vrot.slane %v8349, 1
  %v8352 = vsel %vm986, %v8347, %v8351
  %v8353 = vshrl.u32 %v8268, 16
  %v8355 = vor.u32 %v8353, %v8351
  %v8357 = vshll.u32 %v8269, 16
  %v8359 = vrot.slane %v8357, 1
  %v8360 = vsel %vm986, %v8355, %v8359
  %v8361 = vshrl.u32 %v8269, 16
  %v8363 = vor.u32 %v8361, %v8359
  %v8365 = vshll.u32 %v8270, 16
  %v8367 = vrot.slane %v8365, 1
  %v8368 = vsel %vm986, %v8363, %v8367
  %v8369 = vshrl.u32 %v8270, 16
  %v8371 = vor.u32 %v8369, %v8367
  %v8373 = vshll.u32 %v8271, 16
  %v8375 = vrot.slane %v8373, 1
  %v8376 = vsel %vm986, %v8371, %v8375
  %v8377 = vshrl.u32 %v8271, 16
  %v8379 = vor.u32 %v8377, %v8375
  %v8381 = vshll.u32 %v8272, 16
  %v8383 = vrot.slane %v8381, 1
  %v8384 = vsel %vm986, %v8379, %v8383
  %v8385 = vshrl.u32 %v8272, 16
  %v8387 = vor.u32 %v8385, %v8383
  %v8389 = vshll.u32 %v8273, 16
  %v8391 = vrot.slane %v8389, 1
  %v8392 = vsel %vm986, %v8387, %v8391
  %v8393 = vshrl.u32 %v8273, 16
  %v8395 = vor.u32 %v8393, %v8391
  %v8397 = vshll.u32 %v8274, 16
  %v8399 = vrot.slane %v8397, 1
  %v8400 = vsel %vm986, %v8395, %v8399
  %v8401 = vshrl.u32 %v8274, 16
  %v8403 = vor.u32 %v8401, %v8399
  %v8405 = vshll.u32 %v8275, 16
  %v8407 = vrot.slane %v8405, 1
  %v8408 = vsel %vm986, %v8403, %v8407
  %v8409 = vshrl.u32 %v8275, 16
  %v8411 = vor.u32 %v8409, %v8407
  %v8413 = vshll.u32 %v8276, 16
  %v8415 = vrot.slane %v8413, 1
  %v8416 = vsel %vm986, %v8411, %v8415
  %v8417 = vshrl.u32 %v8276, 16
  %v8419 = vor.u32 %v8417, %v8415
  %v8421 = vshll.u32 %v8277, 16
  %v8423 = vrot.slane %v8421, 1
  %v8424 = vsel %vm986, %v8419, %v8423
  %v8425 = vshrl.u32 %v8277, 16
  %v8427 = vor.u32 %v8425, %v8423
  %v8429 = vshll.u32 %v8278, 16
  %v8431 = vrot.slane %v8429, 1
  %v8432 = vsel %vm986, %v8427, %v8431
  %v8433 = vshrl.u32 %v8278, 16
  %v8435 = vor.u32 %v8433, %v8431
  %v8437 = vshll.u32 %v8279, 16
  %v8439 = vrot.slane %v8437, 1
  %v8440 = vsel %vm986, %v8435, %v8439
  %v8441 = vshrl.u32 %v8279, 16
  %v8443 = vor.u32 %v8441, %v8439
  %v8445 = vshll.u32 %v8280, 16
  %v8447 = vrot.slane %v8445, 1
  %v8448 = vsel %vm986, %v8443, %v8447
  %v8449 = vshrl.u32 %v8280, 16
  %v8451 = vor.u32 %v8449, %v8447
  %v8453 = vshll.u32 %v8281, 16
  %v8455 = vrot.slane %v8453, 1
  %v8456 = vsel %vm986, %v8451, %v8455
  %v8457 = vshrl.u32 %v8281, 16
  %v8459 = vor.u32 %v8457, %v8455
  %v8461 = vshll.u32 %v8282, 16
  %v8463 = vrot.slane %v8461, 1
  %v8464 = vsel %vm986, %v8459, %v8463
  %v8465 = vshrl.u32 %v8282, 16
  %v8467 = vor.u32 %v8465, %v8463
  %v8469 = vshll.u32 %v8283, 16
  %v8471 = vrot.slane %v8469, 1
  %v8472 = vsel %vm986, %v8467, %v8471
  %v8473 = vshrl.u32 %v8283, 16
  %v8475 = vor.u32 %v8473, %v8471
  %v8477 = vshll.u32 %v8284, 16
  %v8479 = vrot.slane %v8477, 1
  %v8480 = vsel %vm986, %v8475, %v8479
  %v8481 = vshrl.u32 %v8284, 16
  %v8483 = vor.u32 %v8481, %v8479
  %v8485 = vshll.u32 %v8285, 16
  %v8487 = vrot.slane %v8485, 1
  %v8488 = vsel %vm986, %v8483, %v8487
  %v8489 = vshrl.u32 %v8285, 16
  %v8491 = vor.u32 %v8489, %v8487
  %v8493 = vshll.u32 %v8286, 16
  %v8495 = vrot.slane %v8493, 1
  %v8496 = vsel %vm986, %v8491, %v8495
  %v8497 = vshrl.u32 %v8286, 16
  %v8499 = vor.u32 %v8497, %v8495
  %v8501 = vshll.u32 %v8287, 16
  %v8503 = vrot.slane %v8501, 1
  %v8504 = vsel %vm986, %v8499, %v8503
  %v8505 = vshrl.u32 %v8287, 16
  %v8507 = vor.u32 %v8505, %v8503
  %v8509 = vshll.u32 %v8288, 16
  %v8511 = vrot.slane %v8509, 1
  %v8512 = vsel %vm986, %v8507, %v8511
  %v8513 = vshrl.u32 %v8288, 16
  %v8515 = vor.u32 %v8513, %v8511
  %v8517 = vshll.u32 %v8289, 16
  %v8519 = vrot.slane %v8517, 1
  %v8520 = vsel %vm986, %v8515, %v8519
  %v8521 = vshrl.u32 %v8289, 16
  %v8523 = vor.u32 %v8521, %v8519
  %v8525 = vshll.u32 %v8290, 16
  %v8527 = vrot.slane %v8525, 1
  %v8528 = vsel %vm986, %v8523, %v8527
  %v8529 = vshrl.u32 %v8290, 16
  %v8531 = vor.u32 %v8529, %v8527
  %v8533 = vshll.u32 %v8291, 16
  %v8535 = vrot.slane %v8533, 1
  %v8536 = vsel %vm986, %v8531, %v8535
  %v8537 = vshrl.u32 %v8291, 16
  %v8539 = vor.u32 %v8537, %v8535
  %v8541 = vshll.u32 %v8292, 16
  %v8543 = vrot.slane %v8541, 1
  %v8544 = vsel %vm986, %v8539, %v8543
  %v8545 = vshrl.u32 %v8292, 16
  %v8547 = vor.u32 %v8545, %v8543
  %v8549 = vshll.u32 %v8293, 16
  %v8551 = vrot.slane %v8549, 1
  %v8552 = vsel %vm986, %v8547, %v8551
  %v8553 = vshrl.u32 %v8293, 16
  %v8555 = vor.u32 %v8553, %v8551
  %v8557 = vshll.u32 %v8294, 16
  %v8559 = vrot.slane %v8557, 1
  %v8560 = vsel %vm986, %v8555, %v8559
  %v8561 = vshrl.u32 %v8294, 16
  %v8563 = vor.u32 %v8561, %v8559
  %v8565 = vshll.u32 %v8295, 16
  %v8567 = vrot.slane %v8565, 1
  %v8568 = vsel %vm986, %v8563, %v8567
  %v8569 = vshrl.u32 %v8295, 16
  %v8571 = vor.u32 %v8569, %v8567
  %v8573 = vshll.u32 %v8296, 16
  %v8575 = vrot.slane %v8573, 1
  %v8576 = vsel %vm986, %v8571, %v8575
  %v8577 = vshrl.u32 %v8296, 16
  %v8579 = vor.u32 %v8577, %v8575
  %v8581 = vshll.u32 %v8297, 16
  %v8583 = vrot.slane %v8581, 1
  %v8584 = vsel %vm986, %v8579, %v8583
  %v8585 = vshrl.u32 %v8297, 16
  %v8587 = vor.u32 %v8585, %v8583
  %v8589 = vshll.u32 %v8298, 16
  %v8591 = vrot.slane %v8589, 1
  %v8592 = vsel %vm986, %v8587, %v8591
  %v8593 = vshrl.u32 %v8298, 16
  %v8595 = vor.u32 %v8593, %v8591
  %v8597 = vshll.u32 %v8299, 16
  %v8599 = vrot.slane %v8597, 1
  %v8600 = vsel %vm986, %v8595, %v8599
  %v8601 = vshrl.u32 %v8299, 16
  %v8603 = vor.u32 %v8601, %v8599
  %v8605 = vshll.u32 %v8300, 16
  %v8607 = vrot.slane %v8605, 1
  %v8608 = vsel %vm986, %v8603, %v8607
  %v8609 = vshrl.u32 %v8300, 16
  %v8611 = vor.u32 %v8609, %v8607
  %v8613 = vshll.u32 %v8301, 16
  %v8615 = vrot.slane %v8613, 1
  %v8616 = vsel %vm986, %v8611, %v8615
  %v8617 = vshrl.u32 %v8301, 16
  %v8619 = vor.u32 %v8617, %v8615
  %v8621 = vshll.u32 %v8302, 16
  %v8623 = vrot.slane %v8621, 1
  %v8624 = vsel %vm986, %v8619, %v8623
  %v8625 = vshrl.u32 %v8302, 16
  %v8627 = vor.u32 %v8625, %v8623
  %v8629 = vshll.u32 %v8303, 16
  %v8631 = vrot.slane %v8629, 1
  %v8632 = vsel %vm986, %v8627, %v8631
  %v8633 = vshrl.u32 %v8303, 16
  %v8635 = vor.u32 %v8633, %v8631
  %v8637 = vshll.u32 %v8304, 16
  %v8639 = vrot.slane %v8637, 1
  %v8640 = vsel %vm986, %v8635, %v8639
  %v8641 = vshrl.u32 %v8304, 16
  %v8643 = vor.u32 %v8641, %v8639
  %v8645 = vshll.u32 %v8305, 16
  %v8647 = vrot.slane %v8645, 1
  %v8648 = vsel %vm986, %v8643, %v8647
  %v8649 = vshrl.u32 %v8305, 16
  %v8651 = vor.u32 %v8649, %v8647
  %v8653 = vshll.u32 %v8306, 16
  %v8655 = vrot.slane %v8653, 1
  %v8656 = vsel %vm986, %v8651, %v8655
  %v8657 = vshrl.u32 %v8306, 16
  %v8659 = vor.u32 %v8657, %v8655
  %v8661 = vshll.u32 %v8307, 16
  %v8663 = vrot.slane %v8661, 1
  %v8664 = vsel %vm986, %v8659, %v8663
  %v8665 = vshrl.u32 %v8307, 16
  %v8667 = vor.u32 %v8665, %v8663
  %v8669 = vshll.u32 %v8308, 16
  %v8671 = vrot.slane %v8669, 1
  %v8672 = vsel %vm986, %v8667, %v8671
  %v8673 = vshrl.u32 %v8308, 16
  %v8675 = vor.u32 %v8673, %v8671
  %v8677 = vshll.u32 %v8309, 16
  %v8679 = vrot.slane %v8677, 1
  %v8680 = vsel %vm986, %v8675, %v8679
  %v8681 = vshrl.u32 %v8309, 16
  %v8683 = vor.u32 %v8681, %v8679
  %v8685 = vshll.u32 %v8310, 16
  %v8687 = vrot.slane %v8685, 1
  %v8688 = vsel %vm986, %v8683, %v8687
  %v8689 = vshrl.u32 %v8310, 16
  %v8691 = vor.u32 %v8689, %v8687
  %v8693 = vshll.u32 %v8311, 16
  %v8695 = vrot.slane %v8693, 1
  %v8696 = vsel %vm986, %v8691, %v8695
  %v8697 = vshrl.u32 %v8311, 16
  %v8699 = vor.u32 %v8697, %v8695
  %v8701 = vshll.u32 %v8312, 16
  %v8703 = vrot.slane %v8701, 1
  %v8704 = vsel %vm986, %v8699, %v8703
  %v8705 = vshrl.u32 %v8312, 16
  %v8707 = vor.u32 %v8705, %v8703
  %v8709 = vshll.u32 %v8313, 16
  %v8711 = vrot.slane %v8709, 1
  %v8712 = vsel %vm986, %v8707, %v8711
  %v8713 = vshrl.u32 %v8313, 16
  %v8715 = vor.u32 %v8713, %v8711
  %v8717 = vshll.u32 %v8314, 16
  %v8719 = vrot.slane %v8717, 1
  %v8720 = vsel %vm986, %v8715, %v8719
  %v8721 = vshrl.u32 %v8314, 16
  %v8723 = vor.u32 %v8721, %v8719
  %v8725 = vshll.u32 %v8315, 16
  %v8727 = vrot.slane %v8725, 1
  %v8728 = vsel %vm986, %v8723, %v8727
  %v8729 = vshrl.u32 %v8315, 16
  %v8731 = vor.u32 %v8729, %v8727
  %v8733 = vshll.u32 %v8316, 16
  %v8735 = vrot.slane %v8733, 1
  %v8736 = vsel %vm986, %v8731, %v8735
  %v8737 = vshrl.u32 %v8316, 16
  %v8739 = vor.u32 %v8737, %v8735
  %v8741 = vshll.u32 %v8317, 16
  %v8743 = vrot.slane %v8741, 1
  %v8744 = vsel %vm986, %v8739, %v8743
  %v8745 = vshrl.u32 %v8317, 16
  %v8747 = vor.u32 %v8745, %v8743
  %v8749 = vshll.u32 %v8318, 16
  %v8751 = vrot.slane %v8749, 1
  %v8752 = vsel %vm986, %v8747, %v8751
  %v8753 = vshrl.u32 %v8318, 16
  %v8755 = vor.u32 %v8753, %v8751
  %v8757 = vshll.u32 %v8319, 16
  %v8759 = vrot.slane %v8757, 1
  %v8760 = vsel %vm986, %v8755, %v8759
  %v8761 = vshrl.u32 %v8319, 16
  %v8763 = vor.u32 %v8761, %v8759
  %v8765 = vshll.u32 %v8320, 16
  %v8767 = vrot.slane %v8765, 1
  %v8768 = vsel %vm986, %v8763, %v8767
  %v8769 = vshrl.u32 %v8320, 16
  %v8771 = vor.u32 %v8769, %v8767
  %v8773 = vshll.u32 %v8324, 16
  %v8775 = vrot.slane %v8773, 1
  %v8776 = vsel %vm986, %v8771, %v8775
  %v8777 = vshrl.u32 %v8324, 16
  %v8779 = vor.u32 %v8777, %v8775
  %8780 = vrot.lane.b32.xlu0 %v8336, 4
  %v8781 = vpop.permute.xlu0 %8780
  %8782 = vrot.lane.b32.xlu0 %v8344, 4
  %v8783 = vpop.permute.xlu0 %8782
  %8784 = vrot.lane.b32.xlu0 %v8352, 4
  %v8785 = vpop.permute.xlu0 %8784
  %8786 = vrot.lane.b32.xlu0 %v8360, 4
  %v8787 = vpop.permute.xlu0 %8786
  %8788 = vrot.lane.b32.xlu0 %v8368, 4
  %v8789 = vpop.permute.xlu0 %8788
  %8790 = vrot.lane.b32.xlu0 %v8376, 4
  %v8791 = vpop.permute.xlu0 %8790
  %8792 = vrot.lane.b32.xlu0 %v8384, 4
  %v8793 = vpop.permute.xlu0 %8792
  %8794 = vrot.lane.b32.xlu0 %v8392, 4
  %v8795 = vpop.permute.xlu0 %8794
  %8796 = vrot.lane.b32.xlu0 %v8400, 4
  %v8797 = vpop.permute.xlu0 %8796
  %8798 = vrot.lane.b32.xlu0 %v8408, 4
  %v8799 = vpop.permute.xlu0 %8798
  %8800 = vrot.lane.b32.xlu0 %v8416, 4
  %v8801 = vpop.permute.xlu0 %8800
  %8802 = vrot.lane.b32.xlu0 %v8424, 4
  %v8803 = vpop.permute.xlu0 %8802
  %8804 = vrot.lane.b32.xlu0 %v8432, 4
  %v8805 = vpop.permute.xlu0 %8804
  %8806 = vrot.lane.b32.xlu0 %v8440, 4
  %v8807 = vpop.permute.xlu0 %8806
  %8808 = vrot.lane.b32.xlu0 %v8448, 4
  %v8809 = vpop.permute.xlu0 %8808
  %8810 = vrot.lane.b32.xlu0 %v8456, 4
  %v8811 = vpop.permute.xlu0 %8810
  %8812 = vrot.lane.b32.xlu0 %v8464, 4
  %v8813 = vpop.permute.xlu0 %8812
  %8814 = vrot.lane.b32.xlu0 %v8472, 4
  %v8815 = vpop.permute.xlu0 %8814
  %8816 = vrot.lane.b32.xlu0 %v8480, 4
  %v8817 = vpop.permute.xlu0 %8816
  %8818 = vrot.lane.b32.xlu0 %v8488, 4
  %v8819 = vpop.permute.xlu0 %8818
  %8820 = vrot.lane.b32.xlu0 %v8496, 4
  %v8821 = vpop.permute.xlu0 %8820
  %8822 = vrot.lane.b32.xlu0 %v8504, 4
  %v8823 = vpop.permute.xlu0 %8822
  %8824 = vrot.lane.b32.xlu0 %v8512, 4
  %v8825 = vpop.permute.xlu0 %8824
  %8826 = vrot.lane.b32.xlu0 %v8520, 4
  %v8827 = vpop.permute.xlu0 %8826
  %8828 = vrot.lane.b32.xlu0 %v8528, 4
  %v8829 = vpop.permute.xlu0 %8828
  %8830 = vrot.lane.b32.xlu0 %v8536, 4
  %v8831 = vpop.permute.xlu0 %8830
  %8832 = vrot.lane.b32.xlu0 %v8544, 4
  %v8833 = vpop.permute.xlu0 %8832
  %8834 = vrot.lane.b32.xlu0 %v8552, 4
  %v8835 = vpop.permute.xlu0 %8834
  %8836 = vrot.lane.b32.xlu0 %v8560, 4
  %v8837 = vpop.permute.xlu0 %8836
  %8838 = vrot.lane.b32.xlu0 %v8568, 4
  %v8839 = vpop.permute.xlu0 %8838
  %8840 = vrot.lane.b32.xlu0 %v8576, 4
  %v8841 = vpop.permute.xlu0 %8840
  %8842 = vrot.lane.b32.xlu0 %v8584, 4
  %v8843 = vpop.permute.xlu0 %8842
  %8844 = vrot.lane.b32.xlu0 %v8592, 4
  %v8845 = vpop.permute.xlu0 %8844
  %8846 = vrot.lane.b32.xlu0 %v8600, 4
  %v8847 = vpop.permute.xlu0 %8846
  %8848 = vrot.lane.b32.xlu0 %v8608, 4
  %v8849 = vpop.permute.xlu0 %8848
  %8850 = vrot.lane.b32.xlu0 %v8616, 4
  %v8851 = vpop.permute.xlu0 %8850
  %8852 = vrot.lane.b32.xlu0 %v8624, 4
  %v8853 = vpop.permute.xlu0 %8852
  %8854 = vrot.lane.b32.xlu0 %v8632, 4
  %v8855 = vpop.permute.xlu0 %8854
  %8856 = vrot.lane.b32.xlu0 %v8640, 4
  %v8857 = vpop.permute.xlu0 %8856
  %8858 = vrot.lane.b32.xlu0 %v8648, 4
  %v8859 = vpop.permute.xlu0 %8858
  %8860 = vrot.lane.b32.xlu0 %v8656, 4
  %v8861 = vpop.permute.xlu0 %8860
  %8862 = vrot.lane.b32.xlu0 %v8664, 4
  %v8863 = vpop.permute.xlu0 %8862
  %8864 = vrot.lane.b32.xlu0 %v8672, 4
  %v8865 = vpop.permute.xlu0 %8864
  %8866 = vrot.lane.b32.xlu0 %v8680, 4
  %v8867 = vpop.permute.xlu0 %8866
  %8868 = vrot.lane.b32.xlu0 %v8688, 4
  %v8869 = vpop.permute.xlu0 %8868
  %8870 = vrot.lane.b32.xlu0 %v8696, 4
  %v8871 = vpop.permute.xlu0 %8870
  %8872 = vrot.lane.b32.xlu0 %v8704, 4
  %v8873 = vpop.permute.xlu0 %8872
  %8874 = vrot.lane.b32.xlu0 %v8712, 4
  %v8875 = vpop.permute.xlu0 %8874
  %8876 = vrot.lane.b32.xlu0 %v8720, 4
  %v8877 = vpop.permute.xlu0 %8876
  %8878 = vrot.lane.b32.xlu0 %v8728, 4
  %v8879 = vpop.permute.xlu0 %8878
  %8880 = vrot.lane.b32.xlu0 %v8736, 4
  %v8881 = vpop.permute.xlu0 %8880
  %8882 = vrot.lane.b32.xlu0 %v8744, 4
  %v8883 = vpop.permute.xlu0 %8882
  %8884 = vrot.lane.b32.xlu0 %v8752, 4
  %v8885 = vpop.permute.xlu0 %8884
  %8886 = vrot.lane.b32.xlu0 %v8760, 4
  %v8887 = vpop.permute.xlu0 %8886
  %8888 = vrot.lane.b32.xlu0 %v8768, 4
  %v8889 = vpop.permute.xlu0 %8888
  %8890 = vrot.lane.b32.xlu0 %v8776, 4
  %v8891 = vpop.permute.xlu0 %8890
  %8892 = vrot.lane.b32.xlu0 %v8779, 4
  %v8893 = vpop.permute.xlu0 %8892
  %v8897 = vunpack.c.l.b16 %v8033
  %v8898 = vunpack.c.l.b16 %v8034
  %v8899 = vunpack.c.l.b16 %v8035
  %v8900 = vpack.c.b16 %v8155, %v8154
  %v8901 = vpack.c.b16 %v8157, %v8156
  %v8902 = vpack.c.b16 %v8159, %v8158
  %v8903 = vpack.c.b16 %v8161, %v8160
  %v8904 = vpack.c.b16 %v8163, %v8162
  %v8905 = vpack.c.b16 %v8165, %v8164
  %v8906 = vpack.c.b16 %v8167, %v8166
  %v8907 = vpack.c.b16 %v8169, %v8168
  %v8908 = vpack.c.b16 %v8171, %v8170
  %v8909 = vpack.c.b16 %v8173, %v8172
  %v8910 = vpack.c.b16 %v8175, %v8174
  %v8911 = vpack.c.b16 %v8177, %v8176
  %v8912 = vpack.c.b16 %v8179, %v8178
  %v8913 = vpack.c.b16 %v8181, %v8180
  %v8914 = vpack.c.b16 %v8183, %v8182
  %v8915 = vpack.c.b16 %v8185, %v8184
  %v8916 = vpack.c.b16 %v8187, %v8186
  %v8917 = vpack.c.b16 %v8189, %v8188
  %v8918 = vpack.c.b16 %v8191, %v8190
  %v8919 = vpack.c.b16 %v8193, %v8192
  %v8920 = vpack.c.b16 %v8195, %v8194
  %v8921 = vpack.c.b16 %v8197, %v8196
  %v8922 = vpack.c.b16 %v8199, %v8198
  %v8923 = vpack.c.b16 %v8201, %v8200
  %v8924 = vpack.c.b16 %v8203, %v8202
  %v8925 = vpack.c.b16 %v8205, %v8204
  %v8926 = vpack.c.b16 %v8207, %v8206
  %v8927 = vpack.c.b16 %v8209, %v8208
  %v8928 = vpack.c.b16 %v8211, %v8210
  %v8929 = vpack.c.b16 %v8213, %v8212
  %v8930 = vpack.c.b16 %v8215, %v8214
  %v8931 = vpack.c.b16 %v8217, %v8216
  %v8932 = vpack.c.b16 %v8219, %v8218
  %v8933 = vpack.c.b16 %v8221, %v8220
  %v8934 = vpack.c.b16 %v8223, %v8222
  %v8935 = vpack.c.b16 %v8225, %v8224
  %v8936 = vpack.c.b16 %v8227, %v8226
  %v8937 = vpack.c.b16 %v8229, %v8228
  %v8938 = vpack.c.b16 %v8231, %v8230
  %v8939 = vpack.c.b16 %v8233, %v8232
  %v8940 = vpack.c.b16 %v8235, %v8234
  %v8941 = vpack.c.b16 %v8237, %v8236
  %v8942 = vpack.c.b16 %v8239, %v8238
  %v8943 = vpack.c.b16 %v8241, %v8240
  %v8944 = vpack.c.b16 %v8243, %v8242
  %v8945 = vpack.c.b16 %v8245, %v8244
  %v8946 = vpack.c.b16 %v8247, %v8246
  %v8947 = vpack.c.b16 %v8249, %v8248
  %v8948 = vpack.c.b16 %v8251, %v8250
  %v8949 = vpack.c.b16 %v8253, %v8252
  %v8950 = vpack.c.b16 %v8255, %v8254
  %v8951 = vpack.c.b16 %v8257, %v8256
  %v8952 = vpack.c.b16 %v8259, %v8258
  %v8953 = vpack.c.b16 %v8261, %v8260
  %v8954 = vpack.c.b16 %v8263, %v8262
  %v8955 = vpack.c.b16 %v8897, %v8323
  %v8956 = vpack.c.b16 %v8899, %v8898
  %8957 = vrot.lane.b32.xlu0 %v8900, 8
  %v8958 = vpop.permute.xlu0 %8957
  %8959 = vrot.lane.b32.xlu0 %v8901, 8
  %v8960 = vpop.permute.xlu0 %8959
  %8961 = vrot.lane.b32.xlu0 %v8902, 8
  %v8962 = vpop.permute.xlu0 %8961
  %8963 = vrot.lane.b32.xlu0 %v8903, 8
  %v8964 = vpop.permute.xlu0 %8963
  %8965 = vrot.lane.b32.xlu0 %v8904, 8
  %v8966 = vpop.permute.xlu0 %8965
  %8967 = vrot.lane.b32.xlu0 %v8905, 8
  %v8968 = vpop.permute.xlu0 %8967
  %8969 = vrot.lane.b32.xlu0 %v8906, 8
  %v8970 = vpop.permute.xlu0 %8969
  %8971 = vrot.lane.b32.xlu0 %v8907, 8
  %v8972 = vpop.permute.xlu0 %8971
  %8973 = vrot.lane.b32.xlu0 %v8908, 8
  %v8974 = vpop.permute.xlu0 %8973
  %8975 = vrot.lane.b32.xlu0 %v8909, 8
  %v8976 = vpop.permute.xlu0 %8975
  %8977 = vrot.lane.b32.xlu0 %v8910, 8
  %v8978 = vpop.permute.xlu0 %8977
  %8979 = vrot.lane.b32.xlu0 %v8911, 8
  %v8980 = vpop.permute.xlu0 %8979
  %8981 = vrot.lane.b32.xlu0 %v8912, 8
  %v8982 = vpop.permute.xlu0 %8981
  %8983 = vrot.lane.b32.xlu0 %v8913, 8
  %v8984 = vpop.permute.xlu0 %8983
  %8985 = vrot.lane.b32.xlu0 %v8914, 8
  %v8986 = vpop.permute.xlu0 %8985
  %8987 = vrot.lane.b32.xlu0 %v8915, 8
  %v8988 = vpop.permute.xlu0 %8987
  %8989 = vrot.lane.b32.xlu0 %v8916, 8
  %v8990 = vpop.permute.xlu0 %8989
  %8991 = vrot.lane.b32.xlu0 %v8917, 8
  %v8992 = vpop.permute.xlu0 %8991
  %8993 = vrot.lane.b32.xlu0 %v8918, 8
  %v8994 = vpop.permute.xlu0 %8993
  %8995 = vrot.lane.b32.xlu0 %v8919, 8
  %v8996 = vpop.permute.xlu0 %8995
  %8997 = vrot.lane.b32.xlu0 %v8920, 8
  %v8998 = vpop.permute.xlu0 %8997
  %8999 = vrot.lane.b32.xlu0 %v8921, 8
  %v9000 = vpop.permute.xlu0 %8999
  %9001 = vrot.lane.b32.xlu0 %v8922, 8
  %v9002 = vpop.permute.xlu0 %9001
  %9003 = vrot.lane.b32.xlu0 %v8923, 8
  %v9004 = vpop.permute.xlu0 %9003
  %9005 = vrot.lane.b32.xlu0 %v8924, 8
  %v9006 = vpop.permute.xlu0 %9005
  %9007 = vrot.lane.b32.xlu0 %v8925, 8
  %v9008 = vpop.permute.xlu0 %9007
  %9009 = vrot.lane.b32.xlu0 %v8926, 8
  %v9010 = vpop.permute.xlu0 %9009
  %9011 = vrot.lane.b32.xlu0 %v8927, 8
  %v9012 = vpop.permute.xlu0 %9011
  %9013 = vrot.lane.b32.xlu0 %v8928, 8
  %v9014 = vpop.permute.xlu0 %9013
  %9015 = vrot.lane.b32.xlu0 %v8929, 8
  %v9016 = vpop.permute.xlu0 %9015
  %9017 = vrot.lane.b32.xlu0 %v8930, 8
  %v9018 = vpop.permute.xlu0 %9017
  %9019 = vrot.lane.b32.xlu0 %v8931, 8
  %v9020 = vpop.permute.xlu0 %9019
  %9021 = vrot.lane.b32.xlu0 %v8932, 8
  %v9022 = vpop.permute.xlu0 %9021
  %9023 = vrot.lane.b32.xlu0 %v8933, 8
  %v9024 = vpop.permute.xlu0 %9023
  %9025 = vrot.lane.b32.xlu0 %v8934, 8
  %v9026 = vpop.permute.xlu0 %9025
  %9027 = vrot.lane.b32.xlu0 %v8935, 8
  %v9028 = vpop.permute.xlu0 %9027
  %9029 = vrot.lane.b32.xlu0 %v8936, 8
  %v9030 = vpop.permute.xlu0 %9029
  %9031 = vrot.lane.b32.xlu0 %v8937, 8
  %v9032 = vpop.permute.xlu0 %9031
  %9033 = vrot.lane.b32.xlu0 %v8938, 8
  %v9034 = vpop.permute.xlu0 %9033
  %9035 = vrot.lane.b32.xlu0 %v8939, 8
  %v9036 = vpop.permute.xlu0 %9035
  %9037 = vrot.lane.b32.xlu0 %v8940, 8
  %v9038 = vpop.permute.xlu0 %9037
  %9039 = vrot.lane.b32.xlu0 %v8941, 8
  %v9040 = vpop.permute.xlu0 %9039
  %9041 = vrot.lane.b32.xlu0 %v8942, 8
  %v9042 = vpop.permute.xlu0 %9041
  %9043 = vrot.lane.b32.xlu0 %v8943, 8
  %v9044 = vpop.permute.xlu0 %9043
  %9045 = vrot.lane.b32.xlu0 %v8944, 8
  %v9046 = vpop.permute.xlu0 %9045
  %9047 = vrot.lane.b32.xlu0 %v8945, 8
  %v9048 = vpop.permute.xlu0 %9047
  %9049 = vrot.lane.b32.xlu0 %v8946, 8
  %v9050 = vpop.permute.xlu0 %9049
  %9051 = vrot.lane.b32.xlu0 %v8947, 8
  %v9052 = vpop.permute.xlu0 %9051
  %9053 = vrot.lane.b32.xlu0 %v8948, 8
  %v9054 = vpop.permute.xlu0 %9053
  %9055 = vrot.lane.b32.xlu0 %v8949, 8
  %v9056 = vpop.permute.xlu0 %9055
  %9057 = vrot.lane.b32.xlu0 %v8950, 8
  %v9058 = vpop.permute.xlu0 %9057
  %9059 = vrot.lane.b32.xlu0 %v8951, 8
  %v9060 = vpop.permute.xlu0 %9059
  %9061 = vrot.lane.b32.xlu0 %v8952, 8
  %v9062 = vpop.permute.xlu0 %9061
  %9063 = vrot.lane.b32.xlu0 %v8953, 8
  %v9064 = vpop.permute.xlu0 %9063
  %9065 = vrot.lane.b32.xlu0 %v8954, 8
  %v9066 = vpop.permute.xlu0 %9065
  %9067 = vrot.lane.b32.xlu0 %v8955, 8
  %v9068 = vpop.permute.xlu0 %9067
  %9069 = vrot.lane.b32.xlu0 %v8956, 8
  %v9070 = vpop.permute.xlu0 %9069
  %v9072 = vunpack.c.l.b16 %v8036
  %v9073 = vpack.c.b16 %v9072, %v8898
  %v9075 = vshrl.u32 %v8900, 16
  %v9077 = vshll.u32 %v8900, 16
  %v9079 = vrot.slane %v9077, 1
  %v9080 = vor.u32 %v9075, %v9079
  %v9082 = vshll.u32 %v8901, 16
  %v9084 = vrot.slane %v9082, 1
  %v9085 = vsel %vm986, %v9080, %v9084
  %v9086 = vshrl.u32 %v8901, 16
  %v9088 = vor.u32 %v9086, %v9084
  %v9090 = vshll.u32 %v8902, 16
  %v9092 = vrot.slane %v9090, 1
  %v9093 = vsel %vm986, %v9088, %v9092
  %v9094 = vshrl.u32 %v8902, 16
  %v9096 = vor.u32 %v9094, %v9092
  %v9098 = vshll.u32 %v8903, 16
  %v9100 = vrot.slane %v9098, 1
  %v9101 = vsel %vm986, %v9096, %v9100
  %v9102 = vshrl.u32 %v8903, 16
  %v9104 = vor.u32 %v9102, %v9100
  %v9106 = vshll.u32 %v8904, 16
  %v9108 = vrot.slane %v9106, 1
  %v9109 = vsel %vm986, %v9104, %v9108
  %v9110 = vshrl.u32 %v8904, 16
  %v9112 = vor.u32 %v9110, %v9108
  %v9114 = vshll.u32 %v8905, 16
  %v9116 = vrot.slane %v9114, 1
  %v9117 = vsel %vm986, %v9112, %v9116
  %v9118 = vshrl.u32 %v8905, 16
  %v9120 = vor.u32 %v9118, %v9116
  %v9122 = vshll.u32 %v8906, 16
  %v9124 = vrot.slane %v9122, 1
  %v9125 = vsel %vm986, %v9120, %v9124
  %v9126 = vshrl.u32 %v8906, 16
  %v9128 = vor.u32 %v9126, %v9124
  %v9130 = vshll.u32 %v8907, 16
  %v9132 = vrot.slane %v9130, 1
  %v9133 = vsel %vm986, %v9128, %v9132
  %v9134 = vshrl.u32 %v8907, 16
  %v9136 = vor.u32 %v9134, %v9132
  %v9138 = vshll.u32 %v8908, 16
  %v9140 = vrot.slane %v9138, 1
  %v9141 = vsel %vm986, %v9136, %v9140
  %v9142 = vshrl.u32 %v8908, 16
  %v9144 = vor.u32 %v9142, %v9140
  %v9146 = vshll.u32 %v8909, 16
  %v9148 = vrot.slane %v9146, 1
  %v9149 = vsel %vm986, %v9144, %v9148
  %v9150 = vshrl.u32 %v8909, 16
  %v9152 = vor.u32 %v9150, %v9148
  %v9154 = vshll.u32 %v8910, 16
  %v9156 = vrot.slane %v9154, 1
  %v9157 = vsel %vm986, %v9152, %v9156
  %v9158 = vshrl.u32 %v8910, 16
  %v9160 = vor.u32 %v9158, %v9156
  %v9162 = vshll.u32 %v8911, 16
  %v9164 = vrot.slane %v9162, 1
  %v9165 = vsel %vm986, %v9160, %v9164
  %v9166 = vshrl.u32 %v8911, 16
  %v9168 = vor.u32 %v9166, %v9164
  %v9170 = vshll.u32 %v8912, 16
  %v9172 = vrot.slane %v9170, 1
  %v9173 = vsel %vm986, %v9168, %v9172
  %v9174 = vshrl.u32 %v8912, 16
  %v9176 = vor.u32 %v9174, %v9172
  %v9178 = vshll.u32 %v8913, 16
  %v9180 = vrot.slane %v9178, 1
  %v9181 = vsel %vm986, %v9176, %v9180
  %v9182 = vshrl.u32 %v8913, 16
  %v9184 = vor.u32 %v9182, %v9180
  %v9186 = vshll.u32 %v8914, 16
  %v9188 = vrot.slane %v9186, 1
  %v9189 = vsel %vm986, %v9184, %v9188
  %v9190 = vshrl.u32 %v8914, 16
  %v9192 = vor.u32 %v9190, %v9188
  %v9194 = vshll.u32 %v8915, 16
  %v9196 = vrot.slane %v9194, 1
  %v9197 = vsel %vm986, %v9192, %v9196
  %v9198 = vshrl.u32 %v8915, 16
  %v9200 = vor.u32 %v9198, %v9196
  %v9202 = vshll.u32 %v8916, 16
  %v9204 = vrot.slane %v9202, 1
  %v9205 = vsel %vm986, %v9200, %v9204
  %v9206 = vshrl.u32 %v8916, 16
  %v9208 = vor.u32 %v9206, %v9204
  %v9210 = vshll.u32 %v8917, 16
  %v9212 = vrot.slane %v9210, 1
  %v9213 = vsel %vm986, %v9208, %v9212
  %v9214 = vshrl.u32 %v8917, 16
  %v9216 = vor.u32 %v9214, %v9212
  %v9218 = vshll.u32 %v8918, 16
  %v9220 = vrot.slane %v9218, 1
  %v9221 = vsel %vm986, %v9216, %v9220
  %v9222 = vshrl.u32 %v8918, 16
  %v9224 = vor.u32 %v9222, %v9220
  %v9226 = vshll.u32 %v8919, 16
  %v9228 = vrot.slane %v9226, 1
  %v9229 = vsel %vm986, %v9224, %v9228
  %v9230 = vshrl.u32 %v8919, 16
  %v9232 = vor.u32 %v9230, %v9228
  %v9234 = vshll.u32 %v8920, 16
  %v9236 = vrot.slane %v9234, 1
  %v9237 = vsel %vm986, %v9232, %v9236
  %v9238 = vshrl.u32 %v8920, 16
  %v9240 = vor.u32 %v9238, %v9236
  %v9242 = vshll.u32 %v8921, 16
  %v9244 = vrot.slane %v9242, 1
  %v9245 = vsel %vm986, %v9240, %v9244
  %v9246 = vshrl.u32 %v8921, 16
  %v9248 = vor.u32 %v9246, %v9244
  %v9250 = vshll.u32 %v8922, 16
  %v9252 = vrot.slane %v9250, 1
  %v9253 = vsel %vm986, %v9248, %v9252
  %v9254 = vshrl.u32 %v8922, 16
  %v9256 = vor.u32 %v9254, %v9252
  %v9258 = vshll.u32 %v8923, 16
  %v9260 = vrot.slane %v9258, 1
  %v9261 = vsel %vm986, %v9256, %v9260
  %v9262 = vshrl.u32 %v8923, 16
  %v9264 = vor.u32 %v9262, %v9260
  %v9266 = vshll.u32 %v8924, 16
  %v9268 = vrot.slane %v9266, 1
  %v9269 = vsel %vm986, %v9264, %v9268
  %v9270 = vshrl.u32 %v8924, 16
  %v9272 = vor.u32 %v9270, %v9268
  %v9274 = vshll.u32 %v8925, 16
  %v9276 = vrot.slane %v9274, 1
  %v9277 = vsel %vm986, %v9272, %v9276
  %v9278 = vshrl.u32 %v8925, 16
  %v9280 = vor.u32 %v9278, %v9276
  %v9282 = vshll.u32 %v8926, 16
  %v9284 = vrot.slane %v9282, 1
  %v9285 = vsel %vm986, %v9280, %v9284
  %v9286 = vshrl.u32 %v8926, 16
  %v9288 = vor.u32 %v9286, %v9284
  %v9290 = vshll.u32 %v8927, 16
  %v9292 = vrot.slane %v9290, 1
  %v9293 = vsel %vm986, %v9288, %v9292
  %v9294 = vshrl.u32 %v8927, 16
  %v9296 = vor.u32 %v9294, %v9292
  %v9298 = vshll.u32 %v8928, 16
  %v9300 = vrot.slane %v9298, 1
  %v9301 = vsel %vm986, %v9296, %v9300
  %v9302 = vshrl.u32 %v8928, 16
  %v9304 = vor.u32 %v9302, %v9300
  %v9306 = vshll.u32 %v8929, 16
  %v9308 = vrot.slane %v9306, 1
  %v9309 = vsel %vm986, %v9304, %v9308
  %v9310 = vshrl.u32 %v8929, 16
  %v9312 = vor.u32 %v9310, %v9308
  %v9314 = vshll.u32 %v8930, 16
  %v9316 = vrot.slane %v9314, 1
  %v9317 = vsel %vm986, %v9312, %v9316
  %v9318 = vshrl.u32 %v8930, 16
  %v9320 = vor.u32 %v9318, %v9316
  %v9322 = vshll.u32 %v8931, 16
  %v9324 = vrot.slane %v9322, 1
  %v9325 = vsel %vm986, %v9320, %v9324
  %v9326 = vshrl.u32 %v8931, 16
  %v9328 = vor.u32 %v9326, %v9324
  %v9330 = vshll.u32 %v8932, 16
  %v9332 = vrot.slane %v9330, 1
  %v9333 = vsel %vm986, %v9328, %v9332
  %v9334 = vshrl.u32 %v8932, 16
  %v9336 = vor.u32 %v9334, %v9332
  %v9338 = vshll.u32 %v8933, 16
  %v9340 = vrot.slane %v9338, 1
  %v9341 = vsel %vm986, %v9336, %v9340
  %v9342 = vshrl.u32 %v8933, 16
  %v9344 = vor.u32 %v9342, %v9340
  %v9346 = vshll.u32 %v8934, 16
  %v9348 = vrot.slane %v9346, 1
  %v9349 = vsel %vm986, %v9344, %v9348
  %v9350 = vshrl.u32 %v8934, 16
  %v9352 = vor.u32 %v9350, %v9348
  %v9354 = vshll.u32 %v8935, 16
  %v9356 = vrot.slane %v9354, 1
  %v9357 = vsel %vm986, %v9352, %v9356
  %v9358 = vshrl.u32 %v8935, 16
  %v9360 = vor.u32 %v9358, %v9356
  %v9362 = vshll.u32 %v8936, 16
  %v9364 = vrot.slane %v9362, 1
  %v9365 = vsel %vm986, %v9360, %v9364
  %v9366 = vshrl.u32 %v8936, 16
  %v9368 = vor.u32 %v9366, %v9364
  %v9370 = vshll.u32 %v8937, 16
  %v9372 = vrot.slane %v9370, 1
  %v9373 = vsel %vm986, %v9368, %v9372
  %v9374 = vshrl.u32 %v8937, 16
  %v9376 = vor.u32 %v9374, %v9372
  %v9378 = vshll.u32 %v8938, 16
  %v9380 = vrot.slane %v9378, 1
  %v9381 = vsel %vm986, %v9376, %v9380
  %v9382 = vshrl.u32 %v8938, 16
  %v9384 = vor.u32 %v9382, %v9380
  %v9386 = vshll.u32 %v8939, 16
  %v9388 = vrot.slane %v9386, 1
  %v9389 = vsel %vm986, %v9384, %v9388
  %v9390 = vshrl.u32 %v8939, 16
  %v9392 = vor.u32 %v9390, %v9388
  %v9394 = vshll.u32 %v8940, 16
  %v9396 = vrot.slane %v9394, 1
  %v9397 = vsel %vm986, %v9392, %v9396
  %v9398 = vshrl.u32 %v8940, 16
  %v9400 = vor.u32 %v9398, %v9396
  %v9402 = vshll.u32 %v8941, 16
  %v9404 = vrot.slane %v9402, 1
  %v9405 = vsel %vm986, %v9400, %v9404
  %v9406 = vshrl.u32 %v8941, 16
  %v9408 = vor.u32 %v9406, %v9404
  %v9410 = vshll.u32 %v8942, 16
  %v9412 = vrot.slane %v9410, 1
  %v9413 = vsel %vm986, %v9408, %v9412
  %v9414 = vshrl.u32 %v8942, 16
  %v9416 = vor.u32 %v9414, %v9412
  %v9418 = vshll.u32 %v8943, 16
  %v9420 = vrot.slane %v9418, 1
  %v9421 = vsel %vm986, %v9416, %v9420
  %v9422 = vshrl.u32 %v8943, 16
  %v9424 = vor.u32 %v9422, %v9420
  %v9426 = vshll.u32 %v8944, 16
  %v9428 = vrot.slane %v9426, 1
  %v9429 = vsel %vm986, %v9424, %v9428
  %v9430 = vshrl.u32 %v8944, 16
  %v9432 = vor.u32 %v9430, %v9428
  %v9434 = vshll.u32 %v8945, 16
  %v9436 = vrot.slane %v9434, 1
  %v9437 = vsel %vm986, %v9432, %v9436
  %v9438 = vshrl.u32 %v8945, 16
  %v9440 = vor.u32 %v9438, %v9436
  %v9442 = vshll.u32 %v8946, 16
  %v9444 = vrot.slane %v9442, 1
  %v9445 = vsel %vm986, %v9440, %v9444
  %v9446 = vshrl.u32 %v8946, 16
  %v9448 = vor.u32 %v9446, %v9444
  %v9450 = vshll.u32 %v8947, 16
  %v9452 = vrot.slane %v9450, 1
  %v9453 = vsel %vm986, %v9448, %v9452
  %v9454 = vshrl.u32 %v8947, 16
  %v9456 = vor.u32 %v9454, %v9452
  %v9458 = vshll.u32 %v8948, 16
  %v9460 = vrot.slane %v9458, 1
  %v9461 = vsel %vm986, %v9456, %v9460
  %v9462 = vshrl.u32 %v8948, 16
  %v9464 = vor.u32 %v9462, %v9460
  %v9466 = vshll.u32 %v8949, 16
  %v9468 = vrot.slane %v9466, 1
  %v9469 = vsel %vm986, %v9464, %v9468
  %v9470 = vshrl.u32 %v8949, 16
  %v9472 = vor.u32 %v9470, %v9468
  %v9474 = vshll.u32 %v8950, 16
  %v9476 = vrot.slane %v9474, 1
  %v9477 = vsel %vm986, %v9472, %v9476
  %v9478 = vshrl.u32 %v8950, 16
  %v9480 = vor.u32 %v9478, %v9476
  %v9482 = vshll.u32 %v8951, 16
  %v9484 = vrot.slane %v9482, 1
  %v9485 = vsel %vm986, %v9480, %v9484
  %v9486 = vshrl.u32 %v8951, 16
  %v9488 = vor.u32 %v9486, %v9484
  %v9490 = vshll.u32 %v8952, 16
  %v9492 = vrot.slane %v9490, 1
  %v9493 = vsel %vm986, %v9488, %v9492
  %v9494 = vshrl.u32 %v8952, 16
  %v9496 = vor.u32 %v9494, %v9492
  %v9498 = vshll.u32 %v8953, 16
  %v9500 = vrot.slane %v9498, 1
  %v9501 = vsel %vm986, %v9496, %v9500
  %v9502 = vshrl.u32 %v8953, 16
  %v9504 = vor.u32 %v9502, %v9500
  %v9506 = vshll.u32 %v8954, 16
  %v9508 = vrot.slane %v9506, 1
  %v9509 = vsel %vm986, %v9504, %v9508
  %v9510 = vshrl.u32 %v8954, 16
  %v9512 = vor.u32 %v9510, %v9508
  %v9514 = vshll.u32 %v8955, 16
  %v9516 = vrot.slane %v9514, 1
  %v9517 = vsel %vm986, %v9512, %v9516
  %v9518 = vshrl.u32 %v8955, 16
  %v9520 = vor.u32 %v9518, %v9516
  %v9522 = vshll.u32 %v9073, 16
  %v9524 = vrot.slane %v9522, 1
  %v9525 = vsel %vm986, %v9520, %v9524
  %v9526 = vshrl.u32 %v9073, 16
  %v9528 = vor.u32 %v9526, %v9524
  %9529 = vrot.lane.b32.xlu0 %v9085, 12
  %v9530 = vpop.permute.xlu0 %9529
  %9531 = vrot.lane.b32.xlu0 %v9093, 12
  %v9532 = vpop.permute.xlu0 %9531
  %9533 = vrot.lane.b32.xlu0 %v9101, 12
  %v9534 = vpop.permute.xlu0 %9533
  %9535 = vrot.lane.b32.xlu0 %v9109, 12
  %v9536 = vpop.permute.xlu0 %9535
  %9537 = vrot.lane.b32.xlu0 %v9117, 12
  %v9538 = vpop.permute.xlu0 %9537
  %9539 = vrot.lane.b32.xlu0 %v9125, 12
  %v9540 = vpop.permute.xlu0 %9539
  %9541 = vrot.lane.b32.xlu0 %v9133, 12
  %v9542 = vpop.permute.xlu0 %9541
  %9543 = vrot.lane.b32.xlu0 %v9141, 12
  %v9544 = vpop.permute.xlu0 %9543
  %9545 = vrot.lane.b32.xlu0 %v9149, 12
  %v9546 = vpop.permute.xlu0 %9545
  %9547 = vrot.lane.b32.xlu0 %v9157, 12
  %v9548 = vpop.permute.xlu0 %9547
  %9549 = vrot.lane.b32.xlu0 %v9165, 12
  %v9550 = vpop.permute.xlu0 %9549
  %9551 = vrot.lane.b32.xlu0 %v9173, 12
  %v9552 = vpop.permute.xlu0 %9551
  %9553 = vrot.lane.b32.xlu0 %v9181, 12
  %v9554 = vpop.permute.xlu0 %9553
  %9555 = vrot.lane.b32.xlu0 %v9189, 12
  %v9556 = vpop.permute.xlu0 %9555
  %9557 = vrot.lane.b32.xlu0 %v9197, 12
  %v9558 = vpop.permute.xlu0 %9557
  %9559 = vrot.lane.b32.xlu0 %v9205, 12
  %v9560 = vpop.permute.xlu0 %9559
  %9561 = vrot.lane.b32.xlu0 %v9213, 12
  %v9562 = vpop.permute.xlu0 %9561
  %9563 = vrot.lane.b32.xlu0 %v9221, 12
  %v9564 = vpop.permute.xlu0 %9563
  %9565 = vrot.lane.b32.xlu0 %v9229, 12
  %v9566 = vpop.permute.xlu0 %9565
  %9567 = vrot.lane.b32.xlu0 %v9237, 12
  %v9568 = vpop.permute.xlu0 %9567
  %9569 = vrot.lane.b32.xlu0 %v9245, 12
  %v9570 = vpop.permute.xlu0 %9569
  %9571 = vrot.lane.b32.xlu0 %v9253, 12
  %v9572 = vpop.permute.xlu0 %9571
  %9573 = vrot.lane.b32.xlu0 %v9261, 12
  %v9574 = vpop.permute.xlu0 %9573
  %9575 = vrot.lane.b32.xlu0 %v9269, 12
  %v9576 = vpop.permute.xlu0 %9575
  %9577 = vrot.lane.b32.xlu0 %v9277, 12
  %v9578 = vpop.permute.xlu0 %9577
  %9579 = vrot.lane.b32.xlu0 %v9285, 12
  %v9580 = vpop.permute.xlu0 %9579
  %9581 = vrot.lane.b32.xlu0 %v9293, 12
  %v9582 = vpop.permute.xlu0 %9581
  %9583 = vrot.lane.b32.xlu0 %v9301, 12
  %v9584 = vpop.permute.xlu0 %9583
  %9585 = vrot.lane.b32.xlu0 %v9309, 12
  %v9586 = vpop.permute.xlu0 %9585
  %9587 = vrot.lane.b32.xlu0 %v9317, 12
  %v9588 = vpop.permute.xlu0 %9587
  %9589 = vrot.lane.b32.xlu0 %v9325, 12
  %v9590 = vpop.permute.xlu0 %9589
  %9591 = vrot.lane.b32.xlu0 %v9333, 12
  %v9592 = vpop.permute.xlu0 %9591
  %9593 = vrot.lane.b32.xlu0 %v9341, 12
  %v9594 = vpop.permute.xlu0 %9593
  %9595 = vrot.lane.b32.xlu0 %v9349, 12
  %v9596 = vpop.permute.xlu0 %9595
  %9597 = vrot.lane.b32.xlu0 %v9357, 12
  %v9598 = vpop.permute.xlu0 %9597
  %9599 = vrot.lane.b32.xlu0 %v9365, 12
  %v9600 = vpop.permute.xlu0 %9599
  %9601 = vrot.lane.b32.xlu0 %v9373, 12
  %v9602 = vpop.permute.xlu0 %9601
  %9603 = vrot.lane.b32.xlu0 %v9381, 12
  %v9604 = vpop.permute.xlu0 %9603
  %9605 = vrot.lane.b32.xlu0 %v9389, 12
  %v9606 = vpop.permute.xlu0 %9605
  %9607 = vrot.lane.b32.xlu0 %v9397, 12
  %v9608 = vpop.permute.xlu0 %9607
  %9609 = vrot.lane.b32.xlu0 %v9405, 12
  %v9610 = vpop.permute.xlu0 %9609
  %9611 = vrot.lane.b32.xlu0 %v9413, 12
  %v9612 = vpop.permute.xlu0 %9611
  %9613 = vrot.lane.b32.xlu0 %v9421, 12
  %v9614 = vpop.permute.xlu0 %9613
  %9615 = vrot.lane.b32.xlu0 %v9429, 12
  %v9616 = vpop.permute.xlu0 %9615
  %9617 = vrot.lane.b32.xlu0 %v9437, 12
  %v9618 = vpop.permute.xlu0 %9617
  %9619 = vrot.lane.b32.xlu0 %v9445, 12
  %v9620 = vpop.permute.xlu0 %9619
  %9621 = vrot.lane.b32.xlu0 %v9453, 12
  %v9622 = vpop.permute.xlu0 %9621
  %9623 = vrot.lane.b32.xlu0 %v9461, 12
  %v9624 = vpop.permute.xlu0 %9623
  %9625 = vrot.lane.b32.xlu0 %v9469, 12
  %v9626 = vpop.permute.xlu0 %9625
  %9627 = vrot.lane.b32.xlu0 %v9477, 12
  %v9628 = vpop.permute.xlu0 %9627
  %9629 = vrot.lane.b32.xlu0 %v9485, 12
  %v9630 = vpop.permute.xlu0 %9629
  %9631 = vrot.lane.b32.xlu0 %v9493, 12
  %v9632 = vpop.permute.xlu0 %9631
  %9633 = vrot.lane.b32.xlu0 %v9501, 12
  %v9634 = vpop.permute.xlu0 %9633
  %9635 = vrot.lane.b32.xlu0 %v9509, 12
  %v9636 = vpop.permute.xlu0 %9635
  %9637 = vrot.lane.b32.xlu0 %v9517, 12
  %v9638 = vpop.permute.xlu0 %9637
  %9639 = vrot.lane.b32.xlu0 %v9525, 12
  %v9640 = vpop.permute.xlu0 %9639
  %9641 = vrot.lane.b32.xlu0 %v9528, 12
  %v9642 = vpop.permute.xlu0 %9641
  %v9644 = vsel %vm3709, %v8265, %v8781
  %v9646 = vsel %vm3709, %v8266, %v8783
  %v9648 = vsel %vm3709, %v8267, %v8785
  %v9650 = vsel %vm3709, %v8268, %v8787
  %v9652 = vsel %vm3709, %v8269, %v8789
  %v9654 = vsel %vm3709, %v8270, %v8791
  %v9656 = vsel %vm3709, %v8271, %v8793
  %v9658 = vsel %vm3709, %v8272, %v8795
  %v9660 = vsel %vm3709, %v8273, %v8797
  %v9662 = vsel %vm3709, %v8274, %v8799
  %v9664 = vsel %vm3709, %v8275, %v8801
  %v9666 = vsel %vm3709, %v8276, %v8803
  %v9668 = vsel %vm3709, %v8277, %v8805
  %v9670 = vsel %vm3709, %v8278, %v8807
  %v9672 = vsel %vm3709, %v8279, %v8809
  %v9674 = vsel %vm3709, %v8280, %v8811
  %v9676 = vsel %vm3709, %v8281, %v8813
  %v9678 = vsel %vm3709, %v8282, %v8815
  %v9680 = vsel %vm3709, %v8283, %v8817
  %v9682 = vsel %vm3709, %v8284, %v8819
  %v9684 = vsel %vm3709, %v8285, %v8821
  %v9686 = vsel %vm3709, %v8286, %v8823
  %v9688 = vsel %vm3709, %v8287, %v8825
  %v9690 = vsel %vm3709, %v8288, %v8827
  %v9692 = vsel %vm3709, %v8289, %v8829
  %v9694 = vsel %vm3709, %v8290, %v8831
  %v9696 = vsel %vm3709, %v8291, %v8833
  %v9698 = vsel %vm3709, %v8292, %v8835
  %v9700 = vsel %vm3709, %v8293, %v8837
  %v9702 = vsel %vm3709, %v8294, %v8839
  %v9704 = vsel %vm3709, %v8295, %v8841
  %v9706 = vsel %vm3709, %v8296, %v8843
  %v9708 = vsel %vm3709, %v8297, %v8845
  %v9710 = vsel %vm3709, %v8298, %v8847
  %v9712 = vsel %vm3709, %v8299, %v8849
  %v9714 = vsel %vm3709, %v8300, %v8851
  %v9716 = vsel %vm3709, %v8301, %v8853
  %v9718 = vsel %vm3709, %v8302, %v8855
  %v9720 = vsel %vm3709, %v8303, %v8857
  %v9722 = vsel %vm3709, %v8304, %v8859
  %v9724 = vsel %vm3709, %v8305, %v8861
  %v9726 = vsel %vm3709, %v8306, %v8863
  %v9728 = vsel %vm3709, %v8307, %v8865
  %v9730 = vsel %vm3709, %v8308, %v8867
  %v9732 = vsel %vm3709, %v8309, %v8869
  %v9734 = vsel %vm3709, %v8310, %v8871
  %v9736 = vsel %vm3709, %v8311, %v8873
  %v9738 = vsel %vm3709, %v8312, %v8875
  %v9740 = vsel %vm3709, %v8313, %v8877
  %v9742 = vsel %vm3709, %v8314, %v8879
  %v9744 = vsel %vm3709, %v8315, %v8881
  %v9746 = vsel %vm3709, %v8316, %v8883
  %v9748 = vsel %vm3709, %v8317, %v8885
  %v9750 = vsel %vm3709, %v8318, %v8887
  %v9752 = vsel %vm3709, %v8319, %v8889
  %v9754 = vsel %vm3709, %v8320, %v8891
  %v9757 = vsel %vm3709, %v8321, %v8893
  %v9759 = vsel %vm3828, %v9644, %v8958
  %v9761 = vsel %vm3828, %v9646, %v8960
  %v9763 = vsel %vm3828, %v9648, %v8962
  %v9765 = vsel %vm3828, %v9650, %v8964
  %v9767 = vsel %vm3828, %v9652, %v8966
  %v9769 = vsel %vm3828, %v9654, %v8968
  %v9771 = vsel %vm3828, %v9656, %v8970
  %v9773 = vsel %vm3828, %v9658, %v8972
  %v9775 = vsel %vm3828, %v9660, %v8974
  %v9777 = vsel %vm3828, %v9662, %v8976
  %v9779 = vsel %vm3828, %v9664, %v8978
  %v9781 = vsel %vm3828, %v9666, %v8980
  %v9783 = vsel %vm3828, %v9668, %v8982
  %v9785 = vsel %vm3828, %v9670, %v8984
  %v9787 = vsel %vm3828, %v9672, %v8986
  %v9789 = vsel %vm3828, %v9674, %v8988
  %v9791 = vsel %vm3828, %v9676, %v8990
  %v9793 = vsel %vm3828, %v9678, %v8992
  %v9795 = vsel %vm3828, %v9680, %v8994
  %v9797 = vsel %vm3828, %v9682, %v8996
  %v9799 = vsel %vm3828, %v9684, %v8998
  %v9801 = vsel %vm3828, %v9686, %v9000
  %v9803 = vsel %vm3828, %v9688, %v9002
  %v9805 = vsel %vm3828, %v9690, %v9004
  %v9807 = vsel %vm3828, %v9692, %v9006
  %v9809 = vsel %vm3828, %v9694, %v9008
  %v9811 = vsel %vm3828, %v9696, %v9010
  %v9813 = vsel %vm3828, %v9698, %v9012
  %v9815 = vsel %vm3828, %v9700, %v9014
  %v9817 = vsel %vm3828, %v9702, %v9016
  %v9819 = vsel %vm3828, %v9704, %v9018
  %v9821 = vsel %vm3828, %v9706, %v9020
  %v9823 = vsel %vm3828, %v9708, %v9022
  %v9825 = vsel %vm3828, %v9710, %v9024
  %v9827 = vsel %vm3828, %v9712, %v9026
  %v9829 = vsel %vm3828, %v9714, %v9028
  %v9831 = vsel %vm3828, %v9716, %v9030
  %v9833 = vsel %vm3828, %v9718, %v9032
  %v9835 = vsel %vm3828, %v9720, %v9034
  %v9837 = vsel %vm3828, %v9722, %v9036
  %v9839 = vsel %vm3828, %v9724, %v9038
  %v9841 = vsel %vm3828, %v9726, %v9040
  %v9843 = vsel %vm3828, %v9728, %v9042
  %v9845 = vsel %vm3828, %v9730, %v9044
  %v9847 = vsel %vm3828, %v9732, %v9046
  %v9849 = vsel %vm3828, %v9734, %v9048
  %v9851 = vsel %vm3828, %v9736, %v9050
  %v9853 = vsel %vm3828, %v9738, %v9052
  %v9855 = vsel %vm3828, %v9740, %v9054
  %v9857 = vsel %vm3828, %v9742, %v9056
  %v9859 = vsel %vm3828, %v9744, %v9058
  %v9861 = vsel %vm3828, %v9746, %v9060
  %v9863 = vsel %vm3828, %v9748, %v9062
  %v9865 = vsel %vm3828, %v9750, %v9064
  %v9867 = vsel %vm3828, %v9752, %v9066
  %v9869 = vsel %vm3828, %v9754, %v9068
  %v9871 = vsel %vm3828, %v9757, %v9070
  %v9873 = vsel %vm3947, %v9759, %v9530
  %v9875 = vsel %vm3947, %v9761, %v9532
  %v9877 = vsel %vm3947, %v9763, %v9534
  %v9879 = vsel %vm3947, %v9765, %v9536
  %v9881 = vsel %vm3947, %v9767, %v9538
  %v9883 = vsel %vm3947, %v9769, %v9540
  %v9885 = vsel %vm3947, %v9771, %v9542
  %v9887 = vsel %vm3947, %v9773, %v9544
  %v9889 = vsel %vm3947, %v9775, %v9546
  %v9891 = vsel %vm3947, %v9777, %v9548
  %v9893 = vsel %vm3947, %v9779, %v9550
  %v9895 = vsel %vm3947, %v9781, %v9552
  %v9897 = vsel %vm3947, %v9783, %v9554
  %v9899 = vsel %vm3947, %v9785, %v9556
  %v9901 = vsel %vm3947, %v9787, %v9558
  %v9903 = vsel %vm3947, %v9789, %v9560
  %v9905 = vsel %vm3947, %v9791, %v9562
  %v9907 = vsel %vm3947, %v9793, %v9564
  %v9909 = vsel %vm3947, %v9795, %v9566
  %v9911 = vsel %vm3947, %v9797, %v9568
  %v9913 = vsel %vm3947, %v9799, %v9570
  %v9915 = vsel %vm3947, %v9801, %v9572
  %v9917 = vsel %vm3947, %v9803, %v9574
  %v9919 = vsel %vm3947, %v9805, %v9576
  %v9921 = vsel %vm3947, %v9807, %v9578
  %v9923 = vsel %vm3947, %v9809, %v9580
  %v9925 = vsel %vm3947, %v9811, %v9582
  %v9927 = vsel %vm3947, %v9813, %v9584
  %v9929 = vsel %vm3947, %v9815, %v9586
  %v9931 = vsel %vm3947, %v9817, %v9588
  %v9933 = vsel %vm3947, %v9819, %v9590
  %v9935 = vsel %vm3947, %v9821, %v9592
  %v9937 = vsel %vm3947, %v9823, %v9594
  %v9939 = vsel %vm3947, %v9825, %v9596
  %v9941 = vsel %vm3947, %v9827, %v9598
  %v9943 = vsel %vm3947, %v9829, %v9600
  %v9945 = vsel %vm3947, %v9831, %v9602
  %v9947 = vsel %vm3947, %v9833, %v9604
  %v9949 = vsel %vm3947, %v9835, %v9606
  %v9951 = vsel %vm3947, %v9837, %v9608
  %v9953 = vsel %vm3947, %v9839, %v9610
  %v9955 = vsel %vm3947, %v9841, %v9612
  %v9957 = vsel %vm3947, %v9843, %v9614
  %v9959 = vsel %vm3947, %v9845, %v9616
  %v9961 = vsel %vm3947, %v9847, %v9618
  %v9963 = vsel %vm3947, %v9849, %v9620
  %v9965 = vsel %vm3947, %v9851, %v9622
  %v9967 = vsel %vm3947, %v9853, %v9624
  %v9969 = vsel %vm3947, %v9855, %v9626
  %v9971 = vsel %vm3947, %v9857, %v9628
  %v9973 = vsel %vm3947, %v9859, %v9630
  %v9975 = vsel %vm3947, %v9861, %v9632
  %v9977 = vsel %vm3947, %v9863, %v9634
  %v9979 = vsel %vm3947, %v9865, %v9636
  %v9981 = vsel %vm3947, %v9867, %v9638
  %v9983 = vsel %vm3947, %v9869, %v9640
  %v9985 = vsel %vm3947, %v9871, %v9642
  %v9986 = vld [vmem:[%s8] sm:$0xf]
  %v9987 = vld [vmem:[%s8 + $0x4] sm:$0xf]
  %v9988 = vld [vmem:[%s9] sm:$0x1]
  %v9990 = vlaneseq
  %v9991 = vshrl.u32 %v9990, 7
  %v9992 = vsub.s32 0, %v9991
  %v9993 = vrot.slane %v9988, %v9992
  %v9997 = vunpack.c.l.b16 %v9986
  %v9998 = vunpack.c.l.b16 %v9987
  %v9999 = vpack.c.b16 %v9998, %v9997
  %v10001 = vsel %vm4066, %v9873, 0
  %v10003 = vsel %vm4066, %v9875, 0
  %v10005 = vsel %vm4066, %v9877, 0
  %v10007 = vsel %vm4066, %v9879, 0
  %v10009 = vsel %vm4066, %v9881, 0
  %v10011 = vsel %vm4066, %v9883, 0
  %v10013 = vsel %vm4066, %v9885, 0
  %v10015 = vsel %vm4066, %v9887, 0
  %v10017 = vsel %vm4066, %v9889, 0
  %v10019 = vsel %vm4066, %v9891, 0
  %v10021 = vsel %vm4066, %v9893, 0
  %v10023 = vsel %vm4066, %v9895, 0
  %v10025 = vsel %vm4066, %v9897, 0
  %v10027 = vsel %vm4066, %v9899, 0
  %v10029 = vsel %vm4066, %v9901, 0
  %v10031 = vsel %vm4066, %v9903, 0
  %v10033 = vsel %vm4066, %v9905, 0
  %v10035 = vsel %vm4066, %v9907, 0
  %v10037 = vsel %vm4066, %v9909, 0
  %v10039 = vsel %vm4066, %v9911, 0
  %v10041 = vsel %vm4066, %v9913, 0
  %v10043 = vsel %vm4066, %v9915, 0
  %v10045 = vsel %vm4066, %v9917, 0
  %v10047 = vsel %vm4066, %v9919, 0
  %v10049 = vsel %vm4066, %v9921, 0
  %v10051 = vsel %vm4066, %v9923, 0
  %v10053 = vsel %vm4066, %v9925, 0
  %v10055 = vsel %vm4066, %v9927, 0
  %v10057 = vsel %vm4066, %v9929, 0
  %v10059 = vsel %vm4066, %v9931, 0
  %v10061 = vsel %vm4066, %v9933, 0
  %v10063 = vsel %vm4066, %v9935, 0
  %v10065 = vsel %vm4066, %v9937, 0
  %v10067 = vsel %vm4066, %v9939, 0
  %v10069 = vsel %vm4066, %v9941, 0
  %v10071 = vsel %vm4066, %v9943, 0
  %v10073 = vsel %vm4066, %v9945, 0
  %v10075 = vsel %vm4066, %v9947, 0
  %v10077 = vsel %vm4066, %v9949, 0
  %v10079 = vsel %vm4066, %v9951, 0
  %v10081 = vsel %vm4066, %v9953, 0
  %v10083 = vsel %vm4066, %v9955, 0
  %v10085 = vsel %vm4066, %v9957, 0
  %v10087 = vsel %vm4066, %v9959, 0
  %v10089 = vsel %vm4066, %v9961, 0
  %v10091 = vsel %vm4066, %v9963, 0
  %v10093 = vsel %vm4066, %v9965, 0
  %v10095 = vsel %vm4066, %v9967, 0
  %v10097 = vsel %vm4066, %v9969, 0
  %v10099 = vsel %vm4066, %v9971, 0
  %v10101 = vsel %vm4066, %v9973, 0
  %v10103 = vsel %vm4066, %v9975, 0
  %v10105 = vsel %vm4066, %v9977, 0
  %v10107 = vsel %vm4066, %v9979, 0
  %v10109 = vsel %vm4066, %v9981, 0
  %v10111 = vsel %vm4066, %v9983, 0
  %v10113 = vsel %vm4066, %v9985, 0
  %10115 = vmatprep.subr.bf16.mxu0 0
  %10116 = vmatpush1.bf16.msra.mxu0 %v9999
  %10117 = vmatprep.subr.bf16.mxu0 0
  %10118 = vmatpush1.bf16.msra.mxu0 0
  %10119 = vmatprep.subr.bf16.mxu0 0
  %10120 = vmatpush1.bf16.msra.mxu0 0
  %10121 = vmatprep.subr.bf16.mxu0 0
  %10122 = vmatpush1.bf16.msra.mxu0 0
  %10123 = vmatprep.subr.bf16.mxu0 0
  %10124 = vmatpush1.bf16.msra.mxu0 0
  %10125 = vmatprep.subr.bf16.mxu0 0
  %10126 = vmatpush1.bf16.msra.mxu0 0
  %10127 = vmatprep.subr.bf16.mxu0 0
  %10128 = vmatpush1.bf16.msra.mxu0 0
  %10129 = vmatprep.subr.bf16.mxu0 0
  %10130 = vmatpush1.bf16.msra.mxu0 0
  %10131 = vmatprep.subr.bf16.mxu0 0
  %10132 = vmatpush1.bf16.msra.mxu0 0
  %10133 = vmatprep.subr.bf16.mxu0 0
  %10134 = vmatpush1.bf16.msra.mxu0 0
  %10135 = vmatprep.subr.bf16.mxu0 0
  %10136 = vmatpush1.bf16.msra.mxu0 0
  %10137 = vmatprep.subr.bf16.mxu0 0
  %10138 = vmatpush1.bf16.msra.mxu0 0
  %10139 = vmatprep.subr.bf16.mxu0 0
  %10140 = vmatpush1.bf16.msra.mxu0 0
  %10141 = vmatprep.subr.bf16.mxu0 0
  %10142 = vmatpush1.bf16.msra.mxu0 0
  %10143 = vmatprep.subr.bf16.mxu0 0
  %10144 = vmatpush1.bf16.msra.mxu0 0
  %10145 = vmatprep.subr.bf16.mxu0 0
  %10146 = vmatpush1.bf16.msra.mxu0 0
  %10147 = vmatprep.mubr.bf16.mxu0 0
  %10148 = vmatmul.mubr.bf16.gmra.mrb[0].mxu0 %v10001
  %v10149 = vpop.f32.mrb[0].mxu0
  %v10150 = vadd.f32 %v9993, %v10149
  %v10151 = vpop.f32.mrb[0].mxu0
  %v10152 = vpop.f32.mrb[0].mxu0
  %v10153 = vadd.f32 %v9993, %v10152
  %v10154 = vpop.f32.mrb[0].mxu0
  %10155 = vmatprep.mubr.bf16.mxu0 0
  %10156 = vmatmul.mubr.bf16.gmra.mrb[0].mxu0 %v10003
  %v10157 = vpop.f32.mrb[0].mxu0
  %v10158 = vadd.f32 %v9993, %v10157
  %v10159 = vpop.f32.mrb[0].mxu0
  %v10160 = vpop.f32.mrb[0].mxu0
  %v10161 = vadd.f32 %v9993, %v10160
  %v10162 = vpop.f32.mrb[0].mxu0
  %10163 = vmatprep.mubr.bf16.mxu0 0
  %10164 = vmatmul.mubr.bf16.gmra.mrb[0].mxu0 %v10005
  %v10165 = vpop.f32.mrb[0].mxu0
  %v10166 = vadd.f32 %v9993, %v10165
  %v10167 = vpop.f32.mrb[0].mxu0
  %v10168 = vpop.f32.mrb[0].mxu0
  %v10169 = vadd.f32 %v9993, %v10168
  %v10170 = vpop.f32.mrb[0].mxu0
  %10171 = vmatprep.mubr.bf16.mxu0 0
  %10172 = vmatmul.mubr.bf16.gmra.mrb[0].mxu0 %v10007
  %v10173 = vpop.f32.mrb[0].mxu0
  %v10174 = vadd.f32 %v9993, %v10173
  %v10175 = vpop.f32.mrb[0].mxu0
  %v10176 = vpop.f32.mrb[0].mxu0
  %v10177 = vadd.f32 %v9993, %v10176
  %v10178 = vpop.f32.mrb[0].mxu0
  %10179 = vmatprep.mubr.bf16.mxu0 0
  %10180 = vmatmul.mubr.bf16.gmra.mrb[0].mxu0 %v10009
  %v10181 = vpop.f32.mrb[0].mxu0
  %v10182 = vadd.f32 %v9993, %v10181
  %v10183 = vpop.f32.mrb[0].mxu0
  %v10184 = vpop.f32.mrb[0].mxu0
  %v10185 = vadd.f32 %v9993, %v10184
  %v10186 = vpop.f32.mrb[0].mxu0
  %10187 = vmatprep.mubr.bf16.mxu0 0
  %10188 = vmatmul.mubr.bf16.gmra.mrb[0].mxu0 %v10011
  %v10189 = vpop.f32.mrb[0].mxu0
  %v10190 = vadd.f32 %v9993, %v10189
  %v10191 = vpop.f32.mrb[0].mxu0
  %v10192 = vpop.f32.mrb[0].mxu0
  %v10193 = vadd.f32 %v9993, %v10192
  %v10194 = vpop.f32.mrb[0].mxu0
  %10195 = vmatprep.mubr.bf16.mxu0 0
  %10196 = vmatmul.mubr.bf16.gmra.mrb[0].mxu0 %v10013
  %v10197 = vpop.f32.mrb[0].mxu0
  %v10198 = vadd.f32 %v9993, %v10197
  %v10199 = vpop.f32.mrb[0].mxu0
  %v10200 = vpop.f32.mrb[0].mxu0
  %v10201 = vadd.f32 %v9993, %v10200
  %v10202 = vpop.f32.mrb[0].mxu0
  %10203 = vmatprep.mubr.bf16.mxu0 0
  %10204 = vmatmul.mubr.bf16.gmra.mrb[0].mxu0 %v10015
  %v10205 = vpop.f32.mrb[0].mxu0
  %v10206 = vadd.f32 %v9993, %v10205
  %v10207 = vpop.f32.mrb[0].mxu0
  %v10208 = vpop.f32.mrb[0].mxu0
  %v10209 = vadd.f32 %v9993, %v10208
  %v10210 = vpop.f32.mrb[0].mxu0
  %10211 = vmatprep.mubr.bf16.mxu0 0
  %10212 = vmatmul.mubr.bf16.gmra.mrb[0].mxu0 %v10017
  %v10213 = vpop.f32.mrb[0].mxu0
  %v10214 = vadd.f32 %v9993, %v10213
  %v10215 = vpop.f32.mrb[0].mxu0
  %v10216 = vpop.f32.mrb[0].mxu0
  %v10217 = vadd.f32 %v9993, %v10216
  %v10218 = vpop.f32.mrb[0].mxu0
  %10219 = vmatprep.mubr.bf16.mxu0 0
  %10220 = vmatmul.mubr.bf16.gmra.mrb[0].mxu0 %v10019
  %v10221 = vpop.f32.mrb[0].mxu0
  %v10222 = vadd.f32 %v9993, %v10221
  %v10223 = vpop.f32.mrb[0].mxu0
  %v10224 = vpop.f32.mrb[0].mxu0
  %v10225 = vadd.f32 %v9993, %v10224
  %v10226 = vpop.f32.mrb[0].mxu0
  %10227 = vmatprep.mubr.bf16.mxu0 0
  %10228 = vmatmul.mubr.bf16.gmra.mrb[0].mxu0 %v10021
  %v10229 = vpop.f32.mrb[0].mxu0
  %v10230 = vadd.f32 %v9993, %v10229
  %v10231 = vpop.f32.mrb[0].mxu0
  %v10232 = vpop.f32.mrb[0].mxu0
  %v10233 = vadd.f32 %v9993, %v10232
  %v10234 = vpop.f32.mrb[0].mxu0
  %10235 = vmatprep.mubr.bf16.mxu0 0
  %10236 = vmatmul.mubr.bf16.gmra.mrb[0].mxu0 %v10023
  %v10237 = vpop.f32.mrb[0].mxu0
  %v10238 = vadd.f32 %v9993, %v10237
  %v10239 = vpop.f32.mrb[0].mxu0
  %v10240 = vpop.f32.mrb[0].mxu0
  %v10241 = vadd.f32 %v9993, %v10240
  %v10242 = vpop.f32.mrb[0].mxu0
  %10243 = vmatprep.mubr.bf16.mxu0 0
  %10244 = vmatmul.mubr.bf16.gmra.mrb[0].mxu0 %v10025
  %v10245 = vpop.f32.mrb[0].mxu0
  %v10246 = vadd.f32 %v9993, %v10245
  %v10247 = vpop.f32.mrb[0].mxu0
  %v10248 = vpop.f32.mrb[0].mxu0
  %v10249 = vadd.f32 %v9993, %v10248
  %v10250 = vpop.f32.mrb[0].mxu0
  %10251 = vmatprep.mubr.bf16.mxu0 0
  %10252 = vmatmul.mubr.bf16.gmra.mrb[0].mxu0 %v10027
  %v10253 = vpop.f32.mrb[0].mxu0
  %v10254 = vadd.f32 %v9993, %v10253
  %v10255 = vpop.f32.mrb[0].mxu0
  %v10256 = vpop.f32.mrb[0].mxu0
  %v10257 = vadd.f32 %v9993, %v10256
  %v10258 = vpop.f32.mrb[0].mxu0
  %10259 = vmatprep.mubr.bf16.mxu0 0
  %10260 = vmatmul.mubr.bf16.gmra.mrb[0].mxu0 %v10029
  %v10261 = vpop.f32.mrb[0].mxu0
  %v10262 = vadd.f32 %v9993, %v10261
  %v10263 = vpop.f32.mrb[0].mxu0
  %v10264 = vpop.f32.mrb[0].mxu0
  %v10265 = vadd.f32 %v9993, %v10264
  %v10266 = vpop.f32.mrb[0].mxu0
  %10267 = vmatprep.mubr.bf16.mxu0 0
  %10268 = vmatmul.mubr.bf16.gmra.mrb[0].mxu0 %v10031
  %v10269 = vpop.f32.mrb[0].mxu0
  %v10270 = vadd.f32 %v9993, %v10269
  %v10271 = vpop.f32.mrb[0].mxu0
  %v10272 = vpop.f32.mrb[0].mxu0
  %v10273 = vadd.f32 %v9993, %v10272
  %v10274 = vpop.f32.mrb[0].mxu0
  %10275 = vmatprep.mubr.bf16.mxu0 0
  %10276 = vmatmul.mubr.bf16.gmra.mrb[0].mxu0 %v10033
  %v10277 = vpop.f32.mrb[0].mxu0
  %v10278 = vadd.f32 %v9993, %v10277
  %v10279 = vpop.f32.mrb[0].mxu0
  %v10280 = vpop.f32.mrb[0].mxu0
  %v10281 = vadd.f32 %v9993, %v10280
  %v10282 = vpop.f32.mrb[0].mxu0
  %10283 = vmatprep.mubr.bf16.mxu0 0
  %10284 = vmatmul.mubr.bf16.gmra.mrb[0].mxu0 %v10035
  %v10285 = vpop.f32.mrb[0].mxu0
  %v10286 = vadd.f32 %v9993, %v10285
  %v10287 = vpop.f32.mrb[0].mxu0
  %v10288 = vpop.f32.mrb[0].mxu0
  %v10289 = vadd.f32 %v9993, %v10288
  %v10290 = vpop.f32.mrb[0].mxu0
  %10291 = vmatprep.mubr.bf16.mxu0 0
  %10292 = vmatmul.mubr.bf16.gmra.mrb[0].mxu0 %v10037
  %v10293 = vpop.f32.mrb[0].mxu0
  %v10294 = vadd.f32 %v9993, %v10293
  %v10295 = vpop.f32.mrb[0].mxu0
  %v10296 = vpop.f32.mrb[0].mxu0
  %v10297 = vadd.f32 %v9993, %v10296
  %v10298 = vpop.f32.mrb[0].mxu0
  %10299 = vmatprep.mubr.bf16.mxu0 0
  %10300 = vmatmul.mubr.bf16.gmra.mrb[0].mxu0 %v10039
  %v10301 = vpop.f32.mrb[0].mxu0
  %v10302 = vadd.f32 %v9993, %v10301
  %v10303 = vpop.f32.mrb[0].mxu0
  %v10304 = vpop.f32.mrb[0].mxu0
  %v10305 = vadd.f32 %v9993, %v10304
  %v10306 = vpop.f32.mrb[0].mxu0
  %10307 = vmatprep.mubr.bf16.mxu0 0
  %10308 = vmatmul.mubr.bf16.gmra.mrb[0].mxu0 %v10041
  %v10309 = vpop.f32.mrb[0].mxu0
  %v10310 = vadd.f32 %v9993, %v10309
  %v10311 = vpop.f32.mrb[0].mxu0
  %v10312 = vpop.f32.mrb[0].mxu0
  %v10313 = vadd.f32 %v9993, %v10312
  %v10314 = vpop.f32.mrb[0].mxu0
  %10315 = vmatprep.mubr.bf16.mxu0 0
  %10316 = vmatmul.mubr.bf16.gmra.mrb[0].mxu0 %v10043
  %v10317 = vpop.f32.mrb[0].mxu0
  %v10318 = vadd.f32 %v9993, %v10317
  %v10319 = vpop.f32.mrb[0].mxu0
  %v10320 = vpop.f32.mrb[0].mxu0
  %v10321 = vadd.f32 %v9993, %v10320
  %v10322 = vpop.f32.mrb[0].mxu0
  %10323 = vmatprep.mubr.bf16.mxu0 0
  %10324 = vmatmul.mubr.bf16.gmra.mrb[0].mxu0 %v10045
  %v10325 = vpop.f32.mrb[0].mxu0
  %v10326 = vadd.f32 %v9993, %v10325
  %v10327 = vpop.f32.mrb[0].mxu0
  %v10328 = vpop.f32.mrb[0].mxu0
  %v10329 = vadd.f32 %v9993, %v10328
  %v10330 = vpop.f32.mrb[0].mxu0
  %10331 = vmatprep.mubr.bf16.mxu0 0
  %10332 = vmatmul.mubr.bf16.gmra.mrb[0].mxu0 %v10047
  %v10333 = vpop.f32.mrb[0].mxu0
  %v10334 = vadd.f32 %v9993, %v10333
  %v10335 = vpop.f32.mrb[0].mxu0
  %v10336 = vpop.f32.mrb[0].mxu0
  %v10337 = vadd.f32 %v9993, %v10336
  %v10338 = vpop.f32.mrb[0].mxu0
  %10339 = vmatprep.mubr.bf16.mxu0 0
  %10340 = vmatmul.mubr.bf16.gmra.mrb[0].mxu0 %v10049
  %v10341 = vpop.f32.mrb[0].mxu0
  %v10342 = vadd.f32 %v9993, %v10341
  %v10343 = vpop.f32.mrb[0].mxu0
  %v10344 = vpop.f32.mrb[0].mxu0
  %v10345 = vadd.f32 %v9993, %v10344
  %v10346 = vpop.f32.mrb[0].mxu0
  %10347 = vmatprep.mubr.bf16.mxu0 0
  %10348 = vmatmul.mubr.bf16.gmra.mrb[0].mxu0 %v10051
  %v10349 = vpop.f32.mrb[0].mxu0
  %v10350 = vadd.f32 %v9993, %v10349
  %v10351 = vpop.f32.mrb[0].mxu0
  %v10352 = vpop.f32.mrb[0].mxu0
  %v10353 = vadd.f32 %v9993, %v10352
  %v10354 = vpop.f32.mrb[0].mxu0
  %10355 = vmatprep.mubr.bf16.mxu0 0
  %10356 = vmatmul.mubr.bf16.gmra.mrb[0].mxu0 %v10053
  %v10357 = vpop.f32.mrb[0].mxu0
  %v10358 = vadd.f32 %v9993, %v10357
  %v10359 = vpop.f32.mrb[0].mxu0
  %v10360 = vpop.f32.mrb[0].mxu0
  %v10361 = vadd.f32 %v9993, %v10360
  %v10362 = vpop.f32.mrb[0].mxu0
  %10363 = vmatprep.mubr.bf16.mxu0 0
  %10364 = vmatmul.mubr.bf16.gmra.mrb[0].mxu0 %v10055
  %v10365 = vpop.f32.mrb[0].mxu0
  %v10366 = vadd.f32 %v9993, %v10365
  %v10367 = vpop.f32.mrb[0].mxu0
  %v10368 = vpop.f32.mrb[0].mxu0
  %v10369 = vadd.f32 %v9993, %v10368
  %v10370 = vpop.f32.mrb[0].mxu0
  %10371 = vmatprep.mubr.bf16.mxu0 0
  %10372 = vmatmul.mubr.bf16.gmra.mrb[0].mxu0 %v10057
  %v10373 = vpop.f32.mrb[0].mxu0
  %v10374 = vadd.f32 %v9993, %v10373
  %v10375 = vpop.f32.mrb[0].mxu0
  %v10376 = vpop.f32.mrb[0].mxu0
  %v10377 = vadd.f32 %v9993, %v10376
  %v10378 = vpop.f32.mrb[0].mxu0
  %10379 = vmatprep.mubr.bf16.mxu0 0
  %10380 = vmatmul.mubr.bf16.gmra.mrb[0].mxu0 %v10059
  %v10381 = vpop.f32.mrb[0].mxu0
  %v10382 = vadd.f32 %v9993, %v10381
  %v10383 = vpop.f32.mrb[0].mxu0
  %v10384 = vpop.f32.mrb[0].mxu0
  %v10385 = vadd.f32 %v9993, %v10384
  %v10386 = vpop.f32.mrb[0].mxu0
  %10387 = vmatprep.mubr.bf16.mxu0 0
  %10388 = vmatmul.mubr.bf16.gmra.mrb[0].mxu0 %v10061
  %v10389 = vpop.f32.mrb[0].mxu0
  %v10390 = vadd.f32 %v9993, %v10389
  %v10391 = vpop.f32.mrb[0].mxu0
  %v10392 = vpop.f32.mrb[0].mxu0
  %v10393 = vadd.f32 %v9993, %v10392
  %v10394 = vpop.f32.mrb[0].mxu0
  %10395 = vmatprep.mubr.bf16.mxu0 0
  %10396 = vmatmul.mubr.bf16.gmra.mrb[0].mxu0 %v10063
  %v10397 = vpop.f32.mrb[0].mxu0
  %v10398 = vadd.f32 %v9993, %v10397
  %v10399 = vpop.f32.mrb[0].mxu0
  %v10400 = vpop.f32.mrb[0].mxu0
  %v10401 = vadd.f32 %v9993, %v10400
  %v10402 = vpop.f32.mrb[0].mxu0
  %10403 = vmatprep.mubr.bf16.mxu0 0
  %10404 = vmatmul.mubr.bf16.gmra.mrb[0].mxu0 %v10065
  %v10405 = vpop.f32.mrb[0].mxu0
  %v10406 = vadd.f32 %v9993, %v10405
  %v10407 = vpop.f32.mrb[0].mxu0
  %v10408 = vpop.f32.mrb[0].mxu0
  %v10409 = vadd.f32 %v9993, %v10408
  %v10410 = vpop.f32.mrb[0].mxu0
  %10411 = vmatprep.mubr.bf16.mxu0 0
  %10412 = vmatmul.mubr.bf16.gmra.mrb[0].mxu0 %v10067
  %v10413 = vpop.f32.mrb[0].mxu0
  %v10414 = vadd.f32 %v9993, %v10413
  %v10415 = vpop.f32.mrb[0].mxu0
  %v10416 = vpop.f32.mrb[0].mxu0
  %v10417 = vadd.f32 %v9993, %v10416
  %v10418 = vpop.f32.mrb[0].mxu0
  %10419 = vmatprep.mubr.bf16.mxu0 0
  %10420 = vmatmul.mubr.bf16.gmra.mrb[0].mxu0 %v10069
  %v10421 = vpop.f32.mrb[0].mxu0
  %v10422 = vadd.f32 %v9993, %v10421
  %v10423 = vpop.f32.mrb[0].mxu0
  %v10424 = vpop.f32.mrb[0].mxu0
  %v10425 = vadd.f32 %v9993, %v10424
  %v10426 = vpop.f32.mrb[0].mxu0
  %10427 = vmatprep.mubr.bf16.mxu0 0
  %10428 = vmatmul.mubr.bf16.gmra.mrb[0].mxu0 %v10071
  %v10429 = vpop.f32.mrb[0].mxu0
  %v10430 = vadd.f32 %v9993, %v10429
  %v10431 = vpop.f32.mrb[0].mxu0
  %v10432 = vpop.f32.mrb[0].mxu0
  %v10433 = vadd.f32 %v9993, %v10432
  %v10434 = vpop.f32.mrb[0].mxu0
  %10435 = vmatprep.mubr.bf16.mxu0 0
  %10436 = vmatmul.mubr.bf16.gmra.mrb[0].mxu0 %v10073
  %v10437 = vpop.f32.mrb[0].mxu0
  %v10438 = vadd.f32 %v9993, %v10437
  %v10439 = vpop.f32.mrb[0].mxu0
  %v10440 = vpop.f32.mrb[0].mxu0
  %v10441 = vadd.f32 %v9993, %v10440
  %v10442 = vpop.f32.mrb[0].mxu0
  %10443 = vmatprep.mubr.bf16.mxu0 0
  %10444 = vmatmul.mubr.bf16.gmra.mrb[0].mxu0 %v10075
  %v10445 = vpop.f32.mrb[0].mxu0
  %v10446 = vadd.f32 %v9993, %v10445
  %v10447 = vpop.f32.mrb[0].mxu0
  %v10448 = vpop.f32.mrb[0].mxu0
  %v10449 = vadd.f32 %v9993, %v10448
  %v10450 = vpop.f32.mrb[0].mxu0
  %10451 = vmatprep.mubr.bf16.mxu0 0
  %10452 = vmatmul.mubr.bf16.gmra.mrb[0].mxu0 %v10077
  %v10453 = vpop.f32.mrb[0].mxu0
  %v10454 = vadd.f32 %v9993, %v10453
  %v10455 = vpop.f32.mrb[0].mxu0
  %v10456 = vpop.f32.mrb[0].mxu0
  %v10457 = vadd.f32 %v9993, %v10456
  %v10458 = vpop.f32.mrb[0].mxu0
  %10459 = vmatprep.mubr.bf16.mxu0 0
  %10460 = vmatmul.mubr.bf16.gmra.mrb[0].mxu0 %v10079
  %v10461 = vpop.f32.mrb[0].mxu0
  %v10462 = vadd.f32 %v9993, %v10461
  %v10463 = vpop.f32.mrb[0].mxu0
  %v10464 = vpop.f32.mrb[0].mxu0
  %v10465 = vadd.f32 %v9993, %v10464
  %v10466 = vpop.f32.mrb[0].mxu0
  %10467 = vmatprep.mubr.bf16.mxu0 0
  %10468 = vmatmul.mubr.bf16.gmra.mrb[0].mxu0 %v10081
  %v10469 = vpop.f32.mrb[0].mxu0
  %v10470 = vadd.f32 %v9993, %v10469
  %v10471 = vpop.f32.mrb[0].mxu0
  %v10472 = vpop.f32.mrb[0].mxu0
  %v10473 = vadd.f32 %v9993, %v10472
  %v10474 = vpop.f32.mrb[0].mxu0
  %10475 = vmatprep.mubr.bf16.mxu0 0
  %10476 = vmatmul.mubr.bf16.gmra.mrb[0].mxu0 %v10083
  %v10477 = vpop.f32.mrb[0].mxu0
  %v10478 = vadd.f32 %v9993, %v10477
  %v10479 = vpop.f32.mrb[0].mxu0
  %v10480 = vpop.f32.mrb[0].mxu0
  %v10481 = vadd.f32 %v9993, %v10480
  %v10482 = vpop.f32.mrb[0].mxu0
  %10483 = vmatprep.mubr.bf16.mxu0 0
  %10484 = vmatmul.mubr.bf16.gmra.mrb[0].mxu0 %v10085
  %v10485 = vpop.f32.mrb[0].mxu0
  %v10486 = vadd.f32 %v9993, %v10485
  %v10487 = vpop.f32.mrb[0].mxu0
  %v10488 = vpop.f32.mrb[0].mxu0
  %v10489 = vadd.f32 %v9993, %v10488
  %v10490 = vpop.f32.mrb[0].mxu0
  %10491 = vmatprep.mubr.bf16.mxu0 0
  %10492 = vmatmul.mubr.bf16.gmra.mrb[0].mxu0 %v10087
  %v10493 = vpop.f32.mrb[0].mxu0
  %v10494 = vadd.f32 %v9993, %v10493
  %v10495 = vpop.f32.mrb[0].mxu0
  %v10496 = vpop.f32.mrb[0].mxu0
  %v10497 = vadd.f32 %v9993, %v10496
  %v10498 = vpop.f32.mrb[0].mxu0
  %10499 = vmatprep.mubr.bf16.mxu0 0
  %10500 = vmatmul.mubr.bf16.gmra.mrb[0].mxu0 %v10089
  %v10501 = vpop.f32.mrb[0].mxu0
  %v10502 = vadd.f32 %v9993, %v10501
  %v10503 = vpop.f32.mrb[0].mxu0
  %v10504 = vpop.f32.mrb[0].mxu0
  %v10505 = vadd.f32 %v9993, %v10504
  %v10506 = vpop.f32.mrb[0].mxu0
  %10507 = vmatprep.mubr.bf16.mxu0 0
  %10508 = vmatmul.mubr.bf16.gmra.mrb[0].mxu0 %v10091
  %v10509 = vpop.f32.mrb[0].mxu0
  %v10510 = vadd.f32 %v9993, %v10509
  %v10511 = vpop.f32.mrb[0].mxu0
  %v10512 = vpop.f32.mrb[0].mxu0
  %v10513 = vadd.f32 %v9993, %v10512
  %v10514 = vpop.f32.mrb[0].mxu0
  %10515 = vmatprep.mubr.bf16.mxu0 0
  %10516 = vmatmul.mubr.bf16.gmra.mrb[0].mxu0 %v10093
  %v10517 = vpop.f32.mrb[0].mxu0
  %v10518 = vadd.f32 %v9993, %v10517
  %v10519 = vpop.f32.mrb[0].mxu0
  %v10520 = vpop.f32.mrb[0].mxu0
  %v10521 = vadd.f32 %v9993, %v10520
  %v10522 = vpop.f32.mrb[0].mxu0
  %10523 = vmatprep.mubr.bf16.mxu0 0
  %10524 = vmatmul.mubr.bf16.gmra.mrb[0].mxu0 %v10095
  %v10525 = vpop.f32.mrb[0].mxu0
  %v10526 = vadd.f32 %v9993, %v10525
  %v10527 = vpop.f32.mrb[0].mxu0
  %v10528 = vpop.f32.mrb[0].mxu0
  %v10529 = vadd.f32 %v9993, %v10528
  %v10530 = vpop.f32.mrb[0].mxu0
  %10531 = vmatprep.mubr.bf16.mxu0 0
  %10532 = vmatmul.mubr.bf16.gmra.mrb[0].mxu0 %v10097
  %v10533 = vpop.f32.mrb[0].mxu0
  %v10534 = vadd.f32 %v9993, %v10533
  %v10535 = vpop.f32.mrb[0].mxu0
  %v10536 = vpop.f32.mrb[0].mxu0
  %v10537 = vadd.f32 %v9993, %v10536
  %v10538 = vpop.f32.mrb[0].mxu0
  %10539 = vmatprep.mubr.bf16.mxu0 0
  %10540 = vmatmul.mubr.bf16.gmra.mrb[0].mxu0 %v10099
  %v10541 = vpop.f32.mrb[0].mxu0
  %v10542 = vadd.f32 %v9993, %v10541
  %v10543 = vpop.f32.mrb[0].mxu0
  %v10544 = vpop.f32.mrb[0].mxu0
  %v10545 = vadd.f32 %v9993, %v10544
  %v10546 = vpop.f32.mrb[0].mxu0
  %10547 = vmatprep.mubr.bf16.mxu0 0
  %10548 = vmatmul.mubr.bf16.gmra.mrb[0].mxu0 %v10101
  %v10549 = vpop.f32.mrb[0].mxu0
  %v10550 = vadd.f32 %v9993, %v10549
  %v10551 = vpop.f32.mrb[0].mxu0
  %v10552 = vpop.f32.mrb[0].mxu0
  %v10553 = vadd.f32 %v9993, %v10552
  %v10554 = vpop.f32.mrb[0].mxu0
  %10555 = vmatprep.mubr.bf16.mxu0 0
  %10556 = vmatmul.mubr.bf16.gmra.mrb[0].mxu0 %v10103
  %v10557 = vpop.f32.mrb[0].mxu0
  %v10558 = vadd.f32 %v9993, %v10557
  %v10559 = vpop.f32.mrb[0].mxu0
  %v10560 = vpop.f32.mrb[0].mxu0
  %v10561 = vadd.f32 %v9993, %v10560
  %v10562 = vpop.f32.mrb[0].mxu0
  %10563 = vmatprep.mubr.bf16.mxu0 0
  %10564 = vmatmul.mubr.bf16.gmra.mrb[0].mxu0 %v10105
  %v10565 = vpop.f32.mrb[0].mxu0
  %v10566 = vadd.f32 %v9993, %v10565
  %v10567 = vpop.f32.mrb[0].mxu0
  %v10568 = vpop.f32.mrb[0].mxu0
  %v10569 = vadd.f32 %v9993, %v10568
  %v10570 = vpop.f32.mrb[0].mxu0
  %10571 = vmatprep.mubr.bf16.mxu0 0
  %10572 = vmatmul.mubr.bf16.gmra.mrb[0].mxu0 %v10107
  %v10573 = vpop.f32.mrb[0].mxu0
  %v10574 = vadd.f32 %v9993, %v10573
  %v10575 = vpop.f32.mrb[0].mxu0
  %v10576 = vpop.f32.mrb[0].mxu0
  %v10577 = vadd.f32 %v9993, %v10576
  %v10578 = vpop.f32.mrb[0].mxu0
  %10579 = vmatprep.mubr.bf16.mxu0 0
  %10580 = vmatmul.mubr.bf16.gmra.mrb[0].mxu0 %v10109
  %v10581 = vpop.f32.mrb[0].mxu0
  %v10582 = vadd.f32 %v9993, %v10581
  %v10583 = vpop.f32.mrb[0].mxu0
  %v10584 = vpop.f32.mrb[0].mxu0
  %v10585 = vadd.f32 %v9993, %v10584
  %v10586 = vpop.f32.mrb[0].mxu0
  %10587 = vmatprep.mubr.bf16.mxu0 0
  %10588 = vmatmul.mubr.bf16.gmra.mrb[0].mxu0 %v10111
  %v10589 = vpop.f32.mrb[0].mxu0
  %v10590 = vadd.f32 %v9993, %v10589
  %v10591 = vpop.f32.mrb[0].mxu0
  %v10592 = vpop.f32.mrb[0].mxu0
  %v10593 = vadd.f32 %v9993, %v10592
  %v10594 = vpop.f32.mrb[0].mxu0
  %10595 = vmatprep.mubr.bf16.mxu0 0
  %10596 = vmatmul.mubr.bf16.gmra.mrb[0].mxu0 %v10113
  %v10597 = vpop.f32.mrb[0].mxu0
  %v10598 = vadd.f32 %v9993, %v10597
  %v10599 = vpop.f32.mrb[0].mxu0
  %v10600 = vpop.f32.mrb[0].mxu0
  %v10601 = vadd.f32 %v9993, %v10600
  %v10602 = vpop.f32.mrb[0].mxu0
  %10603 = vdwg.mxu0
  %v10604 = vld [vmem:[%s3] sm:$0xff]
  %v10605 = vld [vmem:[%s3 + $0x8] sm:$0xff]
  %v10606 = vld [vmem:[%s3 + $0x10] sm:$0xff]
  %v10607 = vld [vmem:[%s3 + $0x18] sm:$0xff]
  %v10608 = vld [vmem:[%s3 + $0x20] sm:$0xff]
  %v10609 = vld [vmem:[%s3 + $0x28] sm:$0xff]
  %v10610 = vld [vmem:[%s3 + $0x30] sm:$0xff]
  %v10611 = vld [vmem:[%s3 + $0x38] sm:$0xff]
  %v10612 = vld [vmem:[%s3 + $0x40] sm:$0xff]
  %v10613 = vld [vmem:[%s3 + $0x48] sm:$0xff]
  %v10614 = vld [vmem:[%s3 + $0x50] sm:$0xff]
  %v10615 = vld [vmem:[%s3 + $0x58] sm:$0xff]
  %v10616 = vld [vmem:[%s3 + $0x60] sm:$0xff]
  %v10617 = vld [vmem:[%s3 + $0x68] sm:$0xff]
  %v10618 = vld [vmem:[%s3 + $0x70] sm:$0xff]
  %v10619 = vld [vmem:[%s3 + $0x78] sm:$0xff]
  %v10620 = vld [vmem:[%s3 + $0x80] sm:$0xff]
  %v10621 = vld [vmem:[%s3 + $0x88] sm:$0xff]
  %v10622 = vld [vmem:[%s3 + $0x90] sm:$0xff]
  %v10623 = vld [vmem:[%s3 + $0x98] sm:$0xff]
  %v10624 = vld [vmem:[%s3 + $0xa0] sm:$0xff]
  %v10625 = vld [vmem:[%s3 + $0xa8] sm:$0xff]
  %v10626 = vld [vmem:[%s3 + $0xb0] sm:$0xff]
  %v10627 = vld [vmem:[%s3 + $0xb8] sm:$0xff]
  %v10628 = vld [vmem:[%s3 + $0xc0] sm:$0xff]
  %v10629 = vld [vmem:[%s3 + $0xc8] sm:$0xff]
  %v10630 = vld [vmem:[%s3 + $0xd0] sm:$0xff]
  %v10631 = vld [vmem:[%s3 + $0xd8] sm:$0xff]
  %v10632 = vld [vmem:[%s3 + $0xe0] sm:$0xff]
  %v10633 = vld [vmem:[%s3 + $0xe8] sm:$0xff]
  %v10634 = vld [vmem:[%s3 + $0xf0] sm:$0xff]
  %v10635 = vld [vmem:[%s3 + $0xf8] sm:$0xff]
  %v10636 = vld [vmem:[%s3 + $0x100] sm:$0xff]
  %v10637 = vld [vmem:[%s3 + $0x108] sm:$0xff]
  %v10638 = vld [vmem:[%s3 + $0x110] sm:$0xff]
  %v10639 = vld [vmem:[%s3 + $0x118] sm:$0xff]
  %v10640 = vld [vmem:[%s3 + $0x120] sm:$0xff]
  %v10641 = vld [vmem:[%s3 + $0x128] sm:$0xff]
  %v10642 = vld [vmem:[%s3 + $0x130] sm:$0xff]
  %v10643 = vld [vmem:[%s3 + $0x138] sm:$0xff]
  %v10644 = vld [vmem:[%s3 + $0x140] sm:$0xff]
  %v10645 = vld [vmem:[%s3 + $0x148] sm:$0xff]
  %v10646 = vld [vmem:[%s3 + $0x150] sm:$0xff]
  %v10647 = vld [vmem:[%s3 + $0x158] sm:$0xff]
  %v10648 = vld [vmem:[%s3 + $0x160] sm:$0xff]
  %v10649 = vld [vmem:[%s3 + $0x168] sm:$0xff]
  %v10650 = vld [vmem:[%s3 + $0x170] sm:$0xff]
  %v10651 = vld [vmem:[%s3 + $0x178] sm:$0xff]
  %v10652 = vld [vmem:[%s3 + $0x180] sm:$0xff]
  %v10653 = vld [vmem:[%s3 + $0x188] sm:$0xff]
  %v10654 = vld [vmem:[%s3 + $0x190] sm:$0xff]
  %v10655 = vld [vmem:[%s3 + $0x198] sm:$0xff]
  %v10656 = vld [vmem:[%s3 + $0x1a0] sm:$0xff]
  %v10657 = vld [vmem:[%s3 + $0x1a8] sm:$0xff]
  %v10658 = vld [vmem:[%s3 + $0x1b0] sm:$0xff]
  %v10659 = vld [vmem:[%s3 + $0x1b8] sm:$0xff]
  %v10660 = vld [vmem:[%s3 + $0x1c0] sm:$0xff]
  %v10661 = vld [vmem:[%s3 + $0x1c8] sm:$0xff]
  %v10662 = vld [vmem:[%s3 + $0x1d0] sm:$0xff]
  %v10663 = vld [vmem:[%s3 + $0x1d8] sm:$0xff]
  %v10664 = vld [vmem:[%s3 + $0x1e0] sm:$0xff]
  %v10665 = vld [vmem:[%s3 + $0x1e8] sm:$0xff]
  %v10666 = vld [vmem:[%s3 + $0x1f0] sm:$0xff]
  %v10667 = vld [vmem:[%s3 + $0x1f8] sm:$0xff]
  %v10668 = vld [vmem:[%s3 + $0x200] sm:$0xff]
  %v10669 = vld [vmem:[%s3 + $0x208] sm:$0xff]
  %v10670 = vld [vmem:[%s3 + $0x210] sm:$0xff]
  %v10671 = vld [vmem:[%s3 + $0x218] sm:$0xff]
  %v10672 = vld [vmem:[%s3 + $0x220] sm:$0xff]
  %v10673 = vld [vmem:[%s3 + $0x228] sm:$0xff]
  %v10674 = vld [vmem:[%s3 + $0x230] sm:$0xff]
  %v10675 = vld [vmem:[%s3 + $0x238] sm:$0xff]
  %v10676 = vld [vmem:[%s3 + $0x240] sm:$0xff]
  %v10677 = vld [vmem:[%s3 + $0x248] sm:$0xff]
  %v10678 = vld [vmem:[%s3 + $0x250] sm:$0xff]
  %v10679 = vld [vmem:[%s3 + $0x258] sm:$0xff]
  %v10680 = vld [vmem:[%s3 + $0x260] sm:$0xff]
  %v10681 = vld [vmem:[%s3 + $0x268] sm:$0xff]
  %v10682 = vld [vmem:[%s3 + $0x270] sm:$0xff]
  %v10683 = vld [vmem:[%s3 + $0x278] sm:$0xff]
  %v10684 = vld [vmem:[%s3 + $0x280] sm:$0xff]
  %v10685 = vld [vmem:[%s3 + $0x288] sm:$0xff]
  %v10686 = vld [vmem:[%s3 + $0x290] sm:$0xff]
  %v10687 = vld [vmem:[%s3 + $0x298] sm:$0xff]
  %v10688 = vld [vmem:[%s3 + $0x2a0] sm:$0xff]
  %v10689 = vld [vmem:[%s3 + $0x2a8] sm:$0xff]
  %v10690 = vld [vmem:[%s3 + $0x2b0] sm:$0xff]
  %v10691 = vld [vmem:[%s3 + $0x2b8] sm:$0xff]
  %v10692 = vld [vmem:[%s3 + $0x2c0] sm:$0xff]
  %v10693 = vld [vmem:[%s3 + $0x2c8] sm:$0xff]
  %v10694 = vld [vmem:[%s3 + $0x2d0] sm:$0xff]
  %v10695 = vld [vmem:[%s3 + $0x2d8] sm:$0xff]
  %v10696 = vld [vmem:[%s3 + $0x2e0] sm:$0xff]
  %v10697 = vld [vmem:[%s3 + $0x2e8] sm:$0xff]
  %v10698 = vld [vmem:[%s3 + $0x2f0] sm:$0xff]
  %v10699 = vld [vmem:[%s3 + $0x2f8] sm:$0xff]
  %v10700 = vld [vmem:[%s3 + $0x300] sm:$0xff]
  %v10701 = vld [vmem:[%s3 + $0x308] sm:$0xff]
  %v10702 = vld [vmem:[%s3 + $0x310] sm:$0xff]
  %v10703 = vld [vmem:[%s3 + $0x318] sm:$0xff]
  %v10704 = vld [vmem:[%s3 + $0x320] sm:$0xff]
  %v10705 = vld [vmem:[%s3 + $0x328] sm:$0xff]
  %v10706 = vld [vmem:[%s3 + $0x330] sm:$0xff]
  %v10707 = vld [vmem:[%s3 + $0x338] sm:$0xff]
  %v10708 = vld [vmem:[%s3 + $0x340] sm:$0xff]
  %v10709 = vld [vmem:[%s3 + $0x348] sm:$0xff]
  %v10710 = vld [vmem:[%s3 + $0x350] sm:$0xff]
  %v10711 = vld [vmem:[%s3 + $0x358] sm:$0xff]
  %v10712 = vld [vmem:[%s3 + $0x360] sm:$0xff]
  %v10713 = vld [vmem:[%s3 + $0x368] sm:$0xff]
  %v10714 = vld [vmem:[%s3 + $0x370] sm:$0xff]
  %v10715 = vld [vmem:[%s3 + $0x378] sm:$0xff]
  %v10716 = vld [vmem:[%s3 + $0x380] sm:$0xff]
  %v10717 = vld [vmem:[%s3 + $0x388] sm:$0x3f]
  %10719 = vset.pattern.permute.xlu0 0
  %10720 = vperm.xlu0 %10719, %v10604
  %v10721 = vpop.permute.xlu0 %10720
  %10724 = vset.pattern.permute.xlu0 0
  %10725 = vperm.xlu0 %10724, %v10605
  %v10726 = vpop.permute.xlu0 %10725
  %10729 = vset.pattern.permute.xlu0 0
  %10730 = vperm.xlu0 %10729, %v10606
  %v10731 = vpop.permute.xlu0 %10730
  %10734 = vset.pattern.permute.xlu0 0
  %10735 = vperm.xlu0 %10734, %v10607
  %v10736 = vpop.permute.xlu0 %10735
  %10739 = vset.pattern.permute.xlu0 0
  %10740 = vperm.xlu0 %10739, %v10608
  %v10741 = vpop.permute.xlu0 %10740
  %10744 = vset.pattern.permute.xlu0 0
  %10745 = vperm.xlu0 %10744, %v10609
  %v10746 = vpop.permute.xlu0 %10745
  %10749 = vset.pattern.permute.xlu0 0
  %10750 = vperm.xlu0 %10749, %v10610
  %v10751 = vpop.permute.xlu0 %10750
  %10754 = vset.pattern.permute.xlu0 0
  %10755 = vperm.xlu0 %10754, %v10611
  %v10756 = vpop.permute.xlu0 %10755
  %10759 = vset.pattern.permute.xlu0 0
  %10760 = vperm.xlu0 %10759, %v10612
  %v10761 = vpop.permute.xlu0 %10760
  %10764 = vset.pattern.permute.xlu0 0
  %10765 = vperm.xlu0 %10764, %v10613
  %v10766 = vpop.permute.xlu0 %10765
  %10769 = vset.pattern.permute.xlu0 0
  %10770 = vperm.xlu0 %10769, %v10614
  %v10771 = vpop.permute.xlu0 %10770
  %10774 = vset.pattern.permute.xlu0 0
  %10775 = vperm.xlu0 %10774, %v10615
  %v10776 = vpop.permute.xlu0 %10775
  %10779 = vset.pattern.permute.xlu0 0
  %10780 = vperm.xlu0 %10779, %v10616
  %v10781 = vpop.permute.xlu0 %10780
  %10784 = vset.pattern.permute.xlu0 0
  %10785 = vperm.xlu0 %10784, %v10617
  %v10786 = vpop.permute.xlu0 %10785
  %10789 = vset.pattern.permute.xlu0 0
  %10790 = vperm.xlu0 %10789, %v10618
  %v10791 = vpop.permute.xlu0 %10790
  %10794 = vset.pattern.permute.xlu0 0
  %10795 = vperm.xlu0 %10794, %v10619
  %v10796 = vpop.permute.xlu0 %10795
  %10799 = vset.pattern.permute.xlu0 0
  %10800 = vperm.xlu0 %10799, %v10620
  %v10801 = vpop.permute.xlu0 %10800
  %10804 = vset.pattern.permute.xlu0 0
  %10805 = vperm.xlu0 %10804, %v10621
  %v10806 = vpop.permute.xlu0 %10805
  %10809 = vset.pattern.permute.xlu0 0
  %10810 = vperm.xlu0 %10809, %v10622
  %v10811 = vpop.permute.xlu0 %10810
  %10814 = vset.pattern.permute.xlu0 0
  %10815 = vperm.xlu0 %10814, %v10623
  %v10816 = vpop.permute.xlu0 %10815
  %10819 = vset.pattern.permute.xlu0 0
  %10820 = vperm.xlu0 %10819, %v10624
  %v10821 = vpop.permute.xlu0 %10820
  %10824 = vset.pattern.permute.xlu0 0
  %10825 = vperm.xlu0 %10824, %v10625
  %v10826 = vpop.permute.xlu0 %10825
  %10829 = vset.pattern.permute.xlu0 0
  %10830 = vperm.xlu0 %10829, %v10626
  %v10831 = vpop.permute.xlu0 %10830
  %10834 = vset.pattern.permute.xlu0 0
  %10835 = vperm.xlu0 %10834, %v10627
  %v10836 = vpop.permute.xlu0 %10835
  %10839 = vset.pattern.permute.xlu0 0
  %10840 = vperm.xlu0 %10839, %v10628
  %v10841 = vpop.permute.xlu0 %10840
  %10844 = vset.pattern.permute.xlu0 0
  %10845 = vperm.xlu0 %10844, %v10629
  %v10846 = vpop.permute.xlu0 %10845
  %10849 = vset.pattern.permute.xlu0 0
  %10850 = vperm.xlu0 %10849, %v10630
  %v10851 = vpop.permute.xlu0 %10850
  %10854 = vset.pattern.permute.xlu0 0
  %10855 = vperm.xlu0 %10854, %v10631
  %v10856 = vpop.permute.xlu0 %10855
  %10859 = vset.pattern.permute.xlu0 0
  %10860 = vperm.xlu0 %10859, %v10632
  %v10861 = vpop.permute.xlu0 %10860
  %10864 = vset.pattern.permute.xlu0 0
  %10865 = vperm.xlu0 %10864, %v10633
  %v10866 = vpop.permute.xlu0 %10865
  %10869 = vset.pattern.permute.xlu0 0
  %10870 = vperm.xlu0 %10869, %v10634
  %v10871 = vpop.permute.xlu0 %10870
  %10874 = vset.pattern.permute.xlu0 0
  %10875 = vperm.xlu0 %10874, %v10635
  %v10876 = vpop.permute.xlu0 %10875
  %10879 = vset.pattern.permute.xlu0 0
  %10880 = vperm.xlu0 %10879, %v10636
  %v10881 = vpop.permute.xlu0 %10880
  %10884 = vset.pattern.permute.xlu0 0
  %10885 = vperm.xlu0 %10884, %v10637
  %v10886 = vpop.permute.xlu0 %10885
  %10889 = vset.pattern.permute.xlu0 0
  %10890 = vperm.xlu0 %10889, %v10638
  %v10891 = vpop.permute.xlu0 %10890
  %10894 = vset.pattern.permute.xlu0 0
  %10895 = vperm.xlu0 %10894, %v10639
  %v10896 = vpop.permute.xlu0 %10895
  %10899 = vset.pattern.permute.xlu0 0
  %10900 = vperm.xlu0 %10899, %v10640
  %v10901 = vpop.permute.xlu0 %10900
  %10904 = vset.pattern.permute.xlu0 0
  %10905 = vperm.xlu0 %10904, %v10641
  %v10906 = vpop.permute.xlu0 %10905
  %10909 = vset.pattern.permute.xlu0 0
  %10910 = vperm.xlu0 %10909, %v10642
  %v10911 = vpop.permute.xlu0 %10910
  %10914 = vset.pattern.permute.xlu0 0
  %10915 = vperm.xlu0 %10914, %v10643
  %v10916 = vpop.permute.xlu0 %10915
  %10919 = vset.pattern.permute.xlu0 0
  %10920 = vperm.xlu0 %10919, %v10644
  %v10921 = vpop.permute.xlu0 %10920
  %10924 = vset.pattern.permute.xlu0 0
  %10925 = vperm.xlu0 %10924, %v10645
  %v10926 = vpop.permute.xlu0 %10925
  %10929 = vset.pattern.permute.xlu0 0
  %10930 = vperm.xlu0 %10929, %v10646
  %v10931 = vpop.permute.xlu0 %10930
  %10934 = vset.pattern.permute.xlu0 0
  %10935 = vperm.xlu0 %10934, %v10647
  %v10936 = vpop.permute.xlu0 %10935
  %10939 = vset.pattern.permute.xlu0 0
  %10940 = vperm.xlu0 %10939, %v10648
  %v10941 = vpop.permute.xlu0 %10940
  %10944 = vset.pattern.permute.xlu0 0
  %10945 = vperm.xlu0 %10944, %v10649
  %v10946 = vpop.permute.xlu0 %10945
  %10949 = vset.pattern.permute.xlu0 0
  %10950 = vperm.xlu0 %10949, %v10650
  %v10951 = vpop.permute.xlu0 %10950
  %10954 = vset.pattern.permute.xlu0 0
  %10955 = vperm.xlu0 %10954, %v10651
  %v10956 = vpop.permute.xlu0 %10955
  %10959 = vset.pattern.permute.xlu0 0
  %10960 = vperm.xlu0 %10959, %v10652
  %v10961 = vpop.permute.xlu0 %10960
  %10964 = vset.pattern.permute.xlu0 0
  %10965 = vperm.xlu0 %10964, %v10653
  %v10966 = vpop.permute.xlu0 %10965
  %10969 = vset.pattern.permute.xlu0 0
  %10970 = vperm.xlu0 %10969, %v10654
  %v10971 = vpop.permute.xlu0 %10970
  %10974 = vset.pattern.permute.xlu0 0
  %10975 = vperm.xlu0 %10974, %v10655
  %v10976 = vpop.permute.xlu0 %10975
  %10979 = vset.pattern.permute.xlu0 0
  %10980 = vperm.xlu0 %10979, %v10656
  %v10981 = vpop.permute.xlu0 %10980
  %10984 = vset.pattern.permute.xlu0 0
  %10985 = vperm.xlu0 %10984, %v10657
  %v10986 = vpop.permute.xlu0 %10985
  %10989 = vset.pattern.permute.xlu0 0
  %10990 = vperm.xlu0 %10989, %v10658
  %v10991 = vpop.permute.xlu0 %10990
  %10994 = vset.pattern.permute.xlu0 0
  %10995 = vperm.xlu0 %10994, %v10659
  %v10996 = vpop.permute.xlu0 %10995
  %10999 = vset.pattern.permute.xlu0 0
  %11000 = vperm.xlu0 %10999, %v10660
  %v11001 = vpop.permute.xlu0 %11000
  %11004 = vset.pattern.permute.xlu0 0
  %11005 = vperm.xlu0 %11004, %v10661
  %v11006 = vpop.permute.xlu0 %11005
  %11009 = vset.pattern.permute.xlu0 0
  %11010 = vperm.xlu0 %11009, %v10662
  %v11011 = vpop.permute.xlu0 %11010
  %11014 = vset.pattern.permute.xlu0 0
  %11015 = vperm.xlu0 %11014, %v10663
  %v11016 = vpop.permute.xlu0 %11015
  %11019 = vset.pattern.permute.xlu0 0
  %11020 = vperm.xlu0 %11019, %v10664
  %v11021 = vpop.permute.xlu0 %11020
  %11024 = vset.pattern.permute.xlu0 0
  %11025 = vperm.xlu0 %11024, %v10665
  %v11026 = vpop.permute.xlu0 %11025
  %11029 = vset.pattern.permute.xlu0 0
  %11030 = vperm.xlu0 %11029, %v10666
  %v11031 = vpop.permute.xlu0 %11030
  %11034 = vset.pattern.permute.xlu0 0
  %11035 = vperm.xlu0 %11034, %v10667
  %v11036 = vpop.permute.xlu0 %11035
  %11039 = vset.pattern.permute.xlu0 0
  %11040 = vperm.xlu0 %11039, %v10668
  %v11041 = vpop.permute.xlu0 %11040
  %11044 = vset.pattern.permute.xlu0 0
  %11045 = vperm.xlu0 %11044, %v10669
  %v11046 = vpop.permute.xlu0 %11045
  %11049 = vset.pattern.permute.xlu0 0
  %11050 = vperm.xlu0 %11049, %v10670
  %v11051 = vpop.permute.xlu0 %11050
  %11054 = vset.pattern.permute.xlu0 0
  %11055 = vperm.xlu0 %11054, %v10671
  %v11056 = vpop.permute.xlu0 %11055
  %11059 = vset.pattern.permute.xlu0 0
  %11060 = vperm.xlu0 %11059, %v10672
  %v11061 = vpop.permute.xlu0 %11060
  %11064 = vset.pattern.permute.xlu0 0
  %11065 = vperm.xlu0 %11064, %v10673
  %v11066 = vpop.permute.xlu0 %11065
  %11069 = vset.pattern.permute.xlu0 0
  %11070 = vperm.xlu0 %11069, %v10674
  %v11071 = vpop.permute.xlu0 %11070
  %11074 = vset.pattern.permute.xlu0 0
  %11075 = vperm.xlu0 %11074, %v10675
  %v11076 = vpop.permute.xlu0 %11075
  %11079 = vset.pattern.permute.xlu0 0
  %11080 = vperm.xlu0 %11079, %v10676
  %v11081 = vpop.permute.xlu0 %11080
  %11084 = vset.pattern.permute.xlu0 0
  %11085 = vperm.xlu0 %11084, %v10677
  %v11086 = vpop.permute.xlu0 %11085
  %11089 = vset.pattern.permute.xlu0 0
  %11090 = vperm.xlu0 %11089, %v10678
  %v11091 = vpop.permute.xlu0 %11090
  %11094 = vset.pattern.permute.xlu0 0
  %11095 = vperm.xlu0 %11094, %v10679
  %v11096 = vpop.permute.xlu0 %11095
  %11099 = vset.pattern.permute.xlu0 0
  %11100 = vperm.xlu0 %11099, %v10680
  %v11101 = vpop.permute.xlu0 %11100
  %11104 = vset.pattern.permute.xlu0 0
  %11105 = vperm.xlu0 %11104, %v10681
  %v11106 = vpop.permute.xlu0 %11105
  %11109 = vset.pattern.permute.xlu0 0
  %11110 = vperm.xlu0 %11109, %v10682
  %v11111 = vpop.permute.xlu0 %11110
  %11114 = vset.pattern.permute.xlu0 0
  %11115 = vperm.xlu0 %11114, %v10683
  %v11116 = vpop.permute.xlu0 %11115
  %11119 = vset.pattern.permute.xlu0 0
  %11120 = vperm.xlu0 %11119, %v10684
  %v11121 = vpop.permute.xlu0 %11120
  %11124 = vset.pattern.permute.xlu0 0
  %11125 = vperm.xlu0 %11124, %v10685
  %v11126 = vpop.permute.xlu0 %11125
  %11129 = vset.pattern.permute.xlu0 0
  %11130 = vperm.xlu0 %11129, %v10686
  %v11131 = vpop.permute.xlu0 %11130
  %11134 = vset.pattern.permute.xlu0 0
  %11135 = vperm.xlu0 %11134, %v10687
  %v11136 = vpop.permute.xlu0 %11135
  %11139 = vset.pattern.permute.xlu0 0
  %11140 = vperm.xlu0 %11139, %v10688
  %v11141 = vpop.permute.xlu0 %11140
  %11144 = vset.pattern.permute.xlu0 0
  %11145 = vperm.xlu0 %11144, %v10689
  %v11146 = vpop.permute.xlu0 %11145
  %11149 = vset.pattern.permute.xlu0 0
  %11150 = vperm.xlu0 %11149, %v10690
  %v11151 = vpop.permute.xlu0 %11150
  %11154 = vset.pattern.permute.xlu0 0
  %11155 = vperm.xlu0 %11154, %v10691
  %v11156 = vpop.permute.xlu0 %11155
  %11159 = vset.pattern.permute.xlu0 0
  %11160 = vperm.xlu0 %11159, %v10692
  %v11161 = vpop.permute.xlu0 %11160
  %11164 = vset.pattern.permute.xlu0 0
  %11165 = vperm.xlu0 %11164, %v10693
  %v11166 = vpop.permute.xlu0 %11165
  %11169 = vset.pattern.permute.xlu0 0
  %11170 = vperm.xlu0 %11169, %v10694
  %v11171 = vpop.permute.xlu0 %11170
  %11174 = vset.pattern.permute.xlu0 0
  %11175 = vperm.xlu0 %11174, %v10695
  %v11176 = vpop.permute.xlu0 %11175
  %11179 = vset.pattern.permute.xlu0 0
  %11180 = vperm.xlu0 %11179, %v10696
  %v11181 = vpop.permute.xlu0 %11180
  %11184 = vset.pattern.permute.xlu0 0
  %11185 = vperm.xlu0 %11184, %v10697
  %v11186 = vpop.permute.xlu0 %11185
  %11189 = vset.pattern.permute.xlu0 0
  %11190 = vperm.xlu0 %11189, %v10698
  %v11191 = vpop.permute.xlu0 %11190
  %11194 = vset.pattern.permute.xlu0 0
  %11195 = vperm.xlu0 %11194, %v10699
  %v11196 = vpop.permute.xlu0 %11195
  %11199 = vset.pattern.permute.xlu0 0
  %11200 = vperm.xlu0 %11199, %v10700
  %v11201 = vpop.permute.xlu0 %11200
  %11204 = vset.pattern.permute.xlu0 0
  %11205 = vperm.xlu0 %11204, %v10701
  %v11206 = vpop.permute.xlu0 %11205
  %11209 = vset.pattern.permute.xlu0 0
  %11210 = vperm.xlu0 %11209, %v10702
  %v11211 = vpop.permute.xlu0 %11210
  %11214 = vset.pattern.permute.xlu0 0
  %11215 = vperm.xlu0 %11214, %v10703
  %v11216 = vpop.permute.xlu0 %11215
  %11219 = vset.pattern.permute.xlu0 0
  %11220 = vperm.xlu0 %11219, %v10704
  %v11221 = vpop.permute.xlu0 %11220
  %11224 = vset.pattern.permute.xlu0 0
  %11225 = vperm.xlu0 %11224, %v10705
  %v11226 = vpop.permute.xlu0 %11225
  %11229 = vset.pattern.permute.xlu0 0
  %11230 = vperm.xlu0 %11229, %v10706
  %v11231 = vpop.permute.xlu0 %11230
  %11234 = vset.pattern.permute.xlu0 0
  %11235 = vperm.xlu0 %11234, %v10707
  %v11236 = vpop.permute.xlu0 %11235
  %11239 = vset.pattern.permute.xlu0 0
  %11240 = vperm.xlu0 %11239, %v10708
  %v11241 = vpop.permute.xlu0 %11240
  %11244 = vset.pattern.permute.xlu0 0
  %11245 = vperm.xlu0 %11244, %v10709
  %v11246 = vpop.permute.xlu0 %11245
  %11249 = vset.pattern.permute.xlu0 0
  %11250 = vperm.xlu0 %11249, %v10710
  %v11251 = vpop.permute.xlu0 %11250
  %11254 = vset.pattern.permute.xlu0 0
  %11255 = vperm.xlu0 %11254, %v10711
  %v11256 = vpop.permute.xlu0 %11255
  %11259 = vset.pattern.permute.xlu0 0
  %11260 = vperm.xlu0 %11259, %v10712
  %v11261 = vpop.permute.xlu0 %11260
  %11264 = vset.pattern.permute.xlu0 0
  %11265 = vperm.xlu0 %11264, %v10713
  %v11266 = vpop.permute.xlu0 %11265
  %11269 = vset.pattern.permute.xlu0 0
  %11270 = vperm.xlu0 %11269, %v10714
  %v11271 = vpop.permute.xlu0 %11270
  %11274 = vset.pattern.permute.xlu0 0
  %11275 = vperm.xlu0 %11274, %v10715
  %v11276 = vpop.permute.xlu0 %11275
  %11279 = vset.pattern.permute.xlu0 0
  %11280 = vperm.xlu0 %11279, %v10716
  %v11281 = vpop.permute.xlu0 %11280
  %11284 = vset.pattern.permute.xlu0 0
  %11285 = vperm.xlu0 %11284, %v10717
  %v11286 = vpop.permute.xlu0 %11285
  %v11288 = vmul.f32 %v10150, %v10721
  %v11289 = vmul.f32 %v10153, %v10726
  %v11290 = vmul.f32 %v10158, %v10731
  %v11291 = vmul.f32 %v10161, %v10736
  %v11292 = vmul.f32 %v10166, %v10741
  %v11293 = vmul.f32 %v10169, %v10746
  %v11294 = vmul.f32 %v10174, %v10751
  %v11295 = vmul.f32 %v10177, %v10756
  %v11296 = vmul.f32 %v10182, %v10761
  %v11297 = vmul.f32 %v10185, %v10766
  %v11298 = vmul.f32 %v10190, %v10771
  %v11299 = vmul.f32 %v10193, %v10776
  %v11300 = vmul.f32 %v10198, %v10781
  %v11301 = vmul.f32 %v10201, %v10786
  %v11302 = vmul.f32 %v10206, %v10791
  %v11303 = vmul.f32 %v10209, %v10796
  %v11304 = vmul.f32 %v10214, %v10801
  %v11305 = vmul.f32 %v10217, %v10806
  %v11306 = vmul.f32 %v10222, %v10811
  %v11307 = vmul.f32 %v10225, %v10816
  %v11308 = vmul.f32 %v10230, %v10821
  %v11309 = vmul.f32 %v10233, %v10826
  %v11310 = vmul.f32 %v10238, %v10831
  %v11311 = vmul.f32 %v10241, %v10836
  %v11312 = vmul.f32 %v10246, %v10841
  %v11313 = vmul.f32 %v10249, %v10846
  %v11314 = vmul.f32 %v10254, %v10851
  %v11315 = vmul.f32 %v10257, %v10856
  %v11316 = vmul.f32 %v10262, %v10861
  %v11317 = vmul.f32 %v10265, %v10866
  %v11318 = vmul.f32 %v10270, %v10871
  %v11319 = vmul.f32 %v10273, %v10876
  %v11320 = vmul.f32 %v10278, %v10881
  %v11321 = vmul.f32 %v10281, %v10886
  %v11322 = vmul.f32 %v10286, %v10891
  %v11323 = vmul.f32 %v10289, %v10896
  %v11324 = vmul.f32 %v10294, %v10901
  %v11325 = vmul.f32 %v10297, %v10906
  %v11326 = vmul.f32 %v10302, %v10911
  %v11327 = vmul.f32 %v10305, %v10916
  %v11328 = vmul.f32 %v10310, %v10921
  %v11329 = vmul.f32 %v10313, %v10926
  %v11330 = vmul.f32 %v10318, %v10931
  %v11331 = vmul.f32 %v10321, %v10936
  %v11332 = vmul.f32 %v10326, %v10941
  %v11333 = vmul.f32 %v10329, %v10946
  %v11334 = vmul.f32 %v10334, %v10951
  %v11335 = vmul.f32 %v10337, %v10956
  %v11336 = vmul.f32 %v10342, %v10961
  %v11337 = vmul.f32 %v10345, %v10966
  %v11338 = vmul.f32 %v10350, %v10971
  %v11339 = vmul.f32 %v10353, %v10976
  %v11340 = vmul.f32 %v10358, %v10981
  %v11341 = vmul.f32 %v10361, %v10986
  %v11342 = vmul.f32 %v10366, %v10991
  %v11343 = vmul.f32 %v10369, %v10996
  %v11344 = vmul.f32 %v10374, %v11001
  %v11345 = vmul.f32 %v10377, %v11006
  %v11346 = vmul.f32 %v10382, %v11011
  %v11347 = vmul.f32 %v10385, %v11016
  %v11348 = vmul.f32 %v10390, %v11021
  %v11349 = vmul.f32 %v10393, %v11026
  %v11350 = vmul.f32 %v10398, %v11031
  %v11351 = vmul.f32 %v10401, %v11036
  %v11352 = vmul.f32 %v10406, %v11041
  %v11353 = vmul.f32 %v10409, %v11046
  %v11354 = vmul.f32 %v10414, %v11051
  %v11355 = vmul.f32 %v10417, %v11056
  %v11356 = vmul.f32 %v10422, %v11061
  %v11357 = vmul.f32 %v10425, %v11066
  %v11358 = vmul.f32 %v10430, %v11071
  %v11359 = vmul.f32 %v10433, %v11076
  %v11360 = vmul.f32 %v10438, %v11081
  %v11361 = vmul.f32 %v10441, %v11086
  %v11362 = vmul.f32 %v10446, %v11091
  %v11363 = vmul.f32 %v10449, %v11096
  %v11364 = vmul.f32 %v10454, %v11101
  %v11365 = vmul.f32 %v10457, %v11106
  %v11366 = vmul.f32 %v10462, %v11111
  %v11367 = vmul.f32 %v10465, %v11116
  %v11368 = vmul.f32 %v10470, %v11121
  %v11369 = vmul.f32 %v10473, %v11126
  %v11370 = vmul.f32 %v10478, %v11131
  %v11371 = vmul.f32 %v10481, %v11136
  %v11372 = vmul.f32 %v10486, %v11141
  %v11373 = vmul.f32 %v10489, %v11146
  %v11374 = vmul.f32 %v10494, %v11151
  %v11375 = vmul.f32 %v10497, %v11156
  %v11376 = vmul.f32 %v10502, %v11161
  %v11377 = vmul.f32 %v10505, %v11166
  %v11378 = vmul.f32 %v10510, %v11171
  %v11379 = vmul.f32 %v10513, %v11176
  %v11380 = vmul.f32 %v10518, %v11181
  %v11381 = vmul.f32 %v10521, %v11186
  %v11382 = vmul.f32 %v10526, %v11191
  %v11383 = vmul.f32 %v10529, %v11196
  %v11384 = vmul.f32 %v10534, %v11201
  %v11385 = vmul.f32 %v10537, %v11206
  %v11386 = vmul.f32 %v10542, %v11211
  %v11387 = vmul.f32 %v10545, %v11216
  %v11388 = vmul.f32 %v10550, %v11221
  %v11389 = vmul.f32 %v10553, %v11226
  %v11390 = vmul.f32 %v10558, %v11231
  %v11391 = vmul.f32 %v10561, %v11236
  %v11392 = vmul.f32 %v10566, %v11241
  %v11393 = vmul.f32 %v10569, %v11246
  %v11394 = vmul.f32 %v10574, %v11251
  %v11395 = vmul.f32 %v10577, %v11256
  %v11396 = vmul.f32 %v10582, %v11261
  %v11397 = vmul.f32 %v10585, %v11266
  %v11398 = vmul.f32 %v10590, %v11271
  %v11399 = vmul.f32 %v10593, %v11276
  %v11400 = vmul.f32 %v10598, %v11281
  %v11401 = vmul.f32 %v10601, %v11286
  %v11402 = vsel %vm3709, %v11288, 0.0
  %v11403 = vsel %vm3709, %v11289, 0.0
  %v11404 = vadd.f32 %v11402, %v11403
  %v11405 = vsel %vm3709, %v11290, 0.0
  %v11406 = vadd.f32 %v11404, %v11405
  %v11407 = vsel %vm3709, %v11291, 0.0
  %v11408 = vadd.f32 %v11406, %v11407
  %v11409 = vsel %vm3709, %v11292, 0.0
  %v11410 = vadd.f32 %v11408, %v11409
  %v11411 = vsel %vm3709, %v11293, 0.0
  %v11412 = vadd.f32 %v11410, %v11411
  %v11413 = vsel %vm3709, %v11294, 0.0
  %v11414 = vadd.f32 %v11412, %v11413
  %v11415 = vsel %vm3709, %v11295, 0.0
  %v11416 = vadd.f32 %v11414, %v11415
  %v11417 = vsel %vm3709, %v11296, 0.0
  %v11418 = vadd.f32 %v11416, %v11417
  %v11419 = vsel %vm3709, %v11297, 0.0
  %v11420 = vadd.f32 %v11418, %v11419
  %v11421 = vsel %vm3709, %v11298, 0.0
  %v11422 = vadd.f32 %v11420, %v11421
  %v11423 = vsel %vm3709, %v11299, 0.0
  %v11424 = vadd.f32 %v11422, %v11423
  %v11425 = vsel %vm3709, %v11300, 0.0
  %v11426 = vadd.f32 %v11424, %v11425
  %v11427 = vsel %vm3709, %v11301, 0.0
  %v11428 = vadd.f32 %v11426, %v11427
  %v11429 = vsel %vm3709, %v11302, 0.0
  %v11430 = vadd.f32 %v11428, %v11429
  %v11431 = vsel %vm3709, %v11303, 0.0
  %v11432 = vadd.f32 %v11430, %v11431
  %v11433 = vsel %vm3709, %v11304, 0.0
  %v11434 = vadd.f32 %v11432, %v11433
  %v11435 = vsel %vm3709, %v11305, 0.0
  %v11436 = vadd.f32 %v11434, %v11435
  %v11437 = vsel %vm3709, %v11306, 0.0
  %v11438 = vadd.f32 %v11436, %v11437
  %v11439 = vsel %vm3709, %v11307, 0.0
  %v11440 = vadd.f32 %v11438, %v11439
  %v11441 = vsel %vm3709, %v11308, 0.0
  %v11442 = vadd.f32 %v11440, %v11441
  %v11443 = vsel %vm3709, %v11309, 0.0
  %v11444 = vadd.f32 %v11442, %v11443
  %v11445 = vsel %vm3709, %v11310, 0.0
  %v11446 = vadd.f32 %v11444, %v11445
  %v11447 = vsel %vm3709, %v11311, 0.0
  %v11448 = vadd.f32 %v11446, %v11447
  %v11449 = vsel %vm3709, %v11312, 0.0
  %v11450 = vadd.f32 %v11448, %v11449
  %v11451 = vsel %vm3709, %v11313, 0.0
  %v11452 = vadd.f32 %v11450, %v11451
  %v11453 = vsel %vm3709, %v11314, 0.0
  %v11454 = vadd.f32 %v11452, %v11453
  %v11455 = vsel %vm3709, %v11315, 0.0
  %v11456 = vadd.f32 %v11454, %v11455
  %v11457 = vsel %vm3709, %v11316, 0.0
  %v11458 = vadd.f32 %v11456, %v11457
  %v11459 = vsel %vm3709, %v11317, 0.0
  %v11460 = vadd.f32 %v11458, %v11459
  %v11461 = vsel %vm3709, %v11318, 0.0
  %v11462 = vadd.f32 %v11460, %v11461
  %v11463 = vsel %vm3709, %v11319, 0.0
  %v11464 = vadd.f32 %v11462, %v11463
  %v11465 = vsel %vm3709, %v11320, 0.0
  %v11466 = vadd.f32 %v11464, %v11465
  %v11467 = vsel %vm3709, %v11321, 0.0
  %v11468 = vadd.f32 %v11466, %v11467
  %v11469 = vsel %vm3709, %v11322, 0.0
  %v11470 = vadd.f32 %v11468, %v11469
  %v11471 = vsel %vm3709, %v11323, 0.0
  %v11472 = vadd.f32 %v11470, %v11471
  %v11473 = vsel %vm3709, %v11324, 0.0
  %v11474 = vadd.f32 %v11472, %v11473
  %v11475 = vsel %vm3709, %v11325, 0.0
  %v11476 = vadd.f32 %v11474, %v11475
  %v11477 = vsel %vm3709, %v11326, 0.0
  %v11478 = vadd.f32 %v11476, %v11477
  %v11479 = vsel %vm3709, %v11327, 0.0
  %v11480 = vadd.f32 %v11478, %v11479
  %v11481 = vsel %vm3709, %v11328, 0.0
  %v11482 = vadd.f32 %v11480, %v11481
  %v11483 = vsel %vm3709, %v11329, 0.0
  %v11484 = vadd.f32 %v11482, %v11483
  %v11485 = vsel %vm3709, %v11330, 0.0
  %v11486 = vadd.f32 %v11484, %v11485
  %v11487 = vsel %vm3709, %v11331, 0.0
  %v11488 = vadd.f32 %v11486, %v11487
  %v11489 = vsel %vm3709, %v11332, 0.0
  %v11490 = vadd.f32 %v11488, %v11489
  %v11491 = vsel %vm3709, %v11333, 0.0
  %v11492 = vadd.f32 %v11490, %v11491
  %v11493 = vsel %vm3709, %v11334, 0.0
  %v11494 = vadd.f32 %v11492, %v11493
  %v11495 = vsel %vm3709, %v11335, 0.0
  %v11496 = vadd.f32 %v11494, %v11495
  %v11497 = vsel %vm3709, %v11336, 0.0
  %v11498 = vadd.f32 %v11496, %v11497
  %v11499 = vsel %vm3709, %v11337, 0.0
  %v11500 = vadd.f32 %v11498, %v11499
  %v11501 = vsel %vm3709, %v11338, 0.0
  %v11502 = vadd.f32 %v11500, %v11501
  %v11503 = vsel %vm3709, %v11339, 0.0
  %v11504 = vadd.f32 %v11502, %v11503
  %v11505 = vsel %vm3709, %v11340, 0.0
  %v11506 = vadd.f32 %v11504, %v11505
  %v11507 = vsel %vm3709, %v11341, 0.0
  %v11508 = vadd.f32 %v11506, %v11507
  %v11509 = vsel %vm3709, %v11342, 0.0
  %v11510 = vadd.f32 %v11508, %v11509
  %v11511 = vsel %vm3709, %v11343, 0.0
  %v11512 = vadd.f32 %v11510, %v11511
  %v11513 = vsel %vm3709, %v11344, 0.0
  %v11514 = vadd.f32 %v11512, %v11513
  %v11515 = vsel %vm3709, %v11345, 0.0
  %v11516 = vadd.f32 %v11514, %v11515
  %v11517 = vsel %vm3709, %v11346, 0.0
  %v11518 = vadd.f32 %v11516, %v11517
  %v11519 = vsel %vm3709, %v11347, 0.0
  %v11520 = vadd.f32 %v11518, %v11519
  %v11521 = vsel %vm3709, %v11348, 0.0
  %v11522 = vadd.f32 %v11520, %v11521
  %v11523 = vsel %vm3709, %v11349, 0.0
  %v11524 = vadd.f32 %v11522, %v11523
  %v11525 = vsel %vm3709, %v11350, 0.0
  %v11526 = vadd.f32 %v11524, %v11525
  %v11527 = vsel %vm3709, %v11351, 0.0
  %v11528 = vadd.f32 %v11526, %v11527
  %v11529 = vsel %vm3709, %v11352, 0.0
  %v11530 = vadd.f32 %v11528, %v11529
  %v11531 = vsel %vm3709, %v11353, 0.0
  %v11532 = vadd.f32 %v11530, %v11531
  %v11533 = vsel %vm3709, %v11354, 0.0
  %v11534 = vadd.f32 %v11532, %v11533
  %v11535 = vsel %vm3709, %v11355, 0.0
  %v11536 = vadd.f32 %v11534, %v11535
  %v11537 = vsel %vm3709, %v11356, 0.0
  %v11538 = vadd.f32 %v11536, %v11537
  %v11539 = vsel %vm3709, %v11357, 0.0
  %v11540 = vadd.f32 %v11538, %v11539
  %v11541 = vsel %vm3709, %v11358, 0.0
  %v11542 = vadd.f32 %v11540, %v11541
  %v11543 = vsel %vm3709, %v11359, 0.0
  %v11544 = vadd.f32 %v11542, %v11543
  %v11545 = vsel %vm3709, %v11360, 0.0
  %v11546 = vadd.f32 %v11544, %v11545
  %v11547 = vsel %vm3709, %v11361, 0.0
  %v11548 = vadd.f32 %v11546, %v11547
  %v11549 = vsel %vm3709, %v11362, 0.0
  %v11550 = vadd.f32 %v11548, %v11549
  %v11551 = vsel %vm3709, %v11363, 0.0
  %v11552 = vadd.f32 %v11550, %v11551
  %v11553 = vsel %vm3709, %v11364, 0.0
  %v11554 = vadd.f32 %v11552, %v11553
  %v11555 = vsel %vm3709, %v11365, 0.0
  %v11556 = vadd.f32 %v11554, %v11555
  %v11557 = vsel %vm3709, %v11366, 0.0
  %v11558 = vadd.f32 %v11556, %v11557
  %v11559 = vsel %vm3709, %v11367, 0.0
  %v11560 = vadd.f32 %v11558, %v11559
  %v11561 = vsel %vm3709, %v11368, 0.0
  %v11562 = vadd.f32 %v11560, %v11561
  %v11563 = vsel %vm3709, %v11369, 0.0
  %v11564 = vadd.f32 %v11562, %v11563
  %v11565 = vsel %vm3709, %v11370, 0.0
  %v11566 = vadd.f32 %v11564, %v11565
  %v11567 = vsel %vm3709, %v11371, 0.0
  %v11568 = vadd.f32 %v11566, %v11567
  %v11569 = vsel %vm3709, %v11372, 0.0
  %v11570 = vadd.f32 %v11568, %v11569
  %v11571 = vsel %vm3709, %v11373, 0.0
  %v11572 = vadd.f32 %v11570, %v11571
  %v11573 = vsel %vm3709, %v11374, 0.0
  %v11574 = vadd.f32 %v11572, %v11573
  %v11575 = vsel %vm3709, %v11375, 0.0
  %v11576 = vadd.f32 %v11574, %v11575
  %v11577 = vsel %vm3709, %v11376, 0.0
  %v11578 = vadd.f32 %v11576, %v11577
  %v11579 = vsel %vm3709, %v11377, 0.0
  %v11580 = vadd.f32 %v11578, %v11579
  %v11581 = vsel %vm3709, %v11378, 0.0
  %v11582 = vadd.f32 %v11580, %v11581
  %v11583 = vsel %vm3709, %v11379, 0.0
  %v11584 = vadd.f32 %v11582, %v11583
  %v11585 = vsel %vm3709, %v11380, 0.0
  %v11586 = vadd.f32 %v11584, %v11585
  %v11587 = vsel %vm3709, %v11381, 0.0
  %v11588 = vadd.f32 %v11586, %v11587
  %v11589 = vsel %vm3709, %v11382, 0.0
  %v11590 = vadd.f32 %v11588, %v11589
  %v11591 = vsel %vm3709, %v11383, 0.0
  %v11592 = vadd.f32 %v11590, %v11591
  %v11593 = vsel %vm3709, %v11384, 0.0
  %v11594 = vadd.f32 %v11592, %v11593
  %v11595 = vsel %vm3709, %v11385, 0.0
  %v11596 = vadd.f32 %v11594, %v11595
  %v11597 = vsel %vm3709, %v11386, 0.0
  %v11598 = vadd.f32 %v11596, %v11597
  %v11599 = vsel %vm3709, %v11387, 0.0
  %v11600 = vadd.f32 %v11598, %v11599
  %v11601 = vsel %vm3709, %v11388, 0.0
  %v11602 = vadd.f32 %v11600, %v11601
  %v11603 = vsel %vm3709, %v11389, 0.0
  %v11604 = vadd.f32 %v11602, %v11603
  %v11605 = vsel %vm3709, %v11390, 0.0
  %v11606 = vadd.f32 %v11604, %v11605
  %v11607 = vsel %vm3709, %v11391, 0.0
  %v11608 = vadd.f32 %v11606, %v11607
  %v11609 = vsel %vm3709, %v11392, 0.0
  %v11610 = vadd.f32 %v11608, %v11609
  %v11611 = vsel %vm3709, %v11393, 0.0
  %v11612 = vadd.f32 %v11610, %v11611
  %v11613 = vsel %vm3709, %v11394, 0.0
  %v11614 = vadd.f32 %v11612, %v11613
  %v11615 = vsel %vm3709, %v11395, 0.0
  %v11616 = vadd.f32 %v11614, %v11615
  %v11617 = vsel %vm3709, %v11396, 0.0
  %v11618 = vadd.f32 %v11616, %v11617
  %v11619 = vsel %vm3709, %v11397, 0.0
  %v11620 = vadd.f32 %v11618, %v11619
  %v11621 = vsel %vm3709, %v11398, 0.0
  %v11622 = vadd.f32 %v11620, %v11621
  %v11623 = vsel %vm3709, %v11399, 0.0
  %v11624 = vadd.f32 %v11622, %v11623
  %v11625 = vsel %vm3709, %v11400, 0.0
  %v11626 = vadd.f32 %v11624, %v11625
  %vm11627 = vcmask 29696
  %v11628 = vsel %vm11627, %v11401, 0.0
  %v11629 = vadd.f32 %v11626, %v11628
  %v11630 = vrot.slane %v11629, 4
  %v11631 = vadd.f32 %v11629, %v11630
  %v11632 = vrot.slane %v11631, 2
  %v11633 = vadd.f32 %v11631, %v11632
  %v11634 = vrot.slane %v11633, 1
  %v11635 = vadd.f32 %v11633, %v11634
  %v11636 = vmul.f32 %v11635, 0.0015432099
  %v11637 = vsub.f32 %v10150, %v11636
  %v11638 = vsub.f32 %v10153, %v11636
  %v11639 = vsub.f32 %v10158, %v11636
  %v11640 = vsub.f32 %v10161, %v11636
  %v11641 = vsub.f32 %v10166, %v11636
  %v11642 = vsub.f32 %v10169, %v11636
  %v11643 = vsub.f32 %v10174, %v11636
  %v11644 = vsub.f32 %v10177, %v11636
  %v11645 = vsub.f32 %v10182, %v11636
  %v11646 = vsub.f32 %v10185, %v11636
  %v11647 = vsub.f32 %v10190, %v11636
  %v11648 = vsub.f32 %v10193, %v11636
  %v11649 = vsub.f32 %v10198, %v11636
  %v11650 = vsub.f32 %v10201, %v11636
  %v11651 = vsub.f32 %v10206, %v11636
  %v11652 = vsub.f32 %v10209, %v11636
  %v11653 = vsub.f32 %v10214, %v11636
  %v11654 = vsub.f32 %v10217, %v11636
  %v11655 = vsub.f32 %v10222, %v11636
  %v11656 = vsub.f32 %v10225, %v11636
  %v11657 = vsub.f32 %v10230, %v11636
  %v11658 = vsub.f32 %v10233, %v11636
  %v11659 = vsub.f32 %v10238, %v11636
  %v11660 = vsub.f32 %v10241, %v11636
  %v11661 = vsub.f32 %v10246, %v11636
  %v11662 = vsub.f32 %v10249, %v11636
  %v11663 = vsub.f32 %v10254, %v11636
  %v11664 = vsub.f32 %v10257, %v11636
  %v11665 = vsub.f32 %v10262, %v11636
  %v11666 = vsub.f32 %v10265, %v11636
  %v11667 = vsub.f32 %v10270, %v11636
  %v11668 = vsub.f32 %v10273, %v11636
  %v11669 = vsub.f32 %v10278, %v11636
  %v11670 = vsub.f32 %v10281, %v11636
  %v11671 = vsub.f32 %v10286, %v11636
  %v11672 = vsub.f32 %v10289, %v11636
  %v11673 = vsub.f32 %v10294, %v11636
  %v11674 = vsub.f32 %v10297, %v11636
  %v11675 = vsub.f32 %v10302, %v11636
  %v11676 = vsub.f32 %v10305, %v11636
  %v11677 = vsub.f32 %v10310, %v11636
  %v11678 = vsub.f32 %v10313, %v11636
  %v11679 = vsub.f32 %v10318, %v11636
  %v11680 = vsub.f32 %v10321, %v11636
  %v11681 = vsub.f32 %v10326, %v11636
  %v11682 = vsub.f32 %v10329, %v11636
  %v11683 = vsub.f32 %v10334, %v11636
  %v11684 = vsub.f32 %v10337, %v11636
  %v11685 = vsub.f32 %v10342, %v11636
  %v11686 = vsub.f32 %v10345, %v11636
  %v11687 = vsub.f32 %v10350, %v11636
  %v11688 = vsub.f32 %v10353, %v11636
  %v11689 = vsub.f32 %v10358, %v11636
  %v11690 = vsub.f32 %v10361, %v11636
  %v11691 = vsub.f32 %v10366, %v11636
  %v11692 = vsub.f32 %v10369, %v11636
  %v11693 = vsub.f32 %v10374, %v11636
  %v11694 = vsub.f32 %v10377, %v11636
  %v11695 = vsub.f32 %v10382, %v11636
  %v11696 = vsub.f32 %v10385, %v11636
  %v11697 = vsub.f32 %v10390, %v11636
  %v11698 = vsub.f32 %v10393, %v11636
  %v11699 = vsub.f32 %v10398, %v11636
  %v11700 = vsub.f32 %v10401, %v11636
  %v11701 = vsub.f32 %v10406, %v11636
  %v11702 = vsub.f32 %v10409, %v11636
  %v11703 = vsub.f32 %v10414, %v11636
  %v11704 = vsub.f32 %v10417, %v11636
  %v11705 = vsub.f32 %v10422, %v11636
  %v11706 = vsub.f32 %v10425, %v11636
  %v11707 = vsub.f32 %v10430, %v11636
  %v11708 = vsub.f32 %v10433, %v11636
  %v11709 = vsub.f32 %v10438, %v11636
  %v11710 = vsub.f32 %v10441, %v11636
  %v11711 = vsub.f32 %v10446, %v11636
  %v11712 = vsub.f32 %v10449, %v11636
  %v11713 = vsub.f32 %v10454, %v11636
  %v11714 = vsub.f32 %v10457, %v11636
  %v11715 = vsub.f32 %v10462, %v11636
  %v11716 = vsub.f32 %v10465, %v11636
  %v11717 = vsub.f32 %v10470, %v11636
  %v11718 = vsub.f32 %v10473, %v11636
  %v11719 = vsub.f32 %v10478, %v11636
  %v11720 = vsub.f32 %v10481, %v11636
  %v11721 = vsub.f32 %v10486, %v11636
  %v11722 = vsub.f32 %v10489, %v11636
  %v11723 = vsub.f32 %v10494, %v11636
  %v11724 = vsub.f32 %v10497, %v11636
  %v11725 = vsub.f32 %v10502, %v11636
  %v11726 = vsub.f32 %v10505, %v11636
  %v11727 = vsub.f32 %v10510, %v11636
  %v11728 = vsub.f32 %v10513, %v11636
  %v11729 = vsub.f32 %v10518, %v11636
  %v11730 = vsub.f32 %v10521, %v11636
  %v11731 = vsub.f32 %v10526, %v11636
  %v11732 = vsub.f32 %v10529, %v11636
  %v11733 = vsub.f32 %v10534, %v11636
  %v11734 = vsub.f32 %v10537, %v11636
  %v11735 = vsub.f32 %v10542, %v11636
  %v11736 = vsub.f32 %v10545, %v11636
  %v11737 = vsub.f32 %v10550, %v11636
  %v11738 = vsub.f32 %v10553, %v11636
  %v11739 = vsub.f32 %v10558, %v11636
  %v11740 = vsub.f32 %v10561, %v11636
  %v11741 = vsub.f32 %v10566, %v11636
  %v11742 = vsub.f32 %v10569, %v11636
  %v11743 = vsub.f32 %v10574, %v11636
  %v11744 = vsub.f32 %v10577, %v11636
  %v11745 = vsub.f32 %v10582, %v11636
  %v11746 = vsub.f32 %v10585, %v11636
  %v11747 = vsub.f32 %v10590, %v11636
  %v11748 = vsub.f32 %v10593, %v11636
  %v11749 = vsub.f32 %v10598, %v11636
  %v11750 = vsub.f32 %v10601, %v11636
  %v11751 = vmul.f32 %v11637, %v10721
  %v11752 = vmul.f32 %v11638, %v10726
  %v11753 = vmul.f32 %v11639, %v10731
  %v11754 = vmul.f32 %v11640, %v10736
  %v11755 = vmul.f32 %v11641, %v10741
  %v11756 = vmul.f32 %v11642, %v10746
  %v11757 = vmul.f32 %v11643, %v10751
  %v11758 = vmul.f32 %v11644, %v10756
  %v11759 = vmul.f32 %v11645, %v10761
  %v11760 = vmul.f32 %v11646, %v10766
  %v11761 = vmul.f32 %v11647, %v10771
  %v11762 = vmul.f32 %v11648, %v10776
  %v11763 = vmul.f32 %v11649, %v10781
  %v11764 = vmul.f32 %v11650, %v10786
  %v11765 = vmul.f32 %v11651, %v10791
  %v11766 = vmul.f32 %v11652, %v10796
  %v11767 = vmul.f32 %v11653, %v10801
  %v11768 = vmul.f32 %v11654, %v10806
  %v11769 = vmul.f32 %v11655, %v10811
  %v11770 = vmul.f32 %v11656, %v10816
  %v11771 = vmul.f32 %v11657, %v10821
  %v11772 = vmul.f32 %v11658, %v10826
  %v11773 = vmul.f32 %v11659, %v10831
  %v11774 = vmul.f32 %v11660, %v10836
  %v11775 = vmul.f32 %v11661, %v10841
  %v11776 = vmul.f32 %v11662, %v10846
  %v11777 = vmul.f32 %v11663, %v10851
  %v11778 = vmul.f32 %v11664, %v10856
  %v11779 = vmul.f32 %v11665, %v10861
  %v11780 = vmul.f32 %v11666, %v10866
  %v11781 = vmul.f32 %v11667, %v10871
  %v11782 = vmul.f32 %v11668, %v10876
  %v11783 = vmul.f32 %v11669, %v10881
  %v11784 = vmul.f32 %v11670, %v10886
  %v11785 = vmul.f32 %v11671, %v10891
  %v11786 = vmul.f32 %v11672, %v10896
  %v11787 = vmul.f32 %v11673, %v10901
  %v11788 = vmul.f32 %v11674, %v10906
  %v11789 = vmul.f32 %v11675, %v10911
  %v11790 = vmul.f32 %v11676, %v10916
  %v11791 = vmul.f32 %v11677, %v10921
  %v11792 = vmul.f32 %v11678, %v10926
  %v11793 = vmul.f32 %v11679, %v10931
  %v11794 = vmul.f32 %v11680, %v10936
  %v11795 = vmul.f32 %v11681, %v10941
  %v11796 = vmul.f32 %v11682, %v10946
  %v11797 = vmul.f32 %v11683, %v10951
  %v11798 = vmul.f32 %v11684, %v10956
  %v11799 = vmul.f32 %v11685, %v10961
  %v11800 = vmul.f32 %v11686, %v10966
  %v11801 = vmul.f32 %v11687, %v10971
  %v11802 = vmul.f32 %v11688, %v10976
  %v11803 = vmul.f32 %v11689, %v10981
  %v11804 = vmul.f32 %v11690, %v10986
  %v11805 = vmul.f32 %v11691, %v10991
  %v11806 = vmul.f32 %v11692, %v10996
  %v11807 = vmul.f32 %v11693, %v11001
  %v11808 = vmul.f32 %v11694, %v11006
  %v11809 = vmul.f32 %v11695, %v11011
  %v11810 = vmul.f32 %v11696, %v11016
  %v11811 = vmul.f32 %v11697, %v11021
  %v11812 = vmul.f32 %v11698, %v11026
  %v11813 = vmul.f32 %v11699, %v11031
  %v11814 = vmul.f32 %v11700, %v11036
  %v11815 = vmul.f32 %v11701, %v11041
  %v11816 = vmul.f32 %v11702, %v11046
  %v11817 = vmul.f32 %v11703, %v11051
  %v11818 = vmul.f32 %v11704, %v11056
  %v11819 = vmul.f32 %v11705, %v11061
  %v11820 = vmul.f32 %v11706, %v11066
  %v11821 = vmul.f32 %v11707, %v11071
  %v11822 = vmul.f32 %v11708, %v11076
  %v11823 = vmul.f32 %v11709, %v11081
  %v11824 = vmul.f32 %v11710, %v11086
  %v11825 = vmul.f32 %v11711, %v11091
  %v11826 = vmul.f32 %v11712, %v11096
  %v11827 = vmul.f32 %v11713, %v11101
  %v11828 = vmul.f32 %v11714, %v11106
  %v11829 = vmul.f32 %v11715, %v11111
  %v11830 = vmul.f32 %v11716, %v11116
  %v11831 = vmul.f32 %v11717, %v11121
  %v11832 = vmul.f32 %v11718, %v11126
  %v11833 = vmul.f32 %v11719, %v11131
  %v11834 = vmul.f32 %v11720, %v11136
  %v11835 = vmul.f32 %v11721, %v11141
  %v11836 = vmul.f32 %v11722, %v11146
  %v11837 = vmul.f32 %v11723, %v11151
  %v11838 = vmul.f32 %v11724, %v11156
  %v11839 = vmul.f32 %v11725, %v11161
  %v11840 = vmul.f32 %v11726, %v11166
  %v11841 = vmul.f32 %v11727, %v11171
  %v11842 = vmul.f32 %v11728, %v11176
  %v11843 = vmul.f32 %v11729, %v11181
  %v11844 = vmul.f32 %v11730, %v11186
  %v11845 = vmul.f32 %v11731, %v11191
  %v11846 = vmul.f32 %v11732, %v11196
  %v11847 = vmul.f32 %v11733, %v11201
  %v11848 = vmul.f32 %v11734, %v11206
  %v11849 = vmul.f32 %v11735, %v11211
  %v11850 = vmul.f32 %v11736, %v11216
  %v11851 = vmul.f32 %v11737, %v11221
  %v11852 = vmul.f32 %v11738, %v11226
  %v11853 = vmul.f32 %v11739, %v11231
  %v11854 = vmul.f32 %v11740, %v11236
  %v11855 = vmul.f32 %v11741, %v11241
  %v11856 = vmul.f32 %v11742, %v11246
  %v11857 = vmul.f32 %v11743, %v11251
  %v11858 = vmul.f32 %v11744, %v11256
  %v11859 = vmul.f32 %v11745, %v11261
  %v11860 = vmul.f32 %v11746, %v11266
  %v11861 = vmul.f32 %v11747, %v11271
  %v11862 = vmul.f32 %v11748, %v11276
  %v11863 = vmul.f32 %v11749, %v11281
  %v11864 = vmul.f32 %v11750, %v11286
  %v11865 = vmul.f32 %v11751, %v11751
  %v11866 = vmul.f32 %v11752, %v11752
  %v11867 = vmul.f32 %v11753, %v11753
  %v11868 = vmul.f32 %v11754, %v11754
  %v11869 = vmul.f32 %v11755, %v11755
  %v11870 = vmul.f32 %v11756, %v11756
  %v11871 = vmul.f32 %v11757, %v11757
  %v11872 = vmul.f32 %v11758, %v11758
  %v11873 = vmul.f32 %v11759, %v11759
  %v11874 = vmul.f32 %v11760, %v11760
  %v11875 = vmul.f32 %v11761, %v11761
  %v11876 = vmul.f32 %v11762, %v11762
  %v11877 = vmul.f32 %v11763, %v11763
  %v11878 = vmul.f32 %v11764, %v11764
  %v11879 = vmul.f32 %v11765, %v11765
  %v11880 = vmul.f32 %v11766, %v11766
  %v11881 = vmul.f32 %v11767, %v11767
  %v11882 = vmul.f32 %v11768, %v11768
  %v11883 = vmul.f32 %v11769, %v11769
  %v11884 = vmul.f32 %v11770, %v11770
  %v11885 = vmul.f32 %v11771, %v11771
  %v11886 = vmul.f32 %v11772, %v11772
  %v11887 = vmul.f32 %v11773, %v11773
  %v11888 = vmul.f32 %v11774, %v11774
  %v11889 = vmul.f32 %v11775, %v11775
  %v11890 = vmul.f32 %v11776, %v11776
  %v11891 = vmul.f32 %v11777, %v11777
  %v11892 = vmul.f32 %v11778, %v11778
  %v11893 = vmul.f32 %v11779, %v11779
  %v11894 = vmul.f32 %v11780, %v11780
  %v11895 = vmul.f32 %v11781, %v11781
  %v11896 = vmul.f32 %v11782, %v11782
  %v11897 = vmul.f32 %v11783, %v11783
  %v11898 = vmul.f32 %v11784, %v11784
  %v11899 = vmul.f32 %v11785, %v11785
  %v11900 = vmul.f32 %v11786, %v11786
  %v11901 = vmul.f32 %v11787, %v11787
  %v11902 = vmul.f32 %v11788, %v11788
  %v11903 = vmul.f32 %v11789, %v11789
  %v11904 = vmul.f32 %v11790, %v11790
  %v11905 = vmul.f32 %v11791, %v11791
  %v11906 = vmul.f32 %v11792, %v11792
  %v11907 = vmul.f32 %v11793, %v11793
  %v11908 = vmul.f32 %v11794, %v11794
  %v11909 = vmul.f32 %v11795, %v11795
  %v11910 = vmul.f32 %v11796, %v11796
  %v11911 = vmul.f32 %v11797, %v11797
  %v11912 = vmul.f32 %v11798, %v11798
  %v11913 = vmul.f32 %v11799, %v11799
  %v11914 = vmul.f32 %v11800, %v11800
  %v11915 = vmul.f32 %v11801, %v11801
  %v11916 = vmul.f32 %v11802, %v11802
  %v11917 = vmul.f32 %v11803, %v11803
  %v11918 = vmul.f32 %v11804, %v11804
  %v11919 = vmul.f32 %v11805, %v11805
  %v11920 = vmul.f32 %v11806, %v11806
  %v11921 = vmul.f32 %v11807, %v11807
  %v11922 = vmul.f32 %v11808, %v11808
  %v11923 = vmul.f32 %v11809, %v11809
  %v11924 = vmul.f32 %v11810, %v11810
  %v11925 = vmul.f32 %v11811, %v11811
  %v11926 = vmul.f32 %v11812, %v11812
  %v11927 = vmul.f32 %v11813, %v11813
  %v11928 = vmul.f32 %v11814, %v11814
  %v11929 = vmul.f32 %v11815, %v11815
  %v11930 = vmul.f32 %v11816, %v11816
  %v11931 = vmul.f32 %v11817, %v11817
  %v11932 = vmul.f32 %v11818, %v11818
  %v11933 = vmul.f32 %v11819, %v11819
  %v11934 = vmul.f32 %v11820, %v11820
  %v11935 = vmul.f32 %v11821, %v11821
  %v11936 = vmul.f32 %v11822, %v11822
  %v11937 = vmul.f32 %v11823, %v11823
  %v11938 = vmul.f32 %v11824, %v11824
  %v11939 = vmul.f32 %v11825, %v11825
  %v11940 = vmul.f32 %v11826, %v11826
  %v11941 = vmul.f32 %v11827, %v11827
  %v11942 = vmul.f32 %v11828, %v11828
  %v11943 = vmul.f32 %v11829, %v11829
  %v11944 = vmul.f32 %v11830, %v11830
  %v11945 = vmul.f32 %v11831, %v11831
  %v11946 = vmul.f32 %v11832, %v11832
  %v11947 = vmul.f32 %v11833, %v11833
  %v11948 = vmul.f32 %v11834, %v11834
  %v11949 = vmul.f32 %v11835, %v11835
  %v11950 = vmul.f32 %v11836, %v11836
  %v11951 = vmul.f32 %v11837, %v11837
  %v11952 = vmul.f32 %v11838, %v11838
  %v11953 = vmul.f32 %v11839, %v11839
  %v11954 = vmul.f32 %v11840, %v11840
  %v11955 = vmul.f32 %v11841, %v11841
  %v11956 = vmul.f32 %v11842, %v11842
  %v11957 = vmul.f32 %v11843, %v11843
  %v11958 = vmul.f32 %v11844, %v11844
  %v11959 = vmul.f32 %v11845, %v11845
  %v11960 = vmul.f32 %v11846, %v11846
  %v11961 = vmul.f32 %v11847, %v11847
  %v11962 = vmul.f32 %v11848, %v11848
  %v11963 = vmul.f32 %v11849, %v11849
  %v11964 = vmul.f32 %v11850, %v11850
  %v11965 = vmul.f32 %v11851, %v11851
  %v11966 = vmul.f32 %v11852, %v11852
  %v11967 = vmul.f32 %v11853, %v11853
  %v11968 = vmul.f32 %v11854, %v11854
  %v11969 = vmul.f32 %v11855, %v11855
  %v11970 = vmul.f32 %v11856, %v11856
  %v11971 = vmul.f32 %v11857, %v11857
  %v11972 = vmul.f32 %v11858, %v11858
  %v11973 = vmul.f32 %v11859, %v11859
  %v11974 = vmul.f32 %v11860, %v11860
  %v11975 = vmul.f32 %v11861, %v11861
  %v11976 = vmul.f32 %v11862, %v11862
  %v11977 = vmul.f32 %v11863, %v11863
  %v11978 = vmul.f32 %v11864, %v11864
  %v11979 = vsel %vm3709, %v11865, 0.0
  %v11980 = vsel %vm3709, %v11866, 0.0
  %v11981 = vadd.f32 %v11979, %v11980
  %v11982 = vsel %vm3709, %v11867, 0.0
  %v11983 = vadd.f32 %v11981, %v11982
  %v11984 = vsel %vm3709, %v11868, 0.0
  %v11985 = vadd.f32 %v11983, %v11984
  %v11986 = vsel %vm3709, %v11869, 0.0
  %v11987 = vadd.f32 %v11985, %v11986
  %v11988 = vsel %vm3709, %v11870, 0.0
  %v11989 = vadd.f32 %v11987, %v11988
  %v11990 = vsel %vm3709, %v11871, 0.0
  %v11991 = vadd.f32 %v11989, %v11990
  %v11992 = vsel %vm3709, %v11872, 0.0
  %v11993 = vadd.f32 %v11991, %v11992
  %v11994 = vsel %vm3709, %v11873, 0.0
  %v11995 = vadd.f32 %v11993, %v11994
  %v11996 = vsel %vm3709, %v11874, 0.0
  %v11997 = vadd.f32 %v11995, %v11996
  %v11998 = vsel %vm3709, %v11875, 0.0
  %v11999 = vadd.f32 %v11997, %v11998
  %v12000 = vsel %vm3709, %v11876, 0.0
  %v12001 = vadd.f32 %v11999, %v12000
  %v12002 = vsel %vm3709, %v11877, 0.0
  %v12003 = vadd.f32 %v12001, %v12002
  %v12004 = vsel %vm3709, %v11878, 0.0
  %v12005 = vadd.f32 %v12003, %v12004
  %v12006 = vsel %vm3709, %v11879, 0.0
  %v12007 = vadd.f32 %v12005, %v12006
  %v12008 = vsel %vm3709, %v11880, 0.0
  %v12009 = vadd.f32 %v12007, %v12008
  %v12010 = vsel %vm3709, %v11881, 0.0
  %v12011 = vadd.f32 %v12009, %v12010
  %v12012 = vsel %vm3709, %v11882, 0.0
  %v12013 = vadd.f32 %v12011, %v12012
  %v12014 = vsel %vm3709, %v11883, 0.0
  %v12015 = vadd.f32 %v12013, %v12014
  %v12016 = vsel %vm3709, %v11884, 0.0
  %v12017 = vadd.f32 %v12015, %v12016
  %v12018 = vsel %vm3709, %v11885, 0.0
  %v12019 = vadd.f32 %v12017, %v12018
  %v12020 = vsel %vm3709, %v11886, 0.0
  %v12021 = vadd.f32 %v12019, %v12020
  %v12022 = vsel %vm3709, %v11887, 0.0
  %v12023 = vadd.f32 %v12021, %v12022
  %v12024 = vsel %vm3709, %v11888, 0.0
  %v12025 = vadd.f32 %v12023, %v12024
  %v12026 = vsel %vm3709, %v11889, 0.0
  %v12027 = vadd.f32 %v12025, %v12026
  %v12028 = vsel %vm3709, %v11890, 0.0
  %v12029 = vadd.f32 %v12027, %v12028
  %v12030 = vsel %vm3709, %v11891, 0.0
  %v12031 = vadd.f32 %v12029, %v12030
  %v12032 = vsel %vm3709, %v11892, 0.0
  %v12033 = vadd.f32 %v12031, %v12032
  %v12034 = vsel %vm3709, %v11893, 0.0
  %v12035 = vadd.f32 %v12033, %v12034
  %v12036 = vsel %vm3709, %v11894, 0.0
  %v12037 = vadd.f32 %v12035, %v12036
  %v12038 = vsel %vm3709, %v11895, 0.0
  %v12039 = vadd.f32 %v12037, %v12038
  %v12040 = vsel %vm3709, %v11896, 0.0
  %v12041 = vadd.f32 %v12039, %v12040
  %v12042 = vsel %vm3709, %v11897, 0.0
  %v12043 = vadd.f32 %v12041, %v12042
  %v12044 = vsel %vm3709, %v11898, 0.0
  %v12045 = vadd.f32 %v12043, %v12044
  %v12046 = vsel %vm3709, %v11899, 0.0
  %v12047 = vadd.f32 %v12045, %v12046
  %v12048 = vsel %vm3709, %v11900, 0.0
  %v12049 = vadd.f32 %v12047, %v12048
  %v12050 = vsel %vm3709, %v11901, 0.0
  %v12051 = vadd.f32 %v12049, %v12050
  %v12052 = vsel %vm3709, %v11902, 0.0
  %v12053 = vadd.f32 %v12051, %v12052
  %v12054 = vsel %vm3709, %v11903, 0.0
  %v12055 = vadd.f32 %v12053, %v12054
  %v12056 = vsel %vm3709, %v11904, 0.0
  %v12057 = vadd.f32 %v12055, %v12056
  %v12058 = vsel %vm3709, %v11905, 0.0
  %v12059 = vadd.f32 %v12057, %v12058
  %v12060 = vsel %vm3709, %v11906, 0.0
  %v12061 = vadd.f32 %v12059, %v12060
  %v12062 = vsel %vm3709, %v11907, 0.0
  %v12063 = vadd.f32 %v12061, %v12062
  %v12064 = vsel %vm3709, %v11908, 0.0
  %v12065 = vadd.f32 %v12063, %v12064
  %v12066 = vsel %vm3709, %v11909, 0.0
  %v12067 = vadd.f32 %v12065, %v12066
  %v12068 = vsel %vm3709, %v11910, 0.0
  %v12069 = vadd.f32 %v12067, %v12068
  %v12070 = vsel %vm3709, %v11911, 0.0
  %v12071 = vadd.f32 %v12069, %v12070
  %v12072 = vsel %vm3709, %v11912, 0.0
  %v12073 = vadd.f32 %v12071, %v12072
  %v12074 = vsel %vm3709, %v11913, 0.0
  %v12075 = vadd.f32 %v12073, %v12074
  %v12076 = vsel %vm3709, %v11914, 0.0
  %v12077 = vadd.f32 %v12075, %v12076
  %v12078 = vsel %vm3709, %v11915, 0.0
  %v12079 = vadd.f32 %v12077, %v12078
  %v12080 = vsel %vm3709, %v11916, 0.0
  %v12081 = vadd.f32 %v12079, %v12080
  %v12082 = vsel %vm3709, %v11917, 0.0
  %v12083 = vadd.f32 %v12081, %v12082
  %v12084 = vsel %vm3709, %v11918, 0.0
  %v12085 = vadd.f32 %v12083, %v12084
  %v12086 = vsel %vm3709, %v11919, 0.0
  %v12087 = vadd.f32 %v12085, %v12086
  %v12088 = vsel %vm3709, %v11920, 0.0
  %v12089 = vadd.f32 %v12087, %v12088
  %v12090 = vsel %vm3709, %v11921, 0.0
  %v12091 = vadd.f32 %v12089, %v12090
  %v12092 = vsel %vm3709, %v11922, 0.0
  %v12093 = vadd.f32 %v12091, %v12092
  %v12094 = vsel %vm3709, %v11923, 0.0
  %v12095 = vadd.f32 %v12093, %v12094
  %v12096 = vsel %vm3709, %v11924, 0.0
  %v12097 = vadd.f32 %v12095, %v12096
  %v12098 = vsel %vm3709, %v11925, 0.0
  %v12099 = vadd.f32 %v12097, %v12098
  %v12100 = vsel %vm3709, %v11926, 0.0
  %v12101 = vadd.f32 %v12099, %v12100
  %v12102 = vsel %vm3709, %v11927, 0.0
  %v12103 = vadd.f32 %v12101, %v12102
  %v12104 = vsel %vm3709, %v11928, 0.0
  %v12105 = vadd.f32 %v12103, %v12104
  %v12106 = vsel %vm3709, %v11929, 0.0
  %v12107 = vadd.f32 %v12105, %v12106
  %v12108 = vsel %vm3709, %v11930, 0.0
  %v12109 = vadd.f32 %v12107, %v12108
  %v12110 = vsel %vm3709, %v11931, 0.0
  %v12111 = vadd.f32 %v12109, %v12110
  %v12112 = vsel %vm3709, %v11932, 0.0
  %v12113 = vadd.f32 %v12111, %v12112
  %v12114 = vsel %vm3709, %v11933, 0.0
  %v12115 = vadd.f32 %v12113, %v12114
  %v12116 = vsel %vm3709, %v11934, 0.0
  %v12117 = vadd.f32 %v12115, %v12116
  %v12118 = vsel %vm3709, %v11935, 0.0
  %v12119 = vadd.f32 %v12117, %v12118
  %v12120 = vsel %vm3709, %v11936, 0.0
  %v12121 = vadd.f32 %v12119, %v12120
  %v12122 = vsel %vm3709, %v11937, 0.0
  %v12123 = vadd.f32 %v12121, %v12122
  %v12124 = vsel %vm3709, %v11938, 0.0
  %v12125 = vadd.f32 %v12123, %v12124
  %v12126 = vsel %vm3709, %v11939, 0.0
  %v12127 = vadd.f32 %v12125, %v12126
  %v12128 = vsel %vm3709, %v11940, 0.0
  %v12129 = vadd.f32 %v12127, %v12128
  %v12130 = vsel %vm3709, %v11941, 0.0
  %v12131 = vadd.f32 %v12129, %v12130
  %v12132 = vsel %vm3709, %v11942, 0.0
  %v12133 = vadd.f32 %v12131, %v12132
  %v12134 = vsel %vm3709, %v11943, 0.0
  %v12135 = vadd.f32 %v12133, %v12134
  %v12136 = vsel %vm3709, %v11944, 0.0
  %v12137 = vadd.f32 %v12135, %v12136
  %v12138 = vsel %vm3709, %v11945, 0.0
  %v12139 = vadd.f32 %v12137, %v12138
  %v12140 = vsel %vm3709, %v11946, 0.0
  %v12141 = vadd.f32 %v12139, %v12140
  %v12142 = vsel %vm3709, %v11947, 0.0
  %v12143 = vadd.f32 %v12141, %v12142
  %v12144 = vsel %vm3709, %v11948, 0.0
  %v12145 = vadd.f32 %v12143, %v12144
  %v12146 = vsel %vm3709, %v11949, 0.0
  %v12147 = vadd.f32 %v12145, %v12146
  %v12148 = vsel %vm3709, %v11950, 0.0
  %v12149 = vadd.f32 %v12147, %v12148
  %v12150 = vsel %vm3709, %v11951, 0.0
  %v12151 = vadd.f32 %v12149, %v12150
  %v12152 = vsel %vm3709, %v11952, 0.0
  %v12153 = vadd.f32 %v12151, %v12152
  %v12154 = vsel %vm3709, %v11953, 0.0
  %v12155 = vadd.f32 %v12153, %v12154
  %v12156 = vsel %vm3709, %v11954, 0.0
  %v12157 = vadd.f32 %v12155, %v12156
  %v12158 = vsel %vm3709, %v11955, 0.0
  %v12159 = vadd.f32 %v12157, %v12158
  %v12160 = vsel %vm3709, %v11956, 0.0
  %v12161 = vadd.f32 %v12159, %v12160
  %v12162 = vsel %vm3709, %v11957, 0.0
  %v12163 = vadd.f32 %v12161, %v12162
  %v12164 = vsel %vm3709, %v11958, 0.0
  %v12165 = vadd.f32 %v12163, %v12164
  %v12166 = vsel %vm3709, %v11959, 0.0
  %v12167 = vadd.f32 %v12165, %v12166
  %v12168 = vsel %vm3709, %v11960, 0.0
  %v12169 = vadd.f32 %v12167, %v12168
  %v12170 = vsel %vm3709, %v11961, 0.0
  %v12171 = vadd.f32 %v12169, %v12170
  %v12172 = vsel %vm3709, %v11962, 0.0
  %v12173 = vadd.f32 %v12171, %v12172
  %v12174 = vsel %vm3709, %v11963, 0.0
  %v12175 = vadd.f32 %v12173, %v12174
  %v12176 = vsel %vm3709, %v11964, 0.0
  %v12177 = vadd.f32 %v12175, %v12176
  %v12178 = vsel %vm3709, %v11965, 0.0
  %v12179 = vadd.f32 %v12177, %v12178
  %v12180 = vsel %vm3709, %v11966, 0.0
  %v12181 = vadd.f32 %v12179, %v12180
  %v12182 = vsel %vm3709, %v11967, 0.0
  %v12183 = vadd.f32 %v12181, %v12182
  %v12184 = vsel %vm3709, %v11968, 0.0
  %v12185 = vadd.f32 %v12183, %v12184
  %v12186 = vsel %vm3709, %v11969, 0.0
  %v12187 = vadd.f32 %v12185, %v12186
  %v12188 = vsel %vm3709, %v11970, 0.0
  %v12189 = vadd.f32 %v12187, %v12188
  %v12190 = vsel %vm3709, %v11971, 0.0
  %v12191 = vadd.f32 %v12189, %v12190
  %v12192 = vsel %vm3709, %v11972, 0.0
  %v12193 = vadd.f32 %v12191, %v12192
  %v12194 = vsel %vm3709, %v11973, 0.0
  %v12195 = vadd.f32 %v12193, %v12194
  %v12196 = vsel %vm3709, %v11974, 0.0
  %v12197 = vadd.f32 %v12195, %v12196
  %v12198 = vsel %vm3709, %v11975, 0.0
  %v12199 = vadd.f32 %v12197, %v12198
  %v12200 = vsel %vm3709, %v11976, 0.0
  %v12201 = vadd.f32 %v12199, %v12200
  %v12202 = vsel %vm3709, %v11977, 0.0
  %v12203 = vadd.f32 %v12201, %v12202
  %v12204 = vsel %vm11627, %v11978, 0.0
  %v12205 = vadd.f32 %v12203, %v12204
  %v12206 = vrot.slane %v12205, 4
  %v12207 = vadd.f32 %v12205, %v12206
  %v12208 = vrot.slane %v12207, 2
  %v12209 = vadd.f32 %v12207, %v12208
  %v12210 = vrot.slane %v12209, 1
  %v12211 = vadd.f32 %v12209, %v12210
  %v12212 = vmul.f32 %v12211, 0.0015432099
  %v12213 = vadd.f32 %v12212, 1e-05
  %v12214 = vrsqrt.pop %v12213
  %v12215 = vld [vmem:[%s10] sm:$0x1]
  %v12216 = vmul.f32 %v12215, %v12214
  %v12217 = vld [vmem:[%s11] sm:$0x1]
  %v12218 = vmul.f32 %v11636, %v12216
  %v12219 = vsub.f32 %v12217, %v12218
  %v12221 = vlaneseq
  %v12222 = vshrl.u32 %v12221, 7
  %v12223 = vsub.s32 0, %v12222
  %v12224 = vrot.slane %v12216, %v12223
  %v12226 = vmul.f32 %v10150, %v12224
  %v12227 = vmul.f32 %v10153, %v12224
  %v12228 = vmul.f32 %v10158, %v12224
  %v12229 = vmul.f32 %v10161, %v12224
  %v12230 = vmul.f32 %v10166, %v12224
  %v12231 = vmul.f32 %v10169, %v12224
  %v12232 = vmul.f32 %v10174, %v12224
  %v12233 = vmul.f32 %v10177, %v12224
  %v12234 = vmul.f32 %v10182, %v12224
  %v12235 = vmul.f32 %v10185, %v12224
  %v12236 = vmul.f32 %v10190, %v12224
  %v12237 = vmul.f32 %v10193, %v12224
  %v12238 = vmul.f32 %v10198, %v12224
  %v12239 = vmul.f32 %v10201, %v12224
  %v12240 = vmul.f32 %v10206, %v12224
  %v12241 = vmul.f32 %v10209, %v12224
  %v12242 = vmul.f32 %v10214, %v12224
  %v12243 = vmul.f32 %v10217, %v12224
  %v12244 = vmul.f32 %v10222, %v12224
  %v12245 = vmul.f32 %v10225, %v12224
  %v12246 = vmul.f32 %v10230, %v12224
  %v12247 = vmul.f32 %v10233, %v12224
  %v12248 = vmul.f32 %v10238, %v12224
  %v12249 = vmul.f32 %v10241, %v12224
  %v12250 = vmul.f32 %v10246, %v12224
  %v12251 = vmul.f32 %v10249, %v12224
  %v12252 = vmul.f32 %v10254, %v12224
  %v12253 = vmul.f32 %v10257, %v12224
  %v12254 = vmul.f32 %v10262, %v12224
  %v12255 = vmul.f32 %v10265, %v12224
  %v12256 = vmul.f32 %v10270, %v12224
  %v12257 = vmul.f32 %v10273, %v12224
  %v12258 = vmul.f32 %v10278, %v12224
  %v12259 = vmul.f32 %v10281, %v12224
  %v12260 = vmul.f32 %v10286, %v12224
  %v12261 = vmul.f32 %v10289, %v12224
  %v12262 = vmul.f32 %v10294, %v12224
  %v12263 = vmul.f32 %v10297, %v12224
  %v12264 = vmul.f32 %v10302, %v12224
  %v12265 = vmul.f32 %v10305, %v12224
  %v12266 = vmul.f32 %v10310, %v12224
  %v12267 = vmul.f32 %v10313, %v12224
  %v12268 = vmul.f32 %v10318, %v12224
  %v12269 = vmul.f32 %v10321, %v12224
  %v12270 = vmul.f32 %v10326, %v12224
  %v12271 = vmul.f32 %v10329, %v12224
  %v12272 = vmul.f32 %v10334, %v12224
  %v12273 = vmul.f32 %v10337, %v12224
  %v12274 = vmul.f32 %v10342, %v12224
  %v12275 = vmul.f32 %v10345, %v12224
  %v12276 = vmul.f32 %v10350, %v12224
  %v12277 = vmul.f32 %v10353, %v12224
  %v12278 = vmul.f32 %v10358, %v12224
  %v12279 = vmul.f32 %v10361, %v12224
  %v12280 = vmul.f32 %v10366, %v12224
  %v12281 = vmul.f32 %v10369, %v12224
  %v12282 = vmul.f32 %v10374, %v12224
  %v12283 = vmul.f32 %v10377, %v12224
  %v12284 = vmul.f32 %v10382, %v12224
  %v12285 = vmul.f32 %v10385, %v12224
  %v12286 = vmul.f32 %v10390, %v12224
  %v12287 = vmul.f32 %v10393, %v12224
  %v12288 = vmul.f32 %v10398, %v12224
  %v12289 = vmul.f32 %v10401, %v12224
  %v12290 = vmul.f32 %v10406, %v12224
  %v12291 = vmul.f32 %v10409, %v12224
  %v12292 = vmul.f32 %v10414, %v12224
  %v12293 = vmul.f32 %v10417, %v12224
  %v12294 = vmul.f32 %v10422, %v12224
  %v12295 = vmul.f32 %v10425, %v12224
  %v12296 = vmul.f32 %v10430, %v12224
  %v12297 = vmul.f32 %v10433, %v12224
  %v12298 = vmul.f32 %v10438, %v12224
  %v12299 = vmul.f32 %v10441, %v12224
  %v12300 = vmul.f32 %v10446, %v12224
  %v12301 = vmul.f32 %v10449, %v12224
  %v12302 = vmul.f32 %v10454, %v12224
  %v12303 = vmul.f32 %v10457, %v12224
  %v12304 = vmul.f32 %v10462, %v12224
  %v12305 = vmul.f32 %v10465, %v12224
  %v12306 = vmul.f32 %v10470, %v12224
  %v12307 = vmul.f32 %v10473, %v12224
  %v12308 = vmul.f32 %v10478, %v12224
  %v12309 = vmul.f32 %v10481, %v12224
  %v12310 = vmul.f32 %v10486, %v12224
  %v12311 = vmul.f32 %v10489, %v12224
  %v12312 = vmul.f32 %v10494, %v12224
  %v12313 = vmul.f32 %v10497, %v12224
  %v12314 = vmul.f32 %v10502, %v12224
  %v12315 = vmul.f32 %v10505, %v12224
  %v12316 = vmul.f32 %v10510, %v12224
  %v12317 = vmul.f32 %v10513, %v12224
  %v12318 = vmul.f32 %v10518, %v12224
  %v12319 = vmul.f32 %v10521, %v12224
  %v12320 = vmul.f32 %v10526, %v12224
  %v12321 = vmul.f32 %v10529, %v12224
  %v12322 = vmul.f32 %v10534, %v12224
  %v12323 = vmul.f32 %v10537, %v12224
  %v12324 = vmul.f32 %v10542, %v12224
  %v12325 = vmul.f32 %v10545, %v12224
  %v12326 = vmul.f32 %v10550, %v12224
  %v12327 = vmul.f32 %v10553, %v12224
  %v12328 = vmul.f32 %v10558, %v12224
  %v12329 = vmul.f32 %v10561, %v12224
  %v12330 = vmul.f32 %v10566, %v12224
  %v12331 = vmul.f32 %v10569, %v12224
  %v12332 = vmul.f32 %v10574, %v12224
  %v12333 = vmul.f32 %v10577, %v12224
  %v12334 = vmul.f32 %v10582, %v12224
  %v12335 = vmul.f32 %v10585, %v12224
  %v12336 = vmul.f32 %v10590, %v12224
  %v12337 = vmul.f32 %v10593, %v12224
  %v12338 = vmul.f32 %v10598, %v12224
  %v12339 = vmul.f32 %v10601, %v12224
  %v12341 = vlaneseq
  %v12342 = vshrl.u32 %v12341, 7
  %v12343 = vsub.s32 0, %v12342
  %v12344 = vrot.slane %v12219, %v12343
  %v12346 = vadd.f32 %v12226, %v12344
  %v12347 = vadd.f32 %v12227, %v12344
  %v12348 = vadd.f32 %v12228, %v12344
  %v12349 = vadd.f32 %v12229, %v12344
  %v12350 = vadd.f32 %v12230, %v12344
  %v12351 = vadd.f32 %v12231, %v12344
  %v12352 = vadd.f32 %v12232, %v12344
  %v12353 = vadd.f32 %v12233, %v12344
  %v12354 = vadd.f32 %v12234, %v12344
  %v12355 = vadd.f32 %v12235, %v12344
  %v12356 = vadd.f32 %v12236, %v12344
  %v12357 = vadd.f32 %v12237, %v12344
  %v12358 = vadd.f32 %v12238, %v12344
  %v12359 = vadd.f32 %v12239, %v12344
  %v12360 = vadd.f32 %v12240, %v12344
  %v12361 = vadd.f32 %v12241, %v12344
  %v12362 = vadd.f32 %v12242, %v12344
  %v12363 = vadd.f32 %v12243, %v12344
  %v12364 = vadd.f32 %v12244, %v12344
  %v12365 = vadd.f32 %v12245, %v12344
  %v12366 = vadd.f32 %v12246, %v12344
  %v12367 = vadd.f32 %v12247, %v12344
  %v12368 = vadd.f32 %v12248, %v12344
  %v12369 = vadd.f32 %v12249, %v12344
  %v12370 = vadd.f32 %v12250, %v12344
  %v12371 = vadd.f32 %v12251, %v12344
  %v12372 = vadd.f32 %v12252, %v12344
  %v12373 = vadd.f32 %v12253, %v12344
  %v12374 = vadd.f32 %v12254, %v12344
  %v12375 = vadd.f32 %v12255, %v12344
  %v12376 = vadd.f32 %v12256, %v12344
  %v12377 = vadd.f32 %v12257, %v12344
  %v12378 = vadd.f32 %v12258, %v12344
  %v12379 = vadd.f32 %v12259, %v12344
  %v12380 = vadd.f32 %v12260, %v12344
  %v12381 = vadd.f32 %v12261, %v12344
  %v12382 = vadd.f32 %v12262, %v12344
  %v12383 = vadd.f32 %v12263, %v12344
  %v12384 = vadd.f32 %v12264, %v12344
  %v12385 = vadd.f32 %v12265, %v12344
  %v12386 = vadd.f32 %v12266, %v12344
  %v12387 = vadd.f32 %v12267, %v12344
  %v12388 = vadd.f32 %v12268, %v12344
  %v12389 = vadd.f32 %v12269, %v12344
  %v12390 = vadd.f32 %v12270, %v12344
  %v12391 = vadd.f32 %v12271, %v12344
  %v12392 = vadd.f32 %v12272, %v12344
  %v12393 = vadd.f32 %v12273, %v12344
  %v12394 = vadd.f32 %v12274, %v12344
  %v12395 = vadd.f32 %v12275, %v12344
  %v12396 = vadd.f32 %v12276, %v12344
  %v12397 = vadd.f32 %v12277, %v12344
  %v12398 = vadd.f32 %v12278, %v12344
  %v12399 = vadd.f32 %v12279, %v12344
  %v12400 = vadd.f32 %v12280, %v12344
  %v12401 = vadd.f32 %v12281, %v12344
  %v12402 = vadd.f32 %v12282, %v12344
  %v12403 = vadd.f32 %v12283, %v12344
  %v12404 = vadd.f32 %v12284, %v12344
  %v12405 = vadd.f32 %v12285, %v12344
  %v12406 = vadd.f32 %v12286, %v12344
  %v12407 = vadd.f32 %v12287, %v12344
  %v12408 = vadd.f32 %v12288, %v12344
  %v12409 = vadd.f32 %v12289, %v12344
  %v12410 = vadd.f32 %v12290, %v12344
  %v12411 = vadd.f32 %v12291, %v12344
  %v12412 = vadd.f32 %v12292, %v12344
  %v12413 = vadd.f32 %v12293, %v12344
  %v12414 = vadd.f32 %v12294, %v12344
  %v12415 = vadd.f32 %v12295, %v12344
  %v12416 = vadd.f32 %v12296, %v12344
  %v12417 = vadd.f32 %v12297, %v12344
  %v12418 = vadd.f32 %v12298, %v12344
  %v12419 = vadd.f32 %v12299, %v12344
  %v12420 = vadd.f32 %v12300, %v12344
  %v12421 = vadd.f32 %v12301, %v12344
  %v12422 = vadd.f32 %v12302, %v12344
  %v12423 = vadd.f32 %v12303, %v12344
  %v12424 = vadd.f32 %v12304, %v12344
  %v12425 = vadd.f32 %v12305, %v12344
  %v12426 = vadd.f32 %v12306, %v12344
  %v12427 = vadd.f32 %v12307, %v12344
  %v12428 = vadd.f32 %v12308, %v12344
  %v12429 = vadd.f32 %v12309, %v12344
  %v12430 = vadd.f32 %v12310, %v12344
  %v12431 = vadd.f32 %v12311, %v12344
  %v12432 = vadd.f32 %v12312, %v12344
  %v12433 = vadd.f32 %v12313, %v12344
  %v12434 = vadd.f32 %v12314, %v12344
  %v12435 = vadd.f32 %v12315, %v12344
  %v12436 = vadd.f32 %v12316, %v12344
  %v12437 = vadd.f32 %v12317, %v12344
  %v12438 = vadd.f32 %v12318, %v12344
  %v12439 = vadd.f32 %v12319, %v12344
  %v12440 = vadd.f32 %v12320, %v12344
  %v12441 = vadd.f32 %v12321, %v12344
  %v12442 = vadd.f32 %v12322, %v12344
  %v12443 = vadd.f32 %v12323, %v12344
  %v12444 = vadd.f32 %v12324, %v12344
  %v12445 = vadd.f32 %v12325, %v12344
  %v12446 = vadd.f32 %v12326, %v12344
  %v12447 = vadd.f32 %v12327, %v12344
  %v12448 = vadd.f32 %v12328, %v12344
  %v12449 = vadd.f32 %v12329, %v12344
  %v12450 = vadd.f32 %v12330, %v12344
  %v12451 = vadd.f32 %v12331, %v12344
  %v12452 = vadd.f32 %v12332, %v12344
  %v12453 = vadd.f32 %v12333, %v12344
  %v12454 = vadd.f32 %v12334, %v12344
  %v12455 = vadd.f32 %v12335, %v12344
  %v12456 = vadd.f32 %v12336, %v12344
  %v12457 = vadd.f32 %v12337, %v12344
  %v12458 = vadd.f32 %v12338, %v12344
  %v12459 = vadd.f32 %v12339, %v12344
  %v12460 = vmax.f32 %v12346, 0.0
  %v12461 = vmax.f32 %v12347, 0.0
  %v12462 = vmax.f32 %v12348, 0.0
  %v12463 = vmax.f32 %v12349, 0.0
  %v12464 = vmax.f32 %v12350, 0.0
  %v12465 = vmax.f32 %v12351, 0.0
  %v12466 = vmax.f32 %v12352, 0.0
  %v12467 = vmax.f32 %v12353, 0.0
  %v12468 = vmax.f32 %v12354, 0.0
  %v12469 = vmax.f32 %v12355, 0.0
  %v12470 = vmax.f32 %v12356, 0.0
  %v12471 = vmax.f32 %v12357, 0.0
  %v12472 = vmax.f32 %v12358, 0.0
  %v12473 = vmax.f32 %v12359, 0.0
  %v12474 = vmax.f32 %v12360, 0.0
  %v12475 = vmax.f32 %v12361, 0.0
  %v12476 = vmax.f32 %v12362, 0.0
  %v12477 = vmax.f32 %v12363, 0.0
  %v12478 = vmax.f32 %v12364, 0.0
  %v12479 = vmax.f32 %v12365, 0.0
  %v12480 = vmax.f32 %v12366, 0.0
  %v12481 = vmax.f32 %v12367, 0.0
  %v12482 = vmax.f32 %v12368, 0.0
  %v12483 = vmax.f32 %v12369, 0.0
  %v12484 = vmax.f32 %v12370, 0.0
  %v12485 = vmax.f32 %v12371, 0.0
  %v12486 = vmax.f32 %v12372, 0.0
  %v12487 = vmax.f32 %v12373, 0.0
  %v12488 = vmax.f32 %v12374, 0.0
  %v12489 = vmax.f32 %v12375, 0.0
  %v12490 = vmax.f32 %v12376, 0.0
  %v12491 = vmax.f32 %v12377, 0.0
  %v12492 = vmax.f32 %v12378, 0.0
  %v12493 = vmax.f32 %v12379, 0.0
  %v12494 = vmax.f32 %v12380, 0.0
  %v12495 = vmax.f32 %v12381, 0.0
  %v12496 = vmax.f32 %v12382, 0.0
  %v12497 = vmax.f32 %v12383, 0.0
  %v12498 = vmax.f32 %v12384, 0.0
  %v12499 = vmax.f32 %v12385, 0.0
  %v12500 = vmax.f32 %v12386, 0.0
  %v12501 = vmax.f32 %v12387, 0.0
  %v12502 = vmax.f32 %v12388, 0.0
  %v12503 = vmax.f32 %v12389, 0.0
  %v12504 = vmax.f32 %v12390, 0.0
  %v12505 = vmax.f32 %v12391, 0.0
  %v12506 = vmax.f32 %v12392, 0.0
  %v12507 = vmax.f32 %v12393, 0.0
  %v12508 = vmax.f32 %v12394, 0.0
  %v12509 = vmax.f32 %v12395, 0.0
  %v12510 = vmax.f32 %v12396, 0.0
  %v12511 = vmax.f32 %v12397, 0.0
  %v12512 = vmax.f32 %v12398, 0.0
  %v12513 = vmax.f32 %v12399, 0.0
  %v12514 = vmax.f32 %v12400, 0.0
  %v12515 = vmax.f32 %v12401, 0.0
  %v12516 = vmax.f32 %v12402, 0.0
  %v12517 = vmax.f32 %v12403, 0.0
  %v12518 = vmax.f32 %v12404, 0.0
  %v12519 = vmax.f32 %v12405, 0.0
  %v12520 = vmax.f32 %v12406, 0.0
  %v12521 = vmax.f32 %v12407, 0.0
  %v12522 = vmax.f32 %v12408, 0.0
  %v12523 = vmax.f32 %v12409, 0.0
  %v12524 = vmax.f32 %v12410, 0.0
  %v12525 = vmax.f32 %v12411, 0.0
  %v12526 = vmax.f32 %v12412, 0.0
  %v12527 = vmax.f32 %v12413, 0.0
  %v12528 = vmax.f32 %v12414, 0.0
  %v12529 = vmax.f32 %v12415, 0.0
  %v12530 = vmax.f32 %v12416, 0.0
  %v12531 = vmax.f32 %v12417, 0.0
  %v12532 = vmax.f32 %v12418, 0.0
  %v12533 = vmax.f32 %v12419, 0.0
  %v12534 = vmax.f32 %v12420, 0.0
  %v12535 = vmax.f32 %v12421, 0.0
  %v12536 = vmax.f32 %v12422, 0.0
  %v12537 = vmax.f32 %v12423, 0.0
  %v12538 = vmax.f32 %v12424, 0.0
  %v12539 = vmax.f32 %v12425, 0.0
  %v12540 = vmax.f32 %v12426, 0.0
  %v12541 = vmax.f32 %v12427, 0.0
  %v12542 = vmax.f32 %v12428, 0.0
  %v12543 = vmax.f32 %v12429, 0.0
  %v12544 = vmax.f32 %v12430, 0.0
  %v12545 = vmax.f32 %v12431, 0.0
  %v12546 = vmax.f32 %v12432, 0.0
  %v12547 = vmax.f32 %v12433, 0.0
  %v12548 = vmax.f32 %v12434, 0.0
  %v12549 = vmax.f32 %v12435, 0.0
  %v12550 = vmax.f32 %v12436, 0.0
  %v12551 = vmax.f32 %v12437, 0.0
  %v12552 = vmax.f32 %v12438, 0.0
  %v12553 = vmax.f32 %v12439, 0.0
  %v12554 = vmax.f32 %v12440, 0.0
  %v12555 = vmax.f32 %v12441, 0.0
  %v12556 = vmax.f32 %v12442, 0.0
  %v12557 = vmax.f32 %v12443, 0.0
  %v12558 = vmax.f32 %v12444, 0.0
  %v12559 = vmax.f32 %v12445, 0.0
  %v12560 = vmax.f32 %v12446, 0.0
  %v12561 = vmax.f32 %v12447, 0.0
  %v12562 = vmax.f32 %v12448, 0.0
  %v12563 = vmax.f32 %v12449, 0.0
  %v12564 = vmax.f32 %v12450, 0.0
  %v12565 = vmax.f32 %v12451, 0.0
  %v12566 = vmax.f32 %v12452, 0.0
  %v12567 = vmax.f32 %v12453, 0.0
  %v12568 = vmax.f32 %v12454, 0.0
  %v12569 = vmax.f32 %v12455, 0.0
  %v12570 = vmax.f32 %v12456, 0.0
  %v12571 = vmax.f32 %v12457, 0.0
  %v12572 = vmax.f32 %v12458, 0.0
  %v12573 = vmax.f32 %v12459, 0.0
  %12574 = vst.msk [vmem:[%s12] sm:$0xff] %vm3709, %v12460
  %12575 = vst.msk [vmem:[%s12 + $0x8] sm:$0xff] %vm3709, %v12461
  %12576 = vst.msk [vmem:[%s12 + $0x10] sm:$0xff] %vm3709, %v12462
  %12577 = vst.msk [vmem:[%s12 + $0x18] sm:$0xff] %vm3709, %v12463
  %12578 = vst.msk [vmem:[%s12 + $0x20] sm:$0xff] %vm3709, %v12464
  %12579 = vst.msk [vmem:[%s12 + $0x28] sm:$0xff] %vm3709, %v12465
  %12580 = vst.msk [vmem:[%s12 + $0x30] sm:$0xff] %vm3709, %v12466
  %12581 = vst.msk [vmem:[%s12 + $0x38] sm:$0xff] %vm3709, %v12467
  %12582 = vst.msk [vmem:[%s12 + $0x40] sm:$0xff] %vm3709, %v12468
  %12583 = vst.msk [vmem:[%s12 + $0x48] sm:$0xff] %vm3709, %v12469
  %12584 = vst.msk [vmem:[%s12 + $0x50] sm:$0xff] %vm3709, %v12470
  %12585 = vst.msk [vmem:[%s12 + $0x58] sm:$0xff] %vm3709, %v12471
  %12586 = vst.msk [vmem:[%s12 + $0x60] sm:$0xff] %vm3709, %v12472
  %12587 = vst.msk [vmem:[%s12 + $0x68] sm:$0xff] %vm3709, %v12473
  %12588 = vst.msk [vmem:[%s12 + $0x70] sm:$0xff] %vm3709, %v12474
  %12589 = vst.msk [vmem:[%s12 + $0x78] sm:$0xff] %vm3709, %v12475
  %12590 = vst.msk [vmem:[%s12 + $0x80] sm:$0xff] %vm3709, %v12476
  %12591 = vst.msk [vmem:[%s12 + $0x88] sm:$0xff] %vm3709, %v12477
  %12592 = vst.msk [vmem:[%s12 + $0x90] sm:$0xff] %vm3709, %v12478
  %12593 = vst.msk [vmem:[%s12 + $0x98] sm:$0xff] %vm3709, %v12479
  %12594 = vst.msk [vmem:[%s12 + $0xa0] sm:$0xff] %vm3709, %v12480
  %12595 = vst.msk [vmem:[%s12 + $0xa8] sm:$0xff] %vm3709, %v12481
  %12596 = vst.msk [vmem:[%s12 + $0xb0] sm:$0xff] %vm3709, %v12482
  %12597 = vst.msk [vmem:[%s12 + $0xb8] sm:$0xff] %vm3709, %v12483
  %12598 = vst.msk [vmem:[%s12 + $0xc0] sm:$0xff] %vm3709, %v12484
  %12599 = vst.msk [vmem:[%s12 + $0xc8] sm:$0xff] %vm3709, %v12485
  %12600 = vst.msk [vmem:[%s12 + $0xd0] sm:$0xff] %vm3709, %v12486
  %12601 = vst.msk [vmem:[%s12 + $0xd8] sm:$0xff] %vm3709, %v12487
  %12602 = vst.msk [vmem:[%s12 + $0xe0] sm:$0xff] %vm3709, %v12488
  %12603 = vst.msk [vmem:[%s12 + $0xe8] sm:$0xff] %vm3709, %v12489
  %12604 = vst.msk [vmem:[%s12 + $0xf0] sm:$0xff] %vm3709, %v12490
  %12605 = vst.msk [vmem:[%s12 + $0xf8] sm:$0xff] %vm3709, %v12491
  %12606 = vst.msk [vmem:[%s12 + $0x100] sm:$0xff] %vm3709, %v12492
  %12607 = vst.msk [vmem:[%s12 + $0x108] sm:$0xff] %vm3709, %v12493
  %12608 = vst.msk [vmem:[%s12 + $0x110] sm:$0xff] %vm3709, %v12494
  %12609 = vst.msk [vmem:[%s12 + $0x118] sm:$0xff] %vm3709, %v12495
  %12610 = vst.msk [vmem:[%s12 + $0x120] sm:$0xff] %vm3709, %v12496
  %12611 = vst.msk [vmem:[%s12 + $0x128] sm:$0xff] %vm3709, %v12497
  %12612 = vst.msk [vmem:[%s12 + $0x130] sm:$0xff] %vm3709, %v12498
  %12613 = vst.msk [vmem:[%s12 + $0x138] sm:$0xff] %vm3709, %v12499
  %12614 = vst.msk [vmem:[%s12 + $0x140] sm:$0xff] %vm3709, %v12500
  %12615 = vst.msk [vmem:[%s12 + $0x148] sm:$0xff] %vm3709, %v12501
  %12616 = vst.msk [vmem:[%s12 + $0x150] sm:$0xff] %vm3709, %v12502
  %12617 = vst.msk [vmem:[%s12 + $0x158] sm:$0xff] %vm3709, %v12503
  %12618 = vst.msk [vmem:[%s12 + $0x160] sm:$0xff] %vm3709, %v12504
  %12619 = vst.msk [vmem:[%s12 + $0x168] sm:$0xff] %vm3709, %v12505
  %12620 = vst.msk [vmem:[%s12 + $0x170] sm:$0xff] %vm3709, %v12506
  %12621 = vst.msk [vmem:[%s12 + $0x178] sm:$0xff] %vm3709, %v12507
  %12622 = vst.msk [vmem:[%s12 + $0x180] sm:$0xff] %vm3709, %v12508
  %12623 = vst.msk [vmem:[%s12 + $0x188] sm:$0xff] %vm3709, %v12509
  %12624 = vst.msk [vmem:[%s12 + $0x190] sm:$0xff] %vm3709, %v12510
  %12625 = vst.msk [vmem:[%s12 + $0x198] sm:$0xff] %vm3709, %v12511
  %12626 = vst.msk [vmem:[%s12 + $0x1a0] sm:$0xff] %vm3709, %v12512
  %12627 = vst.msk [vmem:[%s12 + $0x1a8] sm:$0xff] %vm3709, %v12513
  %12628 = vst.msk [vmem:[%s12 + $0x1b0] sm:$0xff] %vm3709, %v12514
  %12629 = vst.msk [vmem:[%s12 + $0x1b8] sm:$0xff] %vm3709, %v12515
  %12630 = vst.msk [vmem:[%s12 + $0x1c0] sm:$0xff] %vm3709, %v12516
  %12631 = vst.msk [vmem:[%s12 + $0x1c8] sm:$0xff] %vm3709, %v12517
  %12632 = vst.msk [vmem:[%s12 + $0x1d0] sm:$0xff] %vm3709, %v12518
  %12633 = vst.msk [vmem:[%s12 + $0x1d8] sm:$0xff] %vm3709, %v12519
  %12634 = vst.msk [vmem:[%s12 + $0x1e0] sm:$0xff] %vm3709, %v12520
  %12635 = vst.msk [vmem:[%s12 + $0x1e8] sm:$0xff] %vm3709, %v12521
  %12636 = vst.msk [vmem:[%s12 + $0x1f0] sm:$0xff] %vm3709, %v12522
  %12637 = vst.msk [vmem:[%s12 + $0x1f8] sm:$0xff] %vm3709, %v12523
  %12638 = vst.msk [vmem:[%s12 + $0x200] sm:$0xff] %vm3709, %v12524
  %12639 = vst.msk [vmem:[%s12 + $0x208] sm:$0xff] %vm3709, %v12525
  %12640 = vst.msk [vmem:[%s12 + $0x210] sm:$0xff] %vm3709, %v12526
  %12641 = vst.msk [vmem:[%s12 + $0x218] sm:$0xff] %vm3709, %v12527
  %12642 = vst.msk [vmem:[%s12 + $0x220] sm:$0xff] %vm3709, %v12528
  %12643 = vst.msk [vmem:[%s12 + $0x228] sm:$0xff] %vm3709, %v12529
  %12644 = vst.msk [vmem:[%s12 + $0x230] sm:$0xff] %vm3709, %v12530
  %12645 = vst.msk [vmem:[%s12 + $0x238] sm:$0xff] %vm3709, %v12531
  %12646 = vst.msk [vmem:[%s12 + $0x240] sm:$0xff] %vm3709, %v12532
  %12647 = vst.msk [vmem:[%s12 + $0x248] sm:$0xff] %vm3709, %v12533
  %12648 = vst.msk [vmem:[%s12 + $0x250] sm:$0xff] %vm3709, %v12534
  %12649 = vst.msk [vmem:[%s12 + $0x258] sm:$0xff] %vm3709, %v12535
  %12650 = vst.msk [vmem:[%s12 + $0x260] sm:$0xff] %vm3709, %v12536
  %12651 = vst.msk [vmem:[%s12 + $0x268] sm:$0xff] %vm3709, %v12537
  %12652 = vst.msk [vmem:[%s12 + $0x270] sm:$0xff] %vm3709, %v12538
  %12653 = vst.msk [vmem:[%s12 + $0x278] sm:$0xff] %vm3709, %v12539
  %12654 = vst.msk [vmem:[%s12 + $0x280] sm:$0xff] %vm3709, %v12540
  %12655 = vst.msk [vmem:[%s12 + $0x288] sm:$0xff] %vm3709, %v12541
  %12656 = vst.msk [vmem:[%s12 + $0x290] sm:$0xff] %vm3709, %v12542
  %12657 = vst.msk [vmem:[%s12 + $0x298] sm:$0xff] %vm3709, %v12543
  %12658 = vst.msk [vmem:[%s12 + $0x2a0] sm:$0xff] %vm3709, %v12544
  %12659 = vst.msk [vmem:[%s12 + $0x2a8] sm:$0xff] %vm3709, %v12545
  %12660 = vst.msk [vmem:[%s12 + $0x2b0] sm:$0xff] %vm3709, %v12546
  %12661 = vst.msk [vmem:[%s12 + $0x2b8] sm:$0xff] %vm3709, %v12547
  %12662 = vst.msk [vmem:[%s12 + $0x2c0] sm:$0xff] %vm3709, %v12548
  %12663 = vst.msk [vmem:[%s12 + $0x2c8] sm:$0xff] %vm3709, %v12549
  %12664 = vst.msk [vmem:[%s12 + $0x2d0] sm:$0xff] %vm3709, %v12550
  %12665 = vst.msk [vmem:[%s12 + $0x2d8] sm:$0xff] %vm3709, %v12551
  %12666 = vst.msk [vmem:[%s12 + $0x2e0] sm:$0xff] %vm3709, %v12552
  %12667 = vst.msk [vmem:[%s12 + $0x2e8] sm:$0xff] %vm3709, %v12553
  %12668 = vst.msk [vmem:[%s12 + $0x2f0] sm:$0xff] %vm3709, %v12554
  %12669 = vst.msk [vmem:[%s12 + $0x2f8] sm:$0xff] %vm3709, %v12555
  %12670 = vst.msk [vmem:[%s12 + $0x300] sm:$0xff] %vm3709, %v12556
  %12671 = vst.msk [vmem:[%s12 + $0x308] sm:$0xff] %vm3709, %v12557
  %12672 = vst.msk [vmem:[%s12 + $0x310] sm:$0xff] %vm3709, %v12558
  %12673 = vst.msk [vmem:[%s12 + $0x318] sm:$0xff] %vm3709, %v12559
  %12674 = vst.msk [vmem:[%s12 + $0x320] sm:$0xff] %vm3709, %v12560
  %12675 = vst.msk [vmem:[%s12 + $0x328] sm:$0xff] %vm3709, %v12561
  %12676 = vst.msk [vmem:[%s12 + $0x330] sm:$0xff] %vm3709, %v12562
  %12677 = vst.msk [vmem:[%s12 + $0x338] sm:$0xff] %vm3709, %v12563
  %12678 = vst.msk [vmem:[%s12 + $0x340] sm:$0xff] %vm3709, %v12564
  %12679 = vst.msk [vmem:[%s12 + $0x348] sm:$0xff] %vm3709, %v12565
  %12680 = vst.msk [vmem:[%s12 + $0x350] sm:$0xff] %vm3709, %v12566
  %12681 = vst.msk [vmem:[%s12 + $0x358] sm:$0xff] %vm3709, %v12567
  %12682 = vst.msk [vmem:[%s12 + $0x360] sm:$0xff] %vm3709, %v12568
  %12683 = vst.msk [vmem:[%s12 + $0x368] sm:$0xff] %vm3709, %v12569
  %12684 = vst.msk [vmem:[%s12 + $0x370] sm:$0xff] %vm3709, %v12570
  %12685 = vst.msk [vmem:[%s12 + $0x378] sm:$0xff] %vm3709, %v12571
  %12686 = vst.msk [vmem:[%s12 + $0x380] sm:$0xff] %vm3709, %v12572
  %12687 = vst.msk [vmem:[%s12 + $0x388] sm:$0x3f] %vm11627, %v12573
  %12688 = vst.msk [vmem:[%s12 + $0x38e] sm:$0xff] %vm3709, 0.0
  %12689 = vst.msk [vmem:[%s12 + $0x396] sm:$0xff] %vm3709, 0.0
  %12690 = vst.msk [vmem:[%s12 + $0x39e] sm:$0xff] %vm3709, 0.0
  %12691 = vst.msk [vmem:[%s12 + $0x3a6] sm:$0xff] %vm3709, 0.0
  %12692 = vst.msk [vmem:[%s12 + $0x3ae] sm:$0xff] %vm3709, 0.0
  %12693 = vst.msk [vmem:[%s12 + $0x3b6] sm:$0xff] %vm3709, 0.0
  %vm12694 = vcmask 25600
  %12695 = vst.msk [vmem:[%s12 + $0x3be] sm:$0x3] %vm12694, 0.0
  // Predicated region
  $region50: #{decoder_forward.3} parent=0 // pred_check
    _
  $region51: #{decoder_forward.3} parent=0 // pred_check_branch
    %12697 = sbr.rel (0) target = $region53
  $region52: #{decoder_forward.3} parent=0 // pred_region
    _
  $region53: #{decoder_forward.3} parent=0 // pred_fallthru
    _
  // Predicated region
  $region54: #{decoder_forward.3} parent=0 // pred_check
    _
  $region55: #{decoder_forward.3} parent=0 // pred_check_branch
    %12699 = sbr.rel (0) target = $region57
  $region56: #{decoder_forward.3} parent=0 // pred_region
    _
  $region57: #{decoder_forward.3} parent=0 // pred_fallthru
    _

</llo_original>
